<compile_context>
chip_gen: v5e
topology: v5e:2x2
jax: 0.10.0
libtpu: 0.0.40
codegen_flags: <defaults>
</compile_context>

<pallas_src>
import functools

import jax
import jax.numpy as jnp
from jax.experimental import pallas as pl
from jax.experimental.pallas import tpu as pltpu

# ---------------------------------------------------------------------------
# Model geometry (fixed by the PyTorch module).
# ---------------------------------------------------------------------------
KH = 5                 # conv kernel size (5x5, padding=2 -> 'same')
H1 = 28                # conv1 spatial size
P1 = H1 + 4            # conv1 padded spatial size (32)
C1 = 16                # conv1 out channels
H2 = H1 // 2           # pool1 / conv2 spatial size (14)
P2 = H2 + 4            # conv2 padded spatial size (18)
C2 = 32                # conv2 out channels
H3 = H2 // 2           # pool2 spatial size (7)
F = H3 * H3 * C2       # flattened features (1568)
D1 = 512               # fc1 width
D2 = 10                # logits

N1 = H1 * C1           # conv1 GEMM output lanes (w, co) -> 448
N2 = H2 * C2           # conv2 GEMM output lanes (w, co) -> 448
L1 = H2 * C1           # pooled1 lanes (w, ci)           -> 224
L2 = H3 * C2           # pooled2 lanes (w, co)           -> 224
K2 = P2 * C1           # conv2 GEMM contraction (padded w, ci) -> 288


# ---------------------------------------------------------------------------
# The fused kernel (runs once per batch tile).
# ---------------------------------------------------------------------------
def _convnet_kernel(tb,
                    x_ref, t1_ref, t2_ref, b1_ref, b2_ref,
                    w3_ref, b3_ref, w4_ref, b4_ref,
                    out_ref,
                    x1p_ref, o1_ref, hp1_ref, a2p_ref, o2_ref, hp2_ref,
                    flat_ref):
    f32 = jnp.float32
    bf16 = jnp.bfloat16
    m1 = tb * P1                      # conv1 GEMM rows (incl. unused tail rows)
    m2 = tb * P2                      # conv2 GEMM rows (incl. unused tail rows)

    # ---- conv1 input: zero-padded slab, rows=(b, padded_i), lanes=padded_j --
    x1p_ref[...] = jnp.zeros_like(x1p_ref)
    for b in range(tb):
        x1p_ref[b * P1 + 2:b * P1 + 2 + H1, 2:2 + H1] = x_ref[b]

    # ---- conv1: 5 banded GEMMs (one per kernel row), f32 accumulation -------
    for kh in range(KH):
        lhs = x1p_ref[...][kh:kh + m1, :].astype(bf16)
        acc = jnp.dot(lhs, t1_ref[kh], preferred_element_type=f32)
        if kh == 0:
            o1_ref[...] = acc
        else:
            o1_ref[...] += acc

    # ---- pool1: horizontal halves (vectorised over all rows) ----------------
    for m in range(H2):
        hp1_ref[:, C1 * m:C1 * (m + 1)] = jnp.maximum(
            o1_ref[:, 2 * C1 * m:2 * C1 * m + C1],
            o1_ref[:, 2 * C1 * m + C1:2 * C1 * m + 2 * C1])

    # ---- pool1 vertical halves + bias + ReLU -> padded conv2 input slab -----
    a2p_ref[...] = jnp.zeros_like(a2p_ref)
    b1row = b1_ref[0:1, :]                                   # (1, 224)
    for b in range(tb):
        for k in range(H2):
            r = b * P1 + 2 * k
            v = jnp.maximum(hp1_ref[r:r + 1, :], hp1_ref[r + 1:r + 2, :])
            a2p_ref[b * P2 + 2 + k:b * P2 + 3 + k, 2 * C1:2 * C1 + L1] = (
                jnp.maximum(v + b1row, 0.0))

    # ---- conv2: 5 banded GEMMs ----------------------------------------------
    for kh in range(KH):
        lhs = a2p_ref[...][kh:kh + m2, :].astype(bf16)
        acc = jnp.dot(lhs, t2_ref[kh], preferred_element_type=f32)
        if kh == 0:
            o2_ref[...] = acc
        else:
            o2_ref[...] += acc

    # ---- pool2: horizontal halves -------------------------------------------
    for m in range(H3):
        hp2_ref[:, C2 * m:C2 * (m + 1)] = jnp.maximum(
            o2_ref[:, 2 * C2 * m:2 * C2 * m + C2],
            o2_ref[:, 2 * C2 * m + C2:2 * C2 * m + 2 * C2])

    # ---- pool2 vertical + bias + ReLU -> NHWC-flattened activation ----------
    b2row = b2_ref[0:1, :]                                   # (1, 224)
    for b in range(tb):
        for k in range(H3):
            r = b * P2 + 2 * k
            v = jnp.maximum(hp2_ref[r:r + 1, :], hp2_ref[r + 1:r + 2, :])
            flat_ref[b:b + 1, L2 * k:L2 * (k + 1)] = jnp.maximum(v + b2row, 0.0)

    # ---- fc1 + ReLU + fc2 ----------------------------------------------------
    a = flat_ref[...].astype(bf16)
    h = jnp.dot(a, w3_ref[...], preferred_element_type=f32) + b3_ref[...]
    h = jnp.maximum(h, 0.0).astype(bf16)
    y = jnp.dot(h, w4_ref[...], preferred_element_type=f32) + b4_ref[...]
    out_ref[...] = y


# ---------------------------------------------------------------------------
# Parameter preparation: torch layouts -> kernel layouts (done once, cheap).
# ---------------------------------------------------------------------------
def _prepare_params(params):
    f32 = jnp.float32
    bf16 = jnp.bfloat16

    # conv1: (16, 1, 5, 5) -> banded rhs T1[kh] of shape (32, 28*16)
    w1r = jnp.transpose(params["conv1_w"].astype(f32)[:, 0], (1, 2, 0))  # kh,kw,co
    t1 = jnp.zeros((KH, P1, H1, C1), f32)
    for kw in range(KH):
        band = jnp.eye(P1, H1, k=-kw, dtype=f32)          # band[j, w]=1 iff j==w+kw
        t1 = t1 + jnp.einsum("jw,kc->kjwc", band, w1r[:, kw, :])
    t1 = t1.reshape(KH, P1, N1).astype(bf16)

    # conv2: (32, 16, 5, 5) -> banded rhs T2[kh] of shape (18*16, 14*32)
    w2r = jnp.transpose(params["conv2_w"].astype(f32), (2, 3, 1, 0))     # kh,kw,ci,co
    t2 = jnp.zeros((KH, P2, C1, H2, C2), f32)
    for kw in range(KH):
        band = jnp.eye(P2, H2, k=-kw, dtype=f32)
        t2 = t2 + jnp.einsum("jw,kio->kjiwo", band, w2r[:, kw])
    t2 = t2.reshape(KH, K2, N2).astype(bf16)

    # conv biases tiled over the (width, channel) lane layout.
    b1row = jnp.tile(params["conv1_b"].astype(f32), H2).reshape(1, L1)
    b2row = jnp.tile(params["conv2_b"].astype(f32), H3).reshape(1, L2)

    # fc1 rows re-ordered from torch's NCHW flatten to the kernel's NHWC flatten.
    fc1 = params["fc1_w"].astype(f32).reshape(C2, H3, H3, D1)
    fc1 = jnp.transpose(fc1, (1, 2, 0, 3)).reshape(F, D1).astype(bf16)
    fc2 = params["fc2_w"].astype(bf16)
    b3 = params["fc1_b"].astype(f32).reshape(1, D1)
    b4 = params["fc2_b"].astype(f32).reshape(1, D2)
    return t1, t2, b1row, b2row, fc1, b3, fc2, b4


# ---------------------------------------------------------------------------
# Full forward pass.
# ---------------------------------------------------------------------------
def convnet_forward(x_nchw, params):
    n = x_nchw.shape[0]
    x = x_nchw.reshape(n, H1, H1).astype(jnp.float32)     # Cin == 1, squeeze it

    tb = n if n <= 8 else 8                               # batch tile
    pad = (-n) % tb
    if pad:
        x = jnp.concatenate([x, jnp.zeros((pad, H1, H1), x.dtype)], axis=0)
    n_pad = n + pad

    prep = _prepare_params(params)
    kernel = functools.partial(_convnet_kernel, tb)

    out = pl.pallas_call(
        kernel,
        out_shape=jax.ShapeDtypeStruct((n_pad, D2), jnp.float32),
        grid_spec=pltpu.PrefetchScalarGridSpec(
            num_scalar_prefetch=0,
            grid=(n_pad // tb,),
            in_specs=[
                pl.BlockSpec((tb, H1, H1), lambda i: (i, 0, 0)),   # x
                pl.BlockSpec((KH, P1, N1), lambda i: (0, 0, 0)),   # conv1 Toeplitz
                pl.BlockSpec((KH, K2, N2), lambda i: (0, 0, 0)),   # conv2 Toeplitz
                pl.BlockSpec((1, L1), lambda i: (0, 0)),           # conv1 bias row
                pl.BlockSpec((1, L2), lambda i: (0, 0)),           # conv2 bias row
                pl.BlockSpec((F, D1), lambda i: (0, 0)),           # fc1 weight
                pl.BlockSpec((1, D1), lambda i: (0, 0)),           # fc1 bias
                pl.BlockSpec((D1, D2), lambda i: (0, 0)),          # fc2 weight
                pl.BlockSpec((1, D2), lambda i: (0, 0)),           # fc2 bias
            ],
            out_specs=pl.BlockSpec((tb, D2), lambda i: (i, 0)),
            scratch_shapes=[
                pltpu.VMEM((tb * P1 + 8, P1), jnp.float32),        # padded conv1 input
                pltpu.VMEM((tb * P1, N1), jnp.float32),            # conv1 GEMM output
                pltpu.VMEM((tb * P1, L1), jnp.float32),            # conv1 h-pooled
                pltpu.VMEM((tb * P2 + 8, K2), jnp.float32),        # padded conv2 input
                pltpu.VMEM((tb * P2, N2), jnp.float32),            # conv2 GEMM output
                pltpu.VMEM((tb * P2, L2), jnp.float32),            # conv2 h-pooled
                pltpu.VMEM((tb, F), jnp.float32),                  # flattened features
            ],
        ),
        compiler_params=pltpu.CompilerParams(dimension_semantics=("parallel",)),
    )(x, *prep)
    return out[:n]


# ---------------------------------------------------------------------------
# Pure-JAX reference (mirrors the kernel's bf16 operand rounding) and params.
# ---------------------------------------------------------------------------
def convnet_reference(x_nchw, params):
    f32 = jnp.float32
    q = lambda a: a.astype(jnp.bfloat16).astype(f32)      # bf16 operand rounding

    def conv(x, w):
        return jax.lax.conv_general_dilated(
            q(x), q(w), window_strides=(1, 1), padding=((2, 2), (2, 2)),
            dimension_numbers=("NCHW", "OIHW", "NCHW"))

    def pool(x):
        n, c, h, w = x.shape
        return x.reshape(n, c, h // 2, 2, w // 2, 2).max(axis=(3, 5))

    y = conv(x_nchw.astype(f32), params["conv1_w"]) + params["conv1_b"].reshape(1, -1, 1, 1)
    y = jnp.maximum(pool(y), 0.0)
    y = conv(y, params["conv2_w"]) + params["conv2_b"].reshape(1, -1, 1, 1)
    y = jnp.maximum(pool(y), 0.0)
    flat = y.reshape(y.shape[0], -1)                       # torch NCHW flatten
    h = jnp.maximum(jnp.dot(q(flat), q(params["fc1_w"])) + params["fc1_b"], 0.0)
    return jnp.dot(q(h), q(params["fc2_w"])) + params["fc2_b"]


def init_params(key):
    ks = jax.random.split(key, 8)
    s = 0.05
    return {
        # torch layouts: conv weight (Cout, Cin, KH, KW); fc weight stored as (in, out)
        "conv1_w": s * jax.random.normal(ks[0], (C1, 1, KH, KH), jnp.float32),
        "conv1_b": s * jax.random.normal(ks[1], (C1,), jnp.float32),
        "conv2_w": s * jax.random.normal(ks[2], (C2, C1, KH, KH), jnp.float32),
        "conv2_b": s * jax.random.normal(ks[3], (C2,), jnp.float32),
        "fc1_w": s * jax.random.normal(ks[4], (F, D1), jnp.float32),
        "fc1_b": s * jax.random.normal(ks[5], (D1,), jnp.float32),
        "fc2_w": s * jax.random.normal(ks[6], (D1, D2), jnp.float32),
        "fc2_b": s * jax.random.normal(ks[7], (D2,), jnp.float32),
    }


if __name__ == "__main__":
    key = jax.random.PRNGKey(0)
    pkey, xkey = jax.random.split(key)
    params = init_params(pkey)
    x = jax.random.normal(xkey, (2, 1, 28, 28), jnp.float32)   # MNIST-shaped input

    fwd = jax.jit(convnet_forward)
    out = jax.block_until_ready(fwd(x, params))
    assert out.shape == (2, D2) and out.dtype == jnp.float32

    ref = jax.block_until_ready(jax.jit(convnet_reference)(x, params))
    err = float(jnp.max(jnp.abs(out - ref)))
    assert err < 5e-3, f"kernel/reference mismatch: max abs err = {err}"

    print("KERNEL_OK")
</pallas_src>

<mosaic_0001>
module attributes {stable_mosaic.version = 11 : i64} {
  func.func @_convnet_kernel(%arg0: i32, %arg1: memref<2x28x28xf32, #tpu.memory_space<vmem>>, %arg2: memref<5x32x448xbf16, #tpu.memory_space<vmem>>, %arg3: memref<5x288x448xbf16, #tpu.memory_space<vmem>>, %arg4: memref<1x224xf32, #tpu.memory_space<vmem>>, %arg5: memref<1x224xf32, #tpu.memory_space<vmem>>, %arg6: memref<1568x512xbf16, #tpu.memory_space<vmem>>, %arg7: memref<1x512xf32, #tpu.memory_space<vmem>>, %arg8: memref<512x10xbf16, #tpu.memory_space<vmem>>, %arg9: memref<1x10xf32, #tpu.memory_space<vmem>>, %arg10: memref<2x10xf32, #tpu.memory_space<vmem>>, %arg11: memref<72x32xf32, #tpu.memory_space<vmem>>, %arg12: memref<64x448xf32, #tpu.memory_space<vmem>>, %arg13: memref<64x224xf32, #tpu.memory_space<vmem>>, %arg14: memref<44x288xf32, #tpu.memory_space<vmem>>, %arg15: memref<36x448xf32, #tpu.memory_space<vmem>>, %arg16: memref<36x224xf32, #tpu.memory_space<vmem>>, %arg17: memref<2x1568xf32, #tpu.memory_space<vmem>>) attributes {dimension_semantics = [#tpu.dimension_semantics<parallel>], iteration_bounds = array<i64: 1>, scalar_prefetch = 0 : i64, scratch_operands = 7 : i64, tpu.core_type = #tpu.core_type<tc>, window_params = [{transform_indices = @transform_0, window_bounds = array<i64: 2, 28, 28>}, {pipeline_mode = #tpu.pipeline_mode<synchronous>, transform_indices = @transform_1, window_bounds = array<i64: 5, 32, 448>}, {pipeline_mode = #tpu.pipeline_mode<synchronous>, transform_indices = @transform_2, window_bounds = array<i64: 5, 288, 448>}, {pipeline_mode = #tpu.pipeline_mode<synchronous>, transform_indices = @transform_3, window_bounds = array<i64: 1, 224>}, {pipeline_mode = #tpu.pipeline_mode<synchronous>, transform_indices = @transform_4, window_bounds = array<i64: 1, 224>}, {pipeline_mode = #tpu.pipeline_mode<synchronous>, transform_indices = @transform_5, window_bounds = array<i64: 1568, 512>}, {pipeline_mode = #tpu.pipeline_mode<synchronous>, transform_indices = @transform_6, window_bounds = array<i64: 1, 512>}, {pipeline_mode = #tpu.pipeline_mode<synchronous>, transform_indices = @transform_7, window_bounds = array<i64: 512, 10>}, {pipeline_mode = #tpu.pipeline_mode<synchronous>, transform_indices = @transform_8, window_bounds = array<i64: 1, 10>}, {transform_indices = @transform_9, window_bounds = array<i64: 2, 10>}]} {
    %cst = arith.constant 0.000000e+00 : f32
    %0 = vector.broadcast %cst : f32 to vector<72x32xf32>
    %c0 = arith.constant 0 : index
    %c0_0 = arith.constant 0 : index
    %1 = vector.load %arg11[%c0, %c0_0] : memref<72x32xf32, #tpu.memory_space<vmem>>, vector<72x32xf32>
    tpu.vector_store %arg11[%c0, %c0_0], %0 {strides = array<i32>} : memref<72x32xf32, #tpu.memory_space<vmem>>, vector<72x32xf32>,
    %c0_1 = arith.constant 0 : index
    %c0_2 = arith.constant 0 : index
    %c0_3 = arith.constant 0 : index
    %2 = vector.load %arg1[%c0_1, %c0_2, %c0_3] : memref<2x28x28xf32, #tpu.memory_space<vmem>>, vector<1x28x28xf32>
    %3 = vector.shape_cast %2 : vector<1x28x28xf32> to vector<28x28xf32>
    %c2 = arith.constant 2 : index
    %c2_4 = arith.constant 2 : index
    %4 = vector.load %arg11[%c2, %c2_4] : memref<72x32xf32, #tpu.memory_space<vmem>>, vector<28x28xf32>
    tpu.vector_store %arg11[%c2, %c2_4], %3 {strides = array<i32>} : memref<72x32xf32, #tpu.memory_space<vmem>>, vector<28x28xf32>,
    %c1 = arith.constant 1 : index
    %c0_5 = arith.constant 0 : index
    %c0_6 = arith.constant 0 : index
    %5 = vector.load %arg1[%c1, %c0_5, %c0_6] : memref<2x28x28xf32, #tpu.memory_space<vmem>>, vector<1x28x28xf32>
    %6 = vector.shape_cast %5 : vector<1x28x28xf32> to vector<28x28xf32>
    %c34 = arith.constant 34 : index
    %c2_7 = arith.constant 2 : index
    %7 = vector.load %arg11[%c34, %c2_7] : memref<72x32xf32, #tpu.memory_space<vmem>>, vector<28x28xf32>
    tpu.vector_store %arg11[%c34, %c2_7], %6 {strides = array<i32>} : memref<72x32xf32, #tpu.memory_space<vmem>>, vector<28x28xf32>,
    %c0_8 = arith.constant 0 : index
    %c0_9 = arith.constant 0 : index
    %8 = vector.load %arg11[%c0_8, %c0_9] : memref<72x32xf32, #tpu.memory_space<vmem>>, vector<72x32xf32>
    %9 = vector.extract_strided_slice %8 {offsets = [0, 0], sizes = [64, 32], strides = [1, 1]} : vector<72x32xf32> to vector<64x32xf32>
    %10 = arith.truncf %9 : vector<64x32xf32> to vector<64x32xbf16>
    %c0_10 = arith.constant 0 : index
    %c0_11 = arith.constant 0 : index
    %c0_12 = arith.constant 0 : index
    %11 = vector.load %arg2[%c0_10, %c0_11, %c0_12] : memref<5x32x448xbf16, #tpu.memory_space<vmem>>, vector<1x32x448xbf16>
    %12 = vector.shape_cast %11 : vector<1x32x448xbf16> to vector<32x448xbf16>
    %cst_13 = arith.constant dense<0.000000e+00> : vector<64x448xf32>
    %13 = tpu.matmul %10, %12, %cst_13 {dimension_numbers = #tpu.dot_dimension_numbers<[1], [0], [0], [1], [0, 0, 1, 1], [], []>} : vector<64x32xbf16>, vector<32x448xbf16>, vector<64x448xf32> -> vector<64x448xf32>
    %c0_14 = arith.constant 0 : index
    %c0_15 = arith.constant 0 : index
    %14 = vector.load %arg12[%c0_14, %c0_15] : memref<64x448xf32, #tpu.memory_space<vmem>>, vector<64x448xf32>
    tpu.vector_store %arg12[%c0_14, %c0_15], %13 {strides = array<i32>} : memref<64x448xf32, #tpu.memory_space<vmem>>, vector<64x448xf32>,
    %c0_16 = arith.constant 0 : index
    %c0_17 = arith.constant 0 : index
    %15 = vector.load %arg11[%c0_16, %c0_17] : memref<72x32xf32, #tpu.memory_space<vmem>>, vector<72x32xf32>
    %16 = vector.extract_strided_slice %15 {offsets = [1, 0], sizes = [64, 32], strides = [1, 1]} : vector<72x32xf32> to vector<64x32xf32>
    %17 = arith.truncf %16 : vector<64x32xf32> to vector<64x32xbf16>
    %c1_18 = arith.constant 1 : index
    %c0_19 = arith.constant 0 : index
    %c0_20 = arith.constant 0 : index
    %18 = vector.load %arg2[%c1_18, %c0_19, %c0_20] : memref<5x32x448xbf16, #tpu.memory_space<vmem>>, vector<1x32x448xbf16>
    %19 = vector.shape_cast %18 : vector<1x32x448xbf16> to vector<32x448xbf16>
    %cst_21 = arith.constant dense<0.000000e+00> : vector<64x448xf32>
    %20 = tpu.matmul %17, %19, %cst_21 {dimension_numbers = #tpu.dot_dimension_numbers<[1], [0], [0], [1], [0, 0, 1, 1], [], []>} : vector<64x32xbf16>, vector<32x448xbf16>, vector<64x448xf32> -> vector<64x448xf32>
    %c0_22 = arith.constant 0 : index
    %c0_23 = arith.constant 0 : index
    %21 = vector.load %arg12[%c0_22, %c0_23] : memref<64x448xf32, #tpu.memory_space<vmem>>, vector<64x448xf32>
    %22 = arith.addf %21, %20 : vector<64x448xf32>
    %c0_24 = arith.constant 0 : index
    %c0_25 = arith.constant 0 : index
    %23 = vector.load %arg12[%c0_24, %c0_25] : memref<64x448xf32, #tpu.memory_space<vmem>>, vector<64x448xf32>
    tpu.vector_store %arg12[%c0_24, %c0_25], %22 {strides = array<i32>} : memref<64x448xf32, #tpu.memory_space<vmem>>, vector<64x448xf32>,
    %c0_26 = arith.constant 0 : index
    %c0_27 = arith.constant 0 : index
    %24 = vector.load %arg11[%c0_26, %c0_27] : memref<72x32xf32, #tpu.memory_space<vmem>>, vector<72x32xf32>
    %25 = vector.extract_strided_slice %24 {offsets = [2, 0], sizes = [64, 32], strides = [1, 1]} : vector<72x32xf32> to vector<64x32xf32>
    %26 = arith.truncf %25 : vector<64x32xf32> to vector<64x32xbf16>
    %c2_28 = arith.constant 2 : index
    %c0_29 = arith.constant 0 : index
    %c0_30 = arith.constant 0 : index
    %27 = vector.load %arg2[%c2_28, %c0_29, %c0_30] : memref<5x32x448xbf16, #tpu.memory_space<vmem>>, vector<1x32x448xbf16>
    %28 = vector.shape_cast %27 : vector<1x32x448xbf16> to vector<32x448xbf16>
    %cst_31 = arith.constant dense<0.000000e+00> : vector<64x448xf32>
    %29 = tpu.matmul %26, %28, %cst_31 {dimension_numbers = #tpu.dot_dimension_numbers<[1], [0], [0], [1], [0, 0, 1, 1], [], []>} : vector<64x32xbf16>, vector<32x448xbf16>, vector<64x448xf32> -> vector<64x448xf32>
    %c0_32 = arith.constant 0 : index
    %c0_33 = arith.constant 0 : index
    %30 = vector.load %arg12[%c0_32, %c0_33] : memref<64x448xf32, #tpu.memory_space<vmem>>, vector<64x448xf32>
    %31 = arith.addf %30, %29 : vector<64x448xf32>
    %c0_34 = arith.constant 0 : index
    %c0_35 = arith.constant 0 : index
    %32 = vector.load %arg12[%c0_34, %c0_35] : memref<64x448xf32, #tpu.memory_space<vmem>>, vector<64x448xf32>
    tpu.vector_store %arg12[%c0_34, %c0_35], %31 {strides = array<i32>} : memref<64x448xf32, #tpu.memory_space<vmem>>, vector<64x448xf32>,
    %c0_36 = arith.constant 0 : index
    %c0_37 = arith.constant 0 : index
    %33 = vector.load %arg11[%c0_36, %c0_37] : memref<72x32xf32, #tpu.memory_space<vmem>>, vector<72x32xf32>
    %34 = vector.extract_strided_slice %33 {offsets = [3, 0], sizes = [64, 32], strides = [1, 1]} : vector<72x32xf32> to vector<64x32xf32>
    %35 = arith.truncf %34 : vector<64x32xf32> to vector<64x32xbf16>
    %c3 = arith.constant 3 : index
    %c0_38 = arith.constant 0 : index
    %c0_39 = arith.constant 0 : index
    %36 = vector.load %arg2[%c3, %c0_38, %c0_39] : memref<5x32x448xbf16, #tpu.memory_space<vmem>>, vector<1x32x448xbf16>
    %37 = vector.shape_cast %36 : vector<1x32x448xbf16> to vector<32x448xbf16>
    %cst_40 = arith.constant dense<0.000000e+00> : vector<64x448xf32>
    %38 = tpu.matmul %35, %37, %cst_40 {dimension_numbers = #tpu.dot_dimension_numbers<[1], [0], [0], [1], [0, 0, 1, 1], [], []>} : vector<64x32xbf16>, vector<32x448xbf16>, vector<64x448xf32> -> vector<64x448xf32>
    %c0_41 = arith.constant 0 : index
    %c0_42 = arith.constant 0 : index
    %39 = vector.load %arg12[%c0_41, %c0_42] : memref<64x448xf32, #tpu.memory_space<vmem>>, vector<64x448xf32>
    %40 = arith.addf %39, %38 : vector<64x448xf32>
    %c0_43 = arith.constant 0 : index
    %c0_44 = arith.constant 0 : index
    %41 = vector.load %arg12[%c0_43, %c0_44] : memref<64x448xf32, #tpu.memory_space<vmem>>, vector<64x448xf32>
    tpu.vector_store %arg12[%c0_43, %c0_44], %40 {strides = array<i32>} : memref<64x448xf32, #tpu.memory_space<vmem>>, vector<64x448xf32>,
    %c0_45 = arith.constant 0 : index
    %c0_46 = arith.constant 0 : index
    %42 = vector.load %arg11[%c0_45, %c0_46] : memref<72x32xf32, #tpu.memory_space<vmem>>, vector<72x32xf32>
    %43 = vector.extract_strided_slice %42 {offsets = [4, 0], sizes = [64, 32], strides = [1, 1]} : vector<72x32xf32> to vector<64x32xf32>
    %44 = arith.truncf %43 : vector<64x32xf32> to vector<64x32xbf16>
    %c4 = arith.constant 4 : index
    %c0_47 = arith.constant 0 : index
    %c0_48 = arith.constant 0 : index
    %45 = vector.load %arg2[%c4, %c0_47, %c0_48] : memref<5x32x448xbf16, #tpu.memory_space<vmem>>, vector<1x32x448xbf16>
    %46 = vector.shape_cast %45 : vector<1x32x448xbf16> to vector<32x448xbf16>
    %cst_49 = arith.constant dense<0.000000e+00> : vector<64x448xf32>
    %47 = tpu.matmul %44, %46, %cst_49 {dimension_numbers = #tpu.dot_dimension_numbers<[1], [0], [0], [1], [0, 0, 1, 1], [], []>} : vector<64x32xbf16>, vector<32x448xbf16>, vector<64x448xf32> -> vector<64x448xf32>
    %c0_50 = arith.constant 0 : index
    %c0_51 = arith.constant 0 : index
    %48 = vector.load %arg12[%c0_50, %c0_51] : memref<64x448xf32, #tpu.memory_space<vmem>>, vector<64x448xf32>
    %49 = arith.addf %48, %47 : vector<64x448xf32>
    %c0_52 = arith.constant 0 : index
    %c0_53 = arith.constant 0 : index
    %50 = vector.load %arg12[%c0_52, %c0_53] : memref<64x448xf32, #tpu.memory_space<vmem>>, vector<64x448xf32>
    tpu.vector_store %arg12[%c0_52, %c0_53], %49 {strides = array<i32>} : memref<64x448xf32, #tpu.memory_space<vmem>>, vector<64x448xf32>,
    %c0_54 = arith.constant 0 : index
    %c0_55 = arith.constant 0 : index
    %51 = vector.load %arg12[%c0_54, %c0_55] : memref<64x448xf32, #tpu.memory_space<vmem>>, vector<64x16xf32>
    %c0_56 = arith.constant 0 : index
    %c16 = arith.constant 16 : index
    %52 = vector.load %arg12[%c0_56, %c16] : memref<64x448xf32, #tpu.memory_space<vmem>>, vector<64x16xf32>
    %53 = arith.maximumf %51, %52 : vector<64x16xf32>
    %c0_57 = arith.constant 0 : index
    %c0_58 = arith.constant 0 : index
    %54 = vector.load %arg13[%c0_57, %c0_58] : memref<64x224xf32, #tpu.memory_space<vmem>>, vector<64x16xf32>
    tpu.vector_store %arg13[%c0_57, %c0_58], %53 {strides = array<i32>} : memref<64x224xf32, #tpu.memory_space<vmem>>, vector<64x16xf32>,
    %c0_59 = arith.constant 0 : index
    %c32 = arith.constant 32 : index
    %55 = vector.load %arg12[%c0_59, %c32] : memref<64x448xf32, #tpu.memory_space<vmem>>, vector<64x16xf32>
    %c0_60 = arith.constant 0 : index
    %c48 = arith.constant 48 : index
    %56 = vector.load %arg12[%c0_60, %c48] : memref<64x448xf32, #tpu.memory_space<vmem>>, vector<64x16xf32>
    %57 = arith.maximumf %55, %56 : vector<64x16xf32>
    %c0_61 = arith.constant 0 : index
    %c16_62 = arith.constant 16 : index
    %58 = vector.load %arg13[%c0_61, %c16_62] : memref<64x224xf32, #tpu.memory_space<vmem>>, vector<64x16xf32>
    tpu.vector_store %arg13[%c0_61, %c16_62], %57 {strides = array<i32>} : memref<64x224xf32, #tpu.memory_space<vmem>>, vector<64x16xf32>,
    %c0_63 = arith.constant 0 : index
    %c64 = arith.constant 64 : index
    %59 = vector.load %arg12[%c0_63, %c64] : memref<64x448xf32, #tpu.memory_space<vmem>>, vector<64x16xf32>
    %c0_64 = arith.constant 0 : index
    %c80 = arith.constant 80 : index
    %60 = vector.load %arg12[%c0_64, %c80] : memref<64x448xf32, #tpu.memory_space<vmem>>, vector<64x16xf32>
    %61 = arith.maximumf %59, %60 : vector<64x16xf32>
    %c0_65 = arith.constant 0 : index
    %c32_66 = arith.constant 32 : index
    %62 = vector.load %arg13[%c0_65, %c32_66] : memref<64x224xf32, #tpu.memory_space<vmem>>, vector<64x16xf32>
    tpu.vector_store %arg13[%c0_65, %c32_66], %61 {strides = array<i32>} : memref<64x224xf32, #tpu.memory_space<vmem>>, vector<64x16xf32>,
    %c0_67 = arith.constant 0 : index
    %c96 = arith.constant 96 : index
    %63 = vector.load %arg12[%c0_67, %c96] : memref<64x448xf32, #tpu.memory_space<vmem>>, vector<64x16xf32>
    %c0_68 = arith.constant 0 : index
    %c112 = arith.constant 112 : index
    %64 = vector.load %arg12[%c0_68, %c112] : memref<64x448xf32, #tpu.memory_space<vmem>>, vector<64x16xf32>
    %65 = arith.maximumf %63, %64 : vector<64x16xf32>
    %c0_69 = arith.constant 0 : index
    %c48_70 = arith.constant 48 : index
    %66 = vector.load %arg13[%c0_69, %c48_70] : memref<64x224xf32, #tpu.memory_space<vmem>>, vector<64x16xf32>
    tpu.vector_store %arg13[%c0_69, %c48_70], %65 {strides = array<i32>} : memref<64x224xf32, #tpu.memory_space<vmem>>, vector<64x16xf32>,
    %c0_71 = arith.constant 0 : index
    %c128 = arith.constant 128 : index
    %67 = vector.load %arg12[%c0_71, %c128] : memref<64x448xf32, #tpu.memory_space<vmem>>, vector<64x16xf32>
    %c0_72 = arith.constant 0 : index
    %c144 = arith.constant 144 : index
    %68 = vector.load %arg12[%c0_72, %c144] : memref<64x448xf32, #tpu.memory_space<vmem>>, vector<64x16xf32>
    %69 = arith.maximumf %67, %68 : vector<64x16xf32>
    %c0_73 = arith.constant 0 : index
    %c64_74 = arith.constant 64 : index
    %70 = vector.load %arg13[%c0_73, %c64_74] : memref<64x224xf32, #tpu.memory_space<vmem>>, vector<64x16xf32>
    tpu.vector_store %arg13[%c0_73, %c64_74], %69 {strides = array<i32>} : memref<64x224xf32, #tpu.memory_space<vmem>>, vector<64x16xf32>,
    %c0_75 = arith.constant 0 : index
    %c160 = arith.constant 160 : index
    %71 = vector.load %arg12[%c0_75, %c160] : memref<64x448xf32, #tpu.memory_space<vmem>>, vector<64x16xf32>
    %c0_76 = arith.constant 0 : index
    %c176 = arith.constant 176 : index
    %72 = vector.load %arg12[%c0_76, %c176] : memref<64x448xf32, #tpu.memory_space<vmem>>, vector<64x16xf32>
    %73 = arith.maximumf %71, %72 : vector<64x16xf32>
    %c0_77 = arith.constant 0 : index
    %c80_78 = arith.constant 80 : index
    %74 = vector.load %arg13[%c0_77, %c80_78] : memref<64x224xf32, #tpu.memory_space<vmem>>, vector<64x16xf32>
    tpu.vector_store %arg13[%c0_77, %c80_78], %73 {strides = array<i32>} : memref<64x224xf32, #tpu.memory_space<vmem>>, vector<64x16xf32>,
    %c0_79 = arith.constant 0 : index
    %c192 = arith.constant 192 : index
    %75 = vector.load %arg12[%c0_79, %c192] : memref<64x448xf32, #tpu.memory_space<vmem>>, vector<64x16xf32>
    %c0_80 = arith.constant 0 : index
    %c208 = arith.constant 208 : index
    %76 = vector.load %arg12[%c0_80, %c208] : memref<64x448xf32, #tpu.memory_space<vmem>>, vector<64x16xf32>
    %77 = arith.maximumf %75, %76 : vector<64x16xf32>
    %c0_81 = arith.constant 0 : index
    %c96_82 = arith.constant 96 : index
    %78 = vector.load %arg13[%c0_81, %c96_82] : memref<64x224xf32, #tpu.memory_space<vmem>>, vector<64x16xf32>
    tpu.vector_store %arg13[%c0_81, %c96_82], %77 {strides = array<i32>} : memref<64x224xf32, #tpu.memory_space<vmem>>, vector<64x16xf32>,
    %c0_83 = arith.constant 0 : index
    %c224 = arith.constant 224 : index
    %79 = vector.load %arg12[%c0_83, %c224] : memref<64x448xf32, #tpu.memory_space<vmem>>, vector<64x16xf32>
    %c0_84 = arith.constant 0 : index
    %c240 = arith.constant 240 : index
    %80 = vector.load %arg12[%c0_84, %c240] : memref<64x448xf32, #tpu.memory_space<vmem>>, vector<64x16xf32>
    %81 = arith.maximumf %79, %80 : vector<64x16xf32>
    %c0_85 = arith.constant 0 : index
    %c112_86 = arith.constant 112 : index
    %82 = vector.load %arg13[%c0_85, %c112_86] : memref<64x224xf32, #tpu.memory_space<vmem>>, vector<64x16xf32>
    tpu.vector_store %arg13[%c0_85, %c112_86], %81 {strides = array<i32>} : memref<64x224xf32, #tpu.memory_space<vmem>>, vector<64x16xf32>,
    %c0_87 = arith.constant 0 : index
    %c256 = arith.constant 256 : index
    %83 = vector.load %arg12[%c0_87, %c256] : memref<64x448xf32, #tpu.memory_space<vmem>>, vector<64x16xf32>
    %c0_88 = arith.constant 0 : index
    %c272 = arith.constant 272 : index
    %84 = vector.load %arg12[%c0_88, %c272] : memref<64x448xf32, #tpu.memory_space<vmem>>, vector<64x16xf32>
    %85 = arith.maximumf %83, %84 : vector<64x16xf32>
    %c0_89 = arith.constant 0 : index
    %c128_90 = arith.constant 128 : index
    %86 = vector.load %arg13[%c0_89, %c128_90] : memref<64x224xf32, #tpu.memory_space<vmem>>, vector<64x16xf32>
    tpu.vector_store %arg13[%c0_89, %c128_90], %85 {strides = array<i32>} : memref<64x224xf32, #tpu.memory_space<vmem>>, vector<64x16xf32>,
    %c0_91 = arith.constant 0 : index
    %c288 = arith.constant 288 : index
    %87 = vector.load %arg12[%c0_91, %c288] : memref<64x448xf32, #tpu.memory_space<vmem>>, vector<64x16xf32>
    %c0_92 = arith.constant 0 : index
    %c304 = arith.constant 304 : index
    %88 = vector.load %arg12[%c0_92, %c304] : memref<64x448xf32, #tpu.memory_space<vmem>>, vector<64x16xf32>
    %89 = arith.maximumf %87, %88 : vector<64x16xf32>
    %c0_93 = arith.constant 0 : index
    %c144_94 = arith.constant 144 : index
    %90 = vector.load %arg13[%c0_93, %c144_94] : memref<64x224xf32, #tpu.memory_space<vmem>>, vector<64x16xf32>
    tpu.vector_store %arg13[%c0_93, %c144_94], %89 {strides = array<i32>} : memref<64x224xf32, #tpu.memory_space<vmem>>, vector<64x16xf32>,
    %c0_95 = arith.constant 0 : index
    %c320 = arith.constant 320 : index
    %91 = vector.load %arg12[%c0_95, %c320] : memref<64x448xf32, #tpu.memory_space<vmem>>, vector<64x16xf32>
    %c0_96 = arith.constant 0 : index
    %c336 = arith.constant 336 : index
    %92 = vector.load %arg12[%c0_96, %c336] : memref<64x448xf32, #tpu.memory_space<vmem>>, vector<64x16xf32>
    %93 = arith.maximumf %91, %92 : vector<64x16xf32>
    %c0_97 = arith.constant 0 : index
    %c160_98 = arith.constant 160 : index
    %94 = vector.load %arg13[%c0_97, %c160_98] : memref<64x224xf32, #tpu.memory_space<vmem>>, vector<64x16xf32>
    tpu.vector_store %arg13[%c0_97, %c160_98], %93 {strides = array<i32>} : memref<64x224xf32, #tpu.memory_space<vmem>>, vector<64x16xf32>,
    %c0_99 = arith.constant 0 : index
    %c352 = arith.constant 352 : index
    %95 = vector.load %arg12[%c0_99, %c352] : memref<64x448xf32, #tpu.memory_space<vmem>>, vector<64x16xf32>
    %c0_100 = arith.constant 0 : index
    %c368 = arith.constant 368 : index
    %96 = vector.load %arg12[%c0_100, %c368] : memref<64x448xf32, #tpu.memory_space<vmem>>, vector<64x16xf32>
    %97 = arith.maximumf %95, %96 : vector<64x16xf32>
    %c0_101 = arith.constant 0 : index
    %c176_102 = arith.constant 176 : index
    %98 = vector.load %arg13[%c0_101, %c176_102] : memref<64x224xf32, #tpu.memory_space<vmem>>, vector<64x16xf32>
    tpu.vector_store %arg13[%c0_101, %c176_102], %97 {strides = array<i32>} : memref<64x224xf32, #tpu.memory_space<vmem>>, vector<64x16xf32>,
    %c0_103 = arith.constant 0 : index
    %c384 = arith.constant 384 : index
    %99 = vector.load %arg12[%c0_103, %c384] : memref<64x448xf32, #tpu.memory_space<vmem>>, vector<64x16xf32>
    %c0_104 = arith.constant 0 : index
    %c400 = arith.constant 400 : index
    %100 = vector.load %arg12[%c0_104, %c400] : memref<64x448xf32, #tpu.memory_space<vmem>>, vector<64x16xf32>
    %101 = arith.maximumf %99, %100 : vector<64x16xf32>
    %c0_105 = arith.constant 0 : index
    %c192_106 = arith.constant 192 : index
    %102 = vector.load %arg13[%c0_105, %c192_106] : memref<64x224xf32, #tpu.memory_space<vmem>>, vector<64x16xf32>
    tpu.vector_store %arg13[%c0_105, %c192_106], %101 {strides = array<i32>} : memref<64x224xf32, #tpu.memory_space<vmem>>, vector<64x16xf32>,
    %c0_107 = arith.constant 0 : index
    %c416 = arith.constant 416 : index
    %103 = vector.load %arg12[%c0_107, %c416] : memref<64x448xf32, #tpu.memory_space<vmem>>, vector<64x16xf32>
    %c0_108 = arith.constant 0 : index
    %c432 = arith.constant 432 : index
    %104 = vector.load %arg12[%c0_108, %c432] : memref<64x448xf32, #tpu.memory_space<vmem>>, vector<64x16xf32>
    %105 = arith.maximumf %103, %104 : vector<64x16xf32>
    %c0_109 = arith.constant 0 : index
    %c208_110 = arith.constant 208 : index
    %106 = vector.load %arg13[%c0_109, %c208_110] : memref<64x224xf32, #tpu.memory_space<vmem>>, vector<64x16xf32>
    tpu.vector_store %arg13[%c0_109, %c208_110], %105 {strides = array<i32>} : memref<64x224xf32, #tpu.memory_space<vmem>>, vector<64x16xf32>,
    %cst_111 = arith.constant 0.000000e+00 : f32
    %107 = vector.broadcast %cst_111 : f32 to vector<44x288xf32>
    %c0_112 = arith.constant 0 : index
    %c0_113 = arith.constant 0 : index
    %108 = vector.load %arg14[%c0_112, %c0_113] : memref<44x288xf32, #tpu.memory_space<vmem>>, vector<44x288xf32>
    tpu.vector_store %arg14[%c0_112, %c0_113], %107 {strides = array<i32>} : memref<44x288xf32, #tpu.memory_space<vmem>>, vector<44x288xf32>,
    %c0_114 = arith.constant 0 : index
    %c0_115 = arith.constant 0 : index
    %109 = vector.load %arg4[%c0_114, %c0_115] : memref<1x224xf32, #tpu.memory_space<vmem>>, vector<1x224xf32>
    %c0_116 = arith.constant 0 : index
    %c0_117 = arith.constant 0 : index
    %110 = vector.load %arg13[%c0_116, %c0_117] : memref<64x224xf32, #tpu.memory_space<vmem>>, vector<1x224xf32>
    %c1_118 = arith.constant 1 : index
    %c0_119 = arith.constant 0 : index
    %111 = vector.load %arg13[%c1_118, %c0_119] : memref<64x224xf32, #tpu.memory_space<vmem>>, vector<1x224xf32>
    %112 = arith.maximumf %110, %111 : vector<1x224xf32>
    %113 = arith.addf %112, %109 : vector<1x224xf32>
    %cst_120 = arith.constant 0.000000e+00 : f32
    %114 = vector.broadcast %cst_120 : f32 to vector<1x224xf32>
    %115 = arith.maximumf %113, %114 : vector<1x224xf32>
    %c2_121 = arith.constant 2 : index
    %c32_122 = arith.constant 32 : index
    %116 = vector.load %arg14[%c2_121, %c32_122] : memref<44x288xf32, #tpu.memory_space<vmem>>, vector<1x224xf32>
    tpu.vector_store %arg14[%c2_121, %c32_122], %115 {strides = array<i32>} : memref<44x288xf32, #tpu.memory_space<vmem>>, vector<1x224xf32>,
    %c2_123 = arith.constant 2 : index
    %c0_124 = arith.constant 0 : index
    %117 = vector.load %arg13[%c2_123, %c0_124] : memref<64x224xf32, #tpu.memory_space<vmem>>, vector<1x224xf32>
    %c3_125 = arith.constant 3 : index
    %c0_126 = arith.constant 0 : index
    %118 = vector.load %arg13[%c3_125, %c0_126] : memref<64x224xf32, #tpu.memory_space<vmem>>, vector<1x224xf32>
    %119 = arith.maximumf %117, %118 : vector<1x224xf32>
    %120 = arith.addf %119, %109 : vector<1x224xf32>
    %cst_127 = arith.constant 0.000000e+00 : f32
    %121 = vector.broadcast %cst_127 : f32 to vector<1x224xf32>
    %122 = arith.maximumf %120, %121 : vector<1x224xf32>
    %c3_128 = arith.constant 3 : index
    %c32_129 = arith.constant 32 : index
    %123 = vector.load %arg14[%c3_128, %c32_129] : memref<44x288xf32, #tpu.memory_space<vmem>>, vector<1x224xf32>
    tpu.vector_store %arg14[%c3_128, %c32_129], %122 {strides = array<i32>} : memref<44x288xf32, #tpu.memory_space<vmem>>, vector<1x224xf32>,
    %c4_130 = arith.constant 4 : index
    %c0_131 = arith.constant 0 : index
    %124 = vector.load %arg13[%c4_130, %c0_131] : memref<64x224xf32, #tpu.memory_space<vmem>>, vector<1x224xf32>
    %c5 = arith.constant 5 : index
    %c0_132 = arith.constant 0 : index
    %125 = vector.load %arg13[%c5, %c0_132] : memref<64x224xf32, #tpu.memory_space<vmem>>, vector<1x224xf32>
    %126 = arith.maximumf %124, %125 : vector<1x224xf32>
    %127 = arith.addf %126, %109 : vector<1x224xf32>
    %cst_133 = arith.constant 0.000000e+00 : f32
    %128 = vector.broadcast %cst_133 : f32 to vector<1x224xf32>
    %129 = arith.maximumf %127, %128 : vector<1x224xf32>
    %c4_134 = arith.constant 4 : index
    %c32_135 = arith.constant 32 : index
    %130 = vector.load %arg14[%c4_134, %c32_135] : memref<44x288xf32, #tpu.memory_space<vmem>>, vector<1x224xf32>
    tpu.vector_store %arg14[%c4_134, %c32_135], %129 {strides = array<i32>} : memref<44x288xf32, #tpu.memory_space<vmem>>, vector<1x224xf32>,
    %c6 = arith.constant 6 : index
    %c0_136 = arith.constant 0 : index
    %131 = vector.load %arg13[%c6, %c0_136] : memref<64x224xf32, #tpu.memory_space<vmem>>, vector<1x224xf32>
    %c7 = arith.constant 7 : index
    %c0_137 = arith.constant 0 : index
    %132 = vector.load %arg13[%c7, %c0_137] : memref<64x224xf32, #tpu.memory_space<vmem>>, vector<1x224xf32>
    %133 = arith.maximumf %131, %132 : vector<1x224xf32>
    %134 = arith.addf %133, %109 : vector<1x224xf32>
    %cst_138 = arith.constant 0.000000e+00 : f32
    %135 = vector.broadcast %cst_138 : f32 to vector<1x224xf32>
    %136 = arith.maximumf %134, %135 : vector<1x224xf32>
    %c5_139 = arith.constant 5 : index
    %c32_140 = arith.constant 32 : index
    %137 = vector.load %arg14[%c5_139, %c32_140] : memref<44x288xf32, #tpu.memory_space<vmem>>, vector<1x224xf32>
    tpu.vector_store %arg14[%c5_139, %c32_140], %136 {strides = array<i32>} : memref<44x288xf32, #tpu.memory_space<vmem>>, vector<1x224xf32>,
    %c8 = arith.constant 8 : index
    %c0_141 = arith.constant 0 : index
    %138 = vector.load %arg13[%c8, %c0_141] : memref<64x224xf32, #tpu.memory_space<vmem>>, vector<1x224xf32>
    %c9 = arith.constant 9 : index
    %c0_142 = arith.constant 0 : index
    %139 = vector.load %arg13[%c9, %c0_142] : memref<64x224xf32, #tpu.memory_space<vmem>>, vector<1x224xf32>
    %140 = arith.maximumf %138, %139 : vector<1x224xf32>
    %141 = arith.addf %140, %109 : vector<1x224xf32>
    %cst_143 = arith.constant 0.000000e+00 : f32
    %142 = vector.broadcast %cst_143 : f32 to vector<1x224xf32>
    %143 = arith.maximumf %141, %142 : vector<1x224xf32>
    %c6_144 = arith.constant 6 : index
    %c32_145 = arith.constant 32 : index
    %144 = vector.load %arg14[%c6_144, %c32_145] : memref<44x288xf32, #tpu.memory_space<vmem>>, vector<1x224xf32>
    tpu.vector_store %arg14[%c6_144, %c32_145], %143 {strides = array<i32>} : memref<44x288xf32, #tpu.memory_space<vmem>>, vector<1x224xf32>,
    %c10 = arith.constant 10 : index
    %c0_146 = arith.constant 0 : index
    %145 = vector.load %arg13[%c10, %c0_146] : memref<64x224xf32, #tpu.memory_space<vmem>>, vector<1x224xf32>
    %c11 = arith.constant 11 : index
    %c0_147 = arith.constant 0 : index
    %146 = vector.load %arg13[%c11, %c0_147] : memref<64x224xf32, #tpu.memory_space<vmem>>, vector<1x224xf32>
    %147 = arith.maximumf %145, %146 : vector<1x224xf32>
    %148 = arith.addf %147, %109 : vector<1x224xf32>
    %cst_148 = arith.constant 0.000000e+00 : f32
    %149 = vector.broadcast %cst_148 : f32 to vector<1x224xf32>
    %150 = arith.maximumf %148, %149 : vector<1x224xf32>
    %c7_149 = arith.constant 7 : index
    %c32_150 = arith.constant 32 : index
    %151 = vector.load %arg14[%c7_149, %c32_150] : memref<44x288xf32, #tpu.memory_space<vmem>>, vector<1x224xf32>
    tpu.vector_store %arg14[%c7_149, %c32_150], %150 {strides = array<i32>} : memref<44x288xf32, #tpu.memory_space<vmem>>, vector<1x224xf32>,
    %c12 = arith.constant 12 : index
    %c0_151 = arith.constant 0 : index
    %152 = vector.load %arg13[%c12, %c0_151] : memref<64x224xf32, #tpu.memory_space<vmem>>, vector<1x224xf32>
    %c13 = arith.constant 13 : index
    %c0_152 = arith.constant 0 : index
    %153 = vector.load %arg13[%c13, %c0_152] : memref<64x224xf32, #tpu.memory_space<vmem>>, vector<1x224xf32>
    %154 = arith.maximumf %152, %153 : vector<1x224xf32>
    %155 = arith.addf %154, %109 : vector<1x224xf32>
    %cst_153 = arith.constant 0.000000e+00 : f32
    %156 = vector.broadcast %cst_153 : f32 to vector<1x224xf32>
    %157 = arith.maximumf %155, %156 : vector<1x224xf32>
    %c8_154 = arith.constant 8 : index
    %c32_155 = arith.constant 32 : index
    %158 = vector.load %arg14[%c8_154, %c32_155] : memref<44x288xf32, #tpu.memory_space<vmem>>, vector<1x224xf32>
    tpu.vector_store %arg14[%c8_154, %c32_155], %157 {strides = array<i32>} : memref<44x288xf32, #tpu.memory_space<vmem>>, vector<1x224xf32>,
    %c14 = arith.constant 14 : index
    %c0_156 = arith.constant 0 : index
    %159 = vector.load %arg13[%c14, %c0_156] : memref<64x224xf32, #tpu.memory_space<vmem>>, vector<1x224xf32>
    %c15 = arith.constant 15 : index
    %c0_157 = arith.constant 0 : index
    %160 = vector.load %arg13[%c15, %c0_157] : memref<64x224xf32, #tpu.memory_space<vmem>>, vector<1x224xf32>
    %161 = arith.maximumf %159, %160 : vector<1x224xf32>
    %162 = arith.addf %161, %109 : vector<1x224xf32>
    %cst_158 = arith.constant 0.000000e+00 : f32
    %163 = vector.broadcast %cst_158 : f32 to vector<1x224xf32>
    %164 = arith.maximumf %162, %163 : vector<1x224xf32>
    %c9_159 = arith.constant 9 : index
    %c32_160 = arith.constant 32 : index
    %165 = vector.load %arg14[%c9_159, %c32_160] : memref<44x288xf32, #tpu.memory_space<vmem>>, vector<1x224xf32>
    tpu.vector_store %arg14[%c9_159, %c32_160], %164 {strides = array<i32>} : memref<44x288xf32, #tpu.memory_space<vmem>>, vector<1x224xf32>,
    %c16_161 = arith.constant 16 : index
    %c0_162 = arith.constant 0 : index
    %166 = vector.load %arg13[%c16_161, %c0_162] : memref<64x224xf32, #tpu.memory_space<vmem>>, vector<1x224xf32>
    %c17 = arith.constant 17 : index
    %c0_163 = arith.constant 0 : index
    %167 = vector.load %arg13[%c17, %c0_163] : memref<64x224xf32, #tpu.memory_space<vmem>>, vector<1x224xf32>
    %168 = arith.maximumf %166, %167 : vector<1x224xf32>
    %169 = arith.addf %168, %109 : vector<1x224xf32>
    %cst_164 = arith.constant 0.000000e+00 : f32
    %170 = vector.broadcast %cst_164 : f32 to vector<1x224xf32>
    %171 = arith.maximumf %169, %170 : vector<1x224xf32>
    %c10_165 = arith.constant 10 : index
    %c32_166 = arith.constant 32 : index
    %172 = vector.load %arg14[%c10_165, %c32_166] : memref<44x288xf32, #tpu.memory_space<vmem>>, vector<1x224xf32>
    tpu.vector_store %arg14[%c10_165, %c32_166], %171 {strides = array<i32>} : memref<44x288xf32, #tpu.memory_space<vmem>>, vector<1x224xf32>,
    %c18 = arith.constant 18 : index
    %c0_167 = arith.constant 0 : index
    %173 = vector.load %arg13[%c18, %c0_167] : memref<64x224xf32, #tpu.memory_space<vmem>>, vector<1x224xf32>
    %c19 = arith.constant 19 : index
    %c0_168 = arith.constant 0 : index
    %174 = vector.load %arg13[%c19, %c0_168] : memref<64x224xf32, #tpu.memory_space<vmem>>, vector<1x224xf32>
    %175 = arith.maximumf %173, %174 : vector<1x224xf32>
    %176 = arith.addf %175, %109 : vector<1x224xf32>
    %cst_169 = arith.constant 0.000000e+00 : f32
    %177 = vector.broadcast %cst_169 : f32 to vector<1x224xf32>
    %178 = arith.maximumf %176, %177 : vector<1x224xf32>
    %c11_170 = arith.constant 11 : index
    %c32_171 = arith.constant 32 : index
    %179 = vector.load %arg14[%c11_170, %c32_171] : memref<44x288xf32, #tpu.memory_space<vmem>>, vector<1x224xf32>
    tpu.vector_store %arg14[%c11_170, %c32_171], %178 {strides = array<i32>} : memref<44x288xf32, #tpu.memory_space<vmem>>, vector<1x224xf32>,
    %c20 = arith.constant 20 : index
    %c0_172 = arith.constant 0 : index
    %180 = vector.load %arg13[%c20, %c0_172] : memref<64x224xf32, #tpu.memory_space<vmem>>, vector<1x224xf32>
    %c21 = arith.constant 21 : index
    %c0_173 = arith.constant 0 : index
    %181 = vector.load %arg13[%c21, %c0_173] : memref<64x224xf32, #tpu.memory_space<vmem>>, vector<1x224xf32>
    %182 = arith.maximumf %180, %181 : vector<1x224xf32>
    %183 = arith.addf %182, %109 : vector<1x224xf32>
    %cst_174 = arith.constant 0.000000e+00 : f32
    %184 = vector.broadcast %cst_174 : f32 to vector<1x224xf32>
    %185 = arith.maximumf %183, %184 : vector<1x224xf32>
    %c12_175 = arith.constant 12 : index
    %c32_176 = arith.constant 32 : index
    %186 = vector.load %arg14[%c12_175, %c32_176] : memref<44x288xf32, #tpu.memory_space<vmem>>, vector<1x224xf32>
    tpu.vector_store %arg14[%c12_175, %c32_176], %185 {strides = array<i32>} : memref<44x288xf32, #tpu.memory_space<vmem>>, vector<1x224xf32>,
    %c22 = arith.constant 22 : index
    %c0_177 = arith.constant 0 : index
    %187 = vector.load %arg13[%c22, %c0_177] : memref<64x224xf32, #tpu.memory_space<vmem>>, vector<1x224xf32>
    %c23 = arith.constant 23 : index
    %c0_178 = arith.constant 0 : index
    %188 = vector.load %arg13[%c23, %c0_178] : memref<64x224xf32, #tpu.memory_space<vmem>>, vector<1x224xf32>
    %189 = arith.maximumf %187, %188 : vector<1x224xf32>
    %190 = arith.addf %189, %109 : vector<1x224xf32>
    %cst_179 = arith.constant 0.000000e+00 : f32
    %191 = vector.broadcast %cst_179 : f32 to vector<1x224xf32>
    %192 = arith.maximumf %190, %191 : vector<1x224xf32>
    %c13_180 = arith.constant 13 : index
    %c32_181 = arith.constant 32 : index
    %193 = vector.load %arg14[%c13_180, %c32_181] : memref<44x288xf32, #tpu.memory_space<vmem>>, vector<1x224xf32>
    tpu.vector_store %arg14[%c13_180, %c32_181], %192 {strides = array<i32>} : memref<44x288xf32, #tpu.memory_space<vmem>>, vector<1x224xf32>,
    %c24 = arith.constant 24 : index
    %c0_182 = arith.constant 0 : index
    %194 = vector.load %arg13[%c24, %c0_182] : memref<64x224xf32, #tpu.memory_space<vmem>>, vector<1x224xf32>
    %c25 = arith.constant 25 : index
    %c0_183 = arith.constant 0 : index
    %195 = vector.load %arg13[%c25, %c0_183] : memref<64x224xf32, #tpu.memory_space<vmem>>, vector<1x224xf32>
    %196 = arith.maximumf %194, %195 : vector<1x224xf32>
    %197 = arith.addf %196, %109 : vector<1x224xf32>
    %cst_184 = arith.constant 0.000000e+00 : f32
    %198 = vector.broadcast %cst_184 : f32 to vector<1x224xf32>
    %199 = arith.maximumf %197, %198 : vector<1x224xf32>
    %c14_185 = arith.constant 14 : index
    %c32_186 = arith.constant 32 : index
    %200 = vector.load %arg14[%c14_185, %c32_186] : memref<44x288xf32, #tpu.memory_space<vmem>>, vector<1x224xf32>
    tpu.vector_store %arg14[%c14_185, %c32_186], %199 {strides = array<i32>} : memref<44x288xf32, #tpu.memory_space<vmem>>, vector<1x224xf32>,
    %c26 = arith.constant 26 : index
    %c0_187 = arith.constant 0 : index
    %201 = vector.load %arg13[%c26, %c0_187] : memref<64x224xf32, #tpu.memory_space<vmem>>, vector<1x224xf32>
    %c27 = arith.constant 27 : index
    %c0_188 = arith.constant 0 : index
    %202 = vector.load %arg13[%c27, %c0_188] : memref<64x224xf32, #tpu.memory_space<vmem>>, vector<1x224xf32>
    %203 = arith.maximumf %201, %202 : vector<1x224xf32>
    %204 = arith.addf %203, %109 : vector<1x224xf32>
    %cst_189 = arith.constant 0.000000e+00 : f32
    %205 = vector.broadcast %cst_189 : f32 to vector<1x224xf32>
    %206 = arith.maximumf %204, %205 : vector<1x224xf32>
    %c15_190 = arith.constant 15 : index
    %c32_191 = arith.constant 32 : index
    %207 = vector.load %arg14[%c15_190, %c32_191] : memref<44x288xf32, #tpu.memory_space<vmem>>, vector<1x224xf32>
    tpu.vector_store %arg14[%c15_190, %c32_191], %206 {strides = array<i32>} : memref<44x288xf32, #tpu.memory_space<vmem>>, vector<1x224xf32>,
    %c32_192 = arith.constant 32 : index
    %c0_193 = arith.constant 0 : index
    %208 = vector.load %arg13[%c32_192, %c0_193] : memref<64x224xf32, #tpu.memory_space<vmem>>, vector<1x224xf32>
    %c33 = arith.constant 33 : index
    %c0_194 = arith.constant 0 : index
    %209 = vector.load %arg13[%c33, %c0_194] : memref<64x224xf32, #tpu.memory_space<vmem>>, vector<1x224xf32>
    %210 = arith.maximumf %208, %209 : vector<1x224xf32>
    %211 = arith.addf %210, %109 : vector<1x224xf32>
    %cst_195 = arith.constant 0.000000e+00 : f32
    %212 = vector.broadcast %cst_195 : f32 to vector<1x224xf32>
    %213 = arith.maximumf %211, %212 : vector<1x224xf32>
    %c20_196 = arith.constant 20 : index
    %c32_197 = arith.constant 32 : index
    %214 = vector.load %arg14[%c20_196, %c32_197] : memref<44x288xf32, #tpu.memory_space<vmem>>, vector<1x224xf32>
    tpu.vector_store %arg14[%c20_196, %c32_197], %213 {strides = array<i32>} : memref<44x288xf32, #tpu.memory_space<vmem>>, vector<1x224xf32>,
    %c34_198 = arith.constant 34 : index
    %c0_199 = arith.constant 0 : index
    %215 = vector.load %arg13[%c34_198, %c0_199] : memref<64x224xf32, #tpu.memory_space<vmem>>, vector<1x224xf32>
    %c35 = arith.constant 35 : index
    %c0_200 = arith.constant 0 : index
    %216 = vector.load %arg13[%c35, %c0_200] : memref<64x224xf32, #tpu.memory_space<vmem>>, vector<1x224xf32>
    %217 = arith.maximumf %215, %216 : vector<1x224xf32>
    %218 = arith.addf %217, %109 : vector<1x224xf32>
    %cst_201 = arith.constant 0.000000e+00 : f32
    %219 = vector.broadcast %cst_201 : f32 to vector<1x224xf32>
    %220 = arith.maximumf %218, %219 : vector<1x224xf32>
    %c21_202 = arith.constant 21 : index
    %c32_203 = arith.constant 32 : index
    %221 = vector.load %arg14[%c21_202, %c32_203] : memref<44x288xf32, #tpu.memory_space<vmem>>, vector<1x224xf32>
    tpu.vector_store %arg14[%c21_202, %c32_203], %220 {strides = array<i32>} : memref<44x288xf32, #tpu.memory_space<vmem>>, vector<1x224xf32>,
    %c36 = arith.constant 36 : index
    %c0_204 = arith.constant 0 : index
    %222 = vector.load %arg13[%c36, %c0_204] : memref<64x224xf32, #tpu.memory_space<vmem>>, vector<1x224xf32>
    %c37 = arith.constant 37 : index
    %c0_205 = arith.constant 0 : index
    %223 = vector.load %arg13[%c37, %c0_205] : memref<64x224xf32, #tpu.memory_space<vmem>>, vector<1x224xf32>
    %224 = arith.maximumf %222, %223 : vector<1x224xf32>
    %225 = arith.addf %224, %109 : vector<1x224xf32>
    %cst_206 = arith.constant 0.000000e+00 : f32
    %226 = vector.broadcast %cst_206 : f32 to vector<1x224xf32>
    %227 = arith.maximumf %225, %226 : vector<1x224xf32>
    %c22_207 = arith.constant 22 : index
    %c32_208 = arith.constant 32 : index
    %228 = vector.load %arg14[%c22_207, %c32_208] : memref<44x288xf32, #tpu.memory_space<vmem>>, vector<1x224xf32>
    tpu.vector_store %arg14[%c22_207, %c32_208], %227 {strides = array<i32>} : memref<44x288xf32, #tpu.memory_space<vmem>>, vector<1x224xf32>,
    %c38 = arith.constant 38 : index
    %c0_209 = arith.constant 0 : index
    %229 = vector.load %arg13[%c38, %c0_209] : memref<64x224xf32, #tpu.memory_space<vmem>>, vector<1x224xf32>
    %c39 = arith.constant 39 : index
    %c0_210 = arith.constant 0 : index
    %230 = vector.load %arg13[%c39, %c0_210] : memref<64x224xf32, #tpu.memory_space<vmem>>, vector<1x224xf32>
    %231 = arith.maximumf %229, %230 : vector<1x224xf32>
    %232 = arith.addf %231, %109 : vector<1x224xf32>
    %cst_211 = arith.constant 0.000000e+00 : f32
    %233 = vector.broadcast %cst_211 : f32 to vector<1x224xf32>
    %234 = arith.maximumf %232, %233 : vector<1x224xf32>
    %c23_212 = arith.constant 23 : index
    %c32_213 = arith.constant 32 : index
    %235 = vector.load %arg14[%c23_212, %c32_213] : memref<44x288xf32, #tpu.memory_space<vmem>>, vector<1x224xf32>
    tpu.vector_store %arg14[%c23_212, %c32_213], %234 {strides = array<i32>} : memref<44x288xf32, #tpu.memory_space<vmem>>, vector<1x224xf32>,
    %c40 = arith.constant 40 : index
    %c0_214 = arith.constant 0 : index
    %236 = vector.load %arg13[%c40, %c0_214] : memref<64x224xf32, #tpu.memory_space<vmem>>, vector<1x224xf32>
    %c41 = arith.constant 41 : index
    %c0_215 = arith.constant 0 : index
    %237 = vector.load %arg13[%c41, %c0_215] : memref<64x224xf32, #tpu.memory_space<vmem>>, vector<1x224xf32>
    %238 = arith.maximumf %236, %237 : vector<1x224xf32>
    %239 = arith.addf %238, %109 : vector<1x224xf32>
    %cst_216 = arith.constant 0.000000e+00 : f32
    %240 = vector.broadcast %cst_216 : f32 to vector<1x224xf32>
    %241 = arith.maximumf %239, %240 : vector<1x224xf32>
    %c24_217 = arith.constant 24 : index
    %c32_218 = arith.constant 32 : index
    %242 = vector.load %arg14[%c24_217, %c32_218] : memref<44x288xf32, #tpu.memory_space<vmem>>, vector<1x224xf32>
    tpu.vector_store %arg14[%c24_217, %c32_218], %241 {strides = array<i32>} : memref<44x288xf32, #tpu.memory_space<vmem>>, vector<1x224xf32>,
    %c42 = arith.constant 42 : index
    %c0_219 = arith.constant 0 : index
    %243 = vector.load %arg13[%c42, %c0_219] : memref<64x224xf32, #tpu.memory_space<vmem>>, vector<1x224xf32>
    %c43 = arith.constant 43 : index
    %c0_220 = arith.constant 0 : index
    %244 = vector.load %arg13[%c43, %c0_220] : memref<64x224xf32, #tpu.memory_space<vmem>>, vector<1x224xf32>
    %245 = arith.maximumf %243, %244 : vector<1x224xf32>
    %246 = arith.addf %245, %109 : vector<1x224xf32>
    %cst_221 = arith.constant 0.000000e+00 : f32
    %247 = vector.broadcast %cst_221 : f32 to vector<1x224xf32>
    %248 = arith.maximumf %246, %247 : vector<1x224xf32>
    %c25_222 = arith.constant 25 : index
    %c32_223 = arith.constant 32 : index
    %249 = vector.load %arg14[%c25_222, %c32_223] : memref<44x288xf32, #tpu.memory_space<vmem>>, vector<1x224xf32>
    tpu.vector_store %arg14[%c25_222, %c32_223], %248 {strides = array<i32>} : memref<44x288xf32, #tpu.memory_space<vmem>>, vector<1x224xf32>,
    %c44 = arith.constant 44 : index
    %c0_224 = arith.constant 0 : index
    %250 = vector.load %arg13[%c44, %c0_224] : memref<64x224xf32, #tpu.memory_space<vmem>>, vector<1x224xf32>
    %c45 = arith.constant 45 : index
    %c0_225 = arith.constant 0 : index
    %251 = vector.load %arg13[%c45, %c0_225] : memref<64x224xf32, #tpu.memory_space<vmem>>, vector<1x224xf32>
    %252 = arith.maximumf %250, %251 : vector<1x224xf32>
    %253 = arith.addf %252, %109 : vector<1x224xf32>
    %cst_226 = arith.constant 0.000000e+00 : f32
    %254 = vector.broadcast %cst_226 : f32 to vector<1x224xf32>
    %255 = arith.maximumf %253, %254 : vector<1x224xf32>
    %c26_227 = arith.constant 26 : index
    %c32_228 = arith.constant 32 : index
    %256 = vector.load %arg14[%c26_227, %c32_228] : memref<44x288xf32, #tpu.memory_space<vmem>>, vector<1x224xf32>
    tpu.vector_store %arg14[%c26_227, %c32_228], %255 {strides = array<i32>} : memref<44x288xf32, #tpu.memory_space<vmem>>, vector<1x224xf32>,
    %c46 = arith.constant 46 : index
    %c0_229 = arith.constant 0 : index
    %257 = vector.load %arg13[%c46, %c0_229] : memref<64x224xf32, #tpu.memory_space<vmem>>, vector<1x224xf32>
    %c47 = arith.constant 47 : index
    %c0_230 = arith.constant 0 : index
    %258 = vector.load %arg13[%c47, %c0_230] : memref<64x224xf32, #tpu.memory_space<vmem>>, vector<1x224xf32>
    %259 = arith.maximumf %257, %258 : vector<1x224xf32>
    %260 = arith.addf %259, %109 : vector<1x224xf32>
    %cst_231 = arith.constant 0.000000e+00 : f32
    %261 = vector.broadcast %cst_231 : f32 to vector<1x224xf32>
    %262 = arith.maximumf %260, %261 : vector<1x224xf32>
    %c27_232 = arith.constant 27 : index
    %c32_233 = arith.constant 32 : index
    %263 = vector.load %arg14[%c27_232, %c32_233] : memref<44x288xf32, #tpu.memory_space<vmem>>, vector<1x224xf32>
    tpu.vector_store %arg14[%c27_232, %c32_233], %262 {strides = array<i32>} : memref<44x288xf32, #tpu.memory_space<vmem>>, vector<1x224xf32>,
    %c48_234 = arith.constant 48 : index
    %c0_235 = arith.constant 0 : index
    %264 = vector.load %arg13[%c48_234, %c0_235] : memref<64x224xf32, #tpu.memory_space<vmem>>, vector<1x224xf32>
    %c49 = arith.constant 49 : index
    %c0_236 = arith.constant 0 : index
    %265 = vector.load %arg13[%c49, %c0_236] : memref<64x224xf32, #tpu.memory_space<vmem>>, vector<1x224xf32>
    %266 = arith.maximumf %264, %265 : vector<1x224xf32>
    %267 = arith.addf %266, %109 : vector<1x224xf32>
    %cst_237 = arith.constant 0.000000e+00 : f32
    %268 = vector.broadcast %cst_237 : f32 to vector<1x224xf32>
    %269 = arith.maximumf %267, %268 : vector<1x224xf32>
    %c28 = arith.constant 28 : index
    %c32_238 = arith.constant 32 : index
    %270 = vector.load %arg14[%c28, %c32_238] : memref<44x288xf32, #tpu.memory_space<vmem>>, vector<1x224xf32>
    tpu.vector_store %arg14[%c28, %c32_238], %269 {strides = array<i32>} : memref<44x288xf32, #tpu.memory_space<vmem>>, vector<1x224xf32>,
    %c50 = arith.constant 50 : index
    %c0_239 = arith.constant 0 : index
    %271 = vector.load %arg13[%c50, %c0_239] : memref<64x224xf32, #tpu.memory_space<vmem>>, vector<1x224xf32>
    %c51 = arith.constant 51 : index
    %c0_240 = arith.constant 0 : index
    %272 = vector.load %arg13[%c51, %c0_240] : memref<64x224xf32, #tpu.memory_space<vmem>>, vector<1x224xf32>
    %273 = arith.maximumf %271, %272 : vector<1x224xf32>
    %274 = arith.addf %273, %109 : vector<1x224xf32>
    %cst_241 = arith.constant 0.000000e+00 : f32
    %275 = vector.broadcast %cst_241 : f32 to vector<1x224xf32>
    %276 = arith.maximumf %274, %275 : vector<1x224xf32>
    %c29 = arith.constant 29 : index
    %c32_242 = arith.constant 32 : index
    %277 = vector.load %arg14[%c29, %c32_242] : memref<44x288xf32, #tpu.memory_space<vmem>>, vector<1x224xf32>
    tpu.vector_store %arg14[%c29, %c32_242], %276 {strides = array<i32>} : memref<44x288xf32, #tpu.memory_space<vmem>>, vector<1x224xf32>,
    %c52 = arith.constant 52 : index
    %c0_243 = arith.constant 0 : index
    %278 = vector.load %arg13[%c52, %c0_243] : memref<64x224xf32, #tpu.memory_space<vmem>>, vector<1x224xf32>
    %c53 = arith.constant 53 : index
    %c0_244 = arith.constant 0 : index
    %279 = vector.load %arg13[%c53, %c0_244] : memref<64x224xf32, #tpu.memory_space<vmem>>, vector<1x224xf32>
    %280 = arith.maximumf %278, %279 : vector<1x224xf32>
    %281 = arith.addf %280, %109 : vector<1x224xf32>
    %cst_245 = arith.constant 0.000000e+00 : f32
    %282 = vector.broadcast %cst_245 : f32 to vector<1x224xf32>
    %283 = arith.maximumf %281, %282 : vector<1x224xf32>
    %c30 = arith.constant 30 : index
    %c32_246 = arith.constant 32 : index
    %284 = vector.load %arg14[%c30, %c32_246] : memref<44x288xf32, #tpu.memory_space<vmem>>, vector<1x224xf32>
    tpu.vector_store %arg14[%c30, %c32_246], %283 {strides = array<i32>} : memref<44x288xf32, #tpu.memory_space<vmem>>, vector<1x224xf32>,
    %c54 = arith.constant 54 : index
    %c0_247 = arith.constant 0 : index
    %285 = vector.load %arg13[%c54, %c0_247] : memref<64x224xf32, #tpu.memory_space<vmem>>, vector<1x224xf32>
    %c55 = arith.constant 55 : index
    %c0_248 = arith.constant 0 : index
    %286 = vector.load %arg13[%c55, %c0_248] : memref<64x224xf32, #tpu.memory_space<vmem>>, vector<1x224xf32>
    %287 = arith.maximumf %285, %286 : vector<1x224xf32>
    %288 = arith.addf %287, %109 : vector<1x224xf32>
    %cst_249 = arith.constant 0.000000e+00 : f32
    %289 = vector.broadcast %cst_249 : f32 to vector<1x224xf32>
    %290 = arith.maximumf %288, %289 : vector<1x224xf32>
    %c31 = arith.constant 31 : index
    %c32_250 = arith.constant 32 : index
    %291 = vector.load %arg14[%c31, %c32_250] : memref<44x288xf32, #tpu.memory_space<vmem>>, vector<1x224xf32>
    tpu.vector_store %arg14[%c31, %c32_250], %290 {strides = array<i32>} : memref<44x288xf32, #tpu.memory_space<vmem>>, vector<1x224xf32>,
    %c56 = arith.constant 56 : index
    %c0_251 = arith.constant 0 : index
    %292 = vector.load %arg13[%c56, %c0_251] : memref<64x224xf32, #tpu.memory_space<vmem>>, vector<1x224xf32>
    %c57 = arith.constant 57 : index
    %c0_252 = arith.constant 0 : index
    %293 = vector.load %arg13[%c57, %c0_252] : memref<64x224xf32, #tpu.memory_space<vmem>>, vector<1x224xf32>
    %294 = arith.maximumf %292, %293 : vector<1x224xf32>
    %295 = arith.addf %294, %109 : vector<1x224xf32>
    %cst_253 = arith.constant 0.000000e+00 : f32
    %296 = vector.broadcast %cst_253 : f32 to vector<1x224xf32>
    %297 = arith.maximumf %295, %296 : vector<1x224xf32>
    %c32_254 = arith.constant 32 : index
    %c32_255 = arith.constant 32 : index
    %298 = vector.load %arg14[%c32_254, %c32_255] : memref<44x288xf32, #tpu.memory_space<vmem>>, vector<1x224xf32>
    tpu.vector_store %arg14[%c32_254, %c32_255], %297 {strides = array<i32>} : memref<44x288xf32, #tpu.memory_space<vmem>>, vector<1x224xf32>,
    %c58 = arith.constant 58 : index
    %c0_256 = arith.constant 0 : index
    %299 = vector.load %arg13[%c58, %c0_256] : memref<64x224xf32, #tpu.memory_space<vmem>>, vector<1x224xf32>
    %c59 = arith.constant 59 : index
    %c0_257 = arith.constant 0 : index
    %300 = vector.load %arg13[%c59, %c0_257] : memref<64x224xf32, #tpu.memory_space<vmem>>, vector<1x224xf32>
    %301 = arith.maximumf %299, %300 : vector<1x224xf32>
    %302 = arith.addf %301, %109 : vector<1x224xf32>
    %cst_258 = arith.constant 0.000000e+00 : f32
    %303 = vector.broadcast %cst_258 : f32 to vector<1x224xf32>
    %304 = arith.maximumf %302, %303 : vector<1x224xf32>
    %c33_259 = arith.constant 33 : index
    %c32_260 = arith.constant 32 : index
    %305 = vector.load %arg14[%c33_259, %c32_260] : memref<44x288xf32, #tpu.memory_space<vmem>>, vector<1x224xf32>
    tpu.vector_store %arg14[%c33_259, %c32_260], %304 {strides = array<i32>} : memref<44x288xf32, #tpu.memory_space<vmem>>, vector<1x224xf32>,
    %c0_261 = arith.constant 0 : index
    %c0_262 = arith.constant 0 : index
    %306 = vector.load %arg14[%c0_261, %c0_262] : memref<44x288xf32, #tpu.memory_space<vmem>>, vector<44x288xf32>
    %307 = vector.extract_strided_slice %306 {offsets = [0, 0], sizes = [36, 288], strides = [1, 1]} : vector<44x288xf32> to vector<36x288xf32>
    %308 = arith.truncf %307 : vector<36x288xf32> to vector<36x288xbf16>
    %c0_263 = arith.constant 0 : index
    %c0_264 = arith.constant 0 : index
    %c0_265 = arith.constant 0 : index
    %309 = vector.load %arg3[%c0_263, %c0_264, %c0_265] : memref<5x288x448xbf16, #tpu.memory_space<vmem>>, vector<1x288x448xbf16>
    %310 = vector.shape_cast %309 : vector<1x288x448xbf16> to vector<288x448xbf16>
    %cst_266 = arith.constant dense<0.000000e+00> : vector<36x448xf32>
    %311 = tpu.matmul %308, %310, %cst_266 {dimension_numbers = #tpu.dot_dimension_numbers<[1], [0], [0], [1], [0, 0, 1, 1], [], []>} : vector<36x288xbf16>, vector<288x448xbf16>, vector<36x448xf32> -> vector<36x448xf32>
    %c0_267 = arith.constant 0 : index
    %c0_268 = arith.constant 0 : index
    %312 = vector.load %arg15[%c0_267, %c0_268] : memref<36x448xf32, #tpu.memory_space<vmem>>, vector<36x448xf32>
    tpu.vector_store %arg15[%c0_267, %c0_268], %311 {strides = array<i32>} : memref<36x448xf32, #tpu.memory_space<vmem>>, vector<36x448xf32>,
    %c0_269 = arith.constant 0 : index
    %c0_270 = arith.constant 0 : index
    %313 = vector.load %arg14[%c0_269, %c0_270] : memref<44x288xf32, #tpu.memory_space<vmem>>, vector<44x288xf32>
    %314 = vector.extract_strided_slice %313 {offsets = [1, 0], sizes = [36, 288], strides = [1, 1]} : vector<44x288xf32> to vector<36x288xf32>
    %315 = arith.truncf %314 : vector<36x288xf32> to vector<36x288xbf16>
    %c1_271 = arith.constant 1 : index
    %c0_272 = arith.constant 0 : index
    %c0_273 = arith.constant 0 : index
    %316 = vector.load %arg3[%c1_271, %c0_272, %c0_273] : memref<5x288x448xbf16, #tpu.memory_space<vmem>>, vector<1x288x448xbf16>
    %317 = vector.shape_cast %316 : vector<1x288x448xbf16> to vector<288x448xbf16>
    %cst_274 = arith.constant dense<0.000000e+00> : vector<36x448xf32>
    %318 = tpu.matmul %315, %317, %cst_274 {dimension_numbers = #tpu.dot_dimension_numbers<[1], [0], [0], [1], [0, 0, 1, 1], [], []>} : vector<36x288xbf16>, vector<288x448xbf16>, vector<36x448xf32> -> vector<36x448xf32>
    %c0_275 = arith.constant 0 : index
    %c0_276 = arith.constant 0 : index
    %319 = vector.load %arg15[%c0_275, %c0_276] : memref<36x448xf32, #tpu.memory_space<vmem>>, vector<36x448xf32>
    %320 = arith.addf %319, %318 : vector<36x448xf32>
    %c0_277 = arith.constant 0 : index
    %c0_278 = arith.constant 0 : index
    %321 = vector.load %arg15[%c0_277, %c0_278] : memref<36x448xf32, #tpu.memory_space<vmem>>, vector<36x448xf32>
    tpu.vector_store %arg15[%c0_277, %c0_278], %320 {strides = array<i32>} : memref<36x448xf32, #tpu.memory_space<vmem>>, vector<36x448xf32>,
    %c0_279 = arith.constant 0 : index
    %c0_280 = arith.constant 0 : index
    %322 = vector.load %arg14[%c0_279, %c0_280] : memref<44x288xf32, #tpu.memory_space<vmem>>, vector<44x288xf32>
    %323 = vector.extract_strided_slice %322 {offsets = [2, 0], sizes = [36, 288], strides = [1, 1]} : vector<44x288xf32> to vector<36x288xf32>
    %324 = arith.truncf %323 : vector<36x288xf32> to vector<36x288xbf16>
    %c2_281 = arith.constant 2 : index
    %c0_282 = arith.constant 0 : index
    %c0_283 = arith.constant 0 : index
    %325 = vector.load %arg3[%c2_281, %c0_282, %c0_283] : memref<5x288x448xbf16, #tpu.memory_space<vmem>>, vector<1x288x448xbf16>
    %326 = vector.shape_cast %325 : vector<1x288x448xbf16> to vector<288x448xbf16>
    %cst_284 = arith.constant dense<0.000000e+00> : vector<36x448xf32>
    %327 = tpu.matmul %324, %326, %cst_284 {dimension_numbers = #tpu.dot_dimension_numbers<[1], [0], [0], [1], [0, 0, 1, 1], [], []>} : vector<36x288xbf16>, vector<288x448xbf16>, vector<36x448xf32> -> vector<36x448xf32>
    %c0_285 = arith.constant 0 : index
    %c0_286 = arith.constant 0 : index
    %328 = vector.load %arg15[%c0_285, %c0_286] : memref<36x448xf32, #tpu.memory_space<vmem>>, vector<36x448xf32>
    %329 = arith.addf %328, %327 : vector<36x448xf32>
    %c0_287 = arith.constant 0 : index
    %c0_288 = arith.constant 0 : index
    %330 = vector.load %arg15[%c0_287, %c0_288] : memref<36x448xf32, #tpu.memory_space<vmem>>, vector<36x448xf32>
    tpu.vector_store %arg15[%c0_287, %c0_288], %329 {strides = array<i32>} : memref<36x448xf32, #tpu.memory_space<vmem>>, vector<36x448xf32>,
    %c0_289 = arith.constant 0 : index
    %c0_290 = arith.constant 0 : index
    %331 = vector.load %arg14[%c0_289, %c0_290] : memref<44x288xf32, #tpu.memory_space<vmem>>, vector<44x288xf32>
    %332 = vector.extract_strided_slice %331 {offsets = [3, 0], sizes = [36, 288], strides = [1, 1]} : vector<44x288xf32> to vector<36x288xf32>
    %333 = arith.truncf %332 : vector<36x288xf32> to vector<36x288xbf16>
    %c3_291 = arith.constant 3 : index
    %c0_292 = arith.constant 0 : index
    %c0_293 = arith.constant 0 : index
    %334 = vector.load %arg3[%c3_291, %c0_292, %c0_293] : memref<5x288x448xbf16, #tpu.memory_space<vmem>>, vector<1x288x448xbf16>
    %335 = vector.shape_cast %334 : vector<1x288x448xbf16> to vector<288x448xbf16>
    %cst_294 = arith.constant dense<0.000000e+00> : vector<36x448xf32>
    %336 = tpu.matmul %333, %335, %cst_294 {dimension_numbers = #tpu.dot_dimension_numbers<[1], [0], [0], [1], [0, 0, 1, 1], [], []>} : vector<36x288xbf16>, vector<288x448xbf16>, vector<36x448xf32> -> vector<36x448xf32>
    %c0_295 = arith.constant 0 : index
    %c0_296 = arith.constant 0 : index
    %337 = vector.load %arg15[%c0_295, %c0_296] : memref<36x448xf32, #tpu.memory_space<vmem>>, vector<36x448xf32>
    %338 = arith.addf %337, %336 : vector<36x448xf32>
    %c0_297 = arith.constant 0 : index
    %c0_298 = arith.constant 0 : index
    %339 = vector.load %arg15[%c0_297, %c0_298] : memref<36x448xf32, #tpu.memory_space<vmem>>, vector<36x448xf32>
    tpu.vector_store %arg15[%c0_297, %c0_298], %338 {strides = array<i32>} : memref<36x448xf32, #tpu.memory_space<vmem>>, vector<36x448xf32>,
    %c0_299 = arith.constant 0 : index
    %c0_300 = arith.constant 0 : index
    %340 = vector.load %arg14[%c0_299, %c0_300] : memref<44x288xf32, #tpu.memory_space<vmem>>, vector<44x288xf32>
    %341 = vector.extract_strided_slice %340 {offsets = [4, 0], sizes = [36, 288], strides = [1, 1]} : vector<44x288xf32> to vector<36x288xf32>
    %342 = arith.truncf %341 : vector<36x288xf32> to vector<36x288xbf16>
    %c4_301 = arith.constant 4 : index
    %c0_302 = arith.constant 0 : index
    %c0_303 = arith.constant 0 : index
    %343 = vector.load %arg3[%c4_301, %c0_302, %c0_303] : memref<5x288x448xbf16, #tpu.memory_space<vmem>>, vector<1x288x448xbf16>
    %344 = vector.shape_cast %343 : vector<1x288x448xbf16> to vector<288x448xbf16>
    %cst_304 = arith.constant dense<0.000000e+00> : vector<36x448xf32>
    %345 = tpu.matmul %342, %344, %cst_304 {dimension_numbers = #tpu.dot_dimension_numbers<[1], [0], [0], [1], [0, 0, 1, 1], [], []>} : vector<36x288xbf16>, vector<288x448xbf16>, vector<36x448xf32> -> vector<36x448xf32>
    %c0_305 = arith.constant 0 : index
    %c0_306 = arith.constant 0 : index
    %346 = vector.load %arg15[%c0_305, %c0_306] : memref<36x448xf32, #tpu.memory_space<vmem>>, vector<36x448xf32>
    %347 = arith.addf %346, %345 : vector<36x448xf32>
    %c0_307 = arith.constant 0 : index
    %c0_308 = arith.constant 0 : index
    %348 = vector.load %arg15[%c0_307, %c0_308] : memref<36x448xf32, #tpu.memory_space<vmem>>, vector<36x448xf32>
    tpu.vector_store %arg15[%c0_307, %c0_308], %347 {strides = array<i32>} : memref<36x448xf32, #tpu.memory_space<vmem>>, vector<36x448xf32>,
    %c0_309 = arith.constant 0 : index
    %c0_310 = arith.constant 0 : index
    %349 = vector.load %arg15[%c0_309, %c0_310] : memref<36x448xf32, #tpu.memory_space<vmem>>, vector<36x32xf32>
    %c0_311 = arith.constant 0 : index
    %c32_312 = arith.constant 32 : index
    %350 = vector.load %arg15[%c0_311, %c32_312] : memref<36x448xf32, #tpu.memory_space<vmem>>, vector<36x32xf32>
    %351 = arith.maximumf %349, %350 : vector<36x32xf32>
    %c0_313 = arith.constant 0 : index
    %c0_314 = arith.constant 0 : index
    %352 = vector.load %arg16[%c0_313, %c0_314] : memref<36x224xf32, #tpu.memory_space<vmem>>, vector<36x32xf32>
    tpu.vector_store %arg16[%c0_313, %c0_314], %351 {strides = array<i32>} : memref<36x224xf32, #tpu.memory_space<vmem>>, vector<36x32xf32>,
    %c0_315 = arith.constant 0 : index
    %c64_316 = arith.constant 64 : index
    %353 = vector.load %arg15[%c0_315, %c64_316] : memref<36x448xf32, #tpu.memory_space<vmem>>, vector<36x32xf32>
    %c0_317 = arith.constant 0 : index
    %c96_318 = arith.constant 96 : index
    %354 = vector.load %arg15[%c0_317, %c96_318] : memref<36x448xf32, #tpu.memory_space<vmem>>, vector<36x32xf32>
    %355 = arith.maximumf %353, %354 : vector<36x32xf32>
    %c0_319 = arith.constant 0 : index
    %c32_320 = arith.constant 32 : index
    %356 = vector.load %arg16[%c0_319, %c32_320] : memref<36x224xf32, #tpu.memory_space<vmem>>, vector<36x32xf32>
    tpu.vector_store %arg16[%c0_319, %c32_320], %355 {strides = array<i32>} : memref<36x224xf32, #tpu.memory_space<vmem>>, vector<36x32xf32>,
    %c0_321 = arith.constant 0 : index
    %c128_322 = arith.constant 128 : index
    %357 = vector.load %arg15[%c0_321, %c128_322] : memref<36x448xf32, #tpu.memory_space<vmem>>, vector<36x32xf32>
    %c0_323 = arith.constant 0 : index
    %c160_324 = arith.constant 160 : index
    %358 = vector.load %arg15[%c0_323, %c160_324] : memref<36x448xf32, #tpu.memory_space<vmem>>, vector<36x32xf32>
    %359 = arith.maximumf %357, %358 : vector<36x32xf32>
    %c0_325 = arith.constant 0 : index
    %c64_326 = arith.constant 64 : index
    %360 = vector.load %arg16[%c0_325, %c64_326] : memref<36x224xf32, #tpu.memory_space<vmem>>, vector<36x32xf32>
    tpu.vector_store %arg16[%c0_325, %c64_326], %359 {strides = array<i32>} : memref<36x224xf32, #tpu.memory_space<vmem>>, vector<36x32xf32>,
    %c0_327 = arith.constant 0 : index
    %c192_328 = arith.constant 192 : index
    %361 = vector.load %arg15[%c0_327, %c192_328] : memref<36x448xf32, #tpu.memory_space<vmem>>, vector<36x32xf32>
    %c0_329 = arith.constant 0 : index
    %c224_330 = arith.constant 224 : index
    %362 = vector.load %arg15[%c0_329, %c224_330] : memref<36x448xf32, #tpu.memory_space<vmem>>, vector<36x32xf32>
    %363 = arith.maximumf %361, %362 : vector<36x32xf32>
    %c0_331 = arith.constant 0 : index
    %c96_332 = arith.constant 96 : index
    %364 = vector.load %arg16[%c0_331, %c96_332] : memref<36x224xf32, #tpu.memory_space<vmem>>, vector<36x32xf32>
    tpu.vector_store %arg16[%c0_331, %c96_332], %363 {strides = array<i32>} : memref<36x224xf32, #tpu.memory_space<vmem>>, vector<36x32xf32>,
    %c0_333 = arith.constant 0 : index
    %c256_334 = arith.constant 256 : index
    %365 = vector.load %arg15[%c0_333, %c256_334] : memref<36x448xf32, #tpu.memory_space<vmem>>, vector<36x32xf32>
    %c0_335 = arith.constant 0 : index
    %c288_336 = arith.constant 288 : index
    %366 = vector.load %arg15[%c0_335, %c288_336] : memref<36x448xf32, #tpu.memory_space<vmem>>, vector<36x32xf32>
    %367 = arith.maximumf %365, %366 : vector<36x32xf32>
    %c0_337 = arith.constant 0 : index
    %c128_338 = arith.constant 128 : index
    %368 = vector.load %arg16[%c0_337, %c128_338] : memref<36x224xf32, #tpu.memory_space<vmem>>, vector<36x32xf32>
    tpu.vector_store %arg16[%c0_337, %c128_338], %367 {strides = array<i32>} : memref<36x224xf32, #tpu.memory_space<vmem>>, vector<36x32xf32>,
    %c0_339 = arith.constant 0 : index
    %c320_340 = arith.constant 320 : index
    %369 = vector.load %arg15[%c0_339, %c320_340] : memref<36x448xf32, #tpu.memory_space<vmem>>, vector<36x32xf32>
    %c0_341 = arith.constant 0 : index
    %c352_342 = arith.constant 352 : index
    %370 = vector.load %arg15[%c0_341, %c352_342] : memref<36x448xf32, #tpu.memory_space<vmem>>, vector<36x32xf32>
    %371 = arith.maximumf %369, %370 : vector<36x32xf32>
    %c0_343 = arith.constant 0 : index
    %c160_344 = arith.constant 160 : index
    %372 = vector.load %arg16[%c0_343, %c160_344] : memref<36x224xf32, #tpu.memory_space<vmem>>, vector<36x32xf32>
    tpu.vector_store %arg16[%c0_343, %c160_344], %371 {strides = array<i32>} : memref<36x224xf32, #tpu.memory_space<vmem>>, vector<36x32xf32>,
    %c0_345 = arith.constant 0 : index
    %c384_346 = arith.constant 384 : index
    %373 = vector.load %arg15[%c0_345, %c384_346] : memref<36x448xf32, #tpu.memory_space<vmem>>, vector<36x32xf32>
    %c0_347 = arith.constant 0 : index
    %c416_348 = arith.constant 416 : index
    %374 = vector.load %arg15[%c0_347, %c416_348] : memref<36x448xf32, #tpu.memory_space<vmem>>, vector<36x32xf32>
    %375 = arith.maximumf %373, %374 : vector<36x32xf32>
    %c0_349 = arith.constant 0 : index
    %c192_350 = arith.constant 192 : index
    %376 = vector.load %arg16[%c0_349, %c192_350] : memref<36x224xf32, #tpu.memory_space<vmem>>, vector<36x32xf32>
    tpu.vector_store %arg16[%c0_349, %c192_350], %375 {strides = array<i32>} : memref<36x224xf32, #tpu.memory_space<vmem>>, vector<36x32xf32>,
    %c0_351 = arith.constant 0 : index
    %c0_352 = arith.constant 0 : index
    %377 = vector.load %arg5[%c0_351, %c0_352] : memref<1x224xf32, #tpu.memory_space<vmem>>, vector<1x224xf32>
    %c0_353 = arith.constant 0 : index
    %c0_354 = arith.constant 0 : index
    %378 = vector.load %arg16[%c0_353, %c0_354] : memref<36x224xf32, #tpu.memory_space<vmem>>, vector<1x224xf32>
    %c1_355 = arith.constant 1 : index
    %c0_356 = arith.constant 0 : index
    %379 = vector.load %arg16[%c1_355, %c0_356] : memref<36x224xf32, #tpu.memory_space<vmem>>, vector<1x224xf32>
    %380 = arith.maximumf %378, %379 : vector<1x224xf32>
    %381 = arith.addf %380, %377 : vector<1x224xf32>
    %cst_357 = arith.constant 0.000000e+00 : f32
    %382 = vector.broadcast %cst_357 : f32 to vector<1x224xf32>
    %383 = arith.maximumf %381, %382 : vector<1x224xf32>
    %c0_358 = arith.constant 0 : index
    %c0_359 = arith.constant 0 : index
    %384 = vector.load %arg17[%c0_358, %c0_359] : memref<2x1568xf32, #tpu.memory_space<vmem>>, vector<1x224xf32>
    tpu.vector_store %arg17[%c0_358, %c0_359], %383 {strides = array<i32>} : memref<2x1568xf32, #tpu.memory_space<vmem>>, vector<1x224xf32>,
    %c2_360 = arith.constant 2 : index
    %c0_361 = arith.constant 0 : index
    %385 = vector.load %arg16[%c2_360, %c0_361] : memref<36x224xf32, #tpu.memory_space<vmem>>, vector<1x224xf32>
    %c3_362 = arith.constant 3 : index
    %c0_363 = arith.constant 0 : index
    %386 = vector.load %arg16[%c3_362, %c0_363] : memref<36x224xf32, #tpu.memory_space<vmem>>, vector<1x224xf32>
    %387 = arith.maximumf %385, %386 : vector<1x224xf32>
    %388 = arith.addf %387, %377 : vector<1x224xf32>
    %cst_364 = arith.constant 0.000000e+00 : f32
    %389 = vector.broadcast %cst_364 : f32 to vector<1x224xf32>
    %390 = arith.maximumf %388, %389 : vector<1x224xf32>
    %c0_365 = arith.constant 0 : index
    %c224_366 = arith.constant 224 : index
    %391 = vector.load %arg17[%c0_365, %c224_366] : memref<2x1568xf32, #tpu.memory_space<vmem>>, vector<1x224xf32>
    tpu.vector_store %arg17[%c0_365, %c224_366], %390 {strides = array<i32>} : memref<2x1568xf32, #tpu.memory_space<vmem>>, vector<1x224xf32>,
    %c4_367 = arith.constant 4 : index
    %c0_368 = arith.constant 0 : index
    %392 = vector.load %arg16[%c4_367, %c0_368] : memref<36x224xf32, #tpu.memory_space<vmem>>, vector<1x224xf32>
    %c5_369 = arith.constant 5 : index
    %c0_370 = arith.constant 0 : index
    %393 = vector.load %arg16[%c5_369, %c0_370] : memref<36x224xf32, #tpu.memory_space<vmem>>, vector<1x224xf32>
    %394 = arith.maximumf %392, %393 : vector<1x224xf32>
    %395 = arith.addf %394, %377 : vector<1x224xf32>
    %cst_371 = arith.constant 0.000000e+00 : f32
    %396 = vector.broadcast %cst_371 : f32 to vector<1x224xf32>
    %397 = arith.maximumf %395, %396 : vector<1x224xf32>
    %c0_372 = arith.constant 0 : index
    %c448 = arith.constant 448 : index
    %398 = vector.load %arg17[%c0_372, %c448] : memref<2x1568xf32, #tpu.memory_space<vmem>>, vector<1x224xf32>
    tpu.vector_store %arg17[%c0_372, %c448], %397 {strides = array<i32>} : memref<2x1568xf32, #tpu.memory_space<vmem>>, vector<1x224xf32>,
    %c6_373 = arith.constant 6 : index
    %c0_374 = arith.constant 0 : index
    %399 = vector.load %arg16[%c6_373, %c0_374] : memref<36x224xf32, #tpu.memory_space<vmem>>, vector<1x224xf32>
    %c7_375 = arith.constant 7 : index
    %c0_376 = arith.constant 0 : index
    %400 = vector.load %arg16[%c7_375, %c0_376] : memref<36x224xf32, #tpu.memory_space<vmem>>, vector<1x224xf32>
    %401 = arith.maximumf %399, %400 : vector<1x224xf32>
    %402 = arith.addf %401, %377 : vector<1x224xf32>
    %cst_377 = arith.constant 0.000000e+00 : f32
    %403 = vector.broadcast %cst_377 : f32 to vector<1x224xf32>
    %404 = arith.maximumf %402, %403 : vector<1x224xf32>
    %c0_378 = arith.constant 0 : index
    %c672 = arith.constant 672 : index
    %405 = vector.load %arg17[%c0_378, %c672] : memref<2x1568xf32, #tpu.memory_space<vmem>>, vector<1x224xf32>
    tpu.vector_store %arg17[%c0_378, %c672], %404 {strides = array<i32>} : memref<2x1568xf32, #tpu.memory_space<vmem>>, vector<1x224xf32>,
    %c8_379 = arith.constant 8 : index
    %c0_380 = arith.constant 0 : index
    %406 = vector.load %arg16[%c8_379, %c0_380] : memref<36x224xf32, #tpu.memory_space<vmem>>, vector<1x224xf32>
    %c9_381 = arith.constant 9 : index
    %c0_382 = arith.constant 0 : index
    %407 = vector.load %arg16[%c9_381, %c0_382] : memref<36x224xf32, #tpu.memory_space<vmem>>, vector<1x224xf32>
    %408 = arith.maximumf %406, %407 : vector<1x224xf32>
    %409 = arith.addf %408, %377 : vector<1x224xf32>
    %cst_383 = arith.constant 0.000000e+00 : f32
    %410 = vector.broadcast %cst_383 : f32 to vector<1x224xf32>
    %411 = arith.maximumf %409, %410 : vector<1x224xf32>
    %c0_384 = arith.constant 0 : index
    %c896 = arith.constant 896 : index
    %412 = vector.load %arg17[%c0_384, %c896] : memref<2x1568xf32, #tpu.memory_space<vmem>>, vector<1x224xf32>
    tpu.vector_store %arg17[%c0_384, %c896], %411 {strides = array<i32>} : memref<2x1568xf32, #tpu.memory_space<vmem>>, vector<1x224xf32>,
    %c10_385 = arith.constant 10 : index
    %c0_386 = arith.constant 0 : index
    %413 = vector.load %arg16[%c10_385, %c0_386] : memref<36x224xf32, #tpu.memory_space<vmem>>, vector<1x224xf32>
    %c11_387 = arith.constant 11 : index
    %c0_388 = arith.constant 0 : index
    %414 = vector.load %arg16[%c11_387, %c0_388] : memref<36x224xf32, #tpu.memory_space<vmem>>, vector<1x224xf32>
    %415 = arith.maximumf %413, %414 : vector<1x224xf32>
    %416 = arith.addf %415, %377 : vector<1x224xf32>
    %cst_389 = arith.constant 0.000000e+00 : f32
    %417 = vector.broadcast %cst_389 : f32 to vector<1x224xf32>
    %418 = arith.maximumf %416, %417 : vector<1x224xf32>
    %c0_390 = arith.constant 0 : index
    %c1120 = arith.constant 1120 : index
    %419 = vector.load %arg17[%c0_390, %c1120] : memref<2x1568xf32, #tpu.memory_space<vmem>>, vector<1x224xf32>
    tpu.vector_store %arg17[%c0_390, %c1120], %418 {strides = array<i32>} : memref<2x1568xf32, #tpu.memory_space<vmem>>, vector<1x224xf32>,
    %c12_391 = arith.constant 12 : index
    %c0_392 = arith.constant 0 : index
    %420 = vector.load %arg16[%c12_391, %c0_392] : memref<36x224xf32, #tpu.memory_space<vmem>>, vector<1x224xf32>
    %c13_393 = arith.constant 13 : index
    %c0_394 = arith.constant 0 : index
    %421 = vector.load %arg16[%c13_393, %c0_394] : memref<36x224xf32, #tpu.memory_space<vmem>>, vector<1x224xf32>
    %422 = arith.maximumf %420, %421 : vector<1x224xf32>
    %423 = arith.addf %422, %377 : vector<1x224xf32>
    %cst_395 = arith.constant 0.000000e+00 : f32
    %424 = vector.broadcast %cst_395 : f32 to vector<1x224xf32>
    %425 = arith.maximumf %423, %424 : vector<1x224xf32>
    %c0_396 = arith.constant 0 : index
    %c1344 = arith.constant 1344 : index
    %426 = vector.load %arg17[%c0_396, %c1344] : memref<2x1568xf32, #tpu.memory_space<vmem>>, vector<1x224xf32>
    tpu.vector_store %arg17[%c0_396, %c1344], %425 {strides = array<i32>} : memref<2x1568xf32, #tpu.memory_space<vmem>>, vector<1x224xf32>,
    %c18_397 = arith.constant 18 : index
    %c0_398 = arith.constant 0 : index
    %427 = vector.load %arg16[%c18_397, %c0_398] : memref<36x224xf32, #tpu.memory_space<vmem>>, vector<1x224xf32>
    %c19_399 = arith.constant 19 : index
    %c0_400 = arith.constant 0 : index
    %428 = vector.load %arg16[%c19_399, %c0_400] : memref<36x224xf32, #tpu.memory_space<vmem>>, vector<1x224xf32>
    %429 = arith.maximumf %427, %428 : vector<1x224xf32>
    %430 = arith.addf %429, %377 : vector<1x224xf32>
    %cst_401 = arith.constant 0.000000e+00 : f32
    %431 = vector.broadcast %cst_401 : f32 to vector<1x224xf32>
    %432 = arith.maximumf %430, %431 : vector<1x224xf32>
    %c1_402 = arith.constant 1 : index
    %c0_403 = arith.constant 0 : index
    %433 = vector.load %arg17[%c1_402, %c0_403] : memref<2x1568xf32, #tpu.memory_space<vmem>>, vector<1x224xf32>
    tpu.vector_store %arg17[%c1_402, %c0_403], %432 {strides = array<i32>} : memref<2x1568xf32, #tpu.memory_space<vmem>>, vector<1x224xf32>,
    %c20_404 = arith.constant 20 : index
    %c0_405 = arith.constant 0 : index
    %434 = vector.load %arg16[%c20_404, %c0_405] : memref<36x224xf32, #tpu.memory_space<vmem>>, vector<1x224xf32>
    %c21_406 = arith.constant 21 : index
    %c0_407 = arith.constant 0 : index
    %435 = vector.load %arg16[%c21_406, %c0_407] : memref<36x224xf32, #tpu.memory_space<vmem>>, vector<1x224xf32>
    %436 = arith.maximumf %434, %435 : vector<1x224xf32>
    %437 = arith.addf %436, %377 : vector<1x224xf32>
    %cst_408 = arith.constant 0.000000e+00 : f32
    %438 = vector.broadcast %cst_408 : f32 to vector<1x224xf32>
    %439 = arith.maximumf %437, %438 : vector<1x224xf32>
    %c1_409 = arith.constant 1 : index
    %c224_410 = arith.constant 224 : index
    %440 = vector.load %arg17[%c1_409, %c224_410] : memref<2x1568xf32, #tpu.memory_space<vmem>>, vector<1x224xf32>
    tpu.vector_store %arg17[%c1_409, %c224_410], %439 {strides = array<i32>} : memref<2x1568xf32, #tpu.memory_space<vmem>>, vector<1x224xf32>,
    %c22_411 = arith.constant 22 : index
    %c0_412 = arith.constant 0 : index
    %441 = vector.load %arg16[%c22_411, %c0_412] : memref<36x224xf32, #tpu.memory_space<vmem>>, vector<1x224xf32>
    %c23_413 = arith.constant 23 : index
    %c0_414 = arith.constant 0 : index
    %442 = vector.load %arg16[%c23_413, %c0_414] : memref<36x224xf32, #tpu.memory_space<vmem>>, vector<1x224xf32>
    %443 = arith.maximumf %441, %442 : vector<1x224xf32>
    %444 = arith.addf %443, %377 : vector<1x224xf32>
    %cst_415 = arith.constant 0.000000e+00 : f32
    %445 = vector.broadcast %cst_415 : f32 to vector<1x224xf32>
    %446 = arith.maximumf %444, %445 : vector<1x224xf32>
    %c1_416 = arith.constant 1 : index
    %c448_417 = arith.constant 448 : index
    %447 = vector.load %arg17[%c1_416, %c448_417] : memref<2x1568xf32, #tpu.memory_space<vmem>>, vector<1x224xf32>
    tpu.vector_store %arg17[%c1_416, %c448_417], %446 {strides = array<i32>} : memref<2x1568xf32, #tpu.memory_space<vmem>>, vector<1x224xf32>,
    %c24_418 = arith.constant 24 : index
    %c0_419 = arith.constant 0 : index
    %448 = vector.load %arg16[%c24_418, %c0_419] : memref<36x224xf32, #tpu.memory_space<vmem>>, vector<1x224xf32>
    %c25_420 = arith.constant 25 : index
    %c0_421 = arith.constant 0 : index
    %449 = vector.load %arg16[%c25_420, %c0_421] : memref<36x224xf32, #tpu.memory_space<vmem>>, vector<1x224xf32>
    %450 = arith.maximumf %448, %449 : vector<1x224xf32>
    %451 = arith.addf %450, %377 : vector<1x224xf32>
    %cst_422 = arith.constant 0.000000e+00 : f32
    %452 = vector.broadcast %cst_422 : f32 to vector<1x224xf32>
    %453 = arith.maximumf %451, %452 : vector<1x224xf32>
    %c1_423 = arith.constant 1 : index
    %c672_424 = arith.constant 672 : index
    %454 = vector.load %arg17[%c1_423, %c672_424] : memref<2x1568xf32, #tpu.memory_space<vmem>>, vector<1x224xf32>
    tpu.vector_store %arg17[%c1_423, %c672_424], %453 {strides = array<i32>} : memref<2x1568xf32, #tpu.memory_space<vmem>>, vector<1x224xf32>,
    %c26_425 = arith.constant 26 : index
    %c0_426 = arith.constant 0 : index
    %455 = vector.load %arg16[%c26_425, %c0_426] : memref<36x224xf32, #tpu.memory_space<vmem>>, vector<1x224xf32>
    %c27_427 = arith.constant 27 : index
    %c0_428 = arith.constant 0 : index
    %456 = vector.load %arg16[%c27_427, %c0_428] : memref<36x224xf32, #tpu.memory_space<vmem>>, vector<1x224xf32>
    %457 = arith.maximumf %455, %456 : vector<1x224xf32>
    %458 = arith.addf %457, %377 : vector<1x224xf32>
    %cst_429 = arith.constant 0.000000e+00 : f32
    %459 = vector.broadcast %cst_429 : f32 to vector<1x224xf32>
    %460 = arith.maximumf %458, %459 : vector<1x224xf32>
    %c1_430 = arith.constant 1 : index
    %c896_431 = arith.constant 896 : index
    %461 = vector.load %arg17[%c1_430, %c896_431] : memref<2x1568xf32, #tpu.memory_space<vmem>>, vector<1x224xf32>
    tpu.vector_store %arg17[%c1_430, %c896_431], %460 {strides = array<i32>} : memref<2x1568xf32, #tpu.memory_space<vmem>>, vector<1x224xf32>,
    %c28_432 = arith.constant 28 : index
    %c0_433 = arith.constant 0 : index
    %462 = vector.load %arg16[%c28_432, %c0_433] : memref<36x224xf32, #tpu.memory_space<vmem>>, vector<1x224xf32>
    %c29_434 = arith.constant 29 : index
    %c0_435 = arith.constant 0 : index
    %463 = vector.load %arg16[%c29_434, %c0_435] : memref<36x224xf32, #tpu.memory_space<vmem>>, vector<1x224xf32>
    %464 = arith.maximumf %462, %463 : vector<1x224xf32>
    %465 = arith.addf %464, %377 : vector<1x224xf32>
    %cst_436 = arith.constant 0.000000e+00 : f32
    %466 = vector.broadcast %cst_436 : f32 to vector<1x224xf32>
    %467 = arith.maximumf %465, %466 : vector<1x224xf32>
    %c1_437 = arith.constant 1 : index
    %c1120_438 = arith.constant 1120 : index
    %468 = vector.load %arg17[%c1_437, %c1120_438] : memref<2x1568xf32, #tpu.memory_space<vmem>>, vector<1x224xf32>
    tpu.vector_store %arg17[%c1_437, %c1120_438], %467 {strides = array<i32>} : memref<2x1568xf32, #tpu.memory_space<vmem>>, vector<1x224xf32>,
    %c30_439 = arith.constant 30 : index
    %c0_440 = arith.constant 0 : index
    %469 = vector.load %arg16[%c30_439, %c0_440] : memref<36x224xf32, #tpu.memory_space<vmem>>, vector<1x224xf32>
    %c31_441 = arith.constant 31 : index
    %c0_442 = arith.constant 0 : index
    %470 = vector.load %arg16[%c31_441, %c0_442] : memref<36x224xf32, #tpu.memory_space<vmem>>, vector<1x224xf32>
    %471 = arith.maximumf %469, %470 : vector<1x224xf32>
    %472 = arith.addf %471, %377 : vector<1x224xf32>
    %cst_443 = arith.constant 0.000000e+00 : f32
    %473 = vector.broadcast %cst_443 : f32 to vector<1x224xf32>
    %474 = arith.maximumf %472, %473 : vector<1x224xf32>
    %c1_444 = arith.constant 1 : index
    %c1344_445 = arith.constant 1344 : index
    %475 = vector.load %arg17[%c1_444, %c1344_445] : memref<2x1568xf32, #tpu.memory_space<vmem>>, vector<1x224xf32>
    tpu.vector_store %arg17[%c1_444, %c1344_445], %474 {strides = array<i32>} : memref<2x1568xf32, #tpu.memory_space<vmem>>, vector<1x224xf32>,
    %c0_446 = arith.constant 0 : index
    %c0_447 = arith.constant 0 : index
    %476 = vector.load %arg17[%c0_446, %c0_447] : memref<2x1568xf32, #tpu.memory_space<vmem>>, vector<2x1568xf32>
    %477 = arith.truncf %476 : vector<2x1568xf32> to vector<2x1568xbf16>
    %c0_448 = arith.constant 0 : index
    %c0_449 = arith.constant 0 : index
    %478 = vector.load %arg6[%c0_448, %c0_449] : memref<1568x512xbf16, #tpu.memory_space<vmem>>, vector<1568x512xbf16>
    %cst_450 = arith.constant dense<0.000000e+00> : vector<2x512xf32>
    %479 = tpu.matmul %477, %478, %cst_450 {dimension_numbers = #tpu.dot_dimension_numbers<[1], [0], [0], [1], [0, 0, 1, 1], [], []>} : vector<2x1568xbf16>, vector<1568x512xbf16>, vector<2x512xf32> -> vector<2x512xf32>
    %c0_451 = arith.constant 0 : index
    %c0_452 = arith.constant 0 : index
    %480 = vector.load %arg7[%c0_451, %c0_452] : memref<1x512xf32, #tpu.memory_space<vmem>>, vector<1x512xf32>
    %481 = vector.broadcast %480 : vector<1x512xf32> to vector<2x512xf32>
    %482 = arith.addf %479, %481 : vector<2x512xf32>
    %cst_453 = arith.constant 0.000000e+00 : f32
    %483 = vector.broadcast %cst_453 : f32 to vector<2x512xf32>
    %484 = arith.maximumf %482, %483 : vector<2x512xf32>
    %485 = arith.truncf %484 : vector<2x512xf32> to vector<2x512xbf16>
    %c0_454 = arith.constant 0 : index
    %c0_455 = arith.constant 0 : index
    %486 = vector.load %arg8[%c0_454, %c0_455] : memref<512x10xbf16, #tpu.memory_space<vmem>>, vector<512x10xbf16>
    %cst_456 = arith.constant dense<0.000000e+00> : vector<2x10xf32>
    %487 = tpu.matmul %485, %486, %cst_456 {dimension_numbers = #tpu.dot_dimension_numbers<[1], [0], [0], [1], [0, 0, 1, 1], [], []>} : vector<2x512xbf16>, vector<512x10xbf16>, vector<2x10xf32> -> vector<2x10xf32>
    %c0_457 = arith.constant 0 : index
    %c0_458 = arith.constant 0 : index
    %488 = vector.load %arg9[%c0_457, %c0_458] : memref<1x10xf32, #tpu.memory_space<vmem>>, vector<1x10xf32>
    %489 = vector.broadcast %488 : vector<1x10xf32> to vector<2x10xf32>
    %490 = arith.addf %487, %489 : vector<2x10xf32>
    %c0_459 = arith.constant 0 : index
    %c0_460 = arith.constant 0 : index
    %491 = vector.load %arg10[%c0_459, %c0_460] : memref<2x10xf32, #tpu.memory_space<vmem>>, vector<2x10xf32>
    tpu.vector_store %arg10[%c0_459, %c0_460], %490 {strides = array<i32>} : memref<2x10xf32, #tpu.memory_space<vmem>>, vector<2x10xf32>,
    return
  }
  func.func @transform_0(%arg0: i32) -> (i32, i32, i32) {
    %c0_i32 = arith.constant 0 : i32
    %c0_i32_0 = arith.constant 0 : i32
    %c0_i32_1 = arith.constant 0 : i32
    return %arg0, %c0_i32, %c0_i32_0 : i32, i32, i32
  }
  func.func @transform_1(%arg0: i32) -> (i32, i32, i32) {
    %c0_i32 = arith.constant 0 : i32
    %c0_i32_0 = arith.constant 0 : i32
    %c0_i32_1 = arith.constant 0 : i32
    %c0_i32_2 = arith.constant 0 : i32
    return %c0_i32, %c0_i32_0, %c0_i32_1 : i32, i32, i32
  }
  func.func @transform_2(%arg0: i32) -> (i32, i32, i32) {
    %c0_i32 = arith.constant 0 : i32
    %c0_i32_0 = arith.constant 0 : i32
    %c0_i32_1 = arith.constant 0 : i32
    %c0_i32_2 = arith.constant 0 : i32
    return %c0_i32, %c0_i32_0, %c0_i32_1 : i32, i32, i32
  }
  func.func @transform_3(%arg0: i32) -> (i32, i32) {
    %c0_i32 = arith.constant 0 : i32
    %c0_i32_0 = arith.constant 0 : i32
    %c0_i32_1 = arith.constant 0 : i32
    return %c0_i32, %c0_i32_0 : i32, i32
  }
  func.func @transform_4(%arg0: i32) -> (i32, i32) {
    %c0_i32 = arith.constant 0 : i32
    %c0_i32_0 = arith.constant 0 : i32
    %c0_i32_1 = arith.constant 0 : i32
    return %c0_i32, %c0_i32_0 : i32, i32
  }
  func.func @transform_5(%arg0: i32) -> (i32, i32) {
    %c0_i32 = arith.constant 0 : i32
    %c0_i32_0 = arith.constant 0 : i32
    %c0_i32_1 = arith.constant 0 : i32
    return %c0_i32, %c0_i32_0 : i32, i32
  }
  func.func @transform_6(%arg0: i32) -> (i32, i32) {
    %c0_i32 = arith.constant 0 : i32
    %c0_i32_0 = arith.constant 0 : i32
    %c0_i32_1 = arith.constant 0 : i32
    return %c0_i32, %c0_i32_0 : i32, i32
  }
  func.func @transform_7(%arg0: i32) -> (i32, i32) {
    %c0_i32 = arith.constant 0 : i32
    %c0_i32_0 = arith.constant 0 : i32
    %c0_i32_1 = arith.constant 0 : i32
    return %c0_i32, %c0_i32_0 : i32, i32
  }
  func.func @transform_8(%arg0: i32) -> (i32, i32) {
    %c0_i32 = arith.constant 0 : i32
    %c0_i32_0 = arith.constant 0 : i32
    %c0_i32_1 = arith.constant 0 : i32
    return %c0_i32, %c0_i32_0 : i32, i32
  }
  func.func @transform_9(%arg0: i32) -> (i32, i32) {
    %c0_i32 = arith.constant 0 : i32
    %c0_i32_0 = arith.constant 0 : i32
    return %arg0, %c0_i32 : i32, i32
  }
}

</mosaic_0001>

<llo_original>
// kernel: tile.13
$region0: #{tile.13}
  #allocation0 [shape = 's32[1]{0}', space=sflag, size = 0x4, scoped, tag = 'scoped memory for tile.13']
  %s0 = inlined_call_operand.vmem [shape: f32[16], index: 0, kind: input, shape index: {}]
  %s1 = inlined_call_operand.vmem [shape: f32[14,16], index: 1, kind: output, shape index: {}]
  // Predicated region
  $region2: #{tile.13} parent=0 // pred_check
    _
  $region3: #{tile.13} parent=0 // pred_check_branch
    %3 = sbr.rel (0) target = $region5
  $region4: #{tile.13} parent=0 // pred_region
    _
  $region5: #{tile.13} parent=0 // pred_fallthru
    _
  %v4 = vld [vmem:[%s0] ss:$0 sm:$0xff]
  %5 = vst [vmem:[%s1] sm:$0xff] %v4
  %s6 = scalar_lea.vmem %s1, 8
  %7 = vst [vmem:[%s6] sm:$0xff] %v4

// kernel: tile.14
$region0: #{tile.14}
  %s0 = inlined_call_operand.vmem [shape: f32[14,16], index: 0, kind: input, shape index: {}]
  %s1 = inlined_call_operand.vmem [shape: f32[1,224], index: 1, kind: output, shape index: {}]
  $region1: #{tile.14} parent=0
    #allocation0 [shape = 'u8[8192]{0}', space=vmem, size = 0x2000, scoped, tag = 'scoped mem for output reshape']
    %s2 = smov 3
    %v3 = vld [vmem:[%s0] ss:$8 sm:%s2]
    %vm4 = vcmask 130048
    %5 = vst.msk [vmem:[#allocation0] ss:$8 sm:$0x3] %vm4, %v3
    %s6 = scalar_lea.vmem %s0, 7
    %v7 = vld [vmem:[%s6] sm:$0x1]
    %8 = vrot.lane.b32.xlu0 %v7, 112
    %v9 = vpop.permute.xlu0 %8
    %vm10 = vcmask 1048448
    %11 = vst.msk [vmem:[#allocation0] sm:$0x1] %vm10, %v9
    %s12 = scalar_lea.vmem %s0, 6
    %v13 = vld [vmem:[%s12] sm:$0x1]
    %14 = vrot.lane.b32.xlu0 %v13, 96
    %v15 = vpop.permute.xlu0 %14
    %vm16 = vcmask 917248
    %17 = vst.msk [vmem:[#allocation0] sm:$0x1] %vm16, %v15
    %s18 = scalar_lea.vmem %s0, 5
    %s19 = smov 3
    %v20 = vld [vmem:[%s18] ss:$8 sm:%s19]
    %21 = vrot.lane.b32.xlu0 %v20, 80
    %v22 = vpop.permute.xlu0 %21
    %vm23 = vcmask 786048
    %24 = vst.msk [vmem:[#allocation0] ss:$8 sm:$0x3] %vm23, %v22
    %s25 = scalar_lea.vmem %s0, 4
    %s26 = smov 3
    %v27 = vld [vmem:[%s25] ss:$8 sm:%s26]
    %28 = vrot.lane.b32.xlu0 %v27, 64
    %v29 = vpop.permute.xlu0 %28
    %vm30 = vcmask 654848
    %31 = vst.msk [vmem:[#allocation0] ss:$8 sm:$0x3] %vm30, %v29
    %s32 = scalar_lea.vmem %s0, 3
    %s33 = smov 3
    %v34 = vld [vmem:[%s32] ss:$8 sm:%s33]
    %35 = vrot.lane.b32.xlu0 %v34, 48
    %v36 = vpop.permute.xlu0 %35
    %vm37 = vcmask 523648
    %38 = vst.msk [vmem:[#allocation0] ss:$8 sm:$0x3] %vm37, %v36
    %s39 = scalar_lea.vmem %s0, 2
    %s40 = smov 3
    %v41 = vld [vmem:[%s39] ss:$8 sm:%s40]
    %42 = vrot.lane.b32.xlu0 %v41, 32
    %v43 = vpop.permute.xlu0 %42
    %vm44 = vcmask 392448
    %45 = vst.msk [vmem:[#allocation0] ss:$8 sm:$0x3] %vm44, %v43
    %s46 = scalar_lea.vmem %s0, 1
    %s47 = smov 3
    %v48 = vld [vmem:[%s46] ss:$8 sm:%s47]
    %49 = vrot.lane.b32.xlu0 %v48, 16
    %v50 = vpop.permute.xlu0 %49
    %vm51 = vcmask 261248
    %52 = vst.msk [vmem:[#allocation0] ss:$8 sm:$0x3] %vm51, %v50
    %s54 = ssub.s32 2, 1
    %v55 = vld [vmem:[#allocation0] sm:%s54]
    %s57 = ssub.s32 2, 1
    %58 = vst [vmem:[%s1] sm:%s57] %v55
    %s59 = scalar_lea.vmem [#allocation0], 8
    %v60 = vld [vmem:[%s59] sm:%s54]
    %s62 = ssub.s32 2, 1
    %s63 = scalar_lea.vmem %s1, 1
    %64 = vst [vmem:[%s63] sm:%s62] %v60

// kernel: tile.18
$region0: #{tile.18}
  #allocation0 [shape = 's32[1]{0}', space=sflag, size = 0x4, scoped, tag = 'scoped memory for tile.18']
  %s0 = inlined_call_operand.vmem [shape: f32[32], index: 0, kind: input, shape index: {}]
  %s1 = inlined_call_operand.vmem [shape: f32[7,32], index: 1, kind: output, shape index: {}]
  // Predicated region
  $region2: #{tile.18} parent=0 // pred_check
    _
  $region3: #{tile.18} parent=0 // pred_check_branch
    %3 = sbr.rel (0) target = $region5
  $region4: #{tile.18} parent=0 // pred_region
    _
  $region5: #{tile.18} parent=0 // pred_fallthru
    _
  %v4 = vld [vmem:[%s0] ss:$0 sm:$0xff]
  %5 = vst [vmem:[%s1] sm:$0xff] %v4

// kernel: tile.19
$region0: #{tile.19}
  %s0 = inlined_call_operand.vmem [shape: f32[7,32], index: 0, kind: input, shape index: {}]
  %s1 = inlined_call_operand.vmem [shape: f32[1,224], index: 1, kind: output, shape index: {}]
  $region1: #{tile.19} parent=0
    #allocation0 [shape = 'u8[8192]{0}', space=vmem, size = 0x2000, scoped, tag = 'scoped mem for output reshape']
    %s2 = smov 3
    %v3 = vld [vmem:[%s0] ss:$4 sm:%s2]
    %vm4 = vcmask 261120
    %5 = vst.msk [vmem:[#allocation0] ss:$8 sm:$0x3] %vm4, %v3
    %s6 = scalar_lea.vmem %s0, 3
    %v7 = vld [vmem:[%s6] sm:$0x1]
    %8 = vrot.lane.b32.xlu0 %v7, 96
    %v9 = vpop.permute.xlu0 %8
    %vm10 = vcmask 1048320
    %11 = vst.msk [vmem:[#allocation0] sm:$0x1] %vm10, %v9
    %s12 = scalar_lea.vmem %s0, 2
    %s13 = smov 3
    %v14 = vld [vmem:[%s12] ss:$4 sm:%s13]
    %15 = vrot.lane.b32.xlu0 %v14, 64
    %v16 = vpop.permute.xlu0 %15
    %vm17 = vcmask 785920
    %18 = vst.msk [vmem:[#allocation0] ss:$8 sm:$0x3] %vm17, %v16
    %s19 = scalar_lea.vmem %s0, 1
    %s20 = smov 3
    %v21 = vld [vmem:[%s19] ss:$4 sm:%s20]
    %22 = vrot.lane.b32.xlu0 %v21, 32
    %v23 = vpop.permute.xlu0 %22
    %vm24 = vcmask 523520
    %25 = vst.msk [vmem:[#allocation0] ss:$8 sm:$0x3] %vm24, %v23
    %s27 = ssub.s32 2, 1
    %v28 = vld [vmem:[#allocation0] sm:%s27]
    %s30 = ssub.s32 2, 1
    %31 = vst [vmem:[%s1] sm:%s30] %v28
    %s32 = scalar_lea.vmem [#allocation0], 8
    %v33 = vld [vmem:[%s32] sm:%s27]
    %s35 = ssub.s32 2, 1
    %s36 = scalar_lea.vmem %s1, 1
    %37 = vst [vmem:[%s36] sm:%s35] %v33

// kernel: convnet_forward.1
$region0: #{convnet_forward.1}
  #allocation0 [shape = 'u32[]', space=smem, size = 0x4, offset = 0x4, fixed_abs, tag = 'smem constant byte address 0x4 - core index']
  #allocation1 [shape = 'u32[72,128]{1,0:T(1,128)}', space=vmem, size = 0x9000, scoped, tag = 'internal scratch']
  #allocation2 [shape = 'f32[72,32]{1,0:T(8,128)}', space=vmem, size = 0x9000, scoped, tag = 'scratch operand']
  #allocation3 [shape = 'f32[64,448]{1,0:T(8,128)}', space=vmem, size = 0x20000, scoped, tag = 'scratch operand']
  #allocation4 [shape = 'f32[64,224]{1,0:T(8,128)}', space=vmem, size = 0x10000, scoped, tag = 'scratch operand']
  #allocation5 [shape = 'f32[44,288]{1,0:T(8,128)}', space=vmem, size = 0x12000, scoped, tag = 'scratch operand']
  #allocation6 [shape = 'f32[36,448]{1,0:T(8,128)}', space=vmem, size = 0x14000, scoped, tag = 'scratch operand']
  #allocation7 [shape = 'f32[36,224]{1,0:T(8,128)}', space=vmem, size = 0xa000, scoped, tag = 'scratch operand']
  #allocation8 [shape = 'f32[2,1568]{1,0:T(2,128)}', space=vmem, size = 0x3400, scoped, tag = 'scratch operand']
  %s0 = inlined_call_operand.vmem [shape: f32[2,28,28], index: 0, kind: input, shape index: {}]
  %s1 = inlined_call_operand.vmem [shape: bf16[5,32,448], index: 1, kind: input, shape index: {}]
  %s2 = inlined_call_operand.vmem [shape: bf16[5,288,448], index: 2, kind: input, shape index: {}]
  %s3 = inlined_call_operand.vmem [shape: f32[1,224], index: 3, kind: input, shape index: {}]
  %s4 = inlined_call_operand.vmem [shape: f32[1,224], index: 4, kind: input, shape index: {}]
  %s5 = inlined_call_operand.vmem [shape: bf16[1568,512], index: 5, kind: input, shape index: {}]
  %s6 = inlined_call_operand.vmem [shape: f32[1,512], index: 6, kind: input, shape index: {}]
  %s7 = inlined_call_operand.vmem [shape: bf16[512,10], index: 7, kind: input, shape index: {}]
  %s8 = inlined_call_operand.vmem [shape: f32[1,10], index: 8, kind: input, shape index: {}]
  %s9 = inlined_call_operand.hbm [shape: f32[2,10], index: 9, kind: output, shape index: {}]
  %s10 = sld [smem:[#allocation0]]
  $region46: #{convnet_forward.1} parent=0
    _
  %s12 = ssub.s32 1, %s10
  %s13 = scalar_select 0, %s12, %s10
  $region1: #{convnet_forward.1} parent=0
    #allocation9 [shape = 'u8[1024]{0}', space=vmem, size = 0x400, scoped, tag = 'output window, operand 0, single buffered']
    #allocation10 [shape = 's32[1]{0}', space=sflag, size = 0x4, scoped, tag = 'scoped memory for convnet_forward.1']
    %14 = vsyncpa [#allocation10], 0
    // Predicated region
    $region2: #{convnet_forward.1} parent=1 // pred_check
      _
    $region3: #{convnet_forward.1} parent=1 // pred_check_branch
      %16 = sbr.rel (0) target = $region5
    $region4: #{convnet_forward.1} parent=1 // pred_region
      _
    $region5: #{convnet_forward.1} parent=1 // pred_fallthru
      _
    // Predicated region
    $region6: #{convnet_forward.1} parent=1 // pred_check
      _
    $region7: #{convnet_forward.1} parent=1 // pred_check_branch
      %18 = sbr.rel (0) target = $region9
    $region8: #{convnet_forward.1} parent=1 // pred_region
      _
    $region9: #{convnet_forward.1} parent=1 // pred_fallthru
      _
    // Predicated region
    $region10: #{convnet_forward.1} parent=1 // pred_check
      _
    $region11: #{convnet_forward.1} parent=1 // pred_check_branch
      %20 = sbr.rel (0) target = $region13
    $region12: #{convnet_forward.1} parent=1 // pred_region
      _
    $region13: #{convnet_forward.1} parent=1 // pred_fallthru
      _
    // Predicated region
    $region14: #{convnet_forward.1} parent=1 // pred_check
      _
    $region15: #{convnet_forward.1} parent=1 // pred_check_branch
      %22 = sbr.rel (0) target = $region17
    $region16: #{convnet_forward.1} parent=1 // pred_region
      _
    $region17: #{convnet_forward.1} parent=1 // pred_fallthru
      _
    // Predicated region
    $region18: #{convnet_forward.1} parent=1 // pred_check
      _
    $region19: #{convnet_forward.1} parent=1 // pred_check_branch
      %24 = sbr.rel (0) target = $region21
    $region20: #{convnet_forward.1} parent=1 // pred_region
      _
    $region21: #{convnet_forward.1} parent=1 // pred_fallthru
      _
    // Predicated region
    $region22: #{convnet_forward.1} parent=1 // pred_check
      _
    $region23: #{convnet_forward.1} parent=1 // pred_check_branch
      %26 = sbr.rel (0) target = $region25
    $region24: #{convnet_forward.1} parent=1 // pred_region
      _
    $region25: #{convnet_forward.1} parent=1 // pred_fallthru
      _
    // Predicated region
    $region26: #{convnet_forward.1} parent=1 // pred_check
      _
    $region27: #{convnet_forward.1} parent=1 // pred_check_branch
      %28 = sbr.rel (0) target = $region29
    $region28: #{convnet_forward.1} parent=1 // pred_region
      _
    $region29: #{convnet_forward.1} parent=1 // pred_fallthru
      _
    // Predicated region
    $region30: #{convnet_forward.1} parent=1 // pred_check
      _
    $region31: #{convnet_forward.1} parent=1 // pred_check_branch
      %30 = sbr.rel (0) target = $region33
    $region32: #{convnet_forward.1} parent=1 // pred_region
      _
    $region33: #{convnet_forward.1} parent=1 // pred_fallthru
      _
    // Predicated region
    $region34: #{convnet_forward.1} parent=1 // pred_check
      _
    $region35: #{convnet_forward.1} parent=1 // pred_check_branch
      %32 = sbr.rel (0) target = $region37
    $region36: #{convnet_forward.1} parent=1 // pred_region
      _
    $region37: #{convnet_forward.1} parent=1 // pred_fallthru
      _
    %vm34 = vcmask 261120
    %35 = vst.msk [vmem:[#allocation2] sm:$0xff] %vm34, 0.0
    %36 = vst.msk [vmem:[#allocation2 + $0x8] sm:$0xff] %vm34, 0.0
    %37 = vst.msk [vmem:[#allocation2 + $0x10] sm:$0xff] %vm34, 0.0
    %38 = vst.msk [vmem:[#allocation2 + $0x18] sm:$0xff] %vm34, 0.0
    %39 = vst.msk [vmem:[#allocation2 + $0x20] sm:$0xff] %vm34, 0.0
    %40 = vst.msk [vmem:[#allocation2 + $0x28] sm:$0xff] %vm34, 0.0
    %41 = vst.msk [vmem:[#allocation2 + $0x30] sm:$0xff] %vm34, 0.0
    %42 = vst.msk [vmem:[#allocation2 + $0x38] sm:$0xff] %vm34, 0.0
    %43 = vst.msk [vmem:[#allocation2 + $0x40] sm:$0xff] %vm34, 0.0
    %v44 = vld [vmem:[%s0] sm:$0xff]
    %v45 = vld [vmem:[%s0 + $0x8] sm:$0xff]
    %v46 = vld [vmem:[%s0 + $0x10] sm:$0xff]
    %v47 = vld [vmem:[%s0 + $0x18] sm:$0xf]
    %52 = vrot.lane.b32.xlu0 %v44, 2
    %v53 = vpop.permute.xlu0 %52
    %54 = vrot.lane.b32.xlu0 %v45, 2
    %v55 = vpop.permute.xlu0 %54
    %56 = vrot.lane.b32.xlu0 %v46, 2
    %v57 = vpop.permute.xlu0 %56
    %58 = vrot.lane.b32.xlu0 %v47, 2
    %v59 = vpop.permute.xlu0 %58
    %vm64 = vcmask 244752
    %65 = vst.msk [vmem:[#allocation2 + $0x2] sm:$0xff] %vm64, %v53
    %66 = vst.msk [vmem:[#allocation2 + $0xa] sm:$0xff] %vm64, %v55
    %67 = vst.msk [vmem:[#allocation2 + $0x12] sm:$0xff] %vm64, %v57
    %vm68 = vcmask 240656
    %69 = vst.msk [vmem:[#allocation2 + $0x1a] sm:$0xf] %vm68, %v59
    %s70 = scalar_lea.vmem %s0, 32
    %v71 = vld [vmem:[%s70] sm:$0xff]
    %v72 = vld [vmem:[%s70 + $0x8] sm:$0xff]
    %v73 = vld [vmem:[%s70 + $0x10] sm:$0xff]
    %v74 = vld [vmem:[%s70 + $0x18] sm:$0xf]
    %79 = vrot.lane.b32.xlu0 %v71, 2
    %v80 = vpop.permute.xlu0 %79
    %81 = vrot.lane.b32.xlu0 %v72, 2
    %v82 = vpop.permute.xlu0 %81
    %83 = vrot.lane.b32.xlu0 %v73, 2
    %v84 = vpop.permute.xlu0 %83
    %85 = vrot.lane.b32.xlu0 %v74, 2
    %v86 = vpop.permute.xlu0 %85
    %91 = vst.msk [vmem:[#allocation2 + $0x22] sm:$0xff] %vm64, %v80
    %92 = vst.msk [vmem:[#allocation2 + $0x2a] sm:$0xff] %vm64, %v82
    %93 = vst.msk [vmem:[#allocation2 + $0x32] sm:$0xff] %vm64, %v84
    %94 = vst.msk [vmem:[#allocation2 + $0x3a] sm:$0xf] %vm68, %v86
    %v95 = vld [vmem:[#allocation2] sm:$0xff]
    %v96 = vld [vmem:[#allocation2 + $0x8] sm:$0xff]
    %v97 = vld [vmem:[#allocation2 + $0x10] sm:$0xff]
    %v98 = vld [vmem:[#allocation2 + $0x18] sm:$0xff]
    %v99 = vld [vmem:[#allocation2 + $0x20] sm:$0xff]
    %v100 = vld [vmem:[#allocation2 + $0x28] sm:$0xff]
    %v101 = vld [vmem:[#allocation2 + $0x30] sm:$0xff]
    %v102 = vld [vmem:[#allocation2 + $0x38] sm:$0xff]
    %v103 = vpack.c.bf16 %v96, %v95
    %v104 = vpack.c.bf16 %v98, %v97
    %v105 = vpack.c.bf16 %v100, %v99
    %v106 = vpack.c.bf16 %v102, %v101
    %v107 = vld [vmem:[%s1] sm:$0xff]
    %v108 = vld [vmem:[%s1 + $0x8] sm:$0xff]
    %v109 = vld [vmem:[%s1 + $0x10] sm:$0xff]
    %v110 = vld [vmem:[%s1 + $0x18] sm:$0xff]
    %v111 = vld [vmem:[%s1 + $0x20] sm:$0xff]
    %v112 = vld [vmem:[%s1 + $0x28] sm:$0xff]
    %v113 = vld [vmem:[%s1 + $0x30] sm:$0xff]
    %v114 = vld [vmem:[%s1 + $0x38] sm:$0xff]
    %v123 = vunpack.c.l.b16 %v107
    %v124 = vunpack.c.h.b16 %v107
    %v125 = vunpack.c.l.b16 %v108
    %v126 = vunpack.c.h.b16 %v108
    %v127 = vunpack.c.l.b16 %v109
    %v128 = vunpack.c.h.b16 %v109
    %v129 = vunpack.c.l.b16 %v110
    %v130 = vunpack.c.h.b16 %v110
    %v131 = vunpack.c.l.b16 %v111
    %v132 = vunpack.c.h.b16 %v111
    %v133 = vunpack.c.l.b16 %v112
    %v134 = vunpack.c.h.b16 %v112
    %v135 = vunpack.c.l.b16 %v113
    %v136 = vunpack.c.h.b16 %v113
    %v137 = vunpack.c.l.b16 %v114
    %v138 = vunpack.c.h.b16 %v114
    %v139 = vpack.c.b16 %v127, %v123
    %v140 = vpack.c.b16 %v128, %v124
    %v141 = vpack.c.b16 %v129, %v125
    %v142 = vpack.c.b16 %v130, %v126
    %v143 = vpack.c.b16 %v135, %v131
    %v144 = vpack.c.b16 %v136, %v132
    %v145 = vpack.c.b16 %v137, %v133
    %v146 = vpack.c.b16 %v138, %v134
    %v156 = vsel %vm34, %v103, 0
    %v159 = vsel %vm34, %v104, 0
    %v162 = vsel %vm34, %v105, 0
    %v165 = vsel %vm34, %v106, 0
    %167 = vmatpush.bf16.msra.mxu0 0
    %168 = vmatpush.bf16.msra.mxu0 0
    %169 = vmatpush.bf16.msra.mxu0 0
    %170 = vmatpush.bf16.msra.mxu0 0
    %171 = vmatpush.bf16.msra.mxu0 0
    %172 = vmatpush.bf16.msra.mxu0 0
    %173 = vmatpush.bf16.msra.mxu0 %v143
    %174 = vmatpush.bf16.msra.mxu0 %v139
    %175 = vmatmul.bf16.gmra.mxu0 %v156
    %v176 = vpop.f32.mrf.mxu0
    %v177 = vadd.f32 0.0, %v176
    %v178 = vpop.f32.mrf.mxu0
    %v179 = vadd.f32 0.0, %v178
    %180 = vmatmul.bf16.gmra.mxu0 %v159
    %v181 = vpop.f32.mrf.mxu0
    %v182 = vadd.f32 0.0, %v181
    %v183 = vpop.f32.mrf.mxu0
    %v184 = vadd.f32 0.0, %v183
    %185 = vmatmul.bf16.gmra.mxu0 %v162
    %v186 = vpop.f32.mrf.mxu0
    %v187 = vadd.f32 0.0, %v186
    %v188 = vpop.f32.mrf.mxu0
    %v189 = vadd.f32 0.0, %v188
    %190 = vmatmul.bf16.gmra.mxu0 %v165
    %v191 = vpop.f32.mrf.mxu0
    %v192 = vadd.f32 0.0, %v191
    %v193 = vpop.f32.mrf.mxu0
    %v194 = vadd.f32 0.0, %v193
    %195 = vdwg.mxu0
    %196 = vmatpush.bf16.msra.mxu0 0
    %197 = vmatpush.bf16.msra.mxu0 0
    %198 = vmatpush.bf16.msra.mxu0 0
    %199 = vmatpush.bf16.msra.mxu0 0
    %200 = vmatpush.bf16.msra.mxu0 0
    %201 = vmatpush.bf16.msra.mxu0 0
    %202 = vmatpush.bf16.msra.mxu0 %v144
    %203 = vmatpush.bf16.msra.mxu0 %v140
    %204 = vmatmul.bf16.gmra.mxu0 %v156
    %v205 = vpop.f32.mrf.mxu0
    %v206 = vadd.f32 0.0, %v205
    %v207 = vpop.f32.mrf.mxu0
    %v208 = vadd.f32 0.0, %v207
    %209 = vmatmul.bf16.gmra.mxu0 %v159
    %v210 = vpop.f32.mrf.mxu0
    %v211 = vadd.f32 0.0, %v210
    %v212 = vpop.f32.mrf.mxu0
    %v213 = vadd.f32 0.0, %v212
    %214 = vmatmul.bf16.gmra.mxu0 %v162
    %v215 = vpop.f32.mrf.mxu0
    %v216 = vadd.f32 0.0, %v215
    %v217 = vpop.f32.mrf.mxu0
    %v218 = vadd.f32 0.0, %v217
    %219 = vmatmul.bf16.gmra.mxu0 %v165
    %v220 = vpop.f32.mrf.mxu0
    %v221 = vadd.f32 0.0, %v220
    %v222 = vpop.f32.mrf.mxu0
    %v223 = vadd.f32 0.0, %v222
    %224 = vdwg.mxu0
    %225 = vmatpush.bf16.msra.mxu0 0
    %226 = vmatpush.bf16.msra.mxu0 0
    %227 = vmatpush.bf16.msra.mxu0 0
    %228 = vmatpush.bf16.msra.mxu0 0
    %229 = vmatpush.bf16.msra.mxu0 0
    %230 = vmatpush.bf16.msra.mxu0 0
    %231 = vmatpush.bf16.msra.mxu0 %v145
    %232 = vmatpush.bf16.msra.mxu0 %v141
    %233 = vmatmul.bf16.gmra.mxu0 %v156
    %v234 = vpop.f32.mrf.mxu0
    %v235 = vadd.f32 0.0, %v234
    %v236 = vpop.f32.mrf.mxu0
    %v237 = vadd.f32 0.0, %v236
    %238 = vmatmul.bf16.gmra.mxu0 %v159
    %v239 = vpop.f32.mrf.mxu0
    %v240 = vadd.f32 0.0, %v239
    %v241 = vpop.f32.mrf.mxu0
    %v242 = vadd.f32 0.0, %v241
    %243 = vmatmul.bf16.gmra.mxu0 %v162
    %v244 = vpop.f32.mrf.mxu0
    %v245 = vadd.f32 0.0, %v244
    %v246 = vpop.f32.mrf.mxu0
    %v247 = vadd.f32 0.0, %v246
    %248 = vmatmul.bf16.gmra.mxu0 %v165
    %v249 = vpop.f32.mrf.mxu0
    %v250 = vadd.f32 0.0, %v249
    %v251 = vpop.f32.mrf.mxu0
    %v252 = vadd.f32 0.0, %v251
    %253 = vdwg.mxu0
    %254 = vmatpush.bf16.msra.mxu0 0
    %255 = vmatpush.bf16.msra.mxu0 0
    %256 = vmatpush.bf16.msra.mxu0 0
    %257 = vmatpush.bf16.msra.mxu0 0
    %258 = vmatpush.bf16.msra.mxu0 0
    %259 = vmatpush.bf16.msra.mxu0 0
    %260 = vmatpush.bf16.msra.mxu0 %v146
    %261 = vmatpush.bf16.msra.mxu0 %v142
    %262 = vmatmul.bf16.gmra.mxu0 %v156
    %v263 = vpop.f32.mrf.mxu0
    %v264 = vadd.f32 0.0, %v263
    %v265 = vpop.f32.mrf.mxu0
    %v266 = vadd.f32 0.0, %v265
    %267 = vmatmul.bf16.gmra.mxu0 %v159
    %v268 = vpop.f32.mrf.mxu0
    %v269 = vadd.f32 0.0, %v268
    %v270 = vpop.f32.mrf.mxu0
    %v271 = vadd.f32 0.0, %v270
    %272 = vmatmul.bf16.gmra.mxu0 %v162
    %v273 = vpop.f32.mrf.mxu0
    %v274 = vadd.f32 0.0, %v273
    %v275 = vpop.f32.mrf.mxu0
    %v276 = vadd.f32 0.0, %v275
    %277 = vmatmul.bf16.gmra.mxu0 %v165
    %v278 = vpop.f32.mrf.mxu0
    %v279 = vadd.f32 0.0, %v278
    %v280 = vpop.f32.mrf.mxu0
    %v281 = vadd.f32 0.0, %v280
    %282 = vdwg.mxu0
    %283 = vst [vmem:[#allocation3] sm:$0xff] %v177
    %284 = vst [vmem:[#allocation3 + $0x8] sm:$0xff] %v206
    %285 = vst [vmem:[#allocation3 + $0x10] sm:$0xff] %v235
    %vm286 = vcmask 523264
    %287 = vst.msk [vmem:[#allocation3 + $0x18] sm:$0xff] %vm286, %v264
    %288 = vst [vmem:[#allocation3 + $0x20] sm:$0xff] %v179
    %289 = vst [vmem:[#allocation3 + $0x28] sm:$0xff] %v208
    %290 = vst [vmem:[#allocation3 + $0x30] sm:$0xff] %v237
    %291 = vst.msk [vmem:[#allocation3 + $0x38] sm:$0xff] %vm286, %v266
    %292 = vst [vmem:[#allocation3 + $0x40] sm:$0xff] %v182
    %293 = vst [vmem:[#allocation3 + $0x48] sm:$0xff] %v211
    %294 = vst [vmem:[#allocation3 + $0x50] sm:$0xff] %v240
    %295 = vst.msk [vmem:[#allocation3 + $0x58] sm:$0xff] %vm286, %v269
    %296 = vst [vmem:[#allocation3 + $0x60] sm:$0xff] %v184
    %297 = vst [vmem:[#allocation3 + $0x68] sm:$0xff] %v213
    %298 = vst [vmem:[#allocation3 + $0x70] sm:$0xff] %v242
    %299 = vst.msk [vmem:[#allocation3 + $0x78] sm:$0xff] %vm286, %v271
    %300 = vst [vmem:[#allocation3 + $0x80] sm:$0xff] %v187
    %301 = vst [vmem:[#allocation3 + $0x88] sm:$0xff] %v216
    %302 = vst [vmem:[#allocation3 + $0x90] sm:$0xff] %v245
    %303 = vst.msk [vmem:[#allocation3 + $0x98] sm:$0xff] %vm286, %v274
    %304 = vst [vmem:[#allocation3 + $0xa0] sm:$0xff] %v189
    %305 = vst [vmem:[#allocation3 + $0xa8] sm:$0xff] %v218
    %306 = vst [vmem:[#allocation3 + $0xb0] sm:$0xff] %v247
    %307 = vst.msk [vmem:[#allocation3 + $0xb8] sm:$0xff] %vm286, %v276
    %308 = vst [vmem:[#allocation3 + $0xc0] sm:$0xff] %v192
    %309 = vst [vmem:[#allocation3 + $0xc8] sm:$0xff] %v221
    %310 = vst [vmem:[#allocation3 + $0xd0] sm:$0xff] %v250
    %311 = vst.msk [vmem:[#allocation3 + $0xd8] sm:$0xff] %vm286, %v279
    %312 = vst [vmem:[#allocation3 + $0xe0] sm:$0xff] %v194
    %313 = vst [vmem:[#allocation3 + $0xe8] sm:$0xff] %v223
    %314 = vst [vmem:[#allocation3 + $0xf0] sm:$0xff] %v252
    %315 = vst.msk [vmem:[#allocation3 + $0xf8] sm:$0xff] %vm286, %v281
    %v316 = vld [vmem:[#allocation2] sm:$0xff]
    %v317 = vld [vmem:[#allocation2 + $0x8] sm:$0xff]
    %v318 = vld [vmem:[#allocation2 + $0x10] sm:$0xff]
    %v319 = vld [vmem:[#allocation2 + $0x18] sm:$0xff]
    %v320 = vld [vmem:[#allocation2 + $0x20] sm:$0xff]
    %v321 = vld [vmem:[#allocation2 + $0x28] sm:$0xff]
    %v322 = vld [vmem:[#allocation2 + $0x30] sm:$0xff]
    %v323 = vld [vmem:[#allocation2 + $0x38] sm:$0xff]
    %v324 = vld [vmem:[#allocation2 + $0x40] sm:$0xff]
    %v325 = vpack.c.bf16 %v317, %v316
    %v326 = vpack.c.bf16 %v319, %v318
    %v327 = vpack.c.bf16 %v321, %v320
    %v328 = vpack.c.bf16 %v323, %v322
    %v329 = vpack.c.bf16 %v324, %v324
    %s330 = scalar_lea.vmem %s1, 64
    %v331 = vld [vmem:[%s330] sm:$0xff]
    %v332 = vld [vmem:[%s330 + $0x8] sm:$0xff]
    %v333 = vld [vmem:[%s330 + $0x10] sm:$0xff]
    %v334 = vld [vmem:[%s330 + $0x18] sm:$0xff]
    %v335 = vld [vmem:[%s330 + $0x20] sm:$0xff]
    %v336 = vld [vmem:[%s330 + $0x28] sm:$0xff]
    %v337 = vld [vmem:[%s330 + $0x30] sm:$0xff]
    %v338 = vld [vmem:[%s330 + $0x38] sm:$0xff]
    %vm339 = vsmask.f32 7424
    %v341 = vshrl.u32 %v325, 16
    %v343 = vshll.u32 %v325, 16
    %v345 = vrot.slane %v343, 1
    %v346 = vor.u32 %v341, %v345
    %v348 = vshll.u32 %v326, 16
    %v350 = vrot.slane %v348, 1
    %v351 = vsel %vm339, %v346, %v350
    %v352 = vshrl.u32 %v326, 16
    %v354 = vor.u32 %v352, %v350
    %v356 = vshll.u32 %v327, 16
    %v358 = vrot.slane %v356, 1
    %v359 = vsel %vm339, %v354, %v358
    %v360 = vshrl.u32 %v327, 16
    %v362 = vor.u32 %v360, %v358
    %v364 = vshll.u32 %v328, 16
    %v366 = vrot.slane %v364, 1
    %v367 = vsel %vm339, %v362, %v366
    %v368 = vshrl.u32 %v328, 16
    %v370 = vor.u32 %v368, %v366
    %v372 = vshll.u32 %v329, 16
    %v374 = vrot.slane %v372, 1
    %v375 = vsel %vm339, %v370, %v374
    %v384 = vunpack.c.l.b16 %v331
    %v385 = vunpack.c.h.b16 %v331
    %v386 = vunpack.c.l.b16 %v332
    %v387 = vunpack.c.h.b16 %v332
    %v388 = vunpack.c.l.b16 %v333
    %v389 = vunpack.c.h.b16 %v333
    %v390 = vunpack.c.l.b16 %v334
    %v391 = vunpack.c.h.b16 %v334
    %v392 = vunpack.c.l.b16 %v335
    %v393 = vunpack.c.h.b16 %v335
    %v394 = vunpack.c.l.b16 %v336
    %v395 = vunpack.c.h.b16 %v336
    %v396 = vunpack.c.l.b16 %v337
    %v397 = vunpack.c.h.b16 %v337
    %v398 = vunpack.c.l.b16 %v338
    %v399 = vunpack.c.h.b16 %v338
    %v400 = vpack.c.b16 %v388, %v384
    %v401 = vpack.c.b16 %v389, %v385
    %v402 = vpack.c.b16 %v390, %v386
    %v403 = vpack.c.b16 %v391, %v387
    %v404 = vpack.c.b16 %v396, %v392
    %v405 = vpack.c.b16 %v397, %v393
    %v406 = vpack.c.b16 %v398, %v394
    %v407 = vpack.c.b16 %v399, %v395
    %v417 = vsel %vm34, %v351, 0
    %v420 = vsel %vm34, %v359, 0
    %v423 = vsel %vm34, %v367, 0
    %v426 = vsel %vm34, %v375, 0
    %428 = vmatpush.bf16.msra.mxu0 0
    %429 = vmatpush.bf16.msra.mxu0 0
    %430 = vmatpush.bf16.msra.mxu0 0
    %431 = vmatpush.bf16.msra.mxu0 0
    %432 = vmatpush.bf16.msra.mxu0 0
    %433 = vmatpush.bf16.msra.mxu0 0
    %434 = vmatpush.bf16.msra.mxu0 %v404
    %435 = vmatpush.bf16.msra.mxu0 %v400
    %436 = vmatmul.bf16.gmra.mxu0 %v417
    %v437 = vpop.f32.mrf.mxu0
    %v438 = vadd.f32 0.0, %v437
    %v439 = vpop.f32.mrf.mxu0
    %v440 = vadd.f32 0.0, %v439
    %441 = vmatmul.bf16.gmra.mxu0 %v420
    %v442 = vpop.f32.mrf.mxu0
    %v443 = vadd.f32 0.0, %v442
    %v444 = vpop.f32.mrf.mxu0
    %v445 = vadd.f32 0.0, %v444
    %446 = vmatmul.bf16.gmra.mxu0 %v423
    %v447 = vpop.f32.mrf.mxu0
    %v448 = vadd.f32 0.0, %v447
    %v449 = vpop.f32.mrf.mxu0
    %v450 = vadd.f32 0.0, %v449
    %451 = vmatmul.bf16.gmra.mxu0 %v426
    %v452 = vpop.f32.mrf.mxu0
    %v453 = vadd.f32 0.0, %v452
    %v454 = vpop.f32.mrf.mxu0
    %v455 = vadd.f32 0.0, %v454
    %456 = vdwg.mxu0
    %457 = vmatpush.bf16.msra.mxu0 0
    %458 = vmatpush.bf16.msra.mxu0 0
    %459 = vmatpush.bf16.msra.mxu0 0
    %460 = vmatpush.bf16.msra.mxu0 0
    %461 = vmatpush.bf16.msra.mxu0 0
    %462 = vmatpush.bf16.msra.mxu0 0
    %463 = vmatpush.bf16.msra.mxu0 %v405
    %464 = vmatpush.bf16.msra.mxu0 %v401
    %465 = vmatmul.bf16.gmra.mxu0 %v417
    %v466 = vpop.f32.mrf.mxu0
    %v467 = vadd.f32 0.0, %v466
    %v468 = vpop.f32.mrf.mxu0
    %v469 = vadd.f32 0.0, %v468
    %470 = vmatmul.bf16.gmra.mxu0 %v420
    %v471 = vpop.f32.mrf.mxu0
    %v472 = vadd.f32 0.0, %v471
    %v473 = vpop.f32.mrf.mxu0
    %v474 = vadd.f32 0.0, %v473
    %475 = vmatmul.bf16.gmra.mxu0 %v423
    %v476 = vpop.f32.mrf.mxu0
    %v477 = vadd.f32 0.0, %v476
    %v478 = vpop.f32.mrf.mxu0
    %v479 = vadd.f32 0.0, %v478
    %480 = vmatmul.bf16.gmra.mxu0 %v426
    %v481 = vpop.f32.mrf.mxu0
    %v482 = vadd.f32 0.0, %v481
    %v483 = vpop.f32.mrf.mxu0
    %v484 = vadd.f32 0.0, %v483
    %485 = vdwg.mxu0
    %486 = vmatpush.bf16.msra.mxu0 0
    %487 = vmatpush.bf16.msra.mxu0 0
    %488 = vmatpush.bf16.msra.mxu0 0
    %489 = vmatpush.bf16.msra.mxu0 0
    %490 = vmatpush.bf16.msra.mxu0 0
    %491 = vmatpush.bf16.msra.mxu0 0
    %492 = vmatpush.bf16.msra.mxu0 %v406
    %493 = vmatpush.bf16.msra.mxu0 %v402
    %494 = vmatmul.bf16.gmra.mxu0 %v417
    %v495 = vpop.f32.mrf.mxu0
    %v496 = vadd.f32 0.0, %v495
    %v497 = vpop.f32.mrf.mxu0
    %v498 = vadd.f32 0.0, %v497
    %499 = vmatmul.bf16.gmra.mxu0 %v420
    %v500 = vpop.f32.mrf.mxu0
    %v501 = vadd.f32 0.0, %v500
    %v502 = vpop.f32.mrf.mxu0
    %v503 = vadd.f32 0.0, %v502
    %504 = vmatmul.bf16.gmra.mxu0 %v423
    %v505 = vpop.f32.mrf.mxu0
    %v506 = vadd.f32 0.0, %v505
    %v507 = vpop.f32.mrf.mxu0
    %v508 = vadd.f32 0.0, %v507
    %509 = vmatmul.bf16.gmra.mxu0 %v426
    %v510 = vpop.f32.mrf.mxu0
    %v511 = vadd.f32 0.0, %v510
    %v512 = vpop.f32.mrf.mxu0
    %v513 = vadd.f32 0.0, %v512
    %514 = vdwg.mxu0
    %515 = vmatpush.bf16.msra.mxu0 0
    %516 = vmatpush.bf16.msra.mxu0 0
    %517 = vmatpush.bf16.msra.mxu0 0
    %518 = vmatpush.bf16.msra.mxu0 0
    %519 = vmatpush.bf16.msra.mxu0 0
    %520 = vmatpush.bf16.msra.mxu0 0
    %521 = vmatpush.bf16.msra.mxu0 %v407
    %522 = vmatpush.bf16.msra.mxu0 %v403
    %523 = vmatmul.bf16.gmra.mxu0 %v417
    %v524 = vpop.f32.mrf.mxu0
    %v525 = vadd.f32 0.0, %v524
    %v526 = vpop.f32.mrf.mxu0
    %v527 = vadd.f32 0.0, %v526
    %528 = vmatmul.bf16.gmra.mxu0 %v420
    %v529 = vpop.f32.mrf.mxu0
    %v530 = vadd.f32 0.0, %v529
    %v531 = vpop.f32.mrf.mxu0
    %v532 = vadd.f32 0.0, %v531
    %533 = vmatmul.bf16.gmra.mxu0 %v423
    %v534 = vpop.f32.mrf.mxu0
    %v535 = vadd.f32 0.0, %v534
    %v536 = vpop.f32.mrf.mxu0
    %v537 = vadd.f32 0.0, %v536
    %538 = vmatmul.bf16.gmra.mxu0 %v426
    %v539 = vpop.f32.mrf.mxu0
    %v540 = vadd.f32 0.0, %v539
    %v541 = vpop.f32.mrf.mxu0
    %v542 = vadd.f32 0.0, %v541
    %543 = vdwg.mxu0
    %v544 = vld [vmem:[#allocation3] sm:$0xff]
    %v545 = vld [vmem:[#allocation3 + $0x8] sm:$0xff]
    %v546 = vld [vmem:[#allocation3 + $0x10] sm:$0xff]
    %v547 = vld [vmem:[#allocation3 + $0x18] sm:$0xff]
    %v548 = vld [vmem:[#allocation3 + $0x20] sm:$0xff]
    %v549 = vld [vmem:[#allocation3 + $0x28] sm:$0xff]
    %v550 = vld [vmem:[#allocation3 + $0x30] sm:$0xff]
    %v551 = vld [vmem:[#allocation3 + $0x38] sm:$0xff]
    %v552 = vld [vmem:[#allocation3 + $0x40] sm:$0xff]
    %v553 = vld [vmem:[#allocation3 + $0x48] sm:$0xff]
    %v554 = vld [vmem:[#allocation3 + $0x50] sm:$0xff]
    %v555 = vld [vmem:[#allocation3 + $0x58] sm:$0xff]
    %v556 = vld [vmem:[#allocation3 + $0x60] sm:$0xff]
    %v557 = vld [vmem:[#allocation3 + $0x68] sm:$0xff]
    %v558 = vld [vmem:[#allocation3 + $0x70] sm:$0xff]
    %v559 = vld [vmem:[#allocation3 + $0x78] sm:$0xff]
    %v560 = vld [vmem:[#allocation3 + $0x80] sm:$0xff]
    %v561 = vld [vmem:[#allocation3 + $0x88] sm:$0xff]
    %v562 = vld [vmem:[#allocation3 + $0x90] sm:$0xff]
    %v563 = vld [vmem:[#allocation3 + $0x98] sm:$0xff]
    %v564 = vld [vmem:[#allocation3 + $0xa0] sm:$0xff]
    %v565 = vld [vmem:[#allocation3 + $0xa8] sm:$0xff]
    %v566 = vld [vmem:[#allocation3 + $0xb0] sm:$0xff]
    %v567 = vld [vmem:[#allocation3 + $0xb8] sm:$0xff]
    %v568 = vld [vmem:[#allocation3 + $0xc0] sm:$0xff]
    %v569 = vld [vmem:[#allocation3 + $0xc8] sm:$0xff]
    %v570 = vld [vmem:[#allocation3 + $0xd0] sm:$0xff]
    %v571 = vld [vmem:[#allocation3 + $0xd8] sm:$0xff]
    %v572 = vld [vmem:[#allocation3 + $0xe0] sm:$0xff]
    %v573 = vld [vmem:[#allocation3 + $0xe8] sm:$0xff]
    %v574 = vld [vmem:[#allocation3 + $0xf0] sm:$0xff]
    %v575 = vld [vmem:[#allocation3 + $0xf8] sm:$0xff]
    %v576 = vadd.f32 %v544, %v438
    %v577 = vadd.f32 %v545, %v467
    %v578 = vadd.f32 %v546, %v496
    %v579 = vadd.f32 %v547, %v525
    %v580 = vadd.f32 %v548, %v440
    %v581 = vadd.f32 %v549, %v469
    %v582 = vadd.f32 %v550, %v498
    %v583 = vadd.f32 %v551, %v527
    %v584 = vadd.f32 %v552, %v443
    %v585 = vadd.f32 %v553, %v472
    %v586 = vadd.f32 %v554, %v501
    %v587 = vadd.f32 %v555, %v530
    %v588 = vadd.f32 %v556, %v445
    %v589 = vadd.f32 %v557, %v474
    %v590 = vadd.f32 %v558, %v503
    %v591 = vadd.f32 %v559, %v532
    %v592 = vadd.f32 %v560, %v448
    %v593 = vadd.f32 %v561, %v477
    %v594 = vadd.f32 %v562, %v506
    %v595 = vadd.f32 %v563, %v535
    %v596 = vadd.f32 %v564, %v450
    %v597 = vadd.f32 %v565, %v479
    %v598 = vadd.f32 %v566, %v508
    %v599 = vadd.f32 %v567, %v537
    %v600 = vadd.f32 %v568, %v453
    %v601 = vadd.f32 %v569, %v482
    %v602 = vadd.f32 %v570, %v511
    %v603 = vadd.f32 %v571, %v540
    %v604 = vadd.f32 %v572, %v455
    %v605 = vadd.f32 %v573, %v484
    %v606 = vadd.f32 %v574, %v513
    %v607 = vadd.f32 %v575, %v542
    %608 = vst [vmem:[#allocation3] sm:$0xff] %v576
    %609 = vst [vmem:[#allocation3 + $0x8] sm:$0xff] %v577
    %610 = vst [vmem:[#allocation3 + $0x10] sm:$0xff] %v578
    %611 = vst.msk [vmem:[#allocation3 + $0x18] sm:$0xff] %vm286, %v579
    %612 = vst [vmem:[#allocation3 + $0x20] sm:$0xff] %v580
    %613 = vst [vmem:[#allocation3 + $0x28] sm:$0xff] %v581
    %614 = vst [vmem:[#allocation3 + $0x30] sm:$0xff] %v582
    %615 = vst.msk [vmem:[#allocation3 + $0x38] sm:$0xff] %vm286, %v583
    %616 = vst [vmem:[#allocation3 + $0x40] sm:$0xff] %v584
    %617 = vst [vmem:[#allocation3 + $0x48] sm:$0xff] %v585
    %618 = vst [vmem:[#allocation3 + $0x50] sm:$0xff] %v586
    %619 = vst.msk [vmem:[#allocation3 + $0x58] sm:$0xff] %vm286, %v587
    %620 = vst [vmem:[#allocation3 + $0x60] sm:$0xff] %v588
    %621 = vst [vmem:[#allocation3 + $0x68] sm:$0xff] %v589
    %622 = vst [vmem:[#allocation3 + $0x70] sm:$0xff] %v590
    %623 = vst.msk [vmem:[#allocation3 + $0x78] sm:$0xff] %vm286, %v591
    %624 = vst [vmem:[#allocation3 + $0x80] sm:$0xff] %v592
    %625 = vst [vmem:[#allocation3 + $0x88] sm:$0xff] %v593
    %626 = vst [vmem:[#allocation3 + $0x90] sm:$0xff] %v594
    %627 = vst.msk [vmem:[#allocation3 + $0x98] sm:$0xff] %vm286, %v595
    %628 = vst [vmem:[#allocation3 + $0xa0] sm:$0xff] %v596
    %629 = vst [vmem:[#allocation3 + $0xa8] sm:$0xff] %v597
    %630 = vst [vmem:[#allocation3 + $0xb0] sm:$0xff] %v598
    %631 = vst.msk [vmem:[#allocation3 + $0xb8] sm:$0xff] %vm286, %v599
    %632 = vst [vmem:[#allocation3 + $0xc0] sm:$0xff] %v600
    %633 = vst [vmem:[#allocation3 + $0xc8] sm:$0xff] %v601
    %634 = vst [vmem:[#allocation3 + $0xd0] sm:$0xff] %v602
    %635 = vst.msk [vmem:[#allocation3 + $0xd8] sm:$0xff] %vm286, %v603
    %636 = vst [vmem:[#allocation3 + $0xe0] sm:$0xff] %v604
    %637 = vst [vmem:[#allocation3 + $0xe8] sm:$0xff] %v605
    %638 = vst [vmem:[#allocation3 + $0xf0] sm:$0xff] %v606
    %639 = vst.msk [vmem:[#allocation3 + $0xf8] sm:$0xff] %vm286, %v607
    %v640 = vld [vmem:[#allocation2] sm:$0xff]
    %v641 = vld [vmem:[#allocation2 + $0x8] sm:$0xff]
    %v642 = vld [vmem:[#allocation2 + $0x10] sm:$0xff]
    %v643 = vld [vmem:[#allocation2 + $0x18] sm:$0xff]
    %v644 = vld [vmem:[#allocation2 + $0x20] sm:$0xff]
    %v645 = vld [vmem:[#allocation2 + $0x28] sm:$0xff]
    %v646 = vld [vmem:[#allocation2 + $0x30] sm:$0xff]
    %v647 = vld [vmem:[#allocation2 + $0x38] sm:$0xff]
    %v648 = vld [vmem:[#allocation2 + $0x40] sm:$0xff]
    %v649 = vpack.c.bf16 %v641, %v640
    %v650 = vpack.c.bf16 %v643, %v642
    %v651 = vpack.c.bf16 %v645, %v644
    %v652 = vpack.c.bf16 %v647, %v646
    %v653 = vpack.c.bf16 %v648, %v648
    %s654 = scalar_lea.vmem %s1, 128
    %v655 = vld [vmem:[%s654] sm:$0xff]
    %v656 = vld [vmem:[%s654 + $0x8] sm:$0xff]
    %v657 = vld [vmem:[%s654 + $0x10] sm:$0xff]
    %v658 = vld [vmem:[%s654 + $0x18] sm:$0xff]
    %v659 = vld [vmem:[%s654 + $0x20] sm:$0xff]
    %v660 = vld [vmem:[%s654 + $0x28] sm:$0xff]
    %v661 = vld [vmem:[%s654 + $0x30] sm:$0xff]
    %v662 = vld [vmem:[%s654 + $0x38] sm:$0xff]
    %vm668 = vcmask 1046528
    %v669 = vrot.slane %v649, 1
    %v670 = vrot.slane %v650, 1
    %v671 = vsel %vm668, %v669, %v670
    %v672 = vrot.slane %v651, 1
    %v673 = vsel %vm668, %v670, %v672
    %v674 = vrot.slane %v652, 1
    %v675 = vsel %vm668, %v672, %v674
    %v676 = vrot.slane %v653, 1
    %v677 = vsel %vm668, %v674, %v676
    %v686 = vunpack.c.l.b16 %v655
    %v687 = vunpack.c.h.b16 %v655
    %v688 = vunpack.c.l.b16 %v656
    %v689 = vunpack.c.h.b16 %v656
    %v690 = vunpack.c.l.b16 %v657
    %v691 = vunpack.c.h.b16 %v657
    %v692 = vunpack.c.l.b16 %v658
    %v693 = vunpack.c.h.b16 %v658
    %v694 = vunpack.c.l.b16 %v659
    %v695 = vunpack.c.h.b16 %v659
    %v696 = vunpack.c.l.b16 %v660
    %v697 = vunpack.c.h.b16 %v660
    %v698 = vunpack.c.l.b16 %v661
    %v699 = vunpack.c.h.b16 %v661
    %v700 = vunpack.c.l.b16 %v662
    %v701 = vunpack.c.h.b16 %v662
    %v702 = vpack.c.b16 %v690, %v686
    %v703 = vpack.c.b16 %v691, %v687
    %v704 = vpack.c.b16 %v692, %v688
    %v705 = vpack.c.b16 %v693, %v689
    %v706 = vpack.c.b16 %v698, %v694
    %v707 = vpack.c.b16 %v699, %v695
    %v708 = vpack.c.b16 %v700, %v696
    %v709 = vpack.c.b16 %v701, %v697
    %v719 = vsel %vm34, %v671, 0
    %v722 = vsel %vm34, %v673, 0
    %v725 = vsel %vm34, %v675, 0
    %v728 = vsel %vm34, %v677, 0
    %730 = vmatpush.bf16.msra.mxu0 0
    %731 = vmatpush.bf16.msra.mxu0 0
    %732 = vmatpush.bf16.msra.mxu0 0
    %733 = vmatpush.bf16.msra.mxu0 0
    %734 = vmatpush.bf16.msra.mxu0 0
    %735 = vmatpush.bf16.msra.mxu0 0
    %736 = vmatpush.bf16.msra.mxu0 %v706
    %737 = vmatpush.bf16.msra.mxu0 %v702
    %738 = vmatmul.bf16.gmra.mxu0 %v719
    %v739 = vpop.f32.mrf.mxu0
    %v740 = vadd.f32 0.0, %v739
    %v741 = vpop.f32.mrf.mxu0
    %v742 = vadd.f32 0.0, %v741
    %743 = vmatmul.bf16.gmra.mxu0 %v722
    %v744 = vpop.f32.mrf.mxu0
    %v745 = vadd.f32 0.0, %v744
    %v746 = vpop.f32.mrf.mxu0
    %v747 = vadd.f32 0.0, %v746
    %748 = vmatmul.bf16.gmra.mxu0 %v725
    %v749 = vpop.f32.mrf.mxu0
    %v750 = vadd.f32 0.0, %v749
    %v751 = vpop.f32.mrf.mxu0
    %v752 = vadd.f32 0.0, %v751
    %753 = vmatmul.bf16.gmra.mxu0 %v728
    %v754 = vpop.f32.mrf.mxu0
    %v755 = vadd.f32 0.0, %v754
    %v756 = vpop.f32.mrf.mxu0
    %v757 = vadd.f32 0.0, %v756
    %758 = vdwg.mxu0
    %759 = vmatpush.bf16.msra.mxu0 0
    %760 = vmatpush.bf16.msra.mxu0 0
    %761 = vmatpush.bf16.msra.mxu0 0
    %762 = vmatpush.bf16.msra.mxu0 0
    %763 = vmatpush.bf16.msra.mxu0 0
    %764 = vmatpush.bf16.msra.mxu0 0
    %765 = vmatpush.bf16.msra.mxu0 %v707
    %766 = vmatpush.bf16.msra.mxu0 %v703
    %767 = vmatmul.bf16.gmra.mxu0 %v719
    %v768 = vpop.f32.mrf.mxu0
    %v769 = vadd.f32 0.0, %v768
    %v770 = vpop.f32.mrf.mxu0
    %v771 = vadd.f32 0.0, %v770
    %772 = vmatmul.bf16.gmra.mxu0 %v722
    %v773 = vpop.f32.mrf.mxu0
    %v774 = vadd.f32 0.0, %v773
    %v775 = vpop.f32.mrf.mxu0
    %v776 = vadd.f32 0.0, %v775
    %777 = vmatmul.bf16.gmra.mxu0 %v725
    %v778 = vpop.f32.mrf.mxu0
    %v779 = vadd.f32 0.0, %v778
    %v780 = vpop.f32.mrf.mxu0
    %v781 = vadd.f32 0.0, %v780
    %782 = vmatmul.bf16.gmra.mxu0 %v728
    %v783 = vpop.f32.mrf.mxu0
    %v784 = vadd.f32 0.0, %v783
    %v785 = vpop.f32.mrf.mxu0
    %v786 = vadd.f32 0.0, %v785
    %787 = vdwg.mxu0
    %788 = vmatpush.bf16.msra.mxu0 0
    %789 = vmatpush.bf16.msra.mxu0 0
    %790 = vmatpush.bf16.msra.mxu0 0
    %791 = vmatpush.bf16.msra.mxu0 0
    %792 = vmatpush.bf16.msra.mxu0 0
    %793 = vmatpush.bf16.msra.mxu0 0
    %794 = vmatpush.bf16.msra.mxu0 %v708
    %795 = vmatpush.bf16.msra.mxu0 %v704
    %796 = vmatmul.bf16.gmra.mxu0 %v719
    %v797 = vpop.f32.mrf.mxu0
    %v798 = vadd.f32 0.0, %v797
    %v799 = vpop.f32.mrf.mxu0
    %v800 = vadd.f32 0.0, %v799
    %801 = vmatmul.bf16.gmra.mxu0 %v722
    %v802 = vpop.f32.mrf.mxu0
    %v803 = vadd.f32 0.0, %v802
    %v804 = vpop.f32.mrf.mxu0
    %v805 = vadd.f32 0.0, %v804
    %806 = vmatmul.bf16.gmra.mxu0 %v725
    %v807 = vpop.f32.mrf.mxu0
    %v808 = vadd.f32 0.0, %v807
    %v809 = vpop.f32.mrf.mxu0
    %v810 = vadd.f32 0.0, %v809
    %811 = vmatmul.bf16.gmra.mxu0 %v728
    %v812 = vpop.f32.mrf.mxu0
    %v813 = vadd.f32 0.0, %v812
    %v814 = vpop.f32.mrf.mxu0
    %v815 = vadd.f32 0.0, %v814
    %816 = vdwg.mxu0
    %817 = vmatpush.bf16.msra.mxu0 0
    %818 = vmatpush.bf16.msra.mxu0 0
    %819 = vmatpush.bf16.msra.mxu0 0
    %820 = vmatpush.bf16.msra.mxu0 0
    %821 = vmatpush.bf16.msra.mxu0 0
    %822 = vmatpush.bf16.msra.mxu0 0
    %823 = vmatpush.bf16.msra.mxu0 %v709
    %824 = vmatpush.bf16.msra.mxu0 %v705
    %825 = vmatmul.bf16.gmra.mxu0 %v719
    %v826 = vpop.f32.mrf.mxu0
    %v827 = vadd.f32 0.0, %v826
    %v828 = vpop.f32.mrf.mxu0
    %v829 = vadd.f32 0.0, %v828
    %830 = vmatmul.bf16.gmra.mxu0 %v722
    %v831 = vpop.f32.mrf.mxu0
    %v832 = vadd.f32 0.0, %v831
    %v833 = vpop.f32.mrf.mxu0
    %v834 = vadd.f32 0.0, %v833
    %835 = vmatmul.bf16.gmra.mxu0 %v725
    %v836 = vpop.f32.mrf.mxu0
    %v837 = vadd.f32 0.0, %v836
    %v838 = vpop.f32.mrf.mxu0
    %v839 = vadd.f32 0.0, %v838
    %840 = vmatmul.bf16.gmra.mxu0 %v728
    %v841 = vpop.f32.mrf.mxu0
    %v842 = vadd.f32 0.0, %v841
    %v843 = vpop.f32.mrf.mxu0
    %v844 = vadd.f32 0.0, %v843
    %845 = vdwg.mxu0
    %v846 = vld [vmem:[#allocation3] sm:$0xff]
    %v847 = vld [vmem:[#allocation3 + $0x8] sm:$0xff]
    %v848 = vld [vmem:[#allocation3 + $0x10] sm:$0xff]
    %v849 = vld [vmem:[#allocation3 + $0x18] sm:$0xff]
    %v850 = vld [vmem:[#allocation3 + $0x20] sm:$0xff]
    %v851 = vld [vmem:[#allocation3 + $0x28] sm:$0xff]
    %v852 = vld [vmem:[#allocation3 + $0x30] sm:$0xff]
    %v853 = vld [vmem:[#allocation3 + $0x38] sm:$0xff]
    %v854 = vld [vmem:[#allocation3 + $0x40] sm:$0xff]
    %v855 = vld [vmem:[#allocation3 + $0x48] sm:$0xff]
    %v856 = vld [vmem:[#allocation3 + $0x50] sm:$0xff]
    %v857 = vld [vmem:[#allocation3 + $0x58] sm:$0xff]
    %v858 = vld [vmem:[#allocation3 + $0x60] sm:$0xff]
    %v859 = vld [vmem:[#allocation3 + $0x68] sm:$0xff]
    %v860 = vld [vmem:[#allocation3 + $0x70] sm:$0xff]
    %v861 = vld [vmem:[#allocation3 + $0x78] sm:$0xff]
    %v862 = vld [vmem:[#allocation3 + $0x80] sm:$0xff]
    %v863 = vld [vmem:[#allocation3 + $0x88] sm:$0xff]
    %v864 = vld [vmem:[#allocation3 + $0x90] sm:$0xff]
    %v865 = vld [vmem:[#allocation3 + $0x98] sm:$0xff]
    %v866 = vld [vmem:[#allocation3 + $0xa0] sm:$0xff]
    %v867 = vld [vmem:[#allocation3 + $0xa8] sm:$0xff]
    %v868 = vld [vmem:[#allocation3 + $0xb0] sm:$0xff]
    %v869 = vld [vmem:[#allocation3 + $0xb8] sm:$0xff]
    %v870 = vld [vmem:[#allocation3 + $0xc0] sm:$0xff]
    %v871 = vld [vmem:[#allocation3 + $0xc8] sm:$0xff]
    %v872 = vld [vmem:[#allocation3 + $0xd0] sm:$0xff]
    %v873 = vld [vmem:[#allocation3 + $0xd8] sm:$0xff]
    %v874 = vld [vmem:[#allocation3 + $0xe0] sm:$0xff]
    %v875 = vld [vmem:[#allocation3 + $0xe8] sm:$0xff]
    %v876 = vld [vmem:[#allocation3 + $0xf0] sm:$0xff]
    %v877 = vld [vmem:[#allocation3 + $0xf8] sm:$0xff]
    %v878 = vadd.f32 %v846, %v740
    %v879 = vadd.f32 %v847, %v769
    %v880 = vadd.f32 %v848, %v798
    %v881 = vadd.f32 %v849, %v827
    %v882 = vadd.f32 %v850, %v742
    %v883 = vadd.f32 %v851, %v771
    %v884 = vadd.f32 %v852, %v800
    %v885 = vadd.f32 %v853, %v829
    %v886 = vadd.f32 %v854, %v745
    %v887 = vadd.f32 %v855, %v774
    %v888 = vadd.f32 %v856, %v803
    %v889 = vadd.f32 %v857, %v832
    %v890 = vadd.f32 %v858, %v747
    %v891 = vadd.f32 %v859, %v776
    %v892 = vadd.f32 %v860, %v805
    %v893 = vadd.f32 %v861, %v834
    %v894 = vadd.f32 %v862, %v750
    %v895 = vadd.f32 %v863, %v779
    %v896 = vadd.f32 %v864, %v808
    %v897 = vadd.f32 %v865, %v837
    %v898 = vadd.f32 %v866, %v752
    %v899 = vadd.f32 %v867, %v781
    %v900 = vadd.f32 %v868, %v810
    %v901 = vadd.f32 %v869, %v839
    %v902 = vadd.f32 %v870, %v755
    %v903 = vadd.f32 %v871, %v784
    %v904 = vadd.f32 %v872, %v813
    %v905 = vadd.f32 %v873, %v842
    %v906 = vadd.f32 %v874, %v757
    %v907 = vadd.f32 %v875, %v786
    %v908 = vadd.f32 %v876, %v815
    %v909 = vadd.f32 %v877, %v844
    %910 = vst [vmem:[#allocation3] sm:$0xff] %v878
    %911 = vst [vmem:[#allocation3 + $0x8] sm:$0xff] %v879
    %912 = vst [vmem:[#allocation3 + $0x10] sm:$0xff] %v880
    %913 = vst.msk [vmem:[#allocation3 + $0x18] sm:$0xff] %vm286, %v881
    %914 = vst [vmem:[#allocation3 + $0x20] sm:$0xff] %v882
    %915 = vst [vmem:[#allocation3 + $0x28] sm:$0xff] %v883
    %916 = vst [vmem:[#allocation3 + $0x30] sm:$0xff] %v884
    %917 = vst.msk [vmem:[#allocation3 + $0x38] sm:$0xff] %vm286, %v885
    %918 = vst [vmem:[#allocation3 + $0x40] sm:$0xff] %v886
    %919 = vst [vmem:[#allocation3 + $0x48] sm:$0xff] %v887
    %920 = vst [vmem:[#allocation3 + $0x50] sm:$0xff] %v888
    %921 = vst.msk [vmem:[#allocation3 + $0x58] sm:$0xff] %vm286, %v889
    %922 = vst [vmem:[#allocation3 + $0x60] sm:$0xff] %v890
    %923 = vst [vmem:[#allocation3 + $0x68] sm:$0xff] %v891
    %924 = vst [vmem:[#allocation3 + $0x70] sm:$0xff] %v892
    %925 = vst.msk [vmem:[#allocation3 + $0x78] sm:$0xff] %vm286, %v893
    %926 = vst [vmem:[#allocation3 + $0x80] sm:$0xff] %v894
    %927 = vst [vmem:[#allocation3 + $0x88] sm:$0xff] %v895
    %928 = vst [vmem:[#allocation3 + $0x90] sm:$0xff] %v896
    %929 = vst.msk [vmem:[#allocation3 + $0x98] sm:$0xff] %vm286, %v897
    %930 = vst [vmem:[#allocation3 + $0xa0] sm:$0xff] %v898
    %931 = vst [vmem:[#allocation3 + $0xa8] sm:$0xff] %v899
    %932 = vst [vmem:[#allocation3 + $0xb0] sm:$0xff] %v900
    %933 = vst.msk [vmem:[#allocation3 + $0xb8] sm:$0xff] %vm286, %v901
    %934 = vst [vmem:[#allocation3 + $0xc0] sm:$0xff] %v902
    %935 = vst [vmem:[#allocation3 + $0xc8] sm:$0xff] %v903
    %936 = vst [vmem:[#allocation3 + $0xd0] sm:$0xff] %v904
    %937 = vst.msk [vmem:[#allocation3 + $0xd8] sm:$0xff] %vm286, %v905
    %938 = vst [vmem:[#allocation3 + $0xe0] sm:$0xff] %v906
    %939 = vst [vmem:[#allocation3 + $0xe8] sm:$0xff] %v907
    %940 = vst [vmem:[#allocation3 + $0xf0] sm:$0xff] %v908
    %941 = vst.msk [vmem:[#allocation3 + $0xf8] sm:$0xff] %vm286, %v909
    %v942 = vld [vmem:[#allocation2] sm:$0xff]
    %v943 = vld [vmem:[#allocation2 + $0x8] sm:$0xff]
    %v944 = vld [vmem:[#allocation2 + $0x10] sm:$0xff]
    %v945 = vld [vmem:[#allocation2 + $0x18] sm:$0xff]
    %v946 = vld [vmem:[#allocation2 + $0x20] sm:$0xff]
    %v947 = vld [vmem:[#allocation2 + $0x28] sm:$0xff]
    %v948 = vld [vmem:[#allocation2 + $0x30] sm:$0xff]
    %v949 = vld [vmem:[#allocation2 + $0x38] sm:$0xff]
    %v950 = vld [vmem:[#allocation2 + $0x40] sm:$0xff]
    %v951 = vpack.c.bf16 %v943, %v942
    %v952 = vpack.c.bf16 %v945, %v944
    %v953 = vpack.c.bf16 %v947, %v946
    %v954 = vpack.c.bf16 %v949, %v948
    %v955 = vpack.c.bf16 %v950, %v950
    %s956 = scalar_lea.vmem %s1, 192
    %v957 = vld [vmem:[%s956] sm:$0xff]
    %v958 = vld [vmem:[%s956 + $0x8] sm:$0xff]
    %v959 = vld [vmem:[%s956 + $0x10] sm:$0xff]
    %v960 = vld [vmem:[%s956 + $0x18] sm:$0xff]
    %v961 = vld [vmem:[%s956 + $0x20] sm:$0xff]
    %v962 = vld [vmem:[%s956 + $0x28] sm:$0xff]
    %v963 = vld [vmem:[%s956 + $0x30] sm:$0xff]
    %v964 = vld [vmem:[%s956 + $0x38] sm:$0xff]
    %vm965 = vsmask.f32 6400
    %v967 = vshrl.u32 %v951, 16
    %v969 = vrot.slane %v967, 1
    %v970 = vshll.u32 %v951, 16
    %v972 = vrot.slane %v970, 2
    %v973 = vor.u32 %v969, %v972
    %v975 = vshrl.u32 %v952, 16
    %v977 = vrot.slane %v975, 1
    %v978 = vshll.u32 %v952, 16
    %v980 = vrot.slane %v978, 2
    %v981 = vor.u32 %v977, %v980
    %v982 = vsel %vm965, %v973, %v981
    %v984 = vshrl.u32 %v953, 16
    %v986 = vrot.slane %v984, 1
    %v987 = vshll.u32 %v953, 16
    %v989 = vrot.slane %v987, 2
    %v990 = vor.u32 %v986, %v989
    %v991 = vsel %vm965, %v981, %v990
    %v993 = vshrl.u32 %v954, 16
    %v995 = vrot.slane %v993, 1
    %v996 = vshll.u32 %v954, 16
    %v998 = vrot.slane %v996, 2
    %v999 = vor.u32 %v995, %v998
    %v1000 = vsel %vm965, %v990, %v999
    %v1002 = vshrl.u32 %v955, 16
    %v1004 = vrot.slane %v1002, 1
    %v1005 = vshll.u32 %v955, 16
    %v1007 = vrot.slane %v1005, 2
    %v1008 = vor.u32 %v1004, %v1007
    %v1009 = vsel %vm965, %v999, %v1008
    %v1018 = vunpack.c.l.b16 %v957
    %v1019 = vunpack.c.h.b16 %v957
    %v1020 = vunpack.c.l.b16 %v958
    %v1021 = vunpack.c.h.b16 %v958
    %v1022 = vunpack.c.l.b16 %v959
    %v1023 = vunpack.c.h.b16 %v959
    %v1024 = vunpack.c.l.b16 %v960
    %v1025 = vunpack.c.h.b16 %v960
    %v1026 = vunpack.c.l.b16 %v961
    %v1027 = vunpack.c.h.b16 %v961
    %v1028 = vunpack.c.l.b16 %v962
    %v1029 = vunpack.c.h.b16 %v962
    %v1030 = vunpack.c.l.b16 %v963
    %v1031 = vunpack.c.h.b16 %v963
    %v1032 = vunpack.c.l.b16 %v964
    %v1033 = vunpack.c.h.b16 %v964
    %v1034 = vpack.c.b16 %v1022, %v1018
    %v1035 = vpack.c.b16 %v1023, %v1019
    %v1036 = vpack.c.b16 %v1024, %v1020
    %v1037 = vpack.c.b16 %v1025, %v1021
    %v1038 = vpack.c.b16 %v1030, %v1026
    %v1039 = vpack.c.b16 %v1031, %v1027
    %v1040 = vpack.c.b16 %v1032, %v1028
    %v1041 = vpack.c.b16 %v1033, %v1029
    %v1051 = vsel %vm34, %v982, 0
    %v1054 = vsel %vm34, %v991, 0
    %v1057 = vsel %vm34, %v1000, 0
    %v1060 = vsel %vm34, %v1009, 0
    %1062 = vmatpush.bf16.msra.mxu0 0
    %1063 = vmatpush.bf16.msra.mxu0 0
    %1064 = vmatpush.bf16.msra.mxu0 0
    %1065 = vmatpush.bf16.msra.mxu0 0
    %1066 = vmatpush.bf16.msra.mxu0 0
    %1067 = vmatpush.bf16.msra.mxu0 0
    %1068 = vmatpush.bf16.msra.mxu0 %v1038
    %1069 = vmatpush.bf16.msra.mxu0 %v1034
    %1070 = vmatmul.bf16.gmra.mxu0 %v1051
    %v1071 = vpop.f32.mrf.mxu0
    %v1072 = vadd.f32 0.0, %v1071
    %v1073 = vpop.f32.mrf.mxu0
    %v1074 = vadd.f32 0.0, %v1073
    %1075 = vmatmul.bf16.gmra.mxu0 %v1054
    %v1076 = vpop.f32.mrf.mxu0
    %v1077 = vadd.f32 0.0, %v1076
    %v1078 = vpop.f32.mrf.mxu0
    %v1079 = vadd.f32 0.0, %v1078
    %1080 = vmatmul.bf16.gmra.mxu0 %v1057
    %v1081 = vpop.f32.mrf.mxu0
    %v1082 = vadd.f32 0.0, %v1081
    %v1083 = vpop.f32.mrf.mxu0
    %v1084 = vadd.f32 0.0, %v1083
    %1085 = vmatmul.bf16.gmra.mxu0 %v1060
    %v1086 = vpop.f32.mrf.mxu0
    %v1087 = vadd.f32 0.0, %v1086
    %v1088 = vpop.f32.mrf.mxu0
    %v1089 = vadd.f32 0.0, %v1088
    %1090 = vdwg.mxu0
    %1091 = vmatpush.bf16.msra.mxu0 0
    %1092 = vmatpush.bf16.msra.mxu0 0
    %1093 = vmatpush.bf16.msra.mxu0 0
    %1094 = vmatpush.bf16.msra.mxu0 0
    %1095 = vmatpush.bf16.msra.mxu0 0
    %1096 = vmatpush.bf16.msra.mxu0 0
    %1097 = vmatpush.bf16.msra.mxu0 %v1039
    %1098 = vmatpush.bf16.msra.mxu0 %v1035
    %1099 = vmatmul.bf16.gmra.mxu0 %v1051
    %v1100 = vpop.f32.mrf.mxu0
    %v1101 = vadd.f32 0.0, %v1100
    %v1102 = vpop.f32.mrf.mxu0
    %v1103 = vadd.f32 0.0, %v1102
    %1104 = vmatmul.bf16.gmra.mxu0 %v1054
    %v1105 = vpop.f32.mrf.mxu0
    %v1106 = vadd.f32 0.0, %v1105
    %v1107 = vpop.f32.mrf.mxu0
    %v1108 = vadd.f32 0.0, %v1107
    %1109 = vmatmul.bf16.gmra.mxu0 %v1057
    %v1110 = vpop.f32.mrf.mxu0
    %v1111 = vadd.f32 0.0, %v1110
    %v1112 = vpop.f32.mrf.mxu0
    %v1113 = vadd.f32 0.0, %v1112
    %1114 = vmatmul.bf16.gmra.mxu0 %v1060
    %v1115 = vpop.f32.mrf.mxu0
    %v1116 = vadd.f32 0.0, %v1115
    %v1117 = vpop.f32.mrf.mxu0
    %v1118 = vadd.f32 0.0, %v1117
    %1119 = vdwg.mxu0
    %1120 = vmatpush.bf16.msra.mxu0 0
    %1121 = vmatpush.bf16.msra.mxu0 0
    %1122 = vmatpush.bf16.msra.mxu0 0
    %1123 = vmatpush.bf16.msra.mxu0 0
    %1124 = vmatpush.bf16.msra.mxu0 0
    %1125 = vmatpush.bf16.msra.mxu0 0
    %1126 = vmatpush.bf16.msra.mxu0 %v1040
    %1127 = vmatpush.bf16.msra.mxu0 %v1036
    %1128 = vmatmul.bf16.gmra.mxu0 %v1051
    %v1129 = vpop.f32.mrf.mxu0
    %v1130 = vadd.f32 0.0, %v1129
    %v1131 = vpop.f32.mrf.mxu0
    %v1132 = vadd.f32 0.0, %v1131
    %1133 = vmatmul.bf16.gmra.mxu0 %v1054
    %v1134 = vpop.f32.mrf.mxu0
    %v1135 = vadd.f32 0.0, %v1134
    %v1136 = vpop.f32.mrf.mxu0
    %v1137 = vadd.f32 0.0, %v1136
    %1138 = vmatmul.bf16.gmra.mxu0 %v1057
    %v1139 = vpop.f32.mrf.mxu0
    %v1140 = vadd.f32 0.0, %v1139
    %v1141 = vpop.f32.mrf.mxu0
    %v1142 = vadd.f32 0.0, %v1141
    %1143 = vmatmul.bf16.gmra.mxu0 %v1060
    %v1144 = vpop.f32.mrf.mxu0
    %v1145 = vadd.f32 0.0, %v1144
    %v1146 = vpop.f32.mrf.mxu0
    %v1147 = vadd.f32 0.0, %v1146
    %1148 = vdwg.mxu0
    %1149 = vmatpush.bf16.msra.mxu0 0
    %1150 = vmatpush.bf16.msra.mxu0 0
    %1151 = vmatpush.bf16.msra.mxu0 0
    %1152 = vmatpush.bf16.msra.mxu0 0
    %1153 = vmatpush.bf16.msra.mxu0 0
    %1154 = vmatpush.bf16.msra.mxu0 0
    %1155 = vmatpush.bf16.msra.mxu0 %v1041
    %1156 = vmatpush.bf16.msra.mxu0 %v1037
    %1157 = vmatmul.bf16.gmra.mxu0 %v1051
    %v1158 = vpop.f32.mrf.mxu0
    %v1159 = vadd.f32 0.0, %v1158
    %v1160 = vpop.f32.mrf.mxu0
    %v1161 = vadd.f32 0.0, %v1160
    %1162 = vmatmul.bf16.gmra.mxu0 %v1054
    %v1163 = vpop.f32.mrf.mxu0
    %v1164 = vadd.f32 0.0, %v1163
    %v1165 = vpop.f32.mrf.mxu0
    %v1166 = vadd.f32 0.0, %v1165
    %1167 = vmatmul.bf16.gmra.mxu0 %v1057
    %v1168 = vpop.f32.mrf.mxu0
    %v1169 = vadd.f32 0.0, %v1168
    %v1170 = vpop.f32.mrf.mxu0
    %v1171 = vadd.f32 0.0, %v1170
    %1172 = vmatmul.bf16.gmra.mxu0 %v1060
    %v1173 = vpop.f32.mrf.mxu0
    %v1174 = vadd.f32 0.0, %v1173
    %v1175 = vpop.f32.mrf.mxu0
    %v1176 = vadd.f32 0.0, %v1175
    %1177 = vdwg.mxu0
    %v1178 = vld [vmem:[#allocation3] sm:$0xff]
    %v1179 = vld [vmem:[#allocation3 + $0x8] sm:$0xff]
    %v1180 = vld [vmem:[#allocation3 + $0x10] sm:$0xff]
    %v1181 = vld [vmem:[#allocation3 + $0x18] sm:$0xff]
    %v1182 = vld [vmem:[#allocation3 + $0x20] sm:$0xff]
    %v1183 = vld [vmem:[#allocation3 + $0x28] sm:$0xff]
    %v1184 = vld [vmem:[#allocation3 + $0x30] sm:$0xff]
    %v1185 = vld [vmem:[#allocation3 + $0x38] sm:$0xff]
    %v1186 = vld [vmem:[#allocation3 + $0x40] sm:$0xff]
    %v1187 = vld [vmem:[#allocation3 + $0x48] sm:$0xff]
    %v1188 = vld [vmem:[#allocation3 + $0x50] sm:$0xff]
    %v1189 = vld [vmem:[#allocation3 + $0x58] sm:$0xff]
    %v1190 = vld [vmem:[#allocation3 + $0x60] sm:$0xff]
    %v1191 = vld [vmem:[#allocation3 + $0x68] sm:$0xff]
    %v1192 = vld [vmem:[#allocation3 + $0x70] sm:$0xff]
    %v1193 = vld [vmem:[#allocation3 + $0x78] sm:$0xff]
    %v1194 = vld [vmem:[#allocation3 + $0x80] sm:$0xff]
    %v1195 = vld [vmem:[#allocation3 + $0x88] sm:$0xff]
    %v1196 = vld [vmem:[#allocation3 + $0x90] sm:$0xff]
    %v1197 = vld [vmem:[#allocation3 + $0x98] sm:$0xff]
    %v1198 = vld [vmem:[#allocation3 + $0xa0] sm:$0xff]
    %v1199 = vld [vmem:[#allocation3 + $0xa8] sm:$0xff]
    %v1200 = vld [vmem:[#allocation3 + $0xb0] sm:$0xff]
    %v1201 = vld [vmem:[#allocation3 + $0xb8] sm:$0xff]
    %v1202 = vld [vmem:[#allocation3 + $0xc0] sm:$0xff]
    %v1203 = vld [vmem:[#allocation3 + $0xc8] sm:$0xff]
    %v1204 = vld [vmem:[#allocation3 + $0xd0] sm:$0xff]
    %v1205 = vld [vmem:[#allocation3 + $0xd8] sm:$0xff]
    %v1206 = vld [vmem:[#allocation3 + $0xe0] sm:$0xff]
    %v1207 = vld [vmem:[#allocation3 + $0xe8] sm:$0xff]
    %v1208 = vld [vmem:[#allocation3 + $0xf0] sm:$0xff]
    %v1209 = vld [vmem:[#allocation3 + $0xf8] sm:$0xff]
    %v1210 = vadd.f32 %v1178, %v1072
    %v1211 = vadd.f32 %v1179, %v1101
    %v1212 = vadd.f32 %v1180, %v1130
    %v1213 = vadd.f32 %v1181, %v1159
    %v1214 = vadd.f32 %v1182, %v1074
    %v1215 = vadd.f32 %v1183, %v1103
    %v1216 = vadd.f32 %v1184, %v1132
    %v1217 = vadd.f32 %v1185, %v1161
    %v1218 = vadd.f32 %v1186, %v1077
    %v1219 = vadd.f32 %v1187, %v1106
    %v1220 = vadd.f32 %v1188, %v1135
    %v1221 = vadd.f32 %v1189, %v1164
    %v1222 = vadd.f32 %v1190, %v1079
    %v1223 = vadd.f32 %v1191, %v1108
    %v1224 = vadd.f32 %v1192, %v1137
    %v1225 = vadd.f32 %v1193, %v1166
    %v1226 = vadd.f32 %v1194, %v1082
    %v1227 = vadd.f32 %v1195, %v1111
    %v1228 = vadd.f32 %v1196, %v1140
    %v1229 = vadd.f32 %v1197, %v1169
    %v1230 = vadd.f32 %v1198, %v1084
    %v1231 = vadd.f32 %v1199, %v1113
    %v1232 = vadd.f32 %v1200, %v1142
    %v1233 = vadd.f32 %v1201, %v1171
    %v1234 = vadd.f32 %v1202, %v1087
    %v1235 = vadd.f32 %v1203, %v1116
    %v1236 = vadd.f32 %v1204, %v1145
    %v1237 = vadd.f32 %v1205, %v1174
    %v1238 = vadd.f32 %v1206, %v1089
    %v1239 = vadd.f32 %v1207, %v1118
    %v1240 = vadd.f32 %v1208, %v1147
    %v1241 = vadd.f32 %v1209, %v1176
    %1242 = vst [vmem:[#allocation3] sm:$0xff] %v1210
    %1243 = vst [vmem:[#allocation3 + $0x8] sm:$0xff] %v1211
    %1244 = vst [vmem:[#allocation3 + $0x10] sm:$0xff] %v1212
    %1245 = vst.msk [vmem:[#allocation3 + $0x18] sm:$0xff] %vm286, %v1213
    %1246 = vst [vmem:[#allocation3 + $0x20] sm:$0xff] %v1214
    %1247 = vst [vmem:[#allocation3 + $0x28] sm:$0xff] %v1215
    %1248 = vst [vmem:[#allocation3 + $0x30] sm:$0xff] %v1216
    %1249 = vst.msk [vmem:[#allocation3 + $0x38] sm:$0xff] %vm286, %v1217
    %1250 = vst [vmem:[#allocation3 + $0x40] sm:$0xff] %v1218
    %1251 = vst [vmem:[#allocation3 + $0x48] sm:$0xff] %v1219
    %1252 = vst [vmem:[#allocation3 + $0x50] sm:$0xff] %v1220
    %1253 = vst.msk [vmem:[#allocation3 + $0x58] sm:$0xff] %vm286, %v1221
    %1254 = vst [vmem:[#allocation3 + $0x60] sm:$0xff] %v1222
    %1255 = vst [vmem:[#allocation3 + $0x68] sm:$0xff] %v1223
    %1256 = vst [vmem:[#allocation3 + $0x70] sm:$0xff] %v1224
    %1257 = vst.msk [vmem:[#allocation3 + $0x78] sm:$0xff] %vm286, %v1225
    %1258 = vst [vmem:[#allocation3 + $0x80] sm:$0xff] %v1226
    %1259 = vst [vmem:[#allocation3 + $0x88] sm:$0xff] %v1227
    %1260 = vst [vmem:[#allocation3 + $0x90] sm:$0xff] %v1228
    %1261 = vst.msk [vmem:[#allocation3 + $0x98] sm:$0xff] %vm286, %v1229
    %1262 = vst [vmem:[#allocation3 + $0xa0] sm:$0xff] %v1230
    %1263 = vst [vmem:[#allocation3 + $0xa8] sm:$0xff] %v1231
    %1264 = vst [vmem:[#allocation3 + $0xb0] sm:$0xff] %v1232
    %1265 = vst.msk [vmem:[#allocation3 + $0xb8] sm:$0xff] %vm286, %v1233
    %1266 = vst [vmem:[#allocation3 + $0xc0] sm:$0xff] %v1234
    %1267 = vst [vmem:[#allocation3 + $0xc8] sm:$0xff] %v1235
    %1268 = vst [vmem:[#allocation3 + $0xd0] sm:$0xff] %v1236
    %1269 = vst.msk [vmem:[#allocation3 + $0xd8] sm:$0xff] %vm286, %v1237
    %1270 = vst [vmem:[#allocation3 + $0xe0] sm:$0xff] %v1238
    %1271 = vst [vmem:[#allocation3 + $0xe8] sm:$0xff] %v1239
    %1272 = vst [vmem:[#allocation3 + $0xf0] sm:$0xff] %v1240
    %1273 = vst.msk [vmem:[#allocation3 + $0xf8] sm:$0xff] %vm286, %v1241
    %v1274 = vld [vmem:[#allocation2] sm:$0xff]
    %v1275 = vld [vmem:[#allocation2 + $0x8] sm:$0xff]
    %v1276 = vld [vmem:[#allocation2 + $0x10] sm:$0xff]
    %v1277 = vld [vmem:[#allocation2 + $0x18] sm:$0xff]
    %v1278 = vld [vmem:[#allocation2 + $0x20] sm:$0xff]
    %v1279 = vld [vmem:[#allocation2 + $0x28] sm:$0xff]
    %v1280 = vld [vmem:[#allocation2 + $0x30] sm:$0xff]
    %v1281 = vld [vmem:[#allocation2 + $0x38] sm:$0xff]
    %v1282 = vld [vmem:[#allocation2 + $0x40] sm:$0xff]
    %v1283 = vpack.c.bf16 %v1275, %v1274
    %v1284 = vpack.c.bf16 %v1277, %v1276
    %v1285 = vpack.c.bf16 %v1279, %v1278
    %v1286 = vpack.c.bf16 %v1281, %v1280
    %v1287 = vpack.c.bf16 %v1282, %v1282
    %s1288 = scalar_lea.vmem %s1, 256
    %v1289 = vld [vmem:[%s1288] sm:$0xff]
    %v1290 = vld [vmem:[%s1288 + $0x8] sm:$0xff]
    %v1291 = vld [vmem:[%s1288 + $0x10] sm:$0xff]
    %v1292 = vld [vmem:[%s1288 + $0x18] sm:$0xff]
    %v1293 = vld [vmem:[%s1288 + $0x20] sm:$0xff]
    %v1294 = vld [vmem:[%s1288 + $0x28] sm:$0xff]
    %v1295 = vld [vmem:[%s1288 + $0x30] sm:$0xff]
    %v1296 = vld [vmem:[%s1288 + $0x38] sm:$0xff]
    %vm1302 = vcmask 1045504
    %v1303 = vrot.slane %v1283, 2
    %v1304 = vrot.slane %v1284, 2
    %v1305 = vsel %vm1302, %v1303, %v1304
    %v1306 = vrot.slane %v1285, 2
    %v1307 = vsel %vm1302, %v1304, %v1306
    %v1308 = vrot.slane %v1286, 2
    %v1309 = vsel %vm1302, %v1306, %v1308
    %v1310 = vrot.slane %v1287, 2
    %v1311 = vsel %vm1302, %v1308, %v1310
    %v1320 = vunpack.c.l.b16 %v1289
    %v1321 = vunpack.c.h.b16 %v1289
    %v1322 = vunpack.c.l.b16 %v1290
    %v1323 = vunpack.c.h.b16 %v1290
    %v1324 = vunpack.c.l.b16 %v1291
    %v1325 = vunpack.c.h.b16 %v1291
    %v1326 = vunpack.c.l.b16 %v1292
    %v1327 = vunpack.c.h.b16 %v1292
    %v1328 = vunpack.c.l.b16 %v1293
    %v1329 = vunpack.c.h.b16 %v1293
    %v1330 = vunpack.c.l.b16 %v1294
    %v1331 = vunpack.c.h.b16 %v1294
    %v1332 = vunpack.c.l.b16 %v1295
    %v1333 = vunpack.c.h.b16 %v1295
    %v1334 = vunpack.c.l.b16 %v1296
    %v1335 = vunpack.c.h.b16 %v1296
    %v1336 = vpack.c.b16 %v1324, %v1320
    %v1337 = vpack.c.b16 %v1325, %v1321
    %v1338 = vpack.c.b16 %v1326, %v1322
    %v1339 = vpack.c.b16 %v1327, %v1323
    %v1340 = vpack.c.b16 %v1332, %v1328
    %v1341 = vpack.c.b16 %v1333, %v1329
    %v1342 = vpack.c.b16 %v1334, %v1330
    %v1343 = vpack.c.b16 %v1335, %v1331
    %v1353 = vsel %vm34, %v1305, 0
    %v1356 = vsel %vm34, %v1307, 0
    %v1359 = vsel %vm34, %v1309, 0
    %v1362 = vsel %vm34, %v1311, 0
    %1364 = vmatpush.bf16.msra.mxu0 0
    %1365 = vmatpush.bf16.msra.mxu0 0
    %1366 = vmatpush.bf16.msra.mxu0 0
    %1367 = vmatpush.bf16.msra.mxu0 0
    %1368 = vmatpush.bf16.msra.mxu0 0
    %1369 = vmatpush.bf16.msra.mxu0 0
    %1370 = vmatpush.bf16.msra.mxu0 %v1340
    %1371 = vmatpush.bf16.msra.mxu0 %v1336
    %1372 = vmatmul.bf16.gmra.mxu0 %v1353
    %v1373 = vpop.f32.mrf.mxu0
    %v1374 = vadd.f32 0.0, %v1373
    %v1375 = vpop.f32.mrf.mxu0
    %v1376 = vadd.f32 0.0, %v1375
    %1377 = vmatmul.bf16.gmra.mxu0 %v1356
    %v1378 = vpop.f32.mrf.mxu0
    %v1379 = vadd.f32 0.0, %v1378
    %v1380 = vpop.f32.mrf.mxu0
    %v1381 = vadd.f32 0.0, %v1380
    %1382 = vmatmul.bf16.gmra.mxu0 %v1359
    %v1383 = vpop.f32.mrf.mxu0
    %v1384 = vadd.f32 0.0, %v1383
    %v1385 = vpop.f32.mrf.mxu0
    %v1386 = vadd.f32 0.0, %v1385
    %1387 = vmatmul.bf16.gmra.mxu0 %v1362
    %v1388 = vpop.f32.mrf.mxu0
    %v1389 = vadd.f32 0.0, %v1388
    %v1390 = vpop.f32.mrf.mxu0
    %v1391 = vadd.f32 0.0, %v1390
    %1392 = vdwg.mxu0
    %1393 = vmatpush.bf16.msra.mxu0 0
    %1394 = vmatpush.bf16.msra.mxu0 0
    %1395 = vmatpush.bf16.msra.mxu0 0
    %1396 = vmatpush.bf16.msra.mxu0 0
    %1397 = vmatpush.bf16.msra.mxu0 0
    %1398 = vmatpush.bf16.msra.mxu0 0
    %1399 = vmatpush.bf16.msra.mxu0 %v1341
    %1400 = vmatpush.bf16.msra.mxu0 %v1337
    %1401 = vmatmul.bf16.gmra.mxu0 %v1353
    %v1402 = vpop.f32.mrf.mxu0
    %v1403 = vadd.f32 0.0, %v1402
    %v1404 = vpop.f32.mrf.mxu0
    %v1405 = vadd.f32 0.0, %v1404
    %1406 = vmatmul.bf16.gmra.mxu0 %v1356
    %v1407 = vpop.f32.mrf.mxu0
    %v1408 = vadd.f32 0.0, %v1407
    %v1409 = vpop.f32.mrf.mxu0
    %v1410 = vadd.f32 0.0, %v1409
    %1411 = vmatmul.bf16.gmra.mxu0 %v1359
    %v1412 = vpop.f32.mrf.mxu0
    %v1413 = vadd.f32 0.0, %v1412
    %v1414 = vpop.f32.mrf.mxu0
    %v1415 = vadd.f32 0.0, %v1414
    %1416 = vmatmul.bf16.gmra.mxu0 %v1362
    %v1417 = vpop.f32.mrf.mxu0
    %v1418 = vadd.f32 0.0, %v1417
    %v1419 = vpop.f32.mrf.mxu0
    %v1420 = vadd.f32 0.0, %v1419
    %1421 = vdwg.mxu0
    %1422 = vmatpush.bf16.msra.mxu0 0
    %1423 = vmatpush.bf16.msra.mxu0 0
    %1424 = vmatpush.bf16.msra.mxu0 0
    %1425 = vmatpush.bf16.msra.mxu0 0
    %1426 = vmatpush.bf16.msra.mxu0 0
    %1427 = vmatpush.bf16.msra.mxu0 0
    %1428 = vmatpush.bf16.msra.mxu0 %v1342
    %1429 = vmatpush.bf16.msra.mxu0 %v1338
    %1430 = vmatmul.bf16.gmra.mxu0 %v1353
    %v1431 = vpop.f32.mrf.mxu0
    %v1432 = vadd.f32 0.0, %v1431
    %v1433 = vpop.f32.mrf.mxu0
    %v1434 = vadd.f32 0.0, %v1433
    %1435 = vmatmul.bf16.gmra.mxu0 %v1356
    %v1436 = vpop.f32.mrf.mxu0
    %v1437 = vadd.f32 0.0, %v1436
    %v1438 = vpop.f32.mrf.mxu0
    %v1439 = vadd.f32 0.0, %v1438
    %1440 = vmatmul.bf16.gmra.mxu0 %v1359
    %v1441 = vpop.f32.mrf.mxu0
    %v1442 = vadd.f32 0.0, %v1441
    %v1443 = vpop.f32.mrf.mxu0
    %v1444 = vadd.f32 0.0, %v1443
    %1445 = vmatmul.bf16.gmra.mxu0 %v1362
    %v1446 = vpop.f32.mrf.mxu0
    %v1447 = vadd.f32 0.0, %v1446
    %v1448 = vpop.f32.mrf.mxu0
    %v1449 = vadd.f32 0.0, %v1448
    %1450 = vdwg.mxu0
    %1451 = vmatpush.bf16.msra.mxu0 0
    %1452 = vmatpush.bf16.msra.mxu0 0
    %1453 = vmatpush.bf16.msra.mxu0 0
    %1454 = vmatpush.bf16.msra.mxu0 0
    %1455 = vmatpush.bf16.msra.mxu0 0
    %1456 = vmatpush.bf16.msra.mxu0 0
    %1457 = vmatpush.bf16.msra.mxu0 %v1343
    %1458 = vmatpush.bf16.msra.mxu0 %v1339
    %1459 = vmatmul.bf16.gmra.mxu0 %v1353
    %v1460 = vpop.f32.mrf.mxu0
    %v1461 = vadd.f32 0.0, %v1460
    %v1462 = vpop.f32.mrf.mxu0
    %v1463 = vadd.f32 0.0, %v1462
    %1464 = vmatmul.bf16.gmra.mxu0 %v1356
    %v1465 = vpop.f32.mrf.mxu0
    %v1466 = vadd.f32 0.0, %v1465
    %v1467 = vpop.f32.mrf.mxu0
    %v1468 = vadd.f32 0.0, %v1467
    %1469 = vmatmul.bf16.gmra.mxu0 %v1359
    %v1470 = vpop.f32.mrf.mxu0
    %v1471 = vadd.f32 0.0, %v1470
    %v1472 = vpop.f32.mrf.mxu0
    %v1473 = vadd.f32 0.0, %v1472
    %1474 = vmatmul.bf16.gmra.mxu0 %v1362
    %v1475 = vpop.f32.mrf.mxu0
    %v1476 = vadd.f32 0.0, %v1475
    %v1477 = vpop.f32.mrf.mxu0
    %v1478 = vadd.f32 0.0, %v1477
    %1479 = vdwg.mxu0
    %v1480 = vld [vmem:[#allocation3] sm:$0xff]
    %v1481 = vld [vmem:[#allocation3 + $0x8] sm:$0xff]
    %v1482 = vld [vmem:[#allocation3 + $0x10] sm:$0xff]
    %v1483 = vld [vmem:[#allocation3 + $0x18] sm:$0xff]
    %v1484 = vld [vmem:[#allocation3 + $0x20] sm:$0xff]
    %v1485 = vld [vmem:[#allocation3 + $0x28] sm:$0xff]
    %v1486 = vld [vmem:[#allocation3 + $0x30] sm:$0xff]
    %v1487 = vld [vmem:[#allocation3 + $0x38] sm:$0xff]
    %v1488 = vld [vmem:[#allocation3 + $0x40] sm:$0xff]
    %v1489 = vld [vmem:[#allocation3 + $0x48] sm:$0xff]
    %v1490 = vld [vmem:[#allocation3 + $0x50] sm:$0xff]
    %v1491 = vld [vmem:[#allocation3 + $0x58] sm:$0xff]
    %v1492 = vld [vmem:[#allocation3 + $0x60] sm:$0xff]
    %v1493 = vld [vmem:[#allocation3 + $0x68] sm:$0xff]
    %v1494 = vld [vmem:[#allocation3 + $0x70] sm:$0xff]
    %v1495 = vld [vmem:[#allocation3 + $0x78] sm:$0xff]
    %v1496 = vld [vmem:[#allocation3 + $0x80] sm:$0xff]
    %v1497 = vld [vmem:[#allocation3 + $0x88] sm:$0xff]
    %v1498 = vld [vmem:[#allocation3 + $0x90] sm:$0xff]
    %v1499 = vld [vmem:[#allocation3 + $0x98] sm:$0xff]
    %v1500 = vld [vmem:[#allocation3 + $0xa0] sm:$0xff]
    %v1501 = vld [vmem:[#allocation3 + $0xa8] sm:$0xff]
    %v1502 = vld [vmem:[#allocation3 + $0xb0] sm:$0xff]
    %v1503 = vld [vmem:[#allocation3 + $0xb8] sm:$0xff]
    %v1504 = vld [vmem:[#allocation3 + $0xc0] sm:$0xff]
    %v1505 = vld [vmem:[#allocation3 + $0xc8] sm:$0xff]
    %v1506 = vld [vmem:[#allocation3 + $0xd0] sm:$0xff]
    %v1507 = vld [vmem:[#allocation3 + $0xd8] sm:$0xff]
    %v1508 = vld [vmem:[#allocation3 + $0xe0] sm:$0xff]
    %v1509 = vld [vmem:[#allocation3 + $0xe8] sm:$0xff]
    %v1510 = vld [vmem:[#allocation3 + $0xf0] sm:$0xff]
    %v1511 = vld [vmem:[#allocation3 + $0xf8] sm:$0xff]
    %v1512 = vadd.f32 %v1480, %v1374
    %v1513 = vadd.f32 %v1481, %v1403
    %v1514 = vadd.f32 %v1482, %v1432
    %v1515 = vadd.f32 %v1483, %v1461
    %v1516 = vadd.f32 %v1484, %v1376
    %v1517 = vadd.f32 %v1485, %v1405
    %v1518 = vadd.f32 %v1486, %v1434
    %v1519 = vadd.f32 %v1487, %v1463
    %v1520 = vadd.f32 %v1488, %v1379
    %v1521 = vadd.f32 %v1489, %v1408
    %v1522 = vadd.f32 %v1490, %v1437
    %v1523 = vadd.f32 %v1491, %v1466
    %v1524 = vadd.f32 %v1492, %v1381
    %v1525 = vadd.f32 %v1493, %v1410
    %v1526 = vadd.f32 %v1494, %v1439
    %v1527 = vadd.f32 %v1495, %v1468
    %v1528 = vadd.f32 %v1496, %v1384
    %v1529 = vadd.f32 %v1497, %v1413
    %v1530 = vadd.f32 %v1498, %v1442
    %v1531 = vadd.f32 %v1499, %v1471
    %v1532 = vadd.f32 %v1500, %v1386
    %v1533 = vadd.f32 %v1501, %v1415
    %v1534 = vadd.f32 %v1502, %v1444
    %v1535 = vadd.f32 %v1503, %v1473
    %v1536 = vadd.f32 %v1504, %v1389
    %v1537 = vadd.f32 %v1505, %v1418
    %v1538 = vadd.f32 %v1506, %v1447
    %v1539 = vadd.f32 %v1507, %v1476
    %v1540 = vadd.f32 %v1508, %v1391
    %v1541 = vadd.f32 %v1509, %v1420
    %v1542 = vadd.f32 %v1510, %v1449
    %v1543 = vadd.f32 %v1511, %v1478
    %1544 = vst [vmem:[#allocation3] sm:$0xff] %v1512
    %1545 = vst [vmem:[#allocation3 + $0x8] sm:$0xff] %v1513
    %1546 = vst [vmem:[#allocation3 + $0x10] sm:$0xff] %v1514
    %1547 = vst.msk [vmem:[#allocation3 + $0x18] sm:$0xff] %vm286, %v1515
    %1548 = vst [vmem:[#allocation3 + $0x20] sm:$0xff] %v1516
    %1549 = vst [vmem:[#allocation3 + $0x28] sm:$0xff] %v1517
    %1550 = vst [vmem:[#allocation3 + $0x30] sm:$0xff] %v1518
    %1551 = vst.msk [vmem:[#allocation3 + $0x38] sm:$0xff] %vm286, %v1519
    %1552 = vst [vmem:[#allocation3 + $0x40] sm:$0xff] %v1520
    %1553 = vst [vmem:[#allocation3 + $0x48] sm:$0xff] %v1521
    %1554 = vst [vmem:[#allocation3 + $0x50] sm:$0xff] %v1522
    %1555 = vst.msk [vmem:[#allocation3 + $0x58] sm:$0xff] %vm286, %v1523
    %1556 = vst [vmem:[#allocation3 + $0x60] sm:$0xff] %v1524
    %1557 = vst [vmem:[#allocation3 + $0x68] sm:$0xff] %v1525
    %1558 = vst [vmem:[#allocation3 + $0x70] sm:$0xff] %v1526
    %1559 = vst.msk [vmem:[#allocation3 + $0x78] sm:$0xff] %vm286, %v1527
    %1560 = vst [vmem:[#allocation3 + $0x80] sm:$0xff] %v1528
    %1561 = vst [vmem:[#allocation3 + $0x88] sm:$0xff] %v1529
    %1562 = vst [vmem:[#allocation3 + $0x90] sm:$0xff] %v1530
    %1563 = vst.msk [vmem:[#allocation3 + $0x98] sm:$0xff] %vm286, %v1531
    %1564 = vst [vmem:[#allocation3 + $0xa0] sm:$0xff] %v1532
    %1565 = vst [vmem:[#allocation3 + $0xa8] sm:$0xff] %v1533
    %1566 = vst [vmem:[#allocation3 + $0xb0] sm:$0xff] %v1534
    %1567 = vst.msk [vmem:[#allocation3 + $0xb8] sm:$0xff] %vm286, %v1535
    %1568 = vst [vmem:[#allocation3 + $0xc0] sm:$0xff] %v1536
    %1569 = vst [vmem:[#allocation3 + $0xc8] sm:$0xff] %v1537
    %1570 = vst [vmem:[#allocation3 + $0xd0] sm:$0xff] %v1538
    %1571 = vst.msk [vmem:[#allocation3 + $0xd8] sm:$0xff] %vm286, %v1539
    %1572 = vst [vmem:[#allocation3 + $0xe0] sm:$0xff] %v1540
    %1573 = vst [vmem:[#allocation3 + $0xe8] sm:$0xff] %v1541
    %1574 = vst [vmem:[#allocation3 + $0xf0] sm:$0xff] %v1542
    %1575 = vst.msk [vmem:[#allocation3 + $0xf8] sm:$0xff] %vm286, %v1543
    %v1576 = vld [vmem:[#allocation3] sm:$0xff]
    %v1577 = vld [vmem:[#allocation3 + $0x20] sm:$0xff]
    %v1578 = vld [vmem:[#allocation3 + $0x40] sm:$0xff]
    %v1579 = vld [vmem:[#allocation3 + $0x60] sm:$0xff]
    %v1580 = vld [vmem:[#allocation3 + $0x80] sm:$0xff]
    %v1581 = vld [vmem:[#allocation3 + $0xa0] sm:$0xff]
    %v1582 = vld [vmem:[#allocation3 + $0xc0] sm:$0xff]
    %v1583 = vld [vmem:[#allocation3 + $0xe0] sm:$0xff]
    %1592 = vrot.lane.b32.xlu0 %v1576, 112
    %v1593 = vpop.permute.xlu0 %1592
    %1594 = vrot.lane.b32.xlu0 %v1577, 112
    %v1595 = vpop.permute.xlu0 %1594
    %1596 = vrot.lane.b32.xlu0 %v1578, 112
    %v1597 = vpop.permute.xlu0 %1596
    %1598 = vrot.lane.b32.xlu0 %v1579, 112
    %v1599 = vpop.permute.xlu0 %1598
    %1600 = vrot.lane.b32.xlu0 %v1580, 112
    %v1601 = vpop.permute.xlu0 %1600
    %1602 = vrot.lane.b32.xlu0 %v1581, 112
    %v1603 = vpop.permute.xlu0 %1602
    %1604 = vrot.lane.b32.xlu0 %v1582, 112
    %v1605 = vpop.permute.xlu0 %1604
    %1606 = vrot.lane.b32.xlu0 %v1583, 112
    %v1607 = vpop.permute.xlu0 %1606
    %v1616 = vmax.f32 %v1576, %v1593
    %v1617 = vmax.f32 %v1577, %v1595
    %v1618 = vmax.f32 %v1578, %v1597
    %v1619 = vmax.f32 %v1579, %v1599
    %v1620 = vmax.f32 %v1580, %v1601
    %v1621 = vmax.f32 %v1581, %v1603
    %v1622 = vmax.f32 %v1582, %v1605
    %v1623 = vmax.f32 %v1583, %v1607
    %vm1624 = vcmask 130048
    %1625 = vst.msk [vmem:[#allocation4] sm:$0xff] %vm1624, %v1616
    %1626 = vst.msk [vmem:[#allocation4 + $0x10] sm:$0xff] %vm1624, %v1617
    %1627 = vst.msk [vmem:[#allocation4 + $0x20] sm:$0xff] %vm1624, %v1618
    %1628 = vst.msk [vmem:[#allocation4 + $0x30] sm:$0xff] %vm1624, %v1619
    %1629 = vst.msk [vmem:[#allocation4 + $0x40] sm:$0xff] %vm1624, %v1620
    %1630 = vst.msk [vmem:[#allocation4 + $0x50] sm:$0xff] %vm1624, %v1621
    %1631 = vst.msk [vmem:[#allocation4 + $0x60] sm:$0xff] %vm1624, %v1622
    %1632 = vst.msk [vmem:[#allocation4 + $0x70] sm:$0xff] %vm1624, %v1623
    %v1633 = vld [vmem:[#allocation3] sm:$0xff]
    %v1634 = vld [vmem:[#allocation3 + $0x20] sm:$0xff]
    %v1635 = vld [vmem:[#allocation3 + $0x40] sm:$0xff]
    %v1636 = vld [vmem:[#allocation3 + $0x60] sm:$0xff]
    %v1637 = vld [vmem:[#allocation3 + $0x80] sm:$0xff]
    %v1638 = vld [vmem:[#allocation3 + $0xa0] sm:$0xff]
    %v1639 = vld [vmem:[#allocation3 + $0xc0] sm:$0xff]
    %v1640 = vld [vmem:[#allocation3 + $0xe0] sm:$0xff]
    %1649 = vrot.lane.b32.xlu0 %v1633, 112
    %v1650 = vpop.permute.xlu0 %1649
    %1651 = vrot.lane.b32.xlu0 %v1634, 112
    %v1652 = vpop.permute.xlu0 %1651
    %1653 = vrot.lane.b32.xlu0 %v1635, 112
    %v1654 = vpop.permute.xlu0 %1653
    %1655 = vrot.lane.b32.xlu0 %v1636, 112
    %v1656 = vpop.permute.xlu0 %1655
    %1657 = vrot.lane.b32.xlu0 %v1637, 112
    %v1658 = vpop.permute.xlu0 %1657
    %1659 = vrot.lane.b32.xlu0 %v1638, 112
    %v1660 = vpop.permute.xlu0 %1659
    %1661 = vrot.lane.b32.xlu0 %v1639, 112
    %v1662 = vpop.permute.xlu0 %1661
    %1663 = vrot.lane.b32.xlu0 %v1640, 112
    %v1664 = vpop.permute.xlu0 %1663
    %v1673 = vmax.f32 %v1633, %v1650
    %v1674 = vmax.f32 %v1634, %v1652
    %v1675 = vmax.f32 %v1635, %v1654
    %v1676 = vmax.f32 %v1636, %v1656
    %v1677 = vmax.f32 %v1637, %v1658
    %v1678 = vmax.f32 %v1638, %v1660
    %v1679 = vmax.f32 %v1639, %v1662
    %v1680 = vmax.f32 %v1640, %v1664
    %1689 = vrot.lane.b32.xlu0 %v1673, 112
    %v1690 = vpop.permute.xlu0 %1689
    %1691 = vrot.lane.b32.xlu0 %v1674, 112
    %v1692 = vpop.permute.xlu0 %1691
    %1693 = vrot.lane.b32.xlu0 %v1675, 112
    %v1694 = vpop.permute.xlu0 %1693
    %1695 = vrot.lane.b32.xlu0 %v1676, 112
    %v1696 = vpop.permute.xlu0 %1695
    %1697 = vrot.lane.b32.xlu0 %v1677, 112
    %v1698 = vpop.permute.xlu0 %1697
    %1699 = vrot.lane.b32.xlu0 %v1678, 112
    %v1700 = vpop.permute.xlu0 %1699
    %1701 = vrot.lane.b32.xlu0 %v1679, 112
    %v1702 = vpop.permute.xlu0 %1701
    %1703 = vrot.lane.b32.xlu0 %v1680, 112
    %v1704 = vpop.permute.xlu0 %1703
    %vm1713 = vcmask 261248
    %1714 = vst.msk [vmem:[#allocation4] sm:$0xff] %vm1713, %v1690
    %1715 = vst.msk [vmem:[#allocation4 + $0x10] sm:$0xff] %vm1713, %v1692
    %1716 = vst.msk [vmem:[#allocation4 + $0x20] sm:$0xff] %vm1713, %v1694
    %1717 = vst.msk [vmem:[#allocation4 + $0x30] sm:$0xff] %vm1713, %v1696
    %1718 = vst.msk [vmem:[#allocation4 + $0x40] sm:$0xff] %vm1713, %v1698
    %1719 = vst.msk [vmem:[#allocation4 + $0x50] sm:$0xff] %vm1713, %v1700
    %1720 = vst.msk [vmem:[#allocation4 + $0x60] sm:$0xff] %vm1713, %v1702
    %1721 = vst.msk [vmem:[#allocation4 + $0x70] sm:$0xff] %vm1713, %v1704
    %v1722 = vld [vmem:[#allocation3] sm:$0xff]
    %v1723 = vld [vmem:[#allocation3 + $0x20] sm:$0xff]
    %v1724 = vld [vmem:[#allocation3 + $0x40] sm:$0xff]
    %v1725 = vld [vmem:[#allocation3 + $0x60] sm:$0xff]
    %v1726 = vld [vmem:[#allocation3 + $0x80] sm:$0xff]
    %v1727 = vld [vmem:[#allocation3 + $0xa0] sm:$0xff]
    %v1728 = vld [vmem:[#allocation3 + $0xc0] sm:$0xff]
    %v1729 = vld [vmem:[#allocation3 + $0xe0] sm:$0xff]
    %1738 = vrot.lane.b32.xlu0 %v1722, 112
    %v1739 = vpop.permute.xlu0 %1738
    %1740 = vrot.lane.b32.xlu0 %v1723, 112
    %v1741 = vpop.permute.xlu0 %1740
    %1742 = vrot.lane.b32.xlu0 %v1724, 112
    %v1743 = vpop.permute.xlu0 %1742
    %1744 = vrot.lane.b32.xlu0 %v1725, 112
    %v1745 = vpop.permute.xlu0 %1744
    %1746 = vrot.lane.b32.xlu0 %v1726, 112
    %v1747 = vpop.permute.xlu0 %1746
    %1748 = vrot.lane.b32.xlu0 %v1727, 112
    %v1749 = vpop.permute.xlu0 %1748
    %1750 = vrot.lane.b32.xlu0 %v1728, 112
    %v1751 = vpop.permute.xlu0 %1750
    %1752 = vrot.lane.b32.xlu0 %v1729, 112
    %v1753 = vpop.permute.xlu0 %1752
    %v1762 = vmax.f32 %v1722, %v1739
    %v1763 = vmax.f32 %v1723, %v1741
    %v1764 = vmax.f32 %v1724, %v1743
    %v1765 = vmax.f32 %v1725, %v1745
    %v1766 = vmax.f32 %v1726, %v1747
    %v1767 = vmax.f32 %v1727, %v1749
    %v1768 = vmax.f32 %v1728, %v1751
    %v1769 = vmax.f32 %v1729, %v1753
    %1778 = vrot.lane.b32.xlu0 %v1762, 96
    %v1779 = vpop.permute.xlu0 %1778
    %1780 = vrot.lane.b32.xlu0 %v1763, 96
    %v1781 = vpop.permute.xlu0 %1780
    %1782 = vrot.lane.b32.xlu0 %v1764, 96
    %v1783 = vpop.permute.xlu0 %1782
    %1784 = vrot.lane.b32.xlu0 %v1765, 96
    %v1785 = vpop.permute.xlu0 %1784
    %1786 = vrot.lane.b32.xlu0 %v1766, 96
    %v1787 = vpop.permute.xlu0 %1786
    %1788 = vrot.lane.b32.xlu0 %v1767, 96
    %v1789 = vpop.permute.xlu0 %1788
    %1790 = vrot.lane.b32.xlu0 %v1768, 96
    %v1791 = vpop.permute.xlu0 %1790
    %1792 = vrot.lane.b32.xlu0 %v1769, 96
    %v1793 = vpop.permute.xlu0 %1792
    %vm1802 = vcmask 392448
    %1803 = vst.msk [vmem:[#allocation4] sm:$0xff] %vm1802, %v1779
    %1804 = vst.msk [vmem:[#allocation4 + $0x10] sm:$0xff] %vm1802, %v1781
    %1805 = vst.msk [vmem:[#allocation4 + $0x20] sm:$0xff] %vm1802, %v1783
    %1806 = vst.msk [vmem:[#allocation4 + $0x30] sm:$0xff] %vm1802, %v1785
    %1807 = vst.msk [vmem:[#allocation4 + $0x40] sm:$0xff] %vm1802, %v1787
    %1808 = vst.msk [vmem:[#allocation4 + $0x50] sm:$0xff] %vm1802, %v1789
    %1809 = vst.msk [vmem:[#allocation4 + $0x60] sm:$0xff] %vm1802, %v1791
    %1810 = vst.msk [vmem:[#allocation4 + $0x70] sm:$0xff] %vm1802, %v1793
    %v1811 = vld [vmem:[#allocation3] sm:$0xff]
    %v1812 = vld [vmem:[#allocation3 + $0x20] sm:$0xff]
    %v1813 = vld [vmem:[#allocation3 + $0x40] sm:$0xff]
    %v1814 = vld [vmem:[#allocation3 + $0x60] sm:$0xff]
    %v1815 = vld [vmem:[#allocation3 + $0x80] sm:$0xff]
    %v1816 = vld [vmem:[#allocation3 + $0xa0] sm:$0xff]
    %v1817 = vld [vmem:[#allocation3 + $0xc0] sm:$0xff]
    %v1818 = vld [vmem:[#allocation3 + $0xe0] sm:$0xff]
    %1827 = vrot.lane.b32.xlu0 %v1811, 112
    %v1828 = vpop.permute.xlu0 %1827
    %1829 = vrot.lane.b32.xlu0 %v1812, 112
    %v1830 = vpop.permute.xlu0 %1829
    %1831 = vrot.lane.b32.xlu0 %v1813, 112
    %v1832 = vpop.permute.xlu0 %1831
    %1833 = vrot.lane.b32.xlu0 %v1814, 112
    %v1834 = vpop.permute.xlu0 %1833
    %1835 = vrot.lane.b32.xlu0 %v1815, 112
    %v1836 = vpop.permute.xlu0 %1835
    %1837 = vrot.lane.b32.xlu0 %v1816, 112
    %v1838 = vpop.permute.xlu0 %1837
    %1839 = vrot.lane.b32.xlu0 %v1817, 112
    %v1840 = vpop.permute.xlu0 %1839
    %1841 = vrot.lane.b32.xlu0 %v1818, 112
    %v1842 = vpop.permute.xlu0 %1841
    %v1851 = vmax.f32 %v1811, %v1828
    %v1852 = vmax.f32 %v1812, %v1830
    %v1853 = vmax.f32 %v1813, %v1832
    %v1854 = vmax.f32 %v1814, %v1834
    %v1855 = vmax.f32 %v1815, %v1836
    %v1856 = vmax.f32 %v1816, %v1838
    %v1857 = vmax.f32 %v1817, %v1840
    %v1858 = vmax.f32 %v1818, %v1842
    %1867 = vrot.lane.b32.xlu0 %v1851, 80
    %v1868 = vpop.permute.xlu0 %1867
    %1869 = vrot.lane.b32.xlu0 %v1852, 80
    %v1870 = vpop.permute.xlu0 %1869
    %1871 = vrot.lane.b32.xlu0 %v1853, 80
    %v1872 = vpop.permute.xlu0 %1871
    %1873 = vrot.lane.b32.xlu0 %v1854, 80
    %v1874 = vpop.permute.xlu0 %1873
    %1875 = vrot.lane.b32.xlu0 %v1855, 80
    %v1876 = vpop.permute.xlu0 %1875
    %1877 = vrot.lane.b32.xlu0 %v1856, 80
    %v1878 = vpop.permute.xlu0 %1877
    %1879 = vrot.lane.b32.xlu0 %v1857, 80
    %v1880 = vpop.permute.xlu0 %1879
    %1881 = vrot.lane.b32.xlu0 %v1858, 80
    %v1882 = vpop.permute.xlu0 %1881
    %vm1891 = vcmask 523648
    %1892 = vst.msk [vmem:[#allocation4] sm:$0xff] %vm1891, %v1868
    %1893 = vst.msk [vmem:[#allocation4 + $0x10] sm:$0xff] %vm1891, %v1870
    %1894 = vst.msk [vmem:[#allocation4 + $0x20] sm:$0xff] %vm1891, %v1872
    %1895 = vst.msk [vmem:[#allocation4 + $0x30] sm:$0xff] %vm1891, %v1874
    %1896 = vst.msk [vmem:[#allocation4 + $0x40] sm:$0xff] %vm1891, %v1876
    %1897 = vst.msk [vmem:[#allocation4 + $0x50] sm:$0xff] %vm1891, %v1878
    %1898 = vst.msk [vmem:[#allocation4 + $0x60] sm:$0xff] %vm1891, %v1880
    %1899 = vst.msk [vmem:[#allocation4 + $0x70] sm:$0xff] %vm1891, %v1882
    %v1900 = vld [vmem:[#allocation3 + $0x8] sm:$0xff]
    %v1901 = vld [vmem:[#allocation3 + $0x28] sm:$0xff]
    %v1902 = vld [vmem:[#allocation3 + $0x48] sm:$0xff]
    %v1903 = vld [vmem:[#allocation3 + $0x68] sm:$0xff]
    %v1904 = vld [vmem:[#allocation3 + $0x88] sm:$0xff]
    %v1905 = vld [vmem:[#allocation3 + $0xa8] sm:$0xff]
    %v1906 = vld [vmem:[#allocation3 + $0xc8] sm:$0xff]
    %v1907 = vld [vmem:[#allocation3 + $0xe8] sm:$0xff]
    %1916 = vrot.lane.b32.xlu0 %v1900, 112
    %v1917 = vpop.permute.xlu0 %1916
    %1918 = vrot.lane.b32.xlu0 %v1901, 112
    %v1919 = vpop.permute.xlu0 %1918
    %1920 = vrot.lane.b32.xlu0 %v1902, 112
    %v1921 = vpop.permute.xlu0 %1920
    %1922 = vrot.lane.b32.xlu0 %v1903, 112
    %v1923 = vpop.permute.xlu0 %1922
    %1924 = vrot.lane.b32.xlu0 %v1904, 112
    %v1925 = vpop.permute.xlu0 %1924
    %1926 = vrot.lane.b32.xlu0 %v1905, 112
    %v1927 = vpop.permute.xlu0 %1926
    %1928 = vrot.lane.b32.xlu0 %v1906, 112
    %v1929 = vpop.permute.xlu0 %1928
    %1930 = vrot.lane.b32.xlu0 %v1907, 112
    %v1931 = vpop.permute.xlu0 %1930
    %v1940 = vmax.f32 %v1900, %v1917
    %v1941 = vmax.f32 %v1901, %v1919
    %v1942 = vmax.f32 %v1902, %v1921
    %v1943 = vmax.f32 %v1903, %v1923
    %v1944 = vmax.f32 %v1904, %v1925
    %v1945 = vmax.f32 %v1905, %v1927
    %v1946 = vmax.f32 %v1906, %v1929
    %v1947 = vmax.f32 %v1907, %v1931
    %1956 = vrot.lane.b32.xlu0 %v1940, 64
    %v1957 = vpop.permute.xlu0 %1956
    %1958 = vrot.lane.b32.xlu0 %v1941, 64
    %v1959 = vpop.permute.xlu0 %1958
    %1960 = vrot.lane.b32.xlu0 %v1942, 64
    %v1961 = vpop.permute.xlu0 %1960
    %1962 = vrot.lane.b32.xlu0 %v1943, 64
    %v1963 = vpop.permute.xlu0 %1962
    %1964 = vrot.lane.b32.xlu0 %v1944, 64
    %v1965 = vpop.permute.xlu0 %1964
    %1966 = vrot.lane.b32.xlu0 %v1945, 64
    %v1967 = vpop.permute.xlu0 %1966
    %1968 = vrot.lane.b32.xlu0 %v1946, 64
    %v1969 = vpop.permute.xlu0 %1968
    %1970 = vrot.lane.b32.xlu0 %v1947, 64
    %v1971 = vpop.permute.xlu0 %1970
    %vm1980 = vcmask 654848
    %1981 = vst.msk [vmem:[#allocation4] sm:$0xff] %vm1980, %v1957
    %1982 = vst.msk [vmem:[#allocation4 + $0x10] sm:$0xff] %vm1980, %v1959
    %1983 = vst.msk [vmem:[#allocation4 + $0x20] sm:$0xff] %vm1980, %v1961
    %1984 = vst.msk [vmem:[#allocation4 + $0x30] sm:$0xff] %vm1980, %v1963
    %1985 = vst.msk [vmem:[#allocation4 + $0x40] sm:$0xff] %vm1980, %v1965
    %1986 = vst.msk [vmem:[#allocation4 + $0x50] sm:$0xff] %vm1980, %v1967
    %1987 = vst.msk [vmem:[#allocation4 + $0x60] sm:$0xff] %vm1980, %v1969
    %1988 = vst.msk [vmem:[#allocation4 + $0x70] sm:$0xff] %vm1980, %v1971
    %v1989 = vld [vmem:[#allocation3 + $0x8] sm:$0xff]
    %v1990 = vld [vmem:[#allocation3 + $0x28] sm:$0xff]
    %v1991 = vld [vmem:[#allocation3 + $0x48] sm:$0xff]
    %v1992 = vld [vmem:[#allocation3 + $0x68] sm:$0xff]
    %v1993 = vld [vmem:[#allocation3 + $0x88] sm:$0xff]
    %v1994 = vld [vmem:[#allocation3 + $0xa8] sm:$0xff]
    %v1995 = vld [vmem:[#allocation3 + $0xc8] sm:$0xff]
    %v1996 = vld [vmem:[#allocation3 + $0xe8] sm:$0xff]
    %2005 = vrot.lane.b32.xlu0 %v1989, 112
    %v2006 = vpop.permute.xlu0 %2005
    %2007 = vrot.lane.b32.xlu0 %v1990, 112
    %v2008 = vpop.permute.xlu0 %2007
    %2009 = vrot.lane.b32.xlu0 %v1991, 112
    %v2010 = vpop.permute.xlu0 %2009
    %2011 = vrot.lane.b32.xlu0 %v1992, 112
    %v2012 = vpop.permute.xlu0 %2011
    %2013 = vrot.lane.b32.xlu0 %v1993, 112
    %v2014 = vpop.permute.xlu0 %2013
    %2015 = vrot.lane.b32.xlu0 %v1994, 112
    %v2016 = vpop.permute.xlu0 %2015
    %2017 = vrot.lane.b32.xlu0 %v1995, 112
    %v2018 = vpop.permute.xlu0 %2017
    %2019 = vrot.lane.b32.xlu0 %v1996, 112
    %v2020 = vpop.permute.xlu0 %2019
    %v2029 = vmax.f32 %v1989, %v2006
    %v2030 = vmax.f32 %v1990, %v2008
    %v2031 = vmax.f32 %v1991, %v2010
    %v2032 = vmax.f32 %v1992, %v2012
    %v2033 = vmax.f32 %v1993, %v2014
    %v2034 = vmax.f32 %v1994, %v2016
    %v2035 = vmax.f32 %v1995, %v2018
    %v2036 = vmax.f32 %v1996, %v2020
    %2045 = vrot.lane.b32.xlu0 %v2029, 48
    %v2046 = vpop.permute.xlu0 %2045
    %2047 = vrot.lane.b32.xlu0 %v2030, 48
    %v2048 = vpop.permute.xlu0 %2047
    %2049 = vrot.lane.b32.xlu0 %v2031, 48
    %v2050 = vpop.permute.xlu0 %2049
    %2051 = vrot.lane.b32.xlu0 %v2032, 48
    %v2052 = vpop.permute.xlu0 %2051
    %2053 = vrot.lane.b32.xlu0 %v2033, 48
    %v2054 = vpop.permute.xlu0 %2053
    %2055 = vrot.lane.b32.xlu0 %v2034, 48
    %v2056 = vpop.permute.xlu0 %2055
    %2057 = vrot.lane.b32.xlu0 %v2035, 48
    %v2058 = vpop.permute.xlu0 %2057
    %2059 = vrot.lane.b32.xlu0 %v2036, 48
    %v2060 = vpop.permute.xlu0 %2059
    %vm2069 = vcmask 786048
    %2070 = vst.msk [vmem:[#allocation4] sm:$0xff] %vm2069, %v2046
    %2071 = vst.msk [vmem:[#allocation4 + $0x10] sm:$0xff] %vm2069, %v2048
    %2072 = vst.msk [vmem:[#allocation4 + $0x20] sm:$0xff] %vm2069, %v2050
    %2073 = vst.msk [vmem:[#allocation4 + $0x30] sm:$0xff] %vm2069, %v2052
    %2074 = vst.msk [vmem:[#allocation4 + $0x40] sm:$0xff] %vm2069, %v2054
    %2075 = vst.msk [vmem:[#allocation4 + $0x50] sm:$0xff] %vm2069, %v2056
    %2076 = vst.msk [vmem:[#allocation4 + $0x60] sm:$0xff] %vm2069, %v2058
    %2077 = vst.msk [vmem:[#allocation4 + $0x70] sm:$0xff] %vm2069, %v2060
    %v2078 = vld [vmem:[#allocation3 + $0x8] sm:$0xff]
    %v2079 = vld [vmem:[#allocation3 + $0x28] sm:$0xff]
    %v2080 = vld [vmem:[#allocation3 + $0x48] sm:$0xff]
    %v2081 = vld [vmem:[#allocation3 + $0x68] sm:$0xff]
    %v2082 = vld [vmem:[#allocation3 + $0x88] sm:$0xff]
    %v2083 = vld [vmem:[#allocation3 + $0xa8] sm:$0xff]
    %v2084 = vld [vmem:[#allocation3 + $0xc8] sm:$0xff]
    %v2085 = vld [vmem:[#allocation3 + $0xe8] sm:$0xff]
    %2094 = vrot.lane.b32.xlu0 %v2078, 112
    %v2095 = vpop.permute.xlu0 %2094
    %2096 = vrot.lane.b32.xlu0 %v2079, 112
    %v2097 = vpop.permute.xlu0 %2096
    %2098 = vrot.lane.b32.xlu0 %v2080, 112
    %v2099 = vpop.permute.xlu0 %2098
    %2100 = vrot.lane.b32.xlu0 %v2081, 112
    %v2101 = vpop.permute.xlu0 %2100
    %2102 = vrot.lane.b32.xlu0 %v2082, 112
    %v2103 = vpop.permute.xlu0 %2102
    %2104 = vrot.lane.b32.xlu0 %v2083, 112
    %v2105 = vpop.permute.xlu0 %2104
    %2106 = vrot.lane.b32.xlu0 %v2084, 112
    %v2107 = vpop.permute.xlu0 %2106
    %2108 = vrot.lane.b32.xlu0 %v2085, 112
    %v2109 = vpop.permute.xlu0 %2108
    %v2118 = vmax.f32 %v2078, %v2095
    %v2119 = vmax.f32 %v2079, %v2097
    %v2120 = vmax.f32 %v2080, %v2099
    %v2121 = vmax.f32 %v2081, %v2101
    %v2122 = vmax.f32 %v2082, %v2103
    %v2123 = vmax.f32 %v2083, %v2105
    %v2124 = vmax.f32 %v2084, %v2107
    %v2125 = vmax.f32 %v2085, %v2109
    %2134 = vrot.lane.b32.xlu0 %v2118, 32
    %v2135 = vpop.permute.xlu0 %2134
    %2136 = vrot.lane.b32.xlu0 %v2119, 32
    %v2137 = vpop.permute.xlu0 %2136
    %2138 = vrot.lane.b32.xlu0 %v2120, 32
    %v2139 = vpop.permute.xlu0 %2138
    %2140 = vrot.lane.b32.xlu0 %v2121, 32
    %v2141 = vpop.permute.xlu0 %2140
    %2142 = vrot.lane.b32.xlu0 %v2122, 32
    %v2143 = vpop.permute.xlu0 %2142
    %2144 = vrot.lane.b32.xlu0 %v2123, 32
    %v2145 = vpop.permute.xlu0 %2144
    %2146 = vrot.lane.b32.xlu0 %v2124, 32
    %v2147 = vpop.permute.xlu0 %2146
    %2148 = vrot.lane.b32.xlu0 %v2125, 32
    %v2149 = vpop.permute.xlu0 %2148
    %vm2158 = vcmask 917248
    %2159 = vst.msk [vmem:[#allocation4] sm:$0xff] %vm2158, %v2135
    %2160 = vst.msk [vmem:[#allocation4 + $0x10] sm:$0xff] %vm2158, %v2137
    %2161 = vst.msk [vmem:[#allocation4 + $0x20] sm:$0xff] %vm2158, %v2139
    %2162 = vst.msk [vmem:[#allocation4 + $0x30] sm:$0xff] %vm2158, %v2141
    %2163 = vst.msk [vmem:[#allocation4 + $0x40] sm:$0xff] %vm2158, %v2143
    %2164 = vst.msk [vmem:[#allocation4 + $0x50] sm:$0xff] %vm2158, %v2145
    %2165 = vst.msk [vmem:[#allocation4 + $0x60] sm:$0xff] %vm2158, %v2147
    %2166 = vst.msk [vmem:[#allocation4 + $0x70] sm:$0xff] %vm2158, %v2149
    %v2167 = vld [vmem:[#allocation3 + $0x8] sm:$0xff]
    %v2168 = vld [vmem:[#allocation3 + $0x28] sm:$0xff]
    %v2169 = vld [vmem:[#allocation3 + $0x48] sm:$0xff]
    %v2170 = vld [vmem:[#allocation3 + $0x68] sm:$0xff]
    %v2171 = vld [vmem:[#allocation3 + $0x88] sm:$0xff]
    %v2172 = vld [vmem:[#allocation3 + $0xa8] sm:$0xff]
    %v2173 = vld [vmem:[#allocation3 + $0xc8] sm:$0xff]
    %v2174 = vld [vmem:[#allocation3 + $0xe8] sm:$0xff]
    %2183 = vrot.lane.b32.xlu0 %v2167, 112
    %v2184 = vpop.permute.xlu0 %2183
    %2185 = vrot.lane.b32.xlu0 %v2168, 112
    %v2186 = vpop.permute.xlu0 %2185
    %2187 = vrot.lane.b32.xlu0 %v2169, 112
    %v2188 = vpop.permute.xlu0 %2187
    %2189 = vrot.lane.b32.xlu0 %v2170, 112
    %v2190 = vpop.permute.xlu0 %2189
    %2191 = vrot.lane.b32.xlu0 %v2171, 112
    %v2192 = vpop.permute.xlu0 %2191
    %2193 = vrot.lane.b32.xlu0 %v2172, 112
    %v2194 = vpop.permute.xlu0 %2193
    %2195 = vrot.lane.b32.xlu0 %v2173, 112
    %v2196 = vpop.permute.xlu0 %2195
    %2197 = vrot.lane.b32.xlu0 %v2174, 112
    %v2198 = vpop.permute.xlu0 %2197
    %v2207 = vmax.f32 %v2167, %v2184
    %v2208 = vmax.f32 %v2168, %v2186
    %v2209 = vmax.f32 %v2169, %v2188
    %v2210 = vmax.f32 %v2170, %v2190
    %v2211 = vmax.f32 %v2171, %v2192
    %v2212 = vmax.f32 %v2172, %v2194
    %v2213 = vmax.f32 %v2173, %v2196
    %v2214 = vmax.f32 %v2174, %v2198
    %2223 = vrot.lane.b32.xlu0 %v2207, 16
    %v2224 = vpop.permute.xlu0 %2223
    %2225 = vrot.lane.b32.xlu0 %v2208, 16
    %v2226 = vpop.permute.xlu0 %2225
    %2227 = vrot.lane.b32.xlu0 %v2209, 16
    %v2228 = vpop.permute.xlu0 %2227
    %2229 = vrot.lane.b32.xlu0 %v2210, 16
    %v2230 = vpop.permute.xlu0 %2229
    %2231 = vrot.lane.b32.xlu0 %v2211, 16
    %v2232 = vpop.permute.xlu0 %2231
    %2233 = vrot.lane.b32.xlu0 %v2212, 16
    %v2234 = vpop.permute.xlu0 %2233
    %2235 = vrot.lane.b32.xlu0 %v2213, 16
    %v2236 = vpop.permute.xlu0 %2235
    %2237 = vrot.lane.b32.xlu0 %v2214, 16
    %v2238 = vpop.permute.xlu0 %2237
    %vm2247 = vcmask 1048448
    %2248 = vst.msk [vmem:[#allocation4] sm:$0xff] %vm2247, %v2224
    %2249 = vst.msk [vmem:[#allocation4 + $0x10] sm:$0xff] %vm2247, %v2226
    %2250 = vst.msk [vmem:[#allocation4 + $0x20] sm:$0xff] %vm2247, %v2228
    %2251 = vst.msk [vmem:[#allocation4 + $0x30] sm:$0xff] %vm2247, %v2230
    %2252 = vst.msk [vmem:[#allocation4 + $0x40] sm:$0xff] %vm2247, %v2232
    %2253 = vst.msk [vmem:[#allocation4 + $0x50] sm:$0xff] %vm2247, %v2234
    %2254 = vst.msk [vmem:[#allocation4 + $0x60] sm:$0xff] %vm2247, %v2236
    %2255 = vst.msk [vmem:[#allocation4 + $0x70] sm:$0xff] %vm2247, %v2238
    %v2256 = vld [vmem:[#allocation3 + $0x10] sm:$0xff]
    %v2257 = vld [vmem:[#allocation3 + $0x30] sm:$0xff]
    %v2258 = vld [vmem:[#allocation3 + $0x50] sm:$0xff]
    %v2259 = vld [vmem:[#allocation3 + $0x70] sm:$0xff]
    %v2260 = vld [vmem:[#allocation3 + $0x90] sm:$0xff]
    %v2261 = vld [vmem:[#allocation3 + $0xb0] sm:$0xff]
    %v2262 = vld [vmem:[#allocation3 + $0xd0] sm:$0xff]
    %v2263 = vld [vmem:[#allocation3 + $0xf0] sm:$0xff]
    %2272 = vrot.lane.b32.xlu0 %v2256, 112
    %v2273 = vpop.permute.xlu0 %2272
    %2274 = vrot.lane.b32.xlu0 %v2257, 112
    %v2275 = vpop.permute.xlu0 %2274
    %2276 = vrot.lane.b32.xlu0 %v2258, 112
    %v2277 = vpop.permute.xlu0 %2276
    %2278 = vrot.lane.b32.xlu0 %v2259, 112
    %v2279 = vpop.permute.xlu0 %2278
    %2280 = vrot.lane.b32.xlu0 %v2260, 112
    %v2281 = vpop.permute.xlu0 %2280
    %2282 = vrot.lane.b32.xlu0 %v2261, 112
    %v2283 = vpop.permute.xlu0 %2282
    %2284 = vrot.lane.b32.xlu0 %v2262, 112
    %v2285 = vpop.permute.xlu0 %2284
    %2286 = vrot.lane.b32.xlu0 %v2263, 112
    %v2287 = vpop.permute.xlu0 %2286
    %v2296 = vmax.f32 %v2256, %v2273
    %v2297 = vmax.f32 %v2257, %v2275
    %v2298 = vmax.f32 %v2258, %v2277
    %v2299 = vmax.f32 %v2259, %v2279
    %v2300 = vmax.f32 %v2260, %v2281
    %v2301 = vmax.f32 %v2261, %v2283
    %v2302 = vmax.f32 %v2262, %v2285
    %v2303 = vmax.f32 %v2263, %v2287
    %2304 = vst.msk [vmem:[#allocation4 + $0x8] sm:$0xff] %vm1624, %v2296
    %2305 = vst.msk [vmem:[#allocation4 + $0x18] sm:$0xff] %vm1624, %v2297
    %2306 = vst.msk [vmem:[#allocation4 + $0x28] sm:$0xff] %vm1624, %v2298
    %2307 = vst.msk [vmem:[#allocation4 + $0x38] sm:$0xff] %vm1624, %v2299
    %2308 = vst.msk [vmem:[#allocation4 + $0x48] sm:$0xff] %vm1624, %v2300
    %2309 = vst.msk [vmem:[#allocation4 + $0x58] sm:$0xff] %vm1624, %v2301
    %2310 = vst.msk [vmem:[#allocation4 + $0x68] sm:$0xff] %vm1624, %v2302
    %2311 = vst.msk [vmem:[#allocation4 + $0x78] sm:$0xff] %vm1624, %v2303
    %v2312 = vld [vmem:[#allocation3 + $0x10] sm:$0xff]
    %v2313 = vld [vmem:[#allocation3 + $0x30] sm:$0xff]
    %v2314 = vld [vmem:[#allocation3 + $0x50] sm:$0xff]
    %v2315 = vld [vmem:[#allocation3 + $0x70] sm:$0xff]
    %v2316 = vld [vmem:[#allocation3 + $0x90] sm:$0xff]
    %v2317 = vld [vmem:[#allocation3 + $0xb0] sm:$0xff]
    %v2318 = vld [vmem:[#allocation3 + $0xd0] sm:$0xff]
    %v2319 = vld [vmem:[#allocation3 + $0xf0] sm:$0xff]
    %2328 = vrot.lane.b32.xlu0 %v2312, 112
    %v2329 = vpop.permute.xlu0 %2328
    %2330 = vrot.lane.b32.xlu0 %v2313, 112
    %v2331 = vpop.permute.xlu0 %2330
    %2332 = vrot.lane.b32.xlu0 %v2314, 112
    %v2333 = vpop.permute.xlu0 %2332
    %2334 = vrot.lane.b32.xlu0 %v2315, 112
    %v2335 = vpop.permute.xlu0 %2334
    %2336 = vrot.lane.b32.xlu0 %v2316, 112
    %v2337 = vpop.permute.xlu0 %2336
    %2338 = vrot.lane.b32.xlu0 %v2317, 112
    %v2339 = vpop.permute.xlu0 %2338
    %2340 = vrot.lane.b32.xlu0 %v2318, 112
    %v2341 = vpop.permute.xlu0 %2340
    %2342 = vrot.lane.b32.xlu0 %v2319, 112
    %v2343 = vpop.permute.xlu0 %2342
    %v2352 = vmax.f32 %v2312, %v2329
    %v2353 = vmax.f32 %v2313, %v2331
    %v2354 = vmax.f32 %v2314, %v2333
    %v2355 = vmax.f32 %v2315, %v2335
    %v2356 = vmax.f32 %v2316, %v2337
    %v2357 = vmax.f32 %v2317, %v2339
    %v2358 = vmax.f32 %v2318, %v2341
    %v2359 = vmax.f32 %v2319, %v2343
    %2368 = vrot.lane.b32.xlu0 %v2352, 112
    %v2369 = vpop.permute.xlu0 %2368
    %2370 = vrot.lane.b32.xlu0 %v2353, 112
    %v2371 = vpop.permute.xlu0 %2370
    %2372 = vrot.lane.b32.xlu0 %v2354, 112
    %v2373 = vpop.permute.xlu0 %2372
    %2374 = vrot.lane.b32.xlu0 %v2355, 112
    %v2375 = vpop.permute.xlu0 %2374
    %2376 = vrot.lane.b32.xlu0 %v2356, 112
    %v2377 = vpop.permute.xlu0 %2376
    %2378 = vrot.lane.b32.xlu0 %v2357, 112
    %v2379 = vpop.permute.xlu0 %2378
    %2380 = vrot.lane.b32.xlu0 %v2358, 112
    %v2381 = vpop.permute.xlu0 %2380
    %2382 = vrot.lane.b32.xlu0 %v2359, 112
    %v2383 = vpop.permute.xlu0 %2382
    %2392 = vst.msk [vmem:[#allocation4 + $0x8] sm:$0xff] %vm1713, %v2369
    %2393 = vst.msk [vmem:[#allocation4 + $0x18] sm:$0xff] %vm1713, %v2371
    %2394 = vst.msk [vmem:[#allocation4 + $0x28] sm:$0xff] %vm1713, %v2373
    %2395 = vst.msk [vmem:[#allocation4 + $0x38] sm:$0xff] %vm1713, %v2375
    %2396 = vst.msk [vmem:[#allocation4 + $0x48] sm:$0xff] %vm1713, %v2377
    %2397 = vst.msk [vmem:[#allocation4 + $0x58] sm:$0xff] %vm1713, %v2379
    %2398 = vst.msk [vmem:[#allocation4 + $0x68] sm:$0xff] %vm1713, %v2381
    %2399 = vst.msk [vmem:[#allocation4 + $0x78] sm:$0xff] %vm1713, %v2383
    %v2400 = vld [vmem:[#allocation3 + $0x10] sm:$0xff]
    %v2401 = vld [vmem:[#allocation3 + $0x30] sm:$0xff]
    %v2402 = vld [vmem:[#allocation3 + $0x50] sm:$0xff]
    %v2403 = vld [vmem:[#allocation3 + $0x70] sm:$0xff]
    %v2404 = vld [vmem:[#allocation3 + $0x90] sm:$0xff]
    %v2405 = vld [vmem:[#allocation3 + $0xb0] sm:$0xff]
    %v2406 = vld [vmem:[#allocation3 + $0xd0] sm:$0xff]
    %v2407 = vld [vmem:[#allocation3 + $0xf0] sm:$0xff]
    %2416 = vrot.lane.b32.xlu0 %v2400, 112
    %v2417 = vpop.permute.xlu0 %2416
    %2418 = vrot.lane.b32.xlu0 %v2401, 112
    %v2419 = vpop.permute.xlu0 %2418
    %2420 = vrot.lane.b32.xlu0 %v2402, 112
    %v2421 = vpop.permute.xlu0 %2420
    %2422 = vrot.lane.b32.xlu0 %v2403, 112
    %v2423 = vpop.permute.xlu0 %2422
    %2424 = vrot.lane.b32.xlu0 %v2404, 112
    %v2425 = vpop.permute.xlu0 %2424
    %2426 = vrot.lane.b32.xlu0 %v2405, 112
    %v2427 = vpop.permute.xlu0 %2426
    %2428 = vrot.lane.b32.xlu0 %v2406, 112
    %v2429 = vpop.permute.xlu0 %2428
    %2430 = vrot.lane.b32.xlu0 %v2407, 112
    %v2431 = vpop.permute.xlu0 %2430
    %v2440 = vmax.f32 %v2400, %v2417
    %v2441 = vmax.f32 %v2401, %v2419
    %v2442 = vmax.f32 %v2402, %v2421
    %v2443 = vmax.f32 %v2403, %v2423
    %v2444 = vmax.f32 %v2404, %v2425
    %v2445 = vmax.f32 %v2405, %v2427
    %v2446 = vmax.f32 %v2406, %v2429
    %v2447 = vmax.f32 %v2407, %v2431
    %2456 = vrot.lane.b32.xlu0 %v2440, 96
    %v2457 = vpop.permute.xlu0 %2456
    %2458 = vrot.lane.b32.xlu0 %v2441, 96
    %v2459 = vpop.permute.xlu0 %2458
    %2460 = vrot.lane.b32.xlu0 %v2442, 96
    %v2461 = vpop.permute.xlu0 %2460
    %2462 = vrot.lane.b32.xlu0 %v2443, 96
    %v2463 = vpop.permute.xlu0 %2462
    %2464 = vrot.lane.b32.xlu0 %v2444, 96
    %v2465 = vpop.permute.xlu0 %2464
    %2466 = vrot.lane.b32.xlu0 %v2445, 96
    %v2467 = vpop.permute.xlu0 %2466
    %2468 = vrot.lane.b32.xlu0 %v2446, 96
    %v2469 = vpop.permute.xlu0 %2468
    %2470 = vrot.lane.b32.xlu0 %v2447, 96
    %v2471 = vpop.permute.xlu0 %2470
    %2480 = vst.msk [vmem:[#allocation4 + $0x8] sm:$0xff] %vm1802, %v2457
    %2481 = vst.msk [vmem:[#allocation4 + $0x18] sm:$0xff] %vm1802, %v2459
    %2482 = vst.msk [vmem:[#allocation4 + $0x28] sm:$0xff] %vm1802, %v2461
    %2483 = vst.msk [vmem:[#allocation4 + $0x38] sm:$0xff] %vm1802, %v2463
    %2484 = vst.msk [vmem:[#allocation4 + $0x48] sm:$0xff] %vm1802, %v2465
    %2485 = vst.msk [vmem:[#allocation4 + $0x58] sm:$0xff] %vm1802, %v2467
    %2486 = vst.msk [vmem:[#allocation4 + $0x68] sm:$0xff] %vm1802, %v2469
    %2487 = vst.msk [vmem:[#allocation4 + $0x78] sm:$0xff] %vm1802, %v2471
    %v2488 = vld [vmem:[#allocation3 + $0x10] sm:$0xff]
    %v2489 = vld [vmem:[#allocation3 + $0x30] sm:$0xff]
    %v2490 = vld [vmem:[#allocation3 + $0x50] sm:$0xff]
    %v2491 = vld [vmem:[#allocation3 + $0x70] sm:$0xff]
    %v2492 = vld [vmem:[#allocation3 + $0x90] sm:$0xff]
    %v2493 = vld [vmem:[#allocation3 + $0xb0] sm:$0xff]
    %v2494 = vld [vmem:[#allocation3 + $0xd0] sm:$0xff]
    %v2495 = vld [vmem:[#allocation3 + $0xf0] sm:$0xff]
    %2504 = vrot.lane.b32.xlu0 %v2488, 112
    %v2505 = vpop.permute.xlu0 %2504
    %2506 = vrot.lane.b32.xlu0 %v2489, 112
    %v2507 = vpop.permute.xlu0 %2506
    %2508 = vrot.lane.b32.xlu0 %v2490, 112
    %v2509 = vpop.permute.xlu0 %2508
    %2510 = vrot.lane.b32.xlu0 %v2491, 112
    %v2511 = vpop.permute.xlu0 %2510
    %2512 = vrot.lane.b32.xlu0 %v2492, 112
    %v2513 = vpop.permute.xlu0 %2512
    %2514 = vrot.lane.b32.xlu0 %v2493, 112
    %v2515 = vpop.permute.xlu0 %2514
    %2516 = vrot.lane.b32.xlu0 %v2494, 112
    %v2517 = vpop.permute.xlu0 %2516
    %2518 = vrot.lane.b32.xlu0 %v2495, 112
    %v2519 = vpop.permute.xlu0 %2518
    %v2528 = vmax.f32 %v2488, %v2505
    %v2529 = vmax.f32 %v2489, %v2507
    %v2530 = vmax.f32 %v2490, %v2509
    %v2531 = vmax.f32 %v2491, %v2511
    %v2532 = vmax.f32 %v2492, %v2513
    %v2533 = vmax.f32 %v2493, %v2515
    %v2534 = vmax.f32 %v2494, %v2517
    %v2535 = vmax.f32 %v2495, %v2519
    %2544 = vrot.lane.b32.xlu0 %v2528, 80
    %v2545 = vpop.permute.xlu0 %2544
    %2546 = vrot.lane.b32.xlu0 %v2529, 80
    %v2547 = vpop.permute.xlu0 %2546
    %2548 = vrot.lane.b32.xlu0 %v2530, 80
    %v2549 = vpop.permute.xlu0 %2548
    %2550 = vrot.lane.b32.xlu0 %v2531, 80
    %v2551 = vpop.permute.xlu0 %2550
    %2552 = vrot.lane.b32.xlu0 %v2532, 80
    %v2553 = vpop.permute.xlu0 %2552
    %2554 = vrot.lane.b32.xlu0 %v2533, 80
    %v2555 = vpop.permute.xlu0 %2554
    %2556 = vrot.lane.b32.xlu0 %v2534, 80
    %v2557 = vpop.permute.xlu0 %2556
    %2558 = vrot.lane.b32.xlu0 %v2535, 80
    %v2559 = vpop.permute.xlu0 %2558
    %2568 = vst.msk [vmem:[#allocation4 + $0x8] sm:$0xff] %vm1891, %v2545
    %2569 = vst.msk [vmem:[#allocation4 + $0x18] sm:$0xff] %vm1891, %v2547
    %2570 = vst.msk [vmem:[#allocation4 + $0x28] sm:$0xff] %vm1891, %v2549
    %2571 = vst.msk [vmem:[#allocation4 + $0x38] sm:$0xff] %vm1891, %v2551
    %2572 = vst.msk [vmem:[#allocation4 + $0x48] sm:$0xff] %vm1891, %v2553
    %2573 = vst.msk [vmem:[#allocation4 + $0x58] sm:$0xff] %vm1891, %v2555
    %2574 = vst.msk [vmem:[#allocation4 + $0x68] sm:$0xff] %vm1891, %v2557
    %2575 = vst.msk [vmem:[#allocation4 + $0x78] sm:$0xff] %vm1891, %v2559
    %v2576 = vld [vmem:[#allocation3 + $0x18] sm:$0xff]
    %v2577 = vld [vmem:[#allocation3 + $0x38] sm:$0xff]
    %v2578 = vld [vmem:[#allocation3 + $0x58] sm:$0xff]
    %v2579 = vld [vmem:[#allocation3 + $0x78] sm:$0xff]
    %v2580 = vld [vmem:[#allocation3 + $0x98] sm:$0xff]
    %v2581 = vld [vmem:[#allocation3 + $0xb8] sm:$0xff]
    %v2582 = vld [vmem:[#allocation3 + $0xd8] sm:$0xff]
    %v2583 = vld [vmem:[#allocation3 + $0xf8] sm:$0xff]
    %2592 = vrot.lane.b32.xlu0 %v2576, 112
    %v2593 = vpop.permute.xlu0 %2592
    %2594 = vrot.lane.b32.xlu0 %v2577, 112
    %v2595 = vpop.permute.xlu0 %2594
    %2596 = vrot.lane.b32.xlu0 %v2578, 112
    %v2597 = vpop.permute.xlu0 %2596
    %2598 = vrot.lane.b32.xlu0 %v2579, 112
    %v2599 = vpop.permute.xlu0 %2598
    %2600 = vrot.lane.b32.xlu0 %v2580, 112
    %v2601 = vpop.permute.xlu0 %2600
    %2602 = vrot.lane.b32.xlu0 %v2581, 112
    %v2603 = vpop.permute.xlu0 %2602
    %2604 = vrot.lane.b32.xlu0 %v2582, 112
    %v2605 = vpop.permute.xlu0 %2604
    %2606 = vrot.lane.b32.xlu0 %v2583, 112
    %v2607 = vpop.permute.xlu0 %2606
    %v2616 = vmax.f32 %v2576, %v2593
    %v2617 = vmax.f32 %v2577, %v2595
    %v2618 = vmax.f32 %v2578, %v2597
    %v2619 = vmax.f32 %v2579, %v2599
    %v2620 = vmax.f32 %v2580, %v2601
    %v2621 = vmax.f32 %v2581, %v2603
    %v2622 = vmax.f32 %v2582, %v2605
    %v2623 = vmax.f32 %v2583, %v2607
    %2632 = vrot.lane.b32.xlu0 %v2616, 64
    %v2633 = vpop.permute.xlu0 %2632
    %2634 = vrot.lane.b32.xlu0 %v2617, 64
    %v2635 = vpop.permute.xlu0 %2634
    %2636 = vrot.lane.b32.xlu0 %v2618, 64
    %v2637 = vpop.permute.xlu0 %2636
    %2638 = vrot.lane.b32.xlu0 %v2619, 64
    %v2639 = vpop.permute.xlu0 %2638
    %2640 = vrot.lane.b32.xlu0 %v2620, 64
    %v2641 = vpop.permute.xlu0 %2640
    %2642 = vrot.lane.b32.xlu0 %v2621, 64
    %v2643 = vpop.permute.xlu0 %2642
    %2644 = vrot.lane.b32.xlu0 %v2622, 64
    %v2645 = vpop.permute.xlu0 %2644
    %2646 = vrot.lane.b32.xlu0 %v2623, 64
    %v2647 = vpop.permute.xlu0 %2646
    %2656 = vst.msk [vmem:[#allocation4 + $0x8] sm:$0xff] %vm1980, %v2633
    %2657 = vst.msk [vmem:[#allocation4 + $0x18] sm:$0xff] %vm1980, %v2635
    %2658 = vst.msk [vmem:[#allocation4 + $0x28] sm:$0xff] %vm1980, %v2637
    %2659 = vst.msk [vmem:[#allocation4 + $0x38] sm:$0xff] %vm1980, %v2639
    %2660 = vst.msk [vmem:[#allocation4 + $0x48] sm:$0xff] %vm1980, %v2641
    %2661 = vst.msk [vmem:[#allocation4 + $0x58] sm:$0xff] %vm1980, %v2643
    %2662 = vst.msk [vmem:[#allocation4 + $0x68] sm:$0xff] %vm1980, %v2645
    %2663 = vst.msk [vmem:[#allocation4 + $0x78] sm:$0xff] %vm1980, %v2647
    %v2664 = vld [vmem:[#allocation3 + $0x18] sm:$0xff]
    %v2665 = vld [vmem:[#allocation3 + $0x38] sm:$0xff]
    %v2666 = vld [vmem:[#allocation3 + $0x58] sm:$0xff]
    %v2667 = vld [vmem:[#allocation3 + $0x78] sm:$0xff]
    %v2668 = vld [vmem:[#allocation3 + $0x98] sm:$0xff]
    %v2669 = vld [vmem:[#allocation3 + $0xb8] sm:$0xff]
    %v2670 = vld [vmem:[#allocation3 + $0xd8] sm:$0xff]
    %v2671 = vld [vmem:[#allocation3 + $0xf8] sm:$0xff]
    %2680 = vrot.lane.b32.xlu0 %v2664, 112
    %v2681 = vpop.permute.xlu0 %2680
    %2682 = vrot.lane.b32.xlu0 %v2665, 112
    %v2683 = vpop.permute.xlu0 %2682
    %2684 = vrot.lane.b32.xlu0 %v2666, 112
    %v2685 = vpop.permute.xlu0 %2684
    %2686 = vrot.lane.b32.xlu0 %v2667, 112
    %v2687 = vpop.permute.xlu0 %2686
    %2688 = vrot.lane.b32.xlu0 %v2668, 112
    %v2689 = vpop.permute.xlu0 %2688
    %2690 = vrot.lane.b32.xlu0 %v2669, 112
    %v2691 = vpop.permute.xlu0 %2690
    %2692 = vrot.lane.b32.xlu0 %v2670, 112
    %v2693 = vpop.permute.xlu0 %2692
    %2694 = vrot.lane.b32.xlu0 %v2671, 112
    %v2695 = vpop.permute.xlu0 %2694
    %v2704 = vmax.f32 %v2664, %v2681
    %v2705 = vmax.f32 %v2665, %v2683
    %v2706 = vmax.f32 %v2666, %v2685
    %v2707 = vmax.f32 %v2667, %v2687
    %v2708 = vmax.f32 %v2668, %v2689
    %v2709 = vmax.f32 %v2669, %v2691
    %v2710 = vmax.f32 %v2670, %v2693
    %v2711 = vmax.f32 %v2671, %v2695
    %2720 = vrot.lane.b32.xlu0 %v2704, 48
    %v2721 = vpop.permute.xlu0 %2720
    %2722 = vrot.lane.b32.xlu0 %v2705, 48
    %v2723 = vpop.permute.xlu0 %2722
    %2724 = vrot.lane.b32.xlu0 %v2706, 48
    %v2725 = vpop.permute.xlu0 %2724
    %2726 = vrot.lane.b32.xlu0 %v2707, 48
    %v2727 = vpop.permute.xlu0 %2726
    %2728 = vrot.lane.b32.xlu0 %v2708, 48
    %v2729 = vpop.permute.xlu0 %2728
    %2730 = vrot.lane.b32.xlu0 %v2709, 48
    %v2731 = vpop.permute.xlu0 %2730
    %2732 = vrot.lane.b32.xlu0 %v2710, 48
    %v2733 = vpop.permute.xlu0 %2732
    %2734 = vrot.lane.b32.xlu0 %v2711, 48
    %v2735 = vpop.permute.xlu0 %2734
    %2744 = vst.msk [vmem:[#allocation4 + $0x8] sm:$0xff] %vm2069, %v2721
    %2745 = vst.msk [vmem:[#allocation4 + $0x18] sm:$0xff] %vm2069, %v2723
    %2746 = vst.msk [vmem:[#allocation4 + $0x28] sm:$0xff] %vm2069, %v2725
    %2747 = vst.msk [vmem:[#allocation4 + $0x38] sm:$0xff] %vm2069, %v2727
    %2748 = vst.msk [vmem:[#allocation4 + $0x48] sm:$0xff] %vm2069, %v2729
    %2749 = vst.msk [vmem:[#allocation4 + $0x58] sm:$0xff] %vm2069, %v2731
    %2750 = vst.msk [vmem:[#allocation4 + $0x68] sm:$0xff] %vm2069, %v2733
    %2751 = vst.msk [vmem:[#allocation4 + $0x78] sm:$0xff] %vm2069, %v2735
    %2752 = vst [vmem:[#allocation5] sm:$0xff] 0.0
    %2753 = vst [vmem:[#allocation5 + $0x8] sm:$0xff] 0.0
    %2754 = vst.msk [vmem:[#allocation5 + $0x10] sm:$0xff] %vm34, 0.0
    %2755 = vst [vmem:[#allocation5 + $0x18] sm:$0xff] 0.0
    %2756 = vst [vmem:[#allocation5 + $0x20] sm:$0xff] 0.0
    %2757 = vst.msk [vmem:[#allocation5 + $0x28] sm:$0xff] %vm34, 0.0
    %2758 = vst [vmem:[#allocation5 + $0x30] sm:$0xff] 0.0
    %2759 = vst [vmem:[#allocation5 + $0x38] sm:$0xff] 0.0
    %2760 = vst.msk [vmem:[#allocation5 + $0x40] sm:$0xff] %vm34, 0.0
    %2761 = vst [vmem:[#allocation5 + $0x48] sm:$0xff] 0.0
    %2762 = vst [vmem:[#allocation5 + $0x50] sm:$0xff] 0.0
    %2763 = vst.msk [vmem:[#allocation5 + $0x58] sm:$0xff] %vm34, 0.0
    %2764 = vst [vmem:[#allocation5 + $0x60] sm:$0xff] 0.0
    %2765 = vst [vmem:[#allocation5 + $0x68] sm:$0xff] 0.0
    %2766 = vst.msk [vmem:[#allocation5 + $0x70] sm:$0xff] %vm34, 0.0
    %2767 = vst [vmem:[#allocation5 + $0x78] sm:$0xf] 0.0
    %2768 = vst [vmem:[#allocation5 + $0x80] sm:$0xf] 0.0
    %vm2769 = vcmask 257024
    %2770 = vst.msk [vmem:[#allocation5 + $0x88] sm:$0xf] %vm2769, 0.0
    %v2771 = vld [vmem:[%s3] sm:$0x3]
    %v2772 = vld [vmem:[#allocation4] ss:$8 sm:$0x3]
    %s2773 = scalar_lea.vmem [#allocation4], 1
    %v2774 = vld [vmem:[%s2773] ss:$8 sm:$0x3]
    %v2775 = vmax.f32 %v2772, %v2774
    %v2776 = vadd.f32 %v2775, %v2771
    %v2777 = vmax.f32 %v2776, 0.0
    %2779 = vrot.lane.b32.xlu0 %v2777, 32
    %v2780 = vpop.permute.xlu0 %2779
    %v2781 = vrot.slane %v2780, 7
    %v2782 = vsel %vm34, %v2781, %v2780
    %v2784 = vlaneseq
    %vm2785 = vcmp.ge.s32.totalorder %v2784, 32
    %vm2786 = vcmp.lt.s32.totalorder %v2784, 256
    %vm2787 = vmand %vm2785, %vm2786
    %s2788 = scalar_lea.vmem [#allocation5], 2
    %2789 = vst.msk [vmem:[%s2788] ss:$8 sm:$0x3] %vm2787, %v2782
    %2790 = vst.msk [vmem:[%s2788] ss:$8 sm:$0x0] %vm2787, %v2782
    %s2791 = scalar_lea.vmem [#allocation4], 2
    %v2792 = vld [vmem:[%s2791] ss:$8 sm:$0x3]
    %s2793 = scalar_lea.vmem [#allocation4], 3
    %v2794 = vld [vmem:[%s2793] ss:$8 sm:$0x3]
    %v2795 = vmax.f32 %v2792, %v2794
    %v2796 = vadd.f32 %v2795, %v2771
    %v2797 = vmax.f32 %v2796, 0.0
    %2799 = vrot.lane.b32.xlu0 %v2797, 32
    %v2800 = vpop.permute.xlu0 %2799
    %v2801 = vrot.slane %v2800, 7
    %v2802 = vsel %vm34, %v2801, %v2800
    %s2804 = scalar_lea.vmem [#allocation5], 3
    %2805 = vst.msk [vmem:[%s2804] ss:$8 sm:$0x3] %vm2787, %v2802
    %2806 = vst.msk [vmem:[%s2804] ss:$8 sm:$0x0] %vm2787, %v2802
    %s2807 = scalar_lea.vmem [#allocation4], 4
    %v2808 = vld [vmem:[%s2807] ss:$8 sm:$0x3]
    %s2809 = scalar_lea.vmem [#allocation4], 5
    %v2810 = vld [vmem:[%s2809] ss:$8 sm:$0x3]
    %v2811 = vmax.f32 %v2808, %v2810
    %v2812 = vadd.f32 %v2811, %v2771
    %v2813 = vmax.f32 %v2812, 0.0
    %2815 = vrot.lane.b32.xlu0 %v2813, 32
    %v2816 = vpop.permute.xlu0 %2815
    %v2817 = vrot.slane %v2816, 7
    %v2818 = vsel %vm34, %v2817, %v2816
    %s2820 = scalar_lea.vmem [#allocation5], 4
    %2821 = vst.msk [vmem:[%s2820] ss:$8 sm:$0x3] %vm2787, %v2818
    %2822 = vst.msk [vmem:[%s2820] ss:$8 sm:$0x0] %vm2787, %v2818
    %s2823 = scalar_lea.vmem [#allocation4], 6
    %v2824 = vld [vmem:[%s2823] ss:$8 sm:$0x3]
    %s2825 = scalar_lea.vmem [#allocation4], 7
    %v2826 = vld [vmem:[%s2825] ss:$8 sm:$0x3]
    %v2827 = vmax.f32 %v2824, %v2826
    %v2828 = vadd.f32 %v2827, %v2771
    %v2829 = vmax.f32 %v2828, 0.0
    %2831 = vrot.lane.b32.xlu0 %v2829, 32
    %v2832 = vpop.permute.xlu0 %2831
    %v2833 = vrot.slane %v2832, 7
    %v2834 = vsel %vm34, %v2833, %v2832
    %s2836 = scalar_lea.vmem [#allocation5], 5
    %2837 = vst.msk [vmem:[%s2836] ss:$8 sm:$0x3] %vm2787, %v2834
    %2838 = vst.msk [vmem:[%s2836] ss:$8 sm:$0x0] %vm2787, %v2834
    %s2839 = scalar_lea.vmem [#allocation4], 16
    %v2840 = vld [vmem:[%s2839] ss:$8 sm:$0x3]
    %s2841 = scalar_lea.vmem [#allocation4], 17
    %v2842 = vld [vmem:[%s2841] ss:$8 sm:$0x3]
    %v2843 = vmax.f32 %v2840, %v2842
    %v2844 = vadd.f32 %v2843, %v2771
    %v2845 = vmax.f32 %v2844, 0.0
    %2847 = vrot.lane.b32.xlu0 %v2845, 32
    %v2848 = vpop.permute.xlu0 %2847
    %v2849 = vrot.slane %v2848, 7
    %v2850 = vsel %vm34, %v2849, %v2848
    %s2852 = scalar_lea.vmem [#allocation5], 6
    %2853 = vst.msk [vmem:[%s2852] ss:$8 sm:$0x3] %vm2787, %v2850
    %2854 = vst.msk [vmem:[%s2852] ss:$8 sm:$0x0] %vm2787, %v2850
    %s2855 = scalar_lea.vmem [#allocation4], 18
    %v2856 = vld [vmem:[%s2855] ss:$8 sm:$0x3]
    %s2857 = scalar_lea.vmem [#allocation4], 19
    %v2858 = vld [vmem:[%s2857] ss:$8 sm:$0x3]
    %v2859 = vmax.f32 %v2856, %v2858
    %v2860 = vadd.f32 %v2859, %v2771
    %v2861 = vmax.f32 %v2860, 0.0
    %2863 = vrot.lane.b32.xlu0 %v2861, 32
    %v2864 = vpop.permute.xlu0 %2863
    %v2865 = vrot.slane %v2864, 7
    %v2866 = vsel %vm34, %v2865, %v2864
    %s2868 = scalar_lea.vmem [#allocation5], 7
    %2869 = vst.msk [vmem:[%s2868] ss:$8 sm:$0x3] %vm2787, %v2866
    %2870 = vst.msk [vmem:[%s2868] ss:$8 sm:$0x0] %vm2787, %v2866
    %s2871 = scalar_lea.vmem [#allocation4], 20
    %v2872 = vld [vmem:[%s2871] ss:$8 sm:$0x3]
    %s2873 = scalar_lea.vmem [#allocation4], 21
    %v2874 = vld [vmem:[%s2873] ss:$8 sm:$0x3]
    %v2875 = vmax.f32 %v2872, %v2874
    %v2876 = vadd.f32 %v2875, %v2771
    %v2877 = vmax.f32 %v2876, 0.0
    %2879 = vrot.lane.b32.xlu0 %v2877, 32
    %v2880 = vpop.permute.xlu0 %2879
    %v2881 = vrot.slane %v2880, 7
    %v2882 = vsel %vm34, %v2881, %v2880
    %s2884 = scalar_lea.vmem [#allocation5], 24
    %2885 = vst.msk [vmem:[%s2884] ss:$8 sm:$0x3] %vm2787, %v2882
    %2886 = vst.msk [vmem:[%s2884] ss:$8 sm:$0x0] %vm2787, %v2882
    %s2887 = scalar_lea.vmem [#allocation4], 22
    %v2888 = vld [vmem:[%s2887] ss:$8 sm:$0x3]
    %s2889 = scalar_lea.vmem [#allocation4], 23
    %v2890 = vld [vmem:[%s2889] ss:$8 sm:$0x3]
    %v2891 = vmax.f32 %v2888, %v2890
    %v2892 = vadd.f32 %v2891, %v2771
    %v2893 = vmax.f32 %v2892, 0.0
    %2895 = vrot.lane.b32.xlu0 %v2893, 32
    %v2896 = vpop.permute.xlu0 %2895
    %v2897 = vrot.slane %v2896, 7
    %v2898 = vsel %vm34, %v2897, %v2896
    %s2900 = scalar_lea.vmem [#allocation5], 25
    %2901 = vst.msk [vmem:[%s2900] ss:$8 sm:$0x3] %vm2787, %v2898
    %2902 = vst.msk [vmem:[%s2900] ss:$8 sm:$0x0] %vm2787, %v2898
    %s2903 = scalar_lea.vmem [#allocation4], 32
    %v2904 = vld [vmem:[%s2903] ss:$8 sm:$0x3]
    %s2905 = scalar_lea.vmem [#allocation4], 33
    %v2906 = vld [vmem:[%s2905] ss:$8 sm:$0x3]
    %v2907 = vmax.f32 %v2904, %v2906
    %v2908 = vadd.f32 %v2907, %v2771
    %v2909 = vmax.f32 %v2908, 0.0
    %2911 = vrot.lane.b32.xlu0 %v2909, 32
    %v2912 = vpop.permute.xlu0 %2911
    %v2913 = vrot.slane %v2912, 7
    %v2914 = vsel %vm34, %v2913, %v2912
    %s2916 = scalar_lea.vmem [#allocation5], 26
    %2917 = vst.msk [vmem:[%s2916] ss:$8 sm:$0x3] %vm2787, %v2914
    %2918 = vst.msk [vmem:[%s2916] ss:$8 sm:$0x0] %vm2787, %v2914
    %s2919 = scalar_lea.vmem [#allocation4], 34
    %v2920 = vld [vmem:[%s2919] ss:$8 sm:$0x3]
    %s2921 = scalar_lea.vmem [#allocation4], 35
    %v2922 = vld [vmem:[%s2921] ss:$8 sm:$0x3]
    %v2923 = vmax.f32 %v2920, %v2922
    %v2924 = vadd.f32 %v2923, %v2771
    %v2925 = vmax.f32 %v2924, 0.0
    %2927 = vrot.lane.b32.xlu0 %v2925, 32
    %v2928 = vpop.permute.xlu0 %2927
    %v2929 = vrot.slane %v2928, 7
    %v2930 = vsel %vm34, %v2929, %v2928
    %s2932 = scalar_lea.vmem [#allocation5], 27
    %2933 = vst.msk [vmem:[%s2932] ss:$8 sm:$0x3] %vm2787, %v2930
    %2934 = vst.msk [vmem:[%s2932] ss:$8 sm:$0x0] %vm2787, %v2930
    %s2935 = scalar_lea.vmem [#allocation4], 36
    %v2936 = vld [vmem:[%s2935] ss:$8 sm:$0x3]
    %s2937 = scalar_lea.vmem [#allocation4], 37
    %v2938 = vld [vmem:[%s2937] ss:$8 sm:$0x3]
    %v2939 = vmax.f32 %v2936, %v2938
    %v2940 = vadd.f32 %v2939, %v2771
    %v2941 = vmax.f32 %v2940, 0.0
    %2943 = vrot.lane.b32.xlu0 %v2941, 32
    %v2944 = vpop.permute.xlu0 %2943
    %v2945 = vrot.slane %v2944, 7
    %v2946 = vsel %vm34, %v2945, %v2944
    %s2948 = scalar_lea.vmem [#allocation5], 28
    %2949 = vst.msk [vmem:[%s2948] ss:$8 sm:$0x3] %vm2787, %v2946
    %2950 = vst.msk [vmem:[%s2948] ss:$8 sm:$0x0] %vm2787, %v2946
    %s2951 = scalar_lea.vmem [#allocation4], 38
    %v2952 = vld [vmem:[%s2951] ss:$8 sm:$0x3]
    %s2953 = scalar_lea.vmem [#allocation4], 39
    %v2954 = vld [vmem:[%s2953] ss:$8 sm:$0x3]
    %v2955 = vmax.f32 %v2952, %v2954
    %v2956 = vadd.f32 %v2955, %v2771
    %v2957 = vmax.f32 %v2956, 0.0
    %2959 = vrot.lane.b32.xlu0 %v2957, 32
    %v2960 = vpop.permute.xlu0 %2959
    %v2961 = vrot.slane %v2960, 7
    %v2962 = vsel %vm34, %v2961, %v2960
    %s2964 = scalar_lea.vmem [#allocation5], 29
    %2965 = vst.msk [vmem:[%s2964] ss:$8 sm:$0x3] %vm2787, %v2962
    %2966 = vst.msk [vmem:[%s2964] ss:$8 sm:$0x0] %vm2787, %v2962
    %s2967 = scalar_lea.vmem [#allocation4], 48
    %v2968 = vld [vmem:[%s2967] ss:$8 sm:$0x3]
    %s2969 = scalar_lea.vmem [#allocation4], 49
    %v2970 = vld [vmem:[%s2969] ss:$8 sm:$0x3]
    %v2971 = vmax.f32 %v2968, %v2970
    %v2972 = vadd.f32 %v2971, %v2771
    %v2973 = vmax.f32 %v2972, 0.0
    %2975 = vrot.lane.b32.xlu0 %v2973, 32
    %v2976 = vpop.permute.xlu0 %2975
    %v2977 = vrot.slane %v2976, 7
    %v2978 = vsel %vm34, %v2977, %v2976
    %s2980 = scalar_lea.vmem [#allocation5], 30
    %2981 = vst.msk [vmem:[%s2980] ss:$8 sm:$0x3] %vm2787, %v2978
    %2982 = vst.msk [vmem:[%s2980] ss:$8 sm:$0x0] %vm2787, %v2978
    %s2983 = scalar_lea.vmem [#allocation4], 50
    %v2984 = vld [vmem:[%s2983] ss:$8 sm:$0x3]
    %s2985 = scalar_lea.vmem [#allocation4], 51
    %v2986 = vld [vmem:[%s2985] ss:$8 sm:$0x3]
    %v2987 = vmax.f32 %v2984, %v2986
    %v2988 = vadd.f32 %v2987, %v2771
    %v2989 = vmax.f32 %v2988, 0.0
    %2991 = vrot.lane.b32.xlu0 %v2989, 32
    %v2992 = vpop.permute.xlu0 %2991
    %v2993 = vrot.slane %v2992, 7
    %v2994 = vsel %vm34, %v2993, %v2992
    %s2996 = scalar_lea.vmem [#allocation5], 31
    %2997 = vst.msk [vmem:[%s2996] ss:$8 sm:$0x3] %vm2787, %v2994
    %2998 = vst.msk [vmem:[%s2996] ss:$8 sm:$0x0] %vm2787, %v2994
    %s2999 = scalar_lea.vmem [#allocation4], 64
    %v3000 = vld [vmem:[%s2999] ss:$8 sm:$0x3]
    %s3001 = scalar_lea.vmem [#allocation4], 65
    %v3002 = vld [vmem:[%s3001] ss:$8 sm:$0x3]
    %v3003 = vmax.f32 %v3000, %v3002
    %v3004 = vadd.f32 %v3003, %v2771
    %v3005 = vmax.f32 %v3004, 0.0
    %3007 = vrot.lane.b32.xlu0 %v3005, 32
    %v3008 = vpop.permute.xlu0 %3007
    %v3009 = vrot.slane %v3008, 7
    %v3010 = vsel %vm34, %v3009, %v3008
    %s3012 = scalar_lea.vmem [#allocation5], 52
    %3013 = vst.msk [vmem:[%s3012] ss:$8 sm:$0x3] %vm2787, %v3010
    %3014 = vst.msk [vmem:[%s3012] ss:$8 sm:$0x0] %vm2787, %v3010
    %s3015 = scalar_lea.vmem [#allocation4], 66
    %v3016 = vld [vmem:[%s3015] ss:$8 sm:$0x3]
    %s3017 = scalar_lea.vmem [#allocation4], 67
    %v3018 = vld [vmem:[%s3017] ss:$8 sm:$0x3]
    %v3019 = vmax.f32 %v3016, %v3018
    %v3020 = vadd.f32 %v3019, %v2771
    %v3021 = vmax.f32 %v3020, 0.0
    %3023 = vrot.lane.b32.xlu0 %v3021, 32
    %v3024 = vpop.permute.xlu0 %3023
    %v3025 = vrot.slane %v3024, 7
    %v3026 = vsel %vm34, %v3025, %v3024
    %s3028 = scalar_lea.vmem [#allocation5], 53
    %3029 = vst.msk [vmem:[%s3028] ss:$8 sm:$0x3] %vm2787, %v3026
    %3030 = vst.msk [vmem:[%s3028] ss:$8 sm:$0x0] %vm2787, %v3026
    %s3031 = scalar_lea.vmem [#allocation4], 68
    %v3032 = vld [vmem:[%s3031] ss:$8 sm:$0x3]
    %s3033 = scalar_lea.vmem [#allocation4], 69
    %v3034 = vld [vmem:[%s3033] ss:$8 sm:$0x3]
    %v3035 = vmax.f32 %v3032, %v3034
    %v3036 = vadd.f32 %v3035, %v2771
    %v3037 = vmax.f32 %v3036, 0.0
    %3039 = vrot.lane.b32.xlu0 %v3037, 32
    %v3040 = vpop.permute.xlu0 %3039
    %v3041 = vrot.slane %v3040, 7
    %v3042 = vsel %vm34, %v3041, %v3040
    %s3044 = scalar_lea.vmem [#allocation5], 54
    %3045 = vst.msk [vmem:[%s3044] ss:$8 sm:$0x3] %vm2787, %v3042
    %3046 = vst.msk [vmem:[%s3044] ss:$8 sm:$0x0] %vm2787, %v3042
    %s3047 = scalar_lea.vmem [#allocation4], 70
    %v3048 = vld [vmem:[%s3047] ss:$8 sm:$0x3]
    %s3049 = scalar_lea.vmem [#allocation4], 71
    %v3050 = vld [vmem:[%s3049] ss:$8 sm:$0x3]
    %v3051 = vmax.f32 %v3048, %v3050
    %v3052 = vadd.f32 %v3051, %v2771
    %v3053 = vmax.f32 %v3052, 0.0
    %3055 = vrot.lane.b32.xlu0 %v3053, 32
    %v3056 = vpop.permute.xlu0 %3055
    %v3057 = vrot.slane %v3056, 7
    %v3058 = vsel %vm34, %v3057, %v3056
    %s3060 = scalar_lea.vmem [#allocation5], 55
    %3061 = vst.msk [vmem:[%s3060] ss:$8 sm:$0x3] %vm2787, %v3058
    %3062 = vst.msk [vmem:[%s3060] ss:$8 sm:$0x0] %vm2787, %v3058
    %s3063 = scalar_lea.vmem [#allocation4], 80
    %v3064 = vld [vmem:[%s3063] ss:$8 sm:$0x3]
    %s3065 = scalar_lea.vmem [#allocation4], 81
    %v3066 = vld [vmem:[%s3065] ss:$8 sm:$0x3]
    %v3067 = vmax.f32 %v3064, %v3066
    %v3068 = vadd.f32 %v3067, %v2771
    %v3069 = vmax.f32 %v3068, 0.0
    %3071 = vrot.lane.b32.xlu0 %v3069, 32
    %v3072 = vpop.permute.xlu0 %3071
    %v3073 = vrot.slane %v3072, 7
    %v3074 = vsel %vm34, %v3073, %v3072
    %s3076 = scalar_lea.vmem [#allocation5], 72
    %3077 = vst.msk [vmem:[%s3076] ss:$8 sm:$0x3] %vm2787, %v3074
    %3078 = vst.msk [vmem:[%s3076] ss:$8 sm:$0x0] %vm2787, %v3074
    %s3079 = scalar_lea.vmem [#allocation4], 82
    %v3080 = vld [vmem:[%s3079] ss:$8 sm:$0x3]
    %s3081 = scalar_lea.vmem [#allocation4], 83
    %v3082 = vld [vmem:[%s3081] ss:$8 sm:$0x3]
    %v3083 = vmax.f32 %v3080, %v3082
    %v3084 = vadd.f32 %v3083, %v2771
    %v3085 = vmax.f32 %v3084, 0.0
    %3087 = vrot.lane.b32.xlu0 %v3085, 32
    %v3088 = vpop.permute.xlu0 %3087
    %v3089 = vrot.slane %v3088, 7
    %v3090 = vsel %vm34, %v3089, %v3088
    %s3092 = scalar_lea.vmem [#allocation5], 73
    %3093 = vst.msk [vmem:[%s3092] ss:$8 sm:$0x3] %vm2787, %v3090
    %3094 = vst.msk [vmem:[%s3092] ss:$8 sm:$0x0] %vm2787, %v3090
    %s3095 = scalar_lea.vmem [#allocation4], 84
    %v3096 = vld [vmem:[%s3095] ss:$8 sm:$0x3]
    %s3097 = scalar_lea.vmem [#allocation4], 85
    %v3098 = vld [vmem:[%s3097] ss:$8 sm:$0x3]
    %v3099 = vmax.f32 %v3096, %v3098
    %v3100 = vadd.f32 %v3099, %v2771
    %v3101 = vmax.f32 %v3100, 0.0
    %3103 = vrot.lane.b32.xlu0 %v3101, 32
    %v3104 = vpop.permute.xlu0 %3103
    %v3105 = vrot.slane %v3104, 7
    %v3106 = vsel %vm34, %v3105, %v3104
    %s3108 = scalar_lea.vmem [#allocation5], 74
    %3109 = vst.msk [vmem:[%s3108] ss:$8 sm:$0x3] %vm2787, %v3106
    %3110 = vst.msk [vmem:[%s3108] ss:$8 sm:$0x0] %vm2787, %v3106
    %s3111 = scalar_lea.vmem [#allocation4], 86
    %v3112 = vld [vmem:[%s3111] ss:$8 sm:$0x3]
    %s3113 = scalar_lea.vmem [#allocation4], 87
    %v3114 = vld [vmem:[%s3113] ss:$8 sm:$0x3]
    %v3115 = vmax.f32 %v3112, %v3114
    %v3116 = vadd.f32 %v3115, %v2771
    %v3117 = vmax.f32 %v3116, 0.0
    %3119 = vrot.lane.b32.xlu0 %v3117, 32
    %v3120 = vpop.permute.xlu0 %3119
    %v3121 = vrot.slane %v3120, 7
    %v3122 = vsel %vm34, %v3121, %v3120
    %s3124 = scalar_lea.vmem [#allocation5], 75
    %3125 = vst.msk [vmem:[%s3124] ss:$8 sm:$0x3] %vm2787, %v3122
    %3126 = vst.msk [vmem:[%s3124] ss:$8 sm:$0x0] %vm2787, %v3122
    %s3127 = scalar_lea.vmem [#allocation4], 96
    %v3128 = vld [vmem:[%s3127] ss:$8 sm:$0x3]
    %s3129 = scalar_lea.vmem [#allocation4], 97
    %v3130 = vld [vmem:[%s3129] ss:$8 sm:$0x3]
    %v3131 = vmax.f32 %v3128, %v3130
    %v3132 = vadd.f32 %v3131, %v2771
    %v3133 = vmax.f32 %v3132, 0.0
    %3135 = vrot.lane.b32.xlu0 %v3133, 32
    %v3136 = vpop.permute.xlu0 %3135
    %v3137 = vrot.slane %v3136, 7
    %v3138 = vsel %vm34, %v3137, %v3136
    %s3140 = scalar_lea.vmem [#allocation5], 76
    %3141 = vst.msk [vmem:[%s3140] ss:$8 sm:$0x3] %vm2787, %v3138
    %3142 = vst.msk [vmem:[%s3140] ss:$8 sm:$0x0] %vm2787, %v3138
    %s3143 = scalar_lea.vmem [#allocation4], 98
    %v3144 = vld [vmem:[%s3143] ss:$8 sm:$0x3]
    %s3145 = scalar_lea.vmem [#allocation4], 99
    %v3146 = vld [vmem:[%s3145] ss:$8 sm:$0x3]
    %v3147 = vmax.f32 %v3144, %v3146
    %v3148 = vadd.f32 %v3147, %v2771
    %v3149 = vmax.f32 %v3148, 0.0
    %3151 = vrot.lane.b32.xlu0 %v3149, 32
    %v3152 = vpop.permute.xlu0 %3151
    %v3153 = vrot.slane %v3152, 7
    %v3154 = vsel %vm34, %v3153, %v3152
    %s3156 = scalar_lea.vmem [#allocation5], 77
    %3157 = vst.msk [vmem:[%s3156] ss:$8 sm:$0x3] %vm2787, %v3154
    %3158 = vst.msk [vmem:[%s3156] ss:$8 sm:$0x0] %vm2787, %v3154
    %s3159 = scalar_lea.vmem [#allocation4], 100
    %v3160 = vld [vmem:[%s3159] ss:$8 sm:$0x3]
    %s3161 = scalar_lea.vmem [#allocation4], 101
    %v3162 = vld [vmem:[%s3161] ss:$8 sm:$0x3]
    %v3163 = vmax.f32 %v3160, %v3162
    %v3164 = vadd.f32 %v3163, %v2771
    %v3165 = vmax.f32 %v3164, 0.0
    %3167 = vrot.lane.b32.xlu0 %v3165, 32
    %v3168 = vpop.permute.xlu0 %3167
    %v3169 = vrot.slane %v3168, 7
    %v3170 = vsel %vm34, %v3169, %v3168
    %s3172 = scalar_lea.vmem [#allocation5], 78
    %3173 = vst.msk [vmem:[%s3172] ss:$8 sm:$0x3] %vm2787, %v3170
    %3174 = vst.msk [vmem:[%s3172] ss:$8 sm:$0x0] %vm2787, %v3170
    %s3175 = scalar_lea.vmem [#allocation4], 102
    %v3176 = vld [vmem:[%s3175] ss:$8 sm:$0x3]
    %s3177 = scalar_lea.vmem [#allocation4], 103
    %v3178 = vld [vmem:[%s3177] ss:$8 sm:$0x3]
    %v3179 = vmax.f32 %v3176, %v3178
    %v3180 = vadd.f32 %v3179, %v2771
    %v3181 = vmax.f32 %v3180, 0.0
    %3183 = vrot.lane.b32.xlu0 %v3181, 32
    %v3184 = vpop.permute.xlu0 %3183
    %v3185 = vrot.slane %v3184, 7
    %v3186 = vsel %vm34, %v3185, %v3184
    %s3188 = scalar_lea.vmem [#allocation5], 79
    %3189 = vst.msk [vmem:[%s3188] ss:$8 sm:$0x3] %vm2787, %v3186
    %3190 = vst.msk [vmem:[%s3188] ss:$8 sm:$0x0] %vm2787, %v3186
    %s3191 = scalar_lea.vmem [#allocation4], 112
    %v3192 = vld [vmem:[%s3191] ss:$8 sm:$0x3]
    %s3193 = scalar_lea.vmem [#allocation4], 113
    %v3194 = vld [vmem:[%s3193] ss:$8 sm:$0x3]
    %v3195 = vmax.f32 %v3192, %v3194
    %v3196 = vadd.f32 %v3195, %v2771
    %v3197 = vmax.f32 %v3196, 0.0
    %3199 = vrot.lane.b32.xlu0 %v3197, 32
    %v3200 = vpop.permute.xlu0 %3199
    %v3201 = vrot.slane %v3200, 7
    %v3202 = vsel %vm34, %v3201, %v3200
    %s3204 = scalar_lea.vmem [#allocation5], 96
    %3205 = vst.msk [vmem:[%s3204] ss:$8 sm:$0x3] %vm2787, %v3202
    %3206 = vst.msk [vmem:[%s3204] ss:$8 sm:$0x0] %vm2787, %v3202
    %s3207 = scalar_lea.vmem [#allocation4], 114
    %v3208 = vld [vmem:[%s3207] ss:$8 sm:$0x3]
    %s3209 = scalar_lea.vmem [#allocation4], 115
    %v3210 = vld [vmem:[%s3209] ss:$8 sm:$0x3]
    %v3211 = vmax.f32 %v3208, %v3210
    %v3212 = vadd.f32 %v3211, %v2771
    %v3213 = vmax.f32 %v3212, 0.0
    %3215 = vrot.lane.b32.xlu0 %v3213, 32
    %v3216 = vpop.permute.xlu0 %3215
    %v3217 = vrot.slane %v3216, 7
    %v3218 = vsel %vm34, %v3217, %v3216
    %s3220 = scalar_lea.vmem [#allocation5], 97
    %3221 = vst.msk [vmem:[%s3220] ss:$8 sm:$0x3] %vm2787, %v3218
    %3222 = vst.msk [vmem:[%s3220] ss:$8 sm:$0x0] %vm2787, %v3218
    %v3223 = vld [vmem:[#allocation5] sm:$0xff]
    %v3224 = vld [vmem:[#allocation5 + $0x8] sm:$0xff]
    %v3225 = vld [vmem:[#allocation5 + $0x10] sm:$0xff]
    %v3226 = vld [vmem:[#allocation5 + $0x18] sm:$0xff]
    %v3227 = vld [vmem:[#allocation5 + $0x20] sm:$0xff]
    %v3228 = vld [vmem:[#allocation5 + $0x28] sm:$0xff]
    %v3229 = vld [vmem:[#allocation5 + $0x30] sm:$0xff]
    %v3230 = vld [vmem:[#allocation5 + $0x38] sm:$0xff]
    %v3231 = vld [vmem:[#allocation5 + $0x40] sm:$0xff]
    %v3232 = vld [vmem:[#allocation5 + $0x48] sm:$0xff]
    %v3233 = vld [vmem:[#allocation5 + $0x50] sm:$0xff]
    %v3234 = vld [vmem:[#allocation5 + $0x58] sm:$0xff]
    %v3235 = vld [vmem:[#allocation5 + $0x60] sm:$0xff]
    %v3236 = vld [vmem:[#allocation5 + $0x68] sm:$0xff]
    %v3237 = vld [vmem:[#allocation5 + $0x70] sm:$0xff]
    %v3238 = vpack.c.bf16 %v3226, %v3223
    %v3239 = vpack.c.bf16 %v3227, %v3224
    %v3240 = vpack.c.bf16 %v3228, %v3225
    %v3241 = vpack.c.bf16 %v3232, %v3229
    %v3242 = vpack.c.bf16 %v3233, %v3230
    %v3243 = vpack.c.bf16 %v3234, %v3231
    %v3244 = vpack.c.bf16 %v3235, %v3235
    %v3245 = vpack.c.bf16 %v3236, %v3236
    %v3246 = vpack.c.bf16 %v3237, %v3237
    %v3247 = vld [vmem:[%s2] sm:$0xff]
    %v3248 = vld [vmem:[%s2 + $0x8] sm:$0xff]
    %v3249 = vld [vmem:[%s2 + $0x10] sm:$0xff]
    %v3250 = vld [vmem:[%s2 + $0x18] sm:$0xff]
    %v3251 = vld [vmem:[%s2 + $0x20] sm:$0xff]
    %v3252 = vld [vmem:[%s2 + $0x28] sm:$0xff]
    %v3253 = vld [vmem:[%s2 + $0x30] sm:$0xff]
    %v3254 = vld [vmem:[%s2 + $0x38] sm:$0xff]
    %v3255 = vld [vmem:[%s2 + $0x40] sm:$0xff]
    %v3256 = vld [vmem:[%s2 + $0x48] sm:$0xff]
    %v3257 = vld [vmem:[%s2 + $0x50] sm:$0xff]
    %v3258 = vld [vmem:[%s2 + $0x58] sm:$0xff]
    %v3259 = vld [vmem:[%s2 + $0x60] sm:$0xff]
    %v3260 = vld [vmem:[%s2 + $0x68] sm:$0xff]
    %v3261 = vld [vmem:[%s2 + $0x70] sm:$0xff]
    %v3262 = vld [vmem:[%s2 + $0x78] sm:$0xff]
    %v3263 = vld [vmem:[%s2 + $0x80] sm:$0xff]
    %v3264 = vld [vmem:[%s2 + $0x88] sm:$0xff]
    %v3265 = vld [vmem:[%s2 + $0x90] sm:$0xff]
    %v3266 = vld [vmem:[%s2 + $0x98] sm:$0xff]
    %v3267 = vld [vmem:[%s2 + $0xa0] sm:$0xff]
    %v3268 = vld [vmem:[%s2 + $0xa8] sm:$0xff]
    %v3269 = vld [vmem:[%s2 + $0xb0] sm:$0xff]
    %v3270 = vld [vmem:[%s2 + $0xb8] sm:$0xff]
    %v3271 = vld [vmem:[%s2 + $0xc0] sm:$0xff]
    %v3272 = vld [vmem:[%s2 + $0xc8] sm:$0xff]
    %v3273 = vld [vmem:[%s2 + $0xd0] sm:$0xff]
    %v3274 = vld [vmem:[%s2 + $0xd8] sm:$0xff]
    %v3275 = vld [vmem:[%s2 + $0xe0] sm:$0xff]
    %v3276 = vld [vmem:[%s2 + $0xe8] sm:$0xff]
    %v3277 = vld [vmem:[%s2 + $0xf0] sm:$0xff]
    %v3278 = vld [vmem:[%s2 + $0xf8] sm:$0xff]
    %v3279 = vld [vmem:[%s2 + $0x100] sm:$0xff]
    %v3280 = vld [vmem:[%s2 + $0x108] sm:$0xff]
    %v3281 = vld [vmem:[%s2 + $0x110] sm:$0xff]
    %v3282 = vld [vmem:[%s2 + $0x118] sm:$0xff]
    %v3283 = vld [vmem:[%s2 + $0x120] sm:$0xff]
    %v3284 = vld [vmem:[%s2 + $0x128] sm:$0xff]
    %v3285 = vld [vmem:[%s2 + $0x130] sm:$0xff]
    %v3286 = vld [vmem:[%s2 + $0x138] sm:$0xff]
    %v3287 = vld [vmem:[%s2 + $0x140] sm:$0xff]
    %v3288 = vld [vmem:[%s2 + $0x148] sm:$0xff]
    %v3289 = vld [vmem:[%s2 + $0x150] sm:$0xff]
    %v3290 = vld [vmem:[%s2 + $0x158] sm:$0xff]
    %v3291 = vld [vmem:[%s2 + $0x160] sm:$0xff]
    %v3292 = vld [vmem:[%s2 + $0x168] sm:$0xff]
    %v3293 = vld [vmem:[%s2 + $0x170] sm:$0xff]
    %v3294 = vld [vmem:[%s2 + $0x178] sm:$0xff]
    %v3295 = vld [vmem:[%s2 + $0x180] sm:$0xff]
    %v3296 = vld [vmem:[%s2 + $0x188] sm:$0xff]
    %v3297 = vld [vmem:[%s2 + $0x190] sm:$0xff]
    %v3298 = vld [vmem:[%s2 + $0x198] sm:$0xff]
    %v3299 = vld [vmem:[%s2 + $0x1a0] sm:$0xff]
    %v3300 = vld [vmem:[%s2 + $0x1a8] sm:$0xff]
    %v3301 = vld [vmem:[%s2 + $0x1b0] sm:$0xff]
    %v3302 = vld [vmem:[%s2 + $0x1b8] sm:$0xff]
    %v3303 = vld [vmem:[%s2 + $0x1c0] sm:$0xff]
    %v3304 = vld [vmem:[%s2 + $0x1c8] sm:$0xff]
    %v3305 = vld [vmem:[%s2 + $0x1d0] sm:$0xff]
    %v3306 = vld [vmem:[%s2 + $0x1d8] sm:$0xff]
    %v3307 = vld [vmem:[%s2 + $0x1e0] sm:$0xff]
    %v3308 = vld [vmem:[%s2 + $0x1e8] sm:$0xff]
    %v3309 = vld [vmem:[%s2 + $0x1f0] sm:$0xff]
    %v3310 = vld [vmem:[%s2 + $0x1f8] sm:$0xff]
    %v3311 = vld [vmem:[%s2 + $0x200] sm:$0xff]
    %v3312 = vld [vmem:[%s2 + $0x208] sm:$0xff]
    %v3313 = vld [vmem:[%s2 + $0x210] sm:$0xff]
    %v3314 = vld [vmem:[%s2 + $0x218] sm:$0xff]
    %v3315 = vld [vmem:[%s2 + $0x220] sm:$0xff]
    %v3316 = vld [vmem:[%s2 + $0x228] sm:$0xff]
    %v3317 = vld [vmem:[%s2 + $0x230] sm:$0xff]
    %v3318 = vld [vmem:[%s2 + $0x238] sm:$0xff]
    %v3391 = vunpack.c.l.b16 %v3247
    %v3392 = vunpack.c.h.b16 %v3247
    %v3393 = vunpack.c.l.b16 %v3248
    %v3394 = vunpack.c.h.b16 %v3248
    %v3395 = vunpack.c.l.b16 %v3249
    %v3396 = vunpack.c.h.b16 %v3249
    %v3397 = vunpack.c.l.b16 %v3250
    %v3398 = vunpack.c.h.b16 %v3250
    %v3399 = vunpack.c.l.b16 %v3251
    %v3400 = vunpack.c.h.b16 %v3251
    %v3401 = vunpack.c.l.b16 %v3252
    %v3402 = vunpack.c.h.b16 %v3252
    %v3403 = vunpack.c.l.b16 %v3253
    %v3404 = vunpack.c.h.b16 %v3253
    %v3405 = vunpack.c.l.b16 %v3254
    %v3406 = vunpack.c.h.b16 %v3254
    %v3407 = vunpack.c.l.b16 %v3255
    %v3408 = vunpack.c.h.b16 %v3255
    %v3409 = vunpack.c.l.b16 %v3256
    %v3410 = vunpack.c.h.b16 %v3256
    %v3411 = vunpack.c.l.b16 %v3257
    %v3412 = vunpack.c.h.b16 %v3257
    %v3413 = vunpack.c.l.b16 %v3258
    %v3414 = vunpack.c.h.b16 %v3258
    %v3415 = vunpack.c.l.b16 %v3259
    %v3416 = vunpack.c.h.b16 %v3259
    %v3417 = vunpack.c.l.b16 %v3260
    %v3418 = vunpack.c.h.b16 %v3260
    %v3419 = vunpack.c.l.b16 %v3261
    %v3420 = vunpack.c.h.b16 %v3261
    %v3421 = vunpack.c.l.b16 %v3262
    %v3422 = vunpack.c.h.b16 %v3262
    %v3423 = vunpack.c.l.b16 %v3263
    %v3424 = vunpack.c.h.b16 %v3263
    %v3425 = vunpack.c.l.b16 %v3264
    %v3426 = vunpack.c.h.b16 %v3264
    %v3427 = vunpack.c.l.b16 %v3265
    %v3428 = vunpack.c.h.b16 %v3265
    %v3429 = vunpack.c.l.b16 %v3266
    %v3430 = vunpack.c.h.b16 %v3266
    %v3431 = vunpack.c.l.b16 %v3267
    %v3432 = vunpack.c.h.b16 %v3267
    %v3433 = vunpack.c.l.b16 %v3268
    %v3434 = vunpack.c.h.b16 %v3268
    %v3435 = vunpack.c.l.b16 %v3269
    %v3436 = vunpack.c.h.b16 %v3269
    %v3437 = vunpack.c.l.b16 %v3270
    %v3438 = vunpack.c.h.b16 %v3270
    %v3439 = vunpack.c.l.b16 %v3271
    %v3440 = vunpack.c.h.b16 %v3271
    %v3441 = vunpack.c.l.b16 %v3272
    %v3442 = vunpack.c.h.b16 %v3272
    %v3443 = vunpack.c.l.b16 %v3273
    %v3444 = vunpack.c.h.b16 %v3273
    %v3445 = vunpack.c.l.b16 %v3274
    %v3446 = vunpack.c.h.b16 %v3274
    %v3447 = vunpack.c.l.b16 %v3275
    %v3448 = vunpack.c.h.b16 %v3275
    %v3449 = vunpack.c.l.b16 %v3276
    %v3450 = vunpack.c.h.b16 %v3276
    %v3451 = vunpack.c.l.b16 %v3277
    %v3452 = vunpack.c.h.b16 %v3277
    %v3453 = vunpack.c.l.b16 %v3278
    %v3454 = vunpack.c.h.b16 %v3278
    %v3455 = vunpack.c.l.b16 %v3279
    %v3456 = vunpack.c.h.b16 %v3279
    %v3457 = vunpack.c.l.b16 %v3280
    %v3458 = vunpack.c.h.b16 %v3280
    %v3459 = vunpack.c.l.b16 %v3281
    %v3460 = vunpack.c.h.b16 %v3281
    %v3461 = vunpack.c.l.b16 %v3282
    %v3462 = vunpack.c.h.b16 %v3282
    %v3463 = vunpack.c.l.b16 %v3283
    %v3464 = vunpack.c.h.b16 %v3283
    %v3465 = vunpack.c.l.b16 %v3284
    %v3466 = vunpack.c.h.b16 %v3284
    %v3467 = vunpack.c.l.b16 %v3285
    %v3468 = vunpack.c.h.b16 %v3285
    %v3469 = vunpack.c.l.b16 %v3286
    %v3470 = vunpack.c.h.b16 %v3286
    %v3471 = vunpack.c.l.b16 %v3287
    %v3472 = vunpack.c.h.b16 %v3287
    %v3473 = vunpack.c.l.b16 %v3288
    %v3474 = vunpack.c.h.b16 %v3288
    %v3475 = vunpack.c.l.b16 %v3289
    %v3476 = vunpack.c.h.b16 %v3289
    %v3477 = vunpack.c.l.b16 %v3290
    %v3478 = vunpack.c.h.b16 %v3290
    %v3479 = vunpack.c.l.b16 %v3291
    %v3480 = vunpack.c.h.b16 %v3291
    %v3481 = vunpack.c.l.b16 %v3292
    %v3482 = vunpack.c.h.b16 %v3292
    %v3483 = vunpack.c.l.b16 %v3293
    %v3484 = vunpack.c.h.b16 %v3293
    %v3485 = vunpack.c.l.b16 %v3294
    %v3486 = vunpack.c.h.b16 %v3294
    %v3487 = vunpack.c.l.b16 %v3295
    %v3488 = vunpack.c.h.b16 %v3295
    %v3489 = vunpack.c.l.b16 %v3296
    %v3490 = vunpack.c.h.b16 %v3296
    %v3491 = vunpack.c.l.b16 %v3297
    %v3492 = vunpack.c.h.b16 %v3297
    %v3493 = vunpack.c.l.b16 %v3298
    %v3494 = vunpack.c.h.b16 %v3298
    %v3495 = vunpack.c.l.b16 %v3299
    %v3496 = vunpack.c.h.b16 %v3299
    %v3497 = vunpack.c.l.b16 %v3300
    %v3498 = vunpack.c.h.b16 %v3300
    %v3499 = vunpack.c.l.b16 %v3301
    %v3500 = vunpack.c.h.b16 %v3301
    %v3501 = vunpack.c.l.b16 %v3302
    %v3502 = vunpack.c.h.b16 %v3302
    %v3503 = vunpack.c.l.b16 %v3303
    %v3504 = vunpack.c.h.b16 %v3303
    %v3505 = vunpack.c.l.b16 %v3304
    %v3506 = vunpack.c.h.b16 %v3304
    %v3507 = vunpack.c.l.b16 %v3305
    %v3508 = vunpack.c.h.b16 %v3305
    %v3509 = vunpack.c.l.b16 %v3306
    %v3510 = vunpack.c.h.b16 %v3306
    %v3511 = vunpack.c.l.b16 %v3307
    %v3512 = vunpack.c.h.b16 %v3307
    %v3513 = vunpack.c.l.b16 %v3308
    %v3514 = vunpack.c.h.b16 %v3308
    %v3515 = vunpack.c.l.b16 %v3309
    %v3516 = vunpack.c.h.b16 %v3309
    %v3517 = vunpack.c.l.b16 %v3310
    %v3518 = vunpack.c.h.b16 %v3310
    %v3519 = vunpack.c.l.b16 %v3311
    %v3520 = vunpack.c.h.b16 %v3311
    %v3521 = vunpack.c.l.b16 %v3312
    %v3522 = vunpack.c.h.b16 %v3312
    %v3523 = vunpack.c.l.b16 %v3313
    %v3524 = vunpack.c.h.b16 %v3313
    %v3525 = vunpack.c.l.b16 %v3314
    %v3526 = vunpack.c.h.b16 %v3314
    %v3527 = vunpack.c.l.b16 %v3315
    %v3528 = vunpack.c.h.b16 %v3315
    %v3529 = vunpack.c.l.b16 %v3316
    %v3530 = vunpack.c.h.b16 %v3316
    %v3531 = vunpack.c.l.b16 %v3317
    %v3532 = vunpack.c.h.b16 %v3317
    %v3533 = vunpack.c.l.b16 %v3318
    %v3534 = vunpack.c.h.b16 %v3318
    %v3535 = vpack.c.b16 %v3395, %v3391
    %v3536 = vpack.c.b16 %v3396, %v3392
    %v3537 = vpack.c.b16 %v3397, %v3393
    %v3538 = vpack.c.b16 %v3398, %v3394
    %v3539 = vpack.c.b16 %v3403, %v3399
    %v3540 = vpack.c.b16 %v3404, %v3400
    %v3541 = vpack.c.b16 %v3405, %v3401
    %v3542 = vpack.c.b16 %v3406, %v3402
    %v3543 = vpack.c.b16 %v3411, %v3407
    %v3544 = vpack.c.b16 %v3412, %v3408
    %v3545 = vpack.c.b16 %v3413, %v3409
    %v3546 = vpack.c.b16 %v3414, %v3410
    %v3547 = vpack.c.b16 %v3419, %v3415
    %v3548 = vpack.c.b16 %v3420, %v3416
    %v3549 = vpack.c.b16 %v3421, %v3417
    %v3550 = vpack.c.b16 %v3422, %v3418
    %v3551 = vpack.c.b16 %v3427, %v3423
    %v3552 = vpack.c.b16 %v3428, %v3424
    %v3553 = vpack.c.b16 %v3429, %v3425
    %v3554 = vpack.c.b16 %v3430, %v3426
    %v3555 = vpack.c.b16 %v3435, %v3431
    %v3556 = vpack.c.b16 %v3436, %v3432
    %v3557 = vpack.c.b16 %v3437, %v3433
    %v3558 = vpack.c.b16 %v3438, %v3434
    %v3559 = vpack.c.b16 %v3443, %v3439
    %v3560 = vpack.c.b16 %v3444, %v3440
    %v3561 = vpack.c.b16 %v3445, %v3441
    %v3562 = vpack.c.b16 %v3446, %v3442
    %v3563 = vpack.c.b16 %v3451, %v3447
    %v3564 = vpack.c.b16 %v3452, %v3448
    %v3565 = vpack.c.b16 %v3453, %v3449
    %v3566 = vpack.c.b16 %v3454, %v3450
    %v3567 = vpack.c.b16 %v3459, %v3455
    %v3568 = vpack.c.b16 %v3460, %v3456
    %v3569 = vpack.c.b16 %v3461, %v3457
    %v3570 = vpack.c.b16 %v3462, %v3458
    %v3571 = vpack.c.b16 %v3467, %v3463
    %v3572 = vpack.c.b16 %v3468, %v3464
    %v3573 = vpack.c.b16 %v3469, %v3465
    %v3574 = vpack.c.b16 %v3470, %v3466
    %v3575 = vpack.c.b16 %v3475, %v3471
    %v3576 = vpack.c.b16 %v3476, %v3472
    %v3577 = vpack.c.b16 %v3477, %v3473
    %v3578 = vpack.c.b16 %v3478, %v3474
    %v3579 = vpack.c.b16 %v3483, %v3479
    %v3580 = vpack.c.b16 %v3484, %v3480
    %v3581 = vpack.c.b16 %v3485, %v3481
    %v3582 = vpack.c.b16 %v3486, %v3482
    %v3583 = vpack.c.b16 %v3491, %v3487
    %v3584 = vpack.c.b16 %v3492, %v3488
    %v3585 = vpack.c.b16 %v3493, %v3489
    %v3586 = vpack.c.b16 %v3494, %v3490
    %v3587 = vpack.c.b16 %v3499, %v3495
    %v3588 = vpack.c.b16 %v3500, %v3496
    %v3589 = vpack.c.b16 %v3501, %v3497
    %v3590 = vpack.c.b16 %v3502, %v3498
    %v3591 = vpack.c.b16 %v3507, %v3503
    %v3592 = vpack.c.b16 %v3508, %v3504
    %v3593 = vpack.c.b16 %v3509, %v3505
    %v3594 = vpack.c.b16 %v3510, %v3506
    %v3595 = vpack.c.b16 %v3515, %v3511
    %v3596 = vpack.c.b16 %v3516, %v3512
    %v3597 = vpack.c.b16 %v3517, %v3513
    %v3598 = vpack.c.b16 %v3518, %v3514
    %v3599 = vpack.c.b16 %v3523, %v3519
    %v3600 = vpack.c.b16 %v3524, %v3520
    %v3601 = vpack.c.b16 %v3525, %v3521
    %v3602 = vpack.c.b16 %v3526, %v3522
    %v3603 = vpack.c.b16 %v3531, %v3527
    %v3604 = vpack.c.b16 %v3532, %v3528
    %v3605 = vpack.c.b16 %v3533, %v3529
    %v3606 = vpack.c.b16 %v3534, %v3530
    %v3680 = vsel %vm34, %v3240, 0
    %v3683 = vsel %vm34, %v3243, 0
    %v3686 = vsel %vm34, %v3246, 0
    %3688 = vmatpush.bf16.msra.mxu0 %v3563
    %3689 = vmatpush.bf16.msra.mxu0 %v3559
    %3690 = vmatpush.bf16.msra.mxu0 %v3555
    %3691 = vmatpush.bf16.msra.mxu0 %v3551
    %3692 = vmatpush.bf16.msra.mxu0 %v3547
    %3693 = vmatpush.bf16.msra.mxu0 %v3543
    %3694 = vmatpush.bf16.msra.mxu0 %v3539
    %3695 = vmatpush.bf16.msra.mxu0 %v3535
    %3696 = vmatmul.bf16.gmra.mxu0 %v3238
    %v3697 = vpop.f32.mrf.mxu0
    %v3698 = vadd.f32 0.0, %v3697
    %v3699 = vpop.f32.mrf.mxu0
    %v3700 = vadd.f32 0.0, %v3699
    %3701 = vmatmul.bf16.gmra.mxu0 %v3241
    %v3702 = vpop.f32.mrf.mxu0
    %v3703 = vadd.f32 0.0, %v3702
    %v3704 = vpop.f32.mrf.mxu0
    %v3705 = vadd.f32 0.0, %v3704
    %3706 = vmatmul.bf16.gmra.mxu0 %v3244
    %v3707 = vpop.f32.mrf.mxu0
    %v3708 = vadd.f32 0.0, %v3707
    %v3709 = vpop.f32.mrf.mxu0
    %3710 = vdwg.mxu0
    %3711 = vmatpush.bf16.msra.mxu0 %v3595
    %3712 = vmatpush.bf16.msra.mxu0 %v3591
    %3713 = vmatpush.bf16.msra.mxu0 %v3587
    %3714 = vmatpush.bf16.msra.mxu0 %v3583
    %3715 = vmatpush.bf16.msra.mxu0 %v3579
    %3716 = vmatpush.bf16.msra.mxu0 %v3575
    %3717 = vmatpush.bf16.msra.mxu0 %v3571
    %3718 = vmatpush.bf16.msra.mxu0 %v3567
    %3719 = vmatmul.bf16.gmra.mxu0 %v3239
    %v3720 = vpop.f32.mrf.mxu0
    %v3721 = vadd.f32 %v3698, %v3720
    %v3722 = vpop.f32.mrf.mxu0
    %v3723 = vadd.f32 %v3700, %v3722
    %3724 = vmatmul.bf16.gmra.mxu0 %v3242
    %v3725 = vpop.f32.mrf.mxu0
    %v3726 = vadd.f32 %v3703, %v3725
    %v3727 = vpop.f32.mrf.mxu0
    %v3728 = vadd.f32 %v3705, %v3727
    %3729 = vmatmul.bf16.gmra.mxu0 %v3245
    %v3730 = vpop.f32.mrf.mxu0
    %v3731 = vadd.f32 %v3708, %v3730
    %v3732 = vpop.f32.mrf.mxu0
    %3733 = vdwg.mxu0
    %3734 = vmatpush.bf16.msra.mxu0 0
    %3735 = vmatpush.bf16.msra.mxu0 0
    %3736 = vmatpush.bf16.msra.mxu0 0
    %3737 = vmatpush.bf16.msra.mxu0 0
    %3738 = vmatpush.bf16.msra.mxu0 0
    %3739 = vmatpush.bf16.msra.mxu0 0
    %3740 = vmatpush.bf16.msra.mxu0 %v3603
    %3741 = vmatpush.bf16.msra.mxu0 %v3599
    %3742 = vmatmul.bf16.gmra.mxu0 %v3680
    %v3743 = vpop.f32.mrf.mxu0
    %v3744 = vadd.f32 %v3721, %v3743
    %v3745 = vpop.f32.mrf.mxu0
    %v3746 = vadd.f32 %v3723, %v3745
    %3747 = vmatmul.bf16.gmra.mxu0 %v3683
    %v3748 = vpop.f32.mrf.mxu0
    %v3749 = vadd.f32 %v3726, %v3748
    %v3750 = vpop.f32.mrf.mxu0
    %v3751 = vadd.f32 %v3728, %v3750
    %3752 = vmatmul.bf16.gmra.mxu0 %v3686
    %v3753 = vpop.f32.mrf.mxu0
    %v3754 = vadd.f32 %v3731, %v3753
    %v3755 = vpop.f32.mrf.mxu0
    %3756 = vdwg.mxu0
    %3757 = vmatpush.bf16.msra.mxu0 %v3564
    %3758 = vmatpush.bf16.msra.mxu0 %v3560
    %3759 = vmatpush.bf16.msra.mxu0 %v3556
    %3760 = vmatpush.bf16.msra.mxu0 %v3552
    %3761 = vmatpush.bf16.msra.mxu0 %v3548
    %3762 = vmatpush.bf16.msra.mxu0 %v3544
    %3763 = vmatpush.bf16.msra.mxu0 %v3540
    %3764 = vmatpush.bf16.msra.mxu0 %v3536
    %3765 = vmatmul.bf16.gmra.mxu0 %v3238
    %v3766 = vpop.f32.mrf.mxu0
    %v3767 = vadd.f32 0.0, %v3766
    %v3768 = vpop.f32.mrf.mxu0
    %v3769 = vadd.f32 0.0, %v3768
    %3770 = vmatmul.bf16.gmra.mxu0 %v3241
    %v3771 = vpop.f32.mrf.mxu0
    %v3772 = vadd.f32 0.0, %v3771
    %v3773 = vpop.f32.mrf.mxu0
    %v3774 = vadd.f32 0.0, %v3773
    %3775 = vmatmul.bf16.gmra.mxu0 %v3244
    %v3776 = vpop.f32.mrf.mxu0
    %v3777 = vadd.f32 0.0, %v3776
    %v3778 = vpop.f32.mrf.mxu0
    %3779 = vdwg.mxu0
    %3780 = vmatpush.bf16.msra.mxu0 %v3596
    %3781 = vmatpush.bf16.msra.mxu0 %v3592
    %3782 = vmatpush.bf16.msra.mxu0 %v3588
    %3783 = vmatpush.bf16.msra.mxu0 %v3584
    %3784 = vmatpush.bf16.msra.mxu0 %v3580
    %3785 = vmatpush.bf16.msra.mxu0 %v3576
    %3786 = vmatpush.bf16.msra.mxu0 %v3572
    %3787 = vmatpush.bf16.msra.mxu0 %v3568
    %3788 = vmatmul.bf16.gmra.mxu0 %v3239
    %v3789 = vpop.f32.mrf.mxu0
    %v3790 = vadd.f32 %v3767, %v3789
    %v3791 = vpop.f32.mrf.mxu0
    %v3792 = vadd.f32 %v3769, %v3791
    %3793 = vmatmul.bf16.gmra.mxu0 %v3242
    %v3794 = vpop.f32.mrf.mxu0
    %v3795 = vadd.f32 %v3772, %v3794
    %v3796 = vpop.f32.mrf.mxu0
    %v3797 = vadd.f32 %v3774, %v3796
    %3798 = vmatmul.bf16.gmra.mxu0 %v3245
    %v3799 = vpop.f32.mrf.mxu0
    %v3800 = vadd.f32 %v3777, %v3799
    %v3801 = vpop.f32.mrf.mxu0
    %3802 = vdwg.mxu0
    %3803 = vmatpush.bf16.msra.mxu0 0
    %3804 = vmatpush.bf16.msra.mxu0 0
    %3805 = vmatpush.bf16.msra.mxu0 0
    %3806 = vmatpush.bf16.msra.mxu0 0
    %3807 = vmatpush.bf16.msra.mxu0 0
    %3808 = vmatpush.bf16.msra.mxu0 0
    %3809 = vmatpush.bf16.msra.mxu0 %v3604
    %3810 = vmatpush.bf16.msra.mxu0 %v3600
    %3811 = vmatmul.bf16.gmra.mxu0 %v3680
    %v3812 = vpop.f32.mrf.mxu0
    %v3813 = vadd.f32 %v3790, %v3812
    %v3814 = vpop.f32.mrf.mxu0
    %v3815 = vadd.f32 %v3792, %v3814
    %3816 = vmatmul.bf16.gmra.mxu0 %v3683
    %v3817 = vpop.f32.mrf.mxu0
    %v3818 = vadd.f32 %v3795, %v3817
    %v3819 = vpop.f32.mrf.mxu0
    %v3820 = vadd.f32 %v3797, %v3819
    %3821 = vmatmul.bf16.gmra.mxu0 %v3686
    %v3822 = vpop.f32.mrf.mxu0
    %v3823 = vadd.f32 %v3800, %v3822
    %v3824 = vpop.f32.mrf.mxu0
    %3825 = vdwg.mxu0
    %3826 = vmatpush.bf16.msra.mxu0 %v3565
    %3827 = vmatpush.bf16.msra.mxu0 %v3561
    %3828 = vmatpush.bf16.msra.mxu0 %v3557
    %3829 = vmatpush.bf16.msra.mxu0 %v3553
    %3830 = vmatpush.bf16.msra.mxu0 %v3549
    %3831 = vmatpush.bf16.msra.mxu0 %v3545
    %3832 = vmatpush.bf16.msra.mxu0 %v3541
    %3833 = vmatpush.bf16.msra.mxu0 %v3537
    %3834 = vmatmul.bf16.gmra.mxu0 %v3238
    %v3835 = vpop.f32.mrf.mxu0
    %v3836 = vadd.f32 0.0, %v3835
    %v3837 = vpop.f32.mrf.mxu0
    %v3838 = vadd.f32 0.0, %v3837
    %3839 = vmatmul.bf16.gmra.mxu0 %v3241
    %v3840 = vpop.f32.mrf.mxu0
    %v3841 = vadd.f32 0.0, %v3840
    %v3842 = vpop.f32.mrf.mxu0
    %v3843 = vadd.f32 0.0, %v3842
    %3844 = vmatmul.bf16.gmra.mxu0 %v3244
    %v3845 = vpop.f32.mrf.mxu0
    %v3846 = vadd.f32 0.0, %v3845
    %v3847 = vpop.f32.mrf.mxu0
    %3848 = vdwg.mxu0
    %3849 = vmatpush.bf16.msra.mxu0 %v3597
    %3850 = vmatpush.bf16.msra.mxu0 %v3593
    %3851 = vmatpush.bf16.msra.mxu0 %v3589
    %3852 = vmatpush.bf16.msra.mxu0 %v3585
    %3853 = vmatpush.bf16.msra.mxu0 %v3581
    %3854 = vmatpush.bf16.msra.mxu0 %v3577
    %3855 = vmatpush.bf16.msra.mxu0 %v3573
    %3856 = vmatpush.bf16.msra.mxu0 %v3569
    %3857 = vmatmul.bf16.gmra.mxu0 %v3239
    %v3858 = vpop.f32.mrf.mxu0
    %v3859 = vadd.f32 %v3836, %v3858
    %v3860 = vpop.f32.mrf.mxu0
    %v3861 = vadd.f32 %v3838, %v3860
    %3862 = vmatmul.bf16.gmra.mxu0 %v3242
    %v3863 = vpop.f32.mrf.mxu0
    %v3864 = vadd.f32 %v3841, %v3863
    %v3865 = vpop.f32.mrf.mxu0
    %v3866 = vadd.f32 %v3843, %v3865
    %3867 = vmatmul.bf16.gmra.mxu0 %v3245
    %v3868 = vpop.f32.mrf.mxu0
    %v3869 = vadd.f32 %v3846, %v3868
    %v3870 = vpop.f32.mrf.mxu0
    %3871 = vdwg.mxu0
    %3872 = vmatpush.bf16.msra.mxu0 0
    %3873 = vmatpush.bf16.msra.mxu0 0
    %3874 = vmatpush.bf16.msra.mxu0 0
    %3875 = vmatpush.bf16.msra.mxu0 0
    %3876 = vmatpush.bf16.msra.mxu0 0
    %3877 = vmatpush.bf16.msra.mxu0 0
    %3878 = vmatpush.bf16.msra.mxu0 %v3605
    %3879 = vmatpush.bf16.msra.mxu0 %v3601
    %3880 = vmatmul.bf16.gmra.mxu0 %v3680
    %v3881 = vpop.f32.mrf.mxu0
    %v3882 = vadd.f32 %v3859, %v3881
    %v3883 = vpop.f32.mrf.mxu0
    %v3884 = vadd.f32 %v3861, %v3883
    %3885 = vmatmul.bf16.gmra.mxu0 %v3683
    %v3886 = vpop.f32.mrf.mxu0
    %v3887 = vadd.f32 %v3864, %v3886
    %v3888 = vpop.f32.mrf.mxu0
    %v3889 = vadd.f32 %v3866, %v3888
    %3890 = vmatmul.bf16.gmra.mxu0 %v3686
    %v3891 = vpop.f32.mrf.mxu0
    %v3892 = vadd.f32 %v3869, %v3891
    %v3893 = vpop.f32.mrf.mxu0
    %3894 = vdwg.mxu0
    %3895 = vmatpush.bf16.msra.mxu0 %v3566
    %3896 = vmatpush.bf16.msra.mxu0 %v3562
    %3897 = vmatpush.bf16.msra.mxu0 %v3558
    %3898 = vmatpush.bf16.msra.mxu0 %v3554
    %3899 = vmatpush.bf16.msra.mxu0 %v3550
    %3900 = vmatpush.bf16.msra.mxu0 %v3546
    %3901 = vmatpush.bf16.msra.mxu0 %v3542
    %3902 = vmatpush.bf16.msra.mxu0 %v3538
    %3903 = vmatmul.bf16.gmra.mxu0 %v3238
    %v3904 = vpop.f32.mrf.mxu0
    %v3905 = vadd.f32 0.0, %v3904
    %v3906 = vpop.f32.mrf.mxu0
    %v3907 = vadd.f32 0.0, %v3906
    %3908 = vmatmul.bf16.gmra.mxu0 %v3241
    %v3909 = vpop.f32.mrf.mxu0
    %v3910 = vadd.f32 0.0, %v3909
    %v3911 = vpop.f32.mrf.mxu0
    %v3912 = vadd.f32 0.0, %v3911
    %3913 = vmatmul.bf16.gmra.mxu0 %v3244
    %v3914 = vpop.f32.mrf.mxu0
    %v3915 = vadd.f32 0.0, %v3914
    %v3916 = vpop.f32.mrf.mxu0
    %3917 = vdwg.mxu0
    %3918 = vmatpush.bf16.msra.mxu0 %v3598
    %3919 = vmatpush.bf16.msra.mxu0 %v3594
    %3920 = vmatpush.bf16.msra.mxu0 %v3590
    %3921 = vmatpush.bf16.msra.mxu0 %v3586
    %3922 = vmatpush.bf16.msra.mxu0 %v3582
    %3923 = vmatpush.bf16.msra.mxu0 %v3578
    %3924 = vmatpush.bf16.msra.mxu0 %v3574
    %3925 = vmatpush.bf16.msra.mxu0 %v3570
    %3926 = vmatmul.bf16.gmra.mxu0 %v3239
    %v3927 = vpop.f32.mrf.mxu0
    %v3928 = vadd.f32 %v3905, %v3927
    %v3929 = vpop.f32.mrf.mxu0
    %v3930 = vadd.f32 %v3907, %v3929
    %3931 = vmatmul.bf16.gmra.mxu0 %v3242
    %v3932 = vpop.f32.mrf.mxu0
    %v3933 = vadd.f32 %v3910, %v3932
    %v3934 = vpop.f32.mrf.mxu0
    %v3935 = vadd.f32 %v3912, %v3934
    %3936 = vmatmul.bf16.gmra.mxu0 %v3245
    %v3937 = vpop.f32.mrf.mxu0
    %v3938 = vadd.f32 %v3915, %v3937
    %v3939 = vpop.f32.mrf.mxu0
    %3940 = vdwg.mxu0
    %3941 = vmatpush.bf16.msra.mxu0 0
    %3942 = vmatpush.bf16.msra.mxu0 0
    %3943 = vmatpush.bf16.msra.mxu0 0
    %3944 = vmatpush.bf16.msra.mxu0 0
    %3945 = vmatpush.bf16.msra.mxu0 0
    %3946 = vmatpush.bf16.msra.mxu0 0
    %3947 = vmatpush.bf16.msra.mxu0 %v3606
    %3948 = vmatpush.bf16.msra.mxu0 %v3602
    %3949 = vmatmul.bf16.gmra.mxu0 %v3680
    %v3950 = vpop.f32.mrf.mxu0
    %v3951 = vadd.f32 %v3928, %v3950
    %v3952 = vpop.f32.mrf.mxu0
    %v3953 = vadd.f32 %v3930, %v3952
    %3954 = vmatmul.bf16.gmra.mxu0 %v3683
    %v3955 = vpop.f32.mrf.mxu0
    %v3956 = vadd.f32 %v3933, %v3955
    %v3957 = vpop.f32.mrf.mxu0
    %v3958 = vadd.f32 %v3935, %v3957
    %3959 = vmatmul.bf16.gmra.mxu0 %v3686
    %v3960 = vpop.f32.mrf.mxu0
    %v3961 = vadd.f32 %v3938, %v3960
    %v3962 = vpop.f32.mrf.mxu0
    %3963 = vdwg.mxu0
    %3964 = vst [vmem:[#allocation6] sm:$0xff] %v3744
    %3965 = vst [vmem:[#allocation6 + $0x8] sm:$0xff] %v3813
    %3966 = vst [vmem:[#allocation6 + $0x10] sm:$0xff] %v3882
    %3967 = vst.msk [vmem:[#allocation6 + $0x18] sm:$0xff] %vm286, %v3951
    %3968 = vst [vmem:[#allocation6 + $0x20] sm:$0xff] %v3746
    %3969 = vst [vmem:[#allocation6 + $0x28] sm:$0xff] %v3815
    %3970 = vst [vmem:[#allocation6 + $0x30] sm:$0xff] %v3884
    %3971 = vst.msk [vmem:[#allocation6 + $0x38] sm:$0xff] %vm286, %v3953
    %3972 = vst [vmem:[#allocation6 + $0x40] sm:$0xff] %v3749
    %3973 = vst [vmem:[#allocation6 + $0x48] sm:$0xff] %v3818
    %3974 = vst [vmem:[#allocation6 + $0x50] sm:$0xff] %v3887
    %3975 = vst.msk [vmem:[#allocation6 + $0x58] sm:$0xff] %vm286, %v3956
    %3976 = vst [vmem:[#allocation6 + $0x60] sm:$0xff] %v3751
    %3977 = vst [vmem:[#allocation6 + $0x68] sm:$0xff] %v3820
    %3978 = vst [vmem:[#allocation6 + $0x70] sm:$0xff] %v3889
    %3979 = vst.msk [vmem:[#allocation6 + $0x78] sm:$0xff] %vm286, %v3958
    %3980 = vst [vmem:[#allocation6 + $0x80] sm:$0xf] %v3754
    %3981 = vst [vmem:[#allocation6 + $0x88] sm:$0xf] %v3823
    %3982 = vst [vmem:[#allocation6 + $0x90] sm:$0xf] %v3892
    %vm3983 = vcmask 519168
    %3984 = vst.msk [vmem:[#allocation6 + $0x98] sm:$0xf] %vm3983, %v3961
    %v3985 = vld [vmem:[#allocation5] sm:$0xff]
    %v3986 = vld [vmem:[#allocation5 + $0x8] sm:$0xff]
    %v3987 = vld [vmem:[#allocation5 + $0x10] sm:$0xff]
    %v3988 = vld [vmem:[#allocation5 + $0x18] sm:$0xff]
    %v3989 = vld [vmem:[#allocation5 + $0x20] sm:$0xff]
    %v3990 = vld [vmem:[#allocation5 + $0x28] sm:$0xff]
    %v3991 = vld [vmem:[#allocation5 + $0x30] sm:$0xff]
    %v3992 = vld [vmem:[#allocation5 + $0x38] sm:$0xff]
    %v3993 = vld [vmem:[#allocation5 + $0x40] sm:$0xff]
    %v3994 = vld [vmem:[#allocation5 + $0x48] sm:$0xff]
    %v3995 = vld [vmem:[#allocation5 + $0x50] sm:$0xff]
    %v3996 = vld [vmem:[#allocation5 + $0x58] sm:$0xff]
    %v3997 = vld [vmem:[#allocation5 + $0x60] sm:$0xff]
    %v3998 = vld [vmem:[#allocation5 + $0x68] sm:$0xff]
    %v3999 = vld [vmem:[#allocation5 + $0x70] sm:$0xff]
    %v4000 = vpack.c.bf16 %v3988, %v3985
    %v4001 = vpack.c.bf16 %v3989, %v3986
    %v4002 = vpack.c.bf16 %v3990, %v3987
    %v4003 = vpack.c.bf16 %v3994, %v3991
    %v4004 = vpack.c.bf16 %v3995, %v3992
    %v4005 = vpack.c.bf16 %v3996, %v3993
    %v4006 = vpack.c.bf16 %v3997, %v3997
    %v4007 = vpack.c.bf16 %v3998, %v3998
    %v4008 = vpack.c.bf16 %v3999, %v3999
    %s4009 = scalar_lea.vmem %s2, 576
    %v4010 = vld [vmem:[%s4009] sm:$0xff]
    %v4011 = vld [vmem:[%s4009 + $0x8] sm:$0xff]
    %v4012 = vld [vmem:[%s4009 + $0x10] sm:$0xff]
    %v4013 = vld [vmem:[%s4009 + $0x18] sm:$0xff]
    %v4014 = vld [vmem:[%s4009 + $0x20] sm:$0xff]
    %v4015 = vld [vmem:[%s4009 + $0x28] sm:$0xff]
    %v4016 = vld [vmem:[%s4009 + $0x30] sm:$0xff]
    %v4017 = vld [vmem:[%s4009 + $0x38] sm:$0xff]
    %v4018 = vld [vmem:[%s4009 + $0x40] sm:$0xff]
    %v4019 = vld [vmem:[%s4009 + $0x48] sm:$0xff]
    %v4020 = vld [vmem:[%s4009 + $0x50] sm:$0xff]
    %v4021 = vld [vmem:[%s4009 + $0x58] sm:$0xff]
    %v4022 = vld [vmem:[%s4009 + $0x60] sm:$0xff]
    %v4023 = vld [vmem:[%s4009 + $0x68] sm:$0xff]
    %v4024 = vld [vmem:[%s4009 + $0x70] sm:$0xff]
    %v4025 = vld [vmem:[%s4009 + $0x78] sm:$0xff]
    %v4026 = vld [vmem:[%s4009 + $0x80] sm:$0xff]
    %v4027 = vld [vmem:[%s4009 + $0x88] sm:$0xff]
    %v4028 = vld [vmem:[%s4009 + $0x90] sm:$0xff]
    %v4029 = vld [vmem:[%s4009 + $0x98] sm:$0xff]
    %v4030 = vld [vmem:[%s4009 + $0xa0] sm:$0xff]
    %v4031 = vld [vmem:[%s4009 + $0xa8] sm:$0xff]
    %v4032 = vld [vmem:[%s4009 + $0xb0] sm:$0xff]
    %v4033 = vld [vmem:[%s4009 + $0xb8] sm:$0xff]
    %v4034 = vld [vmem:[%s4009 + $0xc0] sm:$0xff]
    %v4035 = vld [vmem:[%s4009 + $0xc8] sm:$0xff]
    %v4036 = vld [vmem:[%s4009 + $0xd0] sm:$0xff]
    %v4037 = vld [vmem:[%s4009 + $0xd8] sm:$0xff]
    %v4038 = vld [vmem:[%s4009 + $0xe0] sm:$0xff]
    %v4039 = vld [vmem:[%s4009 + $0xe8] sm:$0xff]
    %v4040 = vld [vmem:[%s4009 + $0xf0] sm:$0xff]
    %v4041 = vld [vmem:[%s4009 + $0xf8] sm:$0xff]
    %v4042 = vld [vmem:[%s4009 + $0x100] sm:$0xff]
    %v4043 = vld [vmem:[%s4009 + $0x108] sm:$0xff]
    %v4044 = vld [vmem:[%s4009 + $0x110] sm:$0xff]
    %v4045 = vld [vmem:[%s4009 + $0x118] sm:$0xff]
    %v4046 = vld [vmem:[%s4009 + $0x120] sm:$0xff]
    %v4047 = vld [vmem:[%s4009 + $0x128] sm:$0xff]
    %v4048 = vld [vmem:[%s4009 + $0x130] sm:$0xff]
    %v4049 = vld [vmem:[%s4009 + $0x138] sm:$0xff]
    %v4050 = vld [vmem:[%s4009 + $0x140] sm:$0xff]
    %v4051 = vld [vmem:[%s4009 + $0x148] sm:$0xff]
    %v4052 = vld [vmem:[%s4009 + $0x150] sm:$0xff]
    %v4053 = vld [vmem:[%s4009 + $0x158] sm:$0xff]
    %v4054 = vld [vmem:[%s4009 + $0x160] sm:$0xff]
    %v4055 = vld [vmem:[%s4009 + $0x168] sm:$0xff]
    %v4056 = vld [vmem:[%s4009 + $0x170] sm:$0xff]
    %v4057 = vld [vmem:[%s4009 + $0x178] sm:$0xff]
    %v4058 = vld [vmem:[%s4009 + $0x180] sm:$0xff]
    %v4059 = vld [vmem:[%s4009 + $0x188] sm:$0xff]
    %v4060 = vld [vmem:[%s4009 + $0x190] sm:$0xff]
    %v4061 = vld [vmem:[%s4009 + $0x198] sm:$0xff]
    %v4062 = vld [vmem:[%s4009 + $0x1a0] sm:$0xff]
    %v4063 = vld [vmem:[%s4009 + $0x1a8] sm:$0xff]
    %v4064 = vld [vmem:[%s4009 + $0x1b0] sm:$0xff]
    %v4065 = vld [vmem:[%s4009 + $0x1b8] sm:$0xff]
    %v4066 = vld [vmem:[%s4009 + $0x1c0] sm:$0xff]
    %v4067 = vld [vmem:[%s4009 + $0x1c8] sm:$0xff]
    %v4068 = vld [vmem:[%s4009 + $0x1d0] sm:$0xff]
    %v4069 = vld [vmem:[%s4009 + $0x1d8] sm:$0xff]
    %v4070 = vld [vmem:[%s4009 + $0x1e0] sm:$0xff]
    %v4071 = vld [vmem:[%s4009 + $0x1e8] sm:$0xff]
    %v4072 = vld [vmem:[%s4009 + $0x1f0] sm:$0xff]
    %v4073 = vld [vmem:[%s4009 + $0x1f8] sm:$0xff]
    %v4074 = vld [vmem:[%s4009 + $0x200] sm:$0xff]
    %v4075 = vld [vmem:[%s4009 + $0x208] sm:$0xff]
    %v4076 = vld [vmem:[%s4009 + $0x210] sm:$0xff]
    %v4077 = vld [vmem:[%s4009 + $0x218] sm:$0xff]
    %v4078 = vld [vmem:[%s4009 + $0x220] sm:$0xff]
    %v4079 = vld [vmem:[%s4009 + $0x228] sm:$0xff]
    %v4080 = vld [vmem:[%s4009 + $0x230] sm:$0xff]
    %v4081 = vld [vmem:[%s4009 + $0x238] sm:$0xff]
    %v4083 = vshrl.u32 %v4000, 16
    %v4085 = vshll.u32 %v4000, 16
    %v4087 = vrot.slane %v4085, 1
    %v4088 = vor.u32 %v4083, %v4087
    %v4090 = vshll.u32 %v4003, 16
    %v4092 = vrot.slane %v4090, 1
    %v4093 = vsel %vm339, %v4088, %v4092
    %v4095 = vshrl.u32 %v4001, 16
    %v4097 = vshll.u32 %v4001, 16
    %v4099 = vrot.slane %v4097, 1
    %v4100 = vor.u32 %v4095, %v4099
    %v4102 = vshll.u32 %v4004, 16
    %v4104 = vrot.slane %v4102, 1
    %v4105 = vsel %vm339, %v4100, %v4104
    %v4107 = vshrl.u32 %v4002, 16
    %v4109 = vshll.u32 %v4002, 16
    %v4111 = vrot.slane %v4109, 1
    %v4112 = vor.u32 %v4107, %v4111
    %v4114 = vshll.u32 %v4005, 16
    %v4116 = vrot.slane %v4114, 1
    %v4117 = vsel %vm339, %v4112, %v4116
    %v4118 = vshrl.u32 %v4003, 16
    %v4120 = vor.u32 %v4118, %v4092
    %v4122 = vshll.u32 %v4006, 16
    %v4124 = vrot.slane %v4122, 1
    %v4125 = vsel %vm339, %v4120, %v4124
    %v4126 = vshrl.u32 %v4004, 16
    %v4128 = vor.u32 %v4126, %v4104
    %v4130 = vshll.u32 %v4007, 16
    %v4132 = vrot.slane %v4130, 1
    %v4133 = vsel %vm339, %v4128, %v4132
    %v4134 = vshrl.u32 %v4005, 16
    %v4136 = vor.u32 %v4134, %v4116
    %v4138 = vshll.u32 %v4008, 16
    %v4140 = vrot.slane %v4138, 1
    %v4141 = vsel %vm339, %v4136, %v4140
    %v4142 = vshrl.u32 %v4006, 16
    %v4144 = vor.u32 %v4142, %v4124
    %v4145 = vshrl.u32 %v4007, 16
    %v4147 = vor.u32 %v4145, %v4132
    %v4148 = vshrl.u32 %v4008, 16
    %v4150 = vor.u32 %v4148, %v4140
    %v4229 = vunpack.c.l.b16 %v4010
    %v4230 = vunpack.c.h.b16 %v4010
    %v4231 = vunpack.c.l.b16 %v4011
    %v4232 = vunpack.c.h.b16 %v4011
    %v4233 = vunpack.c.l.b16 %v4012
    %v4234 = vunpack.c.h.b16 %v4012
    %v4235 = vunpack.c.l.b16 %v4013
    %v4236 = vunpack.c.h.b16 %v4013
    %v4237 = vunpack.c.l.b16 %v4014
    %v4238 = vunpack.c.h.b16 %v4014
    %v4239 = vunpack.c.l.b16 %v4015
    %v4240 = vunpack.c.h.b16 %v4015
    %v4241 = vunpack.c.l.b16 %v4016
    %v4242 = vunpack.c.h.b16 %v4016
    %v4243 = vunpack.c.l.b16 %v4017
    %v4244 = vunpack.c.h.b16 %v4017
    %v4245 = vunpack.c.l.b16 %v4018
    %v4246 = vunpack.c.h.b16 %v4018
    %v4247 = vunpack.c.l.b16 %v4019
    %v4248 = vunpack.c.h.b16 %v4019
    %v4249 = vunpack.c.l.b16 %v4020
    %v4250 = vunpack.c.h.b16 %v4020
    %v4251 = vunpack.c.l.b16 %v4021
    %v4252 = vunpack.c.h.b16 %v4021
    %v4253 = vunpack.c.l.b16 %v4022
    %v4254 = vunpack.c.h.b16 %v4022
    %v4255 = vunpack.c.l.b16 %v4023
    %v4256 = vunpack.c.h.b16 %v4023
    %v4257 = vunpack.c.l.b16 %v4024
    %v4258 = vunpack.c.h.b16 %v4024
    %v4259 = vunpack.c.l.b16 %v4025
    %v4260 = vunpack.c.h.b16 %v4025
    %v4261 = vunpack.c.l.b16 %v4026
    %v4262 = vunpack.c.h.b16 %v4026
    %v4263 = vunpack.c.l.b16 %v4027
    %v4264 = vunpack.c.h.b16 %v4027
    %v4265 = vunpack.c.l.b16 %v4028
    %v4266 = vunpack.c.h.b16 %v4028
    %v4267 = vunpack.c.l.b16 %v4029
    %v4268 = vunpack.c.h.b16 %v4029
    %v4269 = vunpack.c.l.b16 %v4030
    %v4270 = vunpack.c.h.b16 %v4030
    %v4271 = vunpack.c.l.b16 %v4031
    %v4272 = vunpack.c.h.b16 %v4031
    %v4273 = vunpack.c.l.b16 %v4032
    %v4274 = vunpack.c.h.b16 %v4032
    %v4275 = vunpack.c.l.b16 %v4033
    %v4276 = vunpack.c.h.b16 %v4033
    %v4277 = vunpack.c.l.b16 %v4034
    %v4278 = vunpack.c.h.b16 %v4034
    %v4279 = vunpack.c.l.b16 %v4035
    %v4280 = vunpack.c.h.b16 %v4035
    %v4281 = vunpack.c.l.b16 %v4036
    %v4282 = vunpack.c.h.b16 %v4036
    %v4283 = vunpack.c.l.b16 %v4037
    %v4284 = vunpack.c.h.b16 %v4037
    %v4285 = vunpack.c.l.b16 %v4038
    %v4286 = vunpack.c.h.b16 %v4038
    %v4287 = vunpack.c.l.b16 %v4039
    %v4288 = vunpack.c.h.b16 %v4039
    %v4289 = vunpack.c.l.b16 %v4040
    %v4290 = vunpack.c.h.b16 %v4040
    %v4291 = vunpack.c.l.b16 %v4041
    %v4292 = vunpack.c.h.b16 %v4041
    %v4293 = vunpack.c.l.b16 %v4042
    %v4294 = vunpack.c.h.b16 %v4042
    %v4295 = vunpack.c.l.b16 %v4043
    %v4296 = vunpack.c.h.b16 %v4043
    %v4297 = vunpack.c.l.b16 %v4044
    %v4298 = vunpack.c.h.b16 %v4044
    %v4299 = vunpack.c.l.b16 %v4045
    %v4300 = vunpack.c.h.b16 %v4045
    %v4301 = vunpack.c.l.b16 %v4046
    %v4302 = vunpack.c.h.b16 %v4046
    %v4303 = vunpack.c.l.b16 %v4047
    %v4304 = vunpack.c.h.b16 %v4047
    %v4305 = vunpack.c.l.b16 %v4048
    %v4306 = vunpack.c.h.b16 %v4048
    %v4307 = vunpack.c.l.b16 %v4049
    %v4308 = vunpack.c.h.b16 %v4049
    %v4309 = vunpack.c.l.b16 %v4050
    %v4310 = vunpack.c.h.b16 %v4050
    %v4311 = vunpack.c.l.b16 %v4051
    %v4312 = vunpack.c.h.b16 %v4051
    %v4313 = vunpack.c.l.b16 %v4052
    %v4314 = vunpack.c.h.b16 %v4052
    %v4315 = vunpack.c.l.b16 %v4053
    %v4316 = vunpack.c.h.b16 %v4053
    %v4317 = vunpack.c.l.b16 %v4054
    %v4318 = vunpack.c.h.b16 %v4054
    %v4319 = vunpack.c.l.b16 %v4055
    %v4320 = vunpack.c.h.b16 %v4055
    %v4321 = vunpack.c.l.b16 %v4056
    %v4322 = vunpack.c.h.b16 %v4056
    %v4323 = vunpack.c.l.b16 %v4057
    %v4324 = vunpack.c.h.b16 %v4057
    %v4325 = vunpack.c.l.b16 %v4058
    %v4326 = vunpack.c.h.b16 %v4058
    %v4327 = vunpack.c.l.b16 %v4059
    %v4328 = vunpack.c.h.b16 %v4059
    %v4329 = vunpack.c.l.b16 %v4060
    %v4330 = vunpack.c.h.b16 %v4060
    %v4331 = vunpack.c.l.b16 %v4061
    %v4332 = vunpack.c.h.b16 %v4061
    %v4333 = vunpack.c.l.b16 %v4062
    %v4334 = vunpack.c.h.b16 %v4062
    %v4335 = vunpack.c.l.b16 %v4063
    %v4336 = vunpack.c.h.b16 %v4063
    %v4337 = vunpack.c.l.b16 %v4064
    %v4338 = vunpack.c.h.b16 %v4064
    %v4339 = vunpack.c.l.b16 %v4065
    %v4340 = vunpack.c.h.b16 %v4065
    %v4341 = vunpack.c.l.b16 %v4066
    %v4342 = vunpack.c.h.b16 %v4066
    %v4343 = vunpack.c.l.b16 %v4067
    %v4344 = vunpack.c.h.b16 %v4067
    %v4345 = vunpack.c.l.b16 %v4068
    %v4346 = vunpack.c.h.b16 %v4068
    %v4347 = vunpack.c.l.b16 %v4069
    %v4348 = vunpack.c.h.b16 %v4069
    %v4349 = vunpack.c.l.b16 %v4070
    %v4350 = vunpack.c.h.b16 %v4070
    %v4351 = vunpack.c.l.b16 %v4071
    %v4352 = vunpack.c.h.b16 %v4071
    %v4353 = vunpack.c.l.b16 %v4072
    %v4354 = vunpack.c.h.b16 %v4072
    %v4355 = vunpack.c.l.b16 %v4073
    %v4356 = vunpack.c.h.b16 %v4073
    %v4357 = vunpack.c.l.b16 %v4074
    %v4358 = vunpack.c.h.b16 %v4074
    %v4359 = vunpack.c.l.b16 %v4075
    %v4360 = vunpack.c.h.b16 %v4075
    %v4361 = vunpack.c.l.b16 %v4076
    %v4362 = vunpack.c.h.b16 %v4076
    %v4363 = vunpack.c.l.b16 %v4077
    %v4364 = vunpack.c.h.b16 %v4077
    %v4365 = vunpack.c.l.b16 %v4078
    %v4366 = vunpack.c.h.b16 %v4078
    %v4367 = vunpack.c.l.b16 %v4079
    %v4368 = vunpack.c.h.b16 %v4079
    %v4369 = vunpack.c.l.b16 %v4080
    %v4370 = vunpack.c.h.b16 %v4080
    %v4371 = vunpack.c.l.b16 %v4081
    %v4372 = vunpack.c.h.b16 %v4081
    %v4373 = vpack.c.b16 %v4233, %v4229
    %v4374 = vpack.c.b16 %v4234, %v4230
    %v4375 = vpack.c.b16 %v4235, %v4231
    %v4376 = vpack.c.b16 %v4236, %v4232
    %v4377 = vpack.c.b16 %v4241, %v4237
    %v4378 = vpack.c.b16 %v4242, %v4238
    %v4379 = vpack.c.b16 %v4243, %v4239
    %v4380 = vpack.c.b16 %v4244, %v4240
    %v4381 = vpack.c.b16 %v4249, %v4245
    %v4382 = vpack.c.b16 %v4250, %v4246
    %v4383 = vpack.c.b16 %v4251, %v4247
    %v4384 = vpack.c.b16 %v4252, %v4248
    %v4385 = vpack.c.b16 %v4257, %v4253
    %v4386 = vpack.c.b16 %v4258, %v4254
    %v4387 = vpack.c.b16 %v4259, %v4255
    %v4388 = vpack.c.b16 %v4260, %v4256
    %v4389 = vpack.c.b16 %v4265, %v4261
    %v4390 = vpack.c.b16 %v4266, %v4262
    %v4391 = vpack.c.b16 %v4267, %v4263
    %v4392 = vpack.c.b16 %v4268, %v4264
    %v4393 = vpack.c.b16 %v4273, %v4269
    %v4394 = vpack.c.b16 %v4274, %v4270
    %v4395 = vpack.c.b16 %v4275, %v4271
    %v4396 = vpack.c.b16 %v4276, %v4272
    %v4397 = vpack.c.b16 %v4281, %v4277
    %v4398 = vpack.c.b16 %v4282, %v4278
    %v4399 = vpack.c.b16 %v4283, %v4279
    %v4400 = vpack.c.b16 %v4284, %v4280
    %v4401 = vpack.c.b16 %v4289, %v4285
    %v4402 = vpack.c.b16 %v4290, %v4286
    %v4403 = vpack.c.b16 %v4291, %v4287
    %v4404 = vpack.c.b16 %v4292, %v4288
    %v4405 = vpack.c.b16 %v4297, %v4293
    %v4406 = vpack.c.b16 %v4298, %v4294
    %v4407 = vpack.c.b16 %v4299, %v4295
    %v4408 = vpack.c.b16 %v4300, %v4296
    %v4409 = vpack.c.b16 %v4305, %v4301
    %v4410 = vpack.c.b16 %v4306, %v4302
    %v4411 = vpack.c.b16 %v4307, %v4303
    %v4412 = vpack.c.b16 %v4308, %v4304
    %v4413 = vpack.c.b16 %v4313, %v4309
    %v4414 = vpack.c.b16 %v4314, %v4310
    %v4415 = vpack.c.b16 %v4315, %v4311
    %v4416 = vpack.c.b16 %v4316, %v4312
    %v4417 = vpack.c.b16 %v4321, %v4317
    %v4418 = vpack.c.b16 %v4322, %v4318
    %v4419 = vpack.c.b16 %v4323, %v4319
    %v4420 = vpack.c.b16 %v4324, %v4320
    %v4421 = vpack.c.b16 %v4329, %v4325
    %v4422 = vpack.c.b16 %v4330, %v4326
    %v4423 = vpack.c.b16 %v4331, %v4327
    %v4424 = vpack.c.b16 %v4332, %v4328
    %v4425 = vpack.c.b16 %v4337, %v4333
    %v4426 = vpack.c.b16 %v4338, %v4334
    %v4427 = vpack.c.b16 %v4339, %v4335
    %v4428 = vpack.c.b16 %v4340, %v4336
    %v4429 = vpack.c.b16 %v4345, %v4341
    %v4430 = vpack.c.b16 %v4346, %v4342
    %v4431 = vpack.c.b16 %v4347, %v4343
    %v4432 = vpack.c.b16 %v4348, %v4344
    %v4433 = vpack.c.b16 %v4353, %v4349
    %v4434 = vpack.c.b16 %v4354, %v4350
    %v4435 = vpack.c.b16 %v4355, %v4351
    %v4436 = vpack.c.b16 %v4356, %v4352
    %v4437 = vpack.c.b16 %v4361, %v4357
    %v4438 = vpack.c.b16 %v4362, %v4358
    %v4439 = vpack.c.b16 %v4363, %v4359
    %v4440 = vpack.c.b16 %v4364, %v4360
    %v4441 = vpack.c.b16 %v4369, %v4365
    %v4442 = vpack.c.b16 %v4370, %v4366
    %v4443 = vpack.c.b16 %v4371, %v4367
    %v4444 = vpack.c.b16 %v4372, %v4368
    %v4518 = vsel %vm34, %v4117, 0
    %v4521 = vsel %vm34, %v4141, 0
    %v4524 = vsel %vm34, %v4150, 0
    %4526 = vmatpush.bf16.msra.mxu0 %v4401
    %4527 = vmatpush.bf16.msra.mxu0 %v4397
    %4528 = vmatpush.bf16.msra.mxu0 %v4393
    %4529 = vmatpush.bf16.msra.mxu0 %v4389
    %4530 = vmatpush.bf16.msra.mxu0 %v4385
    %4531 = vmatpush.bf16.msra.mxu0 %v4381
    %4532 = vmatpush.bf16.msra.mxu0 %v4377
    %4533 = vmatpush.bf16.msra.mxu0 %v4373
    %4534 = vmatmul.bf16.gmra.mxu0 %v4093
    %v4535 = vpop.f32.mrf.mxu0
    %v4536 = vadd.f32 0.0, %v4535
    %v4537 = vpop.f32.mrf.mxu0
    %v4538 = vadd.f32 0.0, %v4537
    %4539 = vmatmul.bf16.gmra.mxu0 %v4125
    %v4540 = vpop.f32.mrf.mxu0
    %v4541 = vadd.f32 0.0, %v4540
    %v4542 = vpop.f32.mrf.mxu0
    %v4543 = vadd.f32 0.0, %v4542
    %4544 = vmatmul.bf16.gmra.mxu0 %v4144
    %v4545 = vpop.f32.mrf.mxu0
    %v4546 = vadd.f32 0.0, %v4545
    %v4547 = vpop.f32.mrf.mxu0
    %4548 = vdwg.mxu0
    %4549 = vmatpush.bf16.msra.mxu0 %v4433
    %4550 = vmatpush.bf16.msra.mxu0 %v4429
    %4551 = vmatpush.bf16.msra.mxu0 %v4425
    %4552 = vmatpush.bf16.msra.mxu0 %v4421
    %4553 = vmatpush.bf16.msra.mxu0 %v4417
    %4554 = vmatpush.bf16.msra.mxu0 %v4413
    %4555 = vmatpush.bf16.msra.mxu0 %v4409
    %4556 = vmatpush.bf16.msra.mxu0 %v4405
    %4557 = vmatmul.bf16.gmra.mxu0 %v4105
    %v4558 = vpop.f32.mrf.mxu0
    %v4559 = vadd.f32 %v4536, %v4558
    %v4560 = vpop.f32.mrf.mxu0
    %v4561 = vadd.f32 %v4538, %v4560
    %4562 = vmatmul.bf16.gmra.mxu0 %v4133
    %v4563 = vpop.f32.mrf.mxu0
    %v4564 = vadd.f32 %v4541, %v4563
    %v4565 = vpop.f32.mrf.mxu0
    %v4566 = vadd.f32 %v4543, %v4565
    %4567 = vmatmul.bf16.gmra.mxu0 %v4147
    %v4568 = vpop.f32.mrf.mxu0
    %v4569 = vadd.f32 %v4546, %v4568
    %v4570 = vpop.f32.mrf.mxu0
    %4571 = vdwg.mxu0
    %4572 = vmatpush.bf16.msra.mxu0 0
    %4573 = vmatpush.bf16.msra.mxu0 0
    %4574 = vmatpush.bf16.msra.mxu0 0
    %4575 = vmatpush.bf16.msra.mxu0 0
    %4576 = vmatpush.bf16.msra.mxu0 0
    %4577 = vmatpush.bf16.msra.mxu0 0
    %4578 = vmatpush.bf16.msra.mxu0 %v4441
    %4579 = vmatpush.bf16.msra.mxu0 %v4437
    %4580 = vmatmul.bf16.gmra.mxu0 %v4518
    %v4581 = vpop.f32.mrf.mxu0
    %v4582 = vadd.f32 %v4559, %v4581
    %v4583 = vpop.f32.mrf.mxu0
    %v4584 = vadd.f32 %v4561, %v4583
    %4585 = vmatmul.bf16.gmra.mxu0 %v4521
    %v4586 = vpop.f32.mrf.mxu0
    %v4587 = vadd.f32 %v4564, %v4586
    %v4588 = vpop.f32.mrf.mxu0
    %v4589 = vadd.f32 %v4566, %v4588
    %4590 = vmatmul.bf16.gmra.mxu0 %v4524
    %v4591 = vpop.f32.mrf.mxu0
    %v4592 = vadd.f32 %v4569, %v4591
    %v4593 = vpop.f32.mrf.mxu0
    %4594 = vdwg.mxu0
    %4595 = vmatpush.bf16.msra.mxu0 %v4402
    %4596 = vmatpush.bf16.msra.mxu0 %v4398
    %4597 = vmatpush.bf16.msra.mxu0 %v4394
    %4598 = vmatpush.bf16.msra.mxu0 %v4390
    %4599 = vmatpush.bf16.msra.mxu0 %v4386
    %4600 = vmatpush.bf16.msra.mxu0 %v4382
    %4601 = vmatpush.bf16.msra.mxu0 %v4378
    %4602 = vmatpush.bf16.msra.mxu0 %v4374
    %4603 = vmatmul.bf16.gmra.mxu0 %v4093
    %v4604 = vpop.f32.mrf.mxu0
    %v4605 = vadd.f32 0.0, %v4604
    %v4606 = vpop.f32.mrf.mxu0
    %v4607 = vadd.f32 0.0, %v4606
    %4608 = vmatmul.bf16.gmra.mxu0 %v4125
    %v4609 = vpop.f32.mrf.mxu0
    %v4610 = vadd.f32 0.0, %v4609
    %v4611 = vpop.f32.mrf.mxu0
    %v4612 = vadd.f32 0.0, %v4611
    %4613 = vmatmul.bf16.gmra.mxu0 %v4144
    %v4614 = vpop.f32.mrf.mxu0
    %v4615 = vadd.f32 0.0, %v4614
    %v4616 = vpop.f32.mrf.mxu0
    %4617 = vdwg.mxu0
    %4618 = vmatpush.bf16.msra.mxu0 %v4434
    %4619 = vmatpush.bf16.msra.mxu0 %v4430
    %4620 = vmatpush.bf16.msra.mxu0 %v4426
    %4621 = vmatpush.bf16.msra.mxu0 %v4422
    %4622 = vmatpush.bf16.msra.mxu0 %v4418
    %4623 = vmatpush.bf16.msra.mxu0 %v4414
    %4624 = vmatpush.bf16.msra.mxu0 %v4410
    %4625 = vmatpush.bf16.msra.mxu0 %v4406
    %4626 = vmatmul.bf16.gmra.mxu0 %v4105
    %v4627 = vpop.f32.mrf.mxu0
    %v4628 = vadd.f32 %v4605, %v4627
    %v4629 = vpop.f32.mrf.mxu0
    %v4630 = vadd.f32 %v4607, %v4629
    %4631 = vmatmul.bf16.gmra.mxu0 %v4133
    %v4632 = vpop.f32.mrf.mxu0
    %v4633 = vadd.f32 %v4610, %v4632
    %v4634 = vpop.f32.mrf.mxu0
    %v4635 = vadd.f32 %v4612, %v4634
    %4636 = vmatmul.bf16.gmra.mxu0 %v4147
    %v4637 = vpop.f32.mrf.mxu0
    %v4638 = vadd.f32 %v4615, %v4637
    %v4639 = vpop.f32.mrf.mxu0
    %4640 = vdwg.mxu0
    %4641 = vmatpush.bf16.msra.mxu0 0
    %4642 = vmatpush.bf16.msra.mxu0 0
    %4643 = vmatpush.bf16.msra.mxu0 0
    %4644 = vmatpush.bf16.msra.mxu0 0
    %4645 = vmatpush.bf16.msra.mxu0 0
    %4646 = vmatpush.bf16.msra.mxu0 0
    %4647 = vmatpush.bf16.msra.mxu0 %v4442
    %4648 = vmatpush.bf16.msra.mxu0 %v4438
    %4649 = vmatmul.bf16.gmra.mxu0 %v4518
    %v4650 = vpop.f32.mrf.mxu0
    %v4651 = vadd.f32 %v4628, %v4650
    %v4652 = vpop.f32.mrf.mxu0
    %v4653 = vadd.f32 %v4630, %v4652
    %4654 = vmatmul.bf16.gmra.mxu0 %v4521
    %v4655 = vpop.f32.mrf.mxu0
    %v4656 = vadd.f32 %v4633, %v4655
    %v4657 = vpop.f32.mrf.mxu0
    %v4658 = vadd.f32 %v4635, %v4657
    %4659 = vmatmul.bf16.gmra.mxu0 %v4524
    %v4660 = vpop.f32.mrf.mxu0
    %v4661 = vadd.f32 %v4638, %v4660
    %v4662 = vpop.f32.mrf.mxu0
    %4663 = vdwg.mxu0
    %4664 = vmatpush.bf16.msra.mxu0 %v4403
    %4665 = vmatpush.bf16.msra.mxu0 %v4399
    %4666 = vmatpush.bf16.msra.mxu0 %v4395
    %4667 = vmatpush.bf16.msra.mxu0 %v4391
    %4668 = vmatpush.bf16.msra.mxu0 %v4387
    %4669 = vmatpush.bf16.msra.mxu0 %v4383
    %4670 = vmatpush.bf16.msra.mxu0 %v4379
    %4671 = vmatpush.bf16.msra.mxu0 %v4375
    %4672 = vmatmul.bf16.gmra.mxu0 %v4093
    %v4673 = vpop.f32.mrf.mxu0
    %v4674 = vadd.f32 0.0, %v4673
    %v4675 = vpop.f32.mrf.mxu0
    %v4676 = vadd.f32 0.0, %v4675
    %4677 = vmatmul.bf16.gmra.mxu0 %v4125
    %v4678 = vpop.f32.mrf.mxu0
    %v4679 = vadd.f32 0.0, %v4678
    %v4680 = vpop.f32.mrf.mxu0
    %v4681 = vadd.f32 0.0, %v4680
    %4682 = vmatmul.bf16.gmra.mxu0 %v4144
    %v4683 = vpop.f32.mrf.mxu0
    %v4684 = vadd.f32 0.0, %v4683
    %v4685 = vpop.f32.mrf.mxu0
    %4686 = vdwg.mxu0
    %4687 = vmatpush.bf16.msra.mxu0 %v4435
    %4688 = vmatpush.bf16.msra.mxu0 %v4431
    %4689 = vmatpush.bf16.msra.mxu0 %v4427
    %4690 = vmatpush.bf16.msra.mxu0 %v4423
    %4691 = vmatpush.bf16.msra.mxu0 %v4419
    %4692 = vmatpush.bf16.msra.mxu0 %v4415
    %4693 = vmatpush.bf16.msra.mxu0 %v4411
    %4694 = vmatpush.bf16.msra.mxu0 %v4407
    %4695 = vmatmul.bf16.gmra.mxu0 %v4105
    %v4696 = vpop.f32.mrf.mxu0
    %v4697 = vadd.f32 %v4674, %v4696
    %v4698 = vpop.f32.mrf.mxu0
    %v4699 = vadd.f32 %v4676, %v4698
    %4700 = vmatmul.bf16.gmra.mxu0 %v4133
    %v4701 = vpop.f32.mrf.mxu0
    %v4702 = vadd.f32 %v4679, %v4701
    %v4703 = vpop.f32.mrf.mxu0
    %v4704 = vadd.f32 %v4681, %v4703
    %4705 = vmatmul.bf16.gmra.mxu0 %v4147
    %v4706 = vpop.f32.mrf.mxu0
    %v4707 = vadd.f32 %v4684, %v4706
    %v4708 = vpop.f32.mrf.mxu0
    %4709 = vdwg.mxu0
    %4710 = vmatpush.bf16.msra.mxu0 0
    %4711 = vmatpush.bf16.msra.mxu0 0
    %4712 = vmatpush.bf16.msra.mxu0 0
    %4713 = vmatpush.bf16.msra.mxu0 0
    %4714 = vmatpush.bf16.msra.mxu0 0
    %4715 = vmatpush.bf16.msra.mxu0 0
    %4716 = vmatpush.bf16.msra.mxu0 %v4443
    %4717 = vmatpush.bf16.msra.mxu0 %v4439
    %4718 = vmatmul.bf16.gmra.mxu0 %v4518
    %v4719 = vpop.f32.mrf.mxu0
    %v4720 = vadd.f32 %v4697, %v4719
    %v4721 = vpop.f32.mrf.mxu0
    %v4722 = vadd.f32 %v4699, %v4721
    %4723 = vmatmul.bf16.gmra.mxu0 %v4521
    %v4724 = vpop.f32.mrf.mxu0
    %v4725 = vadd.f32 %v4702, %v4724
    %v4726 = vpop.f32.mrf.mxu0
    %v4727 = vadd.f32 %v4704, %v4726
    %4728 = vmatmul.bf16.gmra.mxu0 %v4524
    %v4729 = vpop.f32.mrf.mxu0
    %v4730 = vadd.f32 %v4707, %v4729
    %v4731 = vpop.f32.mrf.mxu0
    %4732 = vdwg.mxu0
    %4733 = vmatpush.bf16.msra.mxu0 %v4404
    %4734 = vmatpush.bf16.msra.mxu0 %v4400
    %4735 = vmatpush.bf16.msra.mxu0 %v4396
    %4736 = vmatpush.bf16.msra.mxu0 %v4392
    %4737 = vmatpush.bf16.msra.mxu0 %v4388
    %4738 = vmatpush.bf16.msra.mxu0 %v4384
    %4739 = vmatpush.bf16.msra.mxu0 %v4380
    %4740 = vmatpush.bf16.msra.mxu0 %v4376
    %4741 = vmatmul.bf16.gmra.mxu0 %v4093
    %v4742 = vpop.f32.mrf.mxu0
    %v4743 = vadd.f32 0.0, %v4742
    %v4744 = vpop.f32.mrf.mxu0
    %v4745 = vadd.f32 0.0, %v4744
    %4746 = vmatmul.bf16.gmra.mxu0 %v4125
    %v4747 = vpop.f32.mrf.mxu0
    %v4748 = vadd.f32 0.0, %v4747
    %v4749 = vpop.f32.mrf.mxu0
    %v4750 = vadd.f32 0.0, %v4749
    %4751 = vmatmul.bf16.gmra.mxu0 %v4144
    %v4752 = vpop.f32.mrf.mxu0
    %v4753 = vadd.f32 0.0, %v4752
    %v4754 = vpop.f32.mrf.mxu0
    %4755 = vdwg.mxu0
    %4756 = vmatpush.bf16.msra.mxu0 %v4436
    %4757 = vmatpush.bf16.msra.mxu0 %v4432
    %4758 = vmatpush.bf16.msra.mxu0 %v4428
    %4759 = vmatpush.bf16.msra.mxu0 %v4424
    %4760 = vmatpush.bf16.msra.mxu0 %v4420
    %4761 = vmatpush.bf16.msra.mxu0 %v4416
    %4762 = vmatpush.bf16.msra.mxu0 %v4412
    %4763 = vmatpush.bf16.msra.mxu0 %v4408
    %4764 = vmatmul.bf16.gmra.mxu0 %v4105
    %v4765 = vpop.f32.mrf.mxu0
    %v4766 = vadd.f32 %v4743, %v4765
    %v4767 = vpop.f32.mrf.mxu0
    %v4768 = vadd.f32 %v4745, %v4767
    %4769 = vmatmul.bf16.gmra.mxu0 %v4133
    %v4770 = vpop.f32.mrf.mxu0
    %v4771 = vadd.f32 %v4748, %v4770
    %v4772 = vpop.f32.mrf.mxu0
    %v4773 = vadd.f32 %v4750, %v4772
    %4774 = vmatmul.bf16.gmra.mxu0 %v4147
    %v4775 = vpop.f32.mrf.mxu0
    %v4776 = vadd.f32 %v4753, %v4775
    %v4777 = vpop.f32.mrf.mxu0
    %4778 = vdwg.mxu0
    %4779 = vmatpush.bf16.msra.mxu0 0
    %4780 = vmatpush.bf16.msra.mxu0 0
    %4781 = vmatpush.bf16.msra.mxu0 0
    %4782 = vmatpush.bf16.msra.mxu0 0
    %4783 = vmatpush.bf16.msra.mxu0 0
    %4784 = vmatpush.bf16.msra.mxu0 0
    %4785 = vmatpush.bf16.msra.mxu0 %v4444
    %4786 = vmatpush.bf16.msra.mxu0 %v4440
    %4787 = vmatmul.bf16.gmra.mxu0 %v4518
    %v4788 = vpop.f32.mrf.mxu0
    %v4789 = vadd.f32 %v4766, %v4788
    %v4790 = vpop.f32.mrf.mxu0
    %v4791 = vadd.f32 %v4768, %v4790
    %4792 = vmatmul.bf16.gmra.mxu0 %v4521
    %v4793 = vpop.f32.mrf.mxu0
    %v4794 = vadd.f32 %v4771, %v4793
    %v4795 = vpop.f32.mrf.mxu0
    %v4796 = vadd.f32 %v4773, %v4795
    %4797 = vmatmul.bf16.gmra.mxu0 %v4524
    %v4798 = vpop.f32.mrf.mxu0
    %v4799 = vadd.f32 %v4776, %v4798
    %v4800 = vpop.f32.mrf.mxu0
    %4801 = vdwg.mxu0
    %v4802 = vld [vmem:[#allocation6] sm:$0xff]
    %v4803 = vld [vmem:[#allocation6 + $0x8] sm:$0xff]
    %v4804 = vld [vmem:[#allocation6 + $0x10] sm:$0xff]
    %v4805 = vld [vmem:[#allocation6 + $0x18] sm:$0xff]
    %v4806 = vld [vmem:[#allocation6 + $0x20] sm:$0xff]
    %v4807 = vld [vmem:[#allocation6 + $0x28] sm:$0xff]
    %v4808 = vld [vmem:[#allocation6 + $0x30] sm:$0xff]
    %v4809 = vld [vmem:[#allocation6 + $0x38] sm:$0xff]
    %v4810 = vld [vmem:[#allocation6 + $0x40] sm:$0xff]
    %v4811 = vld [vmem:[#allocation6 + $0x48] sm:$0xff]
    %v4812 = vld [vmem:[#allocation6 + $0x50] sm:$0xff]
    %v4813 = vld [vmem:[#allocation6 + $0x58] sm:$0xff]
    %v4814 = vld [vmem:[#allocation6 + $0x60] sm:$0xff]
    %v4815 = vld [vmem:[#allocation6 + $0x68] sm:$0xff]
    %v4816 = vld [vmem:[#allocation6 + $0x70] sm:$0xff]
    %v4817 = vld [vmem:[#allocation6 + $0x78] sm:$0xff]
    %v4818 = vld [vmem:[#allocation6 + $0x80] sm:$0xf]
    %v4819 = vld [vmem:[#allocation6 + $0x88] sm:$0xf]
    %v4820 = vld [vmem:[#allocation6 + $0x90] sm:$0xf]
    %v4821 = vld [vmem:[#allocation6 + $0x98] sm:$0xf]
    %v4822 = vadd.f32 %v4802, %v4582
    %v4823 = vadd.f32 %v4803, %v4651
    %v4824 = vadd.f32 %v4804, %v4720
    %v4825 = vadd.f32 %v4805, %v4789
    %v4826 = vadd.f32 %v4806, %v4584
    %v4827 = vadd.f32 %v4807, %v4653
    %v4828 = vadd.f32 %v4808, %v4722
    %v4829 = vadd.f32 %v4809, %v4791
    %v4830 = vadd.f32 %v4810, %v4587
    %v4831 = vadd.f32 %v4811, %v4656
    %v4832 = vadd.f32 %v4812, %v4725
    %v4833 = vadd.f32 %v4813, %v4794
    %v4834 = vadd.f32 %v4814, %v4589
    %v4835 = vadd.f32 %v4815, %v4658
    %v4836 = vadd.f32 %v4816, %v4727
    %v4837 = vadd.f32 %v4817, %v4796
    %v4838 = vadd.f32 %v4818, %v4592
    %v4839 = vadd.f32 %v4819, %v4661
    %v4840 = vadd.f32 %v4820, %v4730
    %v4841 = vadd.f32 %v4821, %v4799
    %4842 = vst [vmem:[#allocation6] sm:$0xff] %v4822
    %4843 = vst [vmem:[#allocation6 + $0x8] sm:$0xff] %v4823
    %4844 = vst [vmem:[#allocation6 + $0x10] sm:$0xff] %v4824
    %4845 = vst.msk [vmem:[#allocation6 + $0x18] sm:$0xff] %vm286, %v4825
    %4846 = vst [vmem:[#allocation6 + $0x20] sm:$0xff] %v4826
    %4847 = vst [vmem:[#allocation6 + $0x28] sm:$0xff] %v4827
    %4848 = vst [vmem:[#allocation6 + $0x30] sm:$0xff] %v4828
    %4849 = vst.msk [vmem:[#allocation6 + $0x38] sm:$0xff] %vm286, %v4829
    %4850 = vst [vmem:[#allocation6 + $0x40] sm:$0xff] %v4830
    %4851 = vst [vmem:[#allocation6 + $0x48] sm:$0xff] %v4831
    %4852 = vst [vmem:[#allocation6 + $0x50] sm:$0xff] %v4832
    %4853 = vst.msk [vmem:[#allocation6 + $0x58] sm:$0xff] %vm286, %v4833
    %4854 = vst [vmem:[#allocation6 + $0x60] sm:$0xff] %v4834
    %4855 = vst [vmem:[#allocation6 + $0x68] sm:$0xff] %v4835
    %4856 = vst [vmem:[#allocation6 + $0x70] sm:$0xff] %v4836
    %4857 = vst.msk [vmem:[#allocation6 + $0x78] sm:$0xff] %vm286, %v4837
    %4858 = vst [vmem:[#allocation6 + $0x80] sm:$0xf] %v4838
    %4859 = vst [vmem:[#allocation6 + $0x88] sm:$0xf] %v4839
    %4860 = vst [vmem:[#allocation6 + $0x90] sm:$0xf] %v4840
    %4861 = vst.msk [vmem:[#allocation6 + $0x98] sm:$0xf] %vm3983, %v4841
    %v4862 = vld [vmem:[#allocation5] sm:$0xff]
    %v4863 = vld [vmem:[#allocation5 + $0x8] sm:$0xff]
    %v4864 = vld [vmem:[#allocation5 + $0x10] sm:$0xff]
    %v4865 = vld [vmem:[#allocation5 + $0x18] sm:$0xff]
    %v4866 = vld [vmem:[#allocation5 + $0x20] sm:$0xff]
    %v4867 = vld [vmem:[#allocation5 + $0x28] sm:$0xff]
    %v4868 = vld [vmem:[#allocation5 + $0x30] sm:$0xff]
    %v4869 = vld [vmem:[#allocation5 + $0x38] sm:$0xff]
    %v4870 = vld [vmem:[#allocation5 + $0x40] sm:$0xff]
    %v4871 = vld [vmem:[#allocation5 + $0x48] sm:$0xff]
    %v4872 = vld [vmem:[#allocation5 + $0x50] sm:$0xff]
    %v4873 = vld [vmem:[#allocation5 + $0x58] sm:$0xff]
    %v4874 = vld [vmem:[#allocation5 + $0x60] sm:$0xff]
    %v4875 = vld [vmem:[#allocation5 + $0x68] sm:$0xff]
    %v4876 = vld [vmem:[#allocation5 + $0x70] sm:$0xff]
    %v4877 = vpack.c.bf16 %v4865, %v4862
    %v4878 = vpack.c.bf16 %v4866, %v4863
    %v4879 = vpack.c.bf16 %v4867, %v4864
    %v4880 = vpack.c.bf16 %v4871, %v4868
    %v4881 = vpack.c.bf16 %v4872, %v4869
    %v4882 = vpack.c.bf16 %v4873, %v4870
    %v4883 = vpack.c.bf16 %v4874, %v4874
    %v4884 = vpack.c.bf16 %v4875, %v4875
    %v4885 = vpack.c.bf16 %v4876, %v4876
    %s4886 = scalar_lea.vmem %s2, 1152
    %v4887 = vld [vmem:[%s4886] sm:$0xff]
    %v4888 = vld [vmem:[%s4886 + $0x8] sm:$0xff]
    %v4889 = vld [vmem:[%s4886 + $0x10] sm:$0xff]
    %v4890 = vld [vmem:[%s4886 + $0x18] sm:$0xff]
    %v4891 = vld [vmem:[%s4886 + $0x20] sm:$0xff]
    %v4892 = vld [vmem:[%s4886 + $0x28] sm:$0xff]
    %v4893 = vld [vmem:[%s4886 + $0x30] sm:$0xff]
    %v4894 = vld [vmem:[%s4886 + $0x38] sm:$0xff]
    %v4895 = vld [vmem:[%s4886 + $0x40] sm:$0xff]
    %v4896 = vld [vmem:[%s4886 + $0x48] sm:$0xff]
    %v4897 = vld [vmem:[%s4886 + $0x50] sm:$0xff]
    %v4898 = vld [vmem:[%s4886 + $0x58] sm:$0xff]
    %v4899 = vld [vmem:[%s4886 + $0x60] sm:$0xff]
    %v4900 = vld [vmem:[%s4886 + $0x68] sm:$0xff]
    %v4901 = vld [vmem:[%s4886 + $0x70] sm:$0xff]
    %v4902 = vld [vmem:[%s4886 + $0x78] sm:$0xff]
    %v4903 = vld [vmem:[%s4886 + $0x80] sm:$0xff]
    %v4904 = vld [vmem:[%s4886 + $0x88] sm:$0xff]
    %v4905 = vld [vmem:[%s4886 + $0x90] sm:$0xff]
    %v4906 = vld [vmem:[%s4886 + $0x98] sm:$0xff]
    %v4907 = vld [vmem:[%s4886 + $0xa0] sm:$0xff]
    %v4908 = vld [vmem:[%s4886 + $0xa8] sm:$0xff]
    %v4909 = vld [vmem:[%s4886 + $0xb0] sm:$0xff]
    %v4910 = vld [vmem:[%s4886 + $0xb8] sm:$0xff]
    %v4911 = vld [vmem:[%s4886 + $0xc0] sm:$0xff]
    %v4912 = vld [vmem:[%s4886 + $0xc8] sm:$0xff]
    %v4913 = vld [vmem:[%s4886 + $0xd0] sm:$0xff]
    %v4914 = vld [vmem:[%s4886 + $0xd8] sm:$0xff]
    %v4915 = vld [vmem:[%s4886 + $0xe0] sm:$0xff]
    %v4916 = vld [vmem:[%s4886 + $0xe8] sm:$0xff]
    %v4917 = vld [vmem:[%s4886 + $0xf0] sm:$0xff]
    %v4918 = vld [vmem:[%s4886 + $0xf8] sm:$0xff]
    %v4919 = vld [vmem:[%s4886 + $0x100] sm:$0xff]
    %v4920 = vld [vmem:[%s4886 + $0x108] sm:$0xff]
    %v4921 = vld [vmem:[%s4886 + $0x110] sm:$0xff]
    %v4922 = vld [vmem:[%s4886 + $0x118] sm:$0xff]
    %v4923 = vld [vmem:[%s4886 + $0x120] sm:$0xff]
    %v4924 = vld [vmem:[%s4886 + $0x128] sm:$0xff]
    %v4925 = vld [vmem:[%s4886 + $0x130] sm:$0xff]
    %v4926 = vld [vmem:[%s4886 + $0x138] sm:$0xff]
    %v4927 = vld [vmem:[%s4886 + $0x140] sm:$0xff]
    %v4928 = vld [vmem:[%s4886 + $0x148] sm:$0xff]
    %v4929 = vld [vmem:[%s4886 + $0x150] sm:$0xff]
    %v4930 = vld [vmem:[%s4886 + $0x158] sm:$0xff]
    %v4931 = vld [vmem:[%s4886 + $0x160] sm:$0xff]
    %v4932 = vld [vmem:[%s4886 + $0x168] sm:$0xff]
    %v4933 = vld [vmem:[%s4886 + $0x170] sm:$0xff]
    %v4934 = vld [vmem:[%s4886 + $0x178] sm:$0xff]
    %v4935 = vld [vmem:[%s4886 + $0x180] sm:$0xff]
    %v4936 = vld [vmem:[%s4886 + $0x188] sm:$0xff]
    %v4937 = vld [vmem:[%s4886 + $0x190] sm:$0xff]
    %v4938 = vld [vmem:[%s4886 + $0x198] sm:$0xff]
    %v4939 = vld [vmem:[%s4886 + $0x1a0] sm:$0xff]
    %v4940 = vld [vmem:[%s4886 + $0x1a8] sm:$0xff]
    %v4941 = vld [vmem:[%s4886 + $0x1b0] sm:$0xff]
    %v4942 = vld [vmem:[%s4886 + $0x1b8] sm:$0xff]
    %v4943 = vld [vmem:[%s4886 + $0x1c0] sm:$0xff]
    %v4944 = vld [vmem:[%s4886 + $0x1c8] sm:$0xff]
    %v4945 = vld [vmem:[%s4886 + $0x1d0] sm:$0xff]
    %v4946 = vld [vmem:[%s4886 + $0x1d8] sm:$0xff]
    %v4947 = vld [vmem:[%s4886 + $0x1e0] sm:$0xff]
    %v4948 = vld [vmem:[%s4886 + $0x1e8] sm:$0xff]
    %v4949 = vld [vmem:[%s4886 + $0x1f0] sm:$0xff]
    %v4950 = vld [vmem:[%s4886 + $0x1f8] sm:$0xff]
    %v4951 = vld [vmem:[%s4886 + $0x200] sm:$0xff]
    %v4952 = vld [vmem:[%s4886 + $0x208] sm:$0xff]
    %v4953 = vld [vmem:[%s4886 + $0x210] sm:$0xff]
    %v4954 = vld [vmem:[%s4886 + $0x218] sm:$0xff]
    %v4955 = vld [vmem:[%s4886 + $0x220] sm:$0xff]
    %v4956 = vld [vmem:[%s4886 + $0x228] sm:$0xff]
    %v4957 = vld [vmem:[%s4886 + $0x230] sm:$0xff]
    %v4958 = vld [vmem:[%s4886 + $0x238] sm:$0xff]
    %v4968 = vrot.slane %v4877, 1
    %v4969 = vrot.slane %v4880, 1
    %v4970 = vsel %vm668, %v4968, %v4969
    %v4971 = vrot.slane %v4878, 1
    %v4972 = vrot.slane %v4881, 1
    %v4973 = vsel %vm668, %v4971, %v4972
    %v4974 = vrot.slane %v4879, 1
    %v4975 = vrot.slane %v4882, 1
    %v4976 = vsel %vm668, %v4974, %v4975
    %v4977 = vrot.slane %v4883, 1
    %v4978 = vsel %vm668, %v4969, %v4977
    %v4979 = vrot.slane %v4884, 1
    %v4980 = vsel %vm668, %v4972, %v4979
    %v4981 = vrot.slane %v4885, 1
    %v4982 = vsel %vm668, %v4975, %v4981
    %v5061 = vunpack.c.l.b16 %v4887
    %v5062 = vunpack.c.h.b16 %v4887
    %v5063 = vunpack.c.l.b16 %v4888
    %v5064 = vunpack.c.h.b16 %v4888
    %v5065 = vunpack.c.l.b16 %v4889
    %v5066 = vunpack.c.h.b16 %v4889
    %v5067 = vunpack.c.l.b16 %v4890
    %v5068 = vunpack.c.h.b16 %v4890
    %v5069 = vunpack.c.l.b16 %v4891
    %v5070 = vunpack.c.h.b16 %v4891
    %v5071 = vunpack.c.l.b16 %v4892
    %v5072 = vunpack.c.h.b16 %v4892
    %v5073 = vunpack.c.l.b16 %v4893
    %v5074 = vunpack.c.h.b16 %v4893
    %v5075 = vunpack.c.l.b16 %v4894
    %v5076 = vunpack.c.h.b16 %v4894
    %v5077 = vunpack.c.l.b16 %v4895
    %v5078 = vunpack.c.h.b16 %v4895
    %v5079 = vunpack.c.l.b16 %v4896
    %v5080 = vunpack.c.h.b16 %v4896
    %v5081 = vunpack.c.l.b16 %v4897
    %v5082 = vunpack.c.h.b16 %v4897
    %v5083 = vunpack.c.l.b16 %v4898
    %v5084 = vunpack.c.h.b16 %v4898
    %v5085 = vunpack.c.l.b16 %v4899
    %v5086 = vunpack.c.h.b16 %v4899
    %v5087 = vunpack.c.l.b16 %v4900
    %v5088 = vunpack.c.h.b16 %v4900
    %v5089 = vunpack.c.l.b16 %v4901
    %v5090 = vunpack.c.h.b16 %v4901
    %v5091 = vunpack.c.l.b16 %v4902
    %v5092 = vunpack.c.h.b16 %v4902
    %v5093 = vunpack.c.l.b16 %v4903
    %v5094 = vunpack.c.h.b16 %v4903
    %v5095 = vunpack.c.l.b16 %v4904
    %v5096 = vunpack.c.h.b16 %v4904
    %v5097 = vunpack.c.l.b16 %v4905
    %v5098 = vunpack.c.h.b16 %v4905
    %v5099 = vunpack.c.l.b16 %v4906
    %v5100 = vunpack.c.h.b16 %v4906
    %v5101 = vunpack.c.l.b16 %v4907
    %v5102 = vunpack.c.h.b16 %v4907
    %v5103 = vunpack.c.l.b16 %v4908
    %v5104 = vunpack.c.h.b16 %v4908
    %v5105 = vunpack.c.l.b16 %v4909
    %v5106 = vunpack.c.h.b16 %v4909
    %v5107 = vunpack.c.l.b16 %v4910
    %v5108 = vunpack.c.h.b16 %v4910
    %v5109 = vunpack.c.l.b16 %v4911
    %v5110 = vunpack.c.h.b16 %v4911
    %v5111 = vunpack.c.l.b16 %v4912
    %v5112 = vunpack.c.h.b16 %v4912
    %v5113 = vunpack.c.l.b16 %v4913
    %v5114 = vunpack.c.h.b16 %v4913
    %v5115 = vunpack.c.l.b16 %v4914
    %v5116 = vunpack.c.h.b16 %v4914
    %v5117 = vunpack.c.l.b16 %v4915
    %v5118 = vunpack.c.h.b16 %v4915
    %v5119 = vunpack.c.l.b16 %v4916
    %v5120 = vunpack.c.h.b16 %v4916
    %v5121 = vunpack.c.l.b16 %v4917
    %v5122 = vunpack.c.h.b16 %v4917
    %v5123 = vunpack.c.l.b16 %v4918
    %v5124 = vunpack.c.h.b16 %v4918
    %v5125 = vunpack.c.l.b16 %v4919
    %v5126 = vunpack.c.h.b16 %v4919
    %v5127 = vunpack.c.l.b16 %v4920
    %v5128 = vunpack.c.h.b16 %v4920
    %v5129 = vunpack.c.l.b16 %v4921
    %v5130 = vunpack.c.h.b16 %v4921
    %v5131 = vunpack.c.l.b16 %v4922
    %v5132 = vunpack.c.h.b16 %v4922
    %v5133 = vunpack.c.l.b16 %v4923
    %v5134 = vunpack.c.h.b16 %v4923
    %v5135 = vunpack.c.l.b16 %v4924
    %v5136 = vunpack.c.h.b16 %v4924
    %v5137 = vunpack.c.l.b16 %v4925
    %v5138 = vunpack.c.h.b16 %v4925
    %v5139 = vunpack.c.l.b16 %v4926
    %v5140 = vunpack.c.h.b16 %v4926
    %v5141 = vunpack.c.l.b16 %v4927
    %v5142 = vunpack.c.h.b16 %v4927
    %v5143 = vunpack.c.l.b16 %v4928
    %v5144 = vunpack.c.h.b16 %v4928
    %v5145 = vunpack.c.l.b16 %v4929
    %v5146 = vunpack.c.h.b16 %v4929
    %v5147 = vunpack.c.l.b16 %v4930
    %v5148 = vunpack.c.h.b16 %v4930
    %v5149 = vunpack.c.l.b16 %v4931
    %v5150 = vunpack.c.h.b16 %v4931
    %v5151 = vunpack.c.l.b16 %v4932
    %v5152 = vunpack.c.h.b16 %v4932
    %v5153 = vunpack.c.l.b16 %v4933
    %v5154 = vunpack.c.h.b16 %v4933
    %v5155 = vunpack.c.l.b16 %v4934
    %v5156 = vunpack.c.h.b16 %v4934
    %v5157 = vunpack.c.l.b16 %v4935
    %v5158 = vunpack.c.h.b16 %v4935
    %v5159 = vunpack.c.l.b16 %v4936
    %v5160 = vunpack.c.h.b16 %v4936
    %v5161 = vunpack.c.l.b16 %v4937
    %v5162 = vunpack.c.h.b16 %v4937
    %v5163 = vunpack.c.l.b16 %v4938
    %v5164 = vunpack.c.h.b16 %v4938
    %v5165 = vunpack.c.l.b16 %v4939
    %v5166 = vunpack.c.h.b16 %v4939
    %v5167 = vunpack.c.l.b16 %v4940
    %v5168 = vunpack.c.h.b16 %v4940
    %v5169 = vunpack.c.l.b16 %v4941
    %v5170 = vunpack.c.h.b16 %v4941
    %v5171 = vunpack.c.l.b16 %v4942
    %v5172 = vunpack.c.h.b16 %v4942
    %v5173 = vunpack.c.l.b16 %v4943
    %v5174 = vunpack.c.h.b16 %v4943
    %v5175 = vunpack.c.l.b16 %v4944
    %v5176 = vunpack.c.h.b16 %v4944
    %v5177 = vunpack.c.l.b16 %v4945
    %v5178 = vunpack.c.h.b16 %v4945
    %v5179 = vunpack.c.l.b16 %v4946
    %v5180 = vunpack.c.h.b16 %v4946
    %v5181 = vunpack.c.l.b16 %v4947
    %v5182 = vunpack.c.h.b16 %v4947
    %v5183 = vunpack.c.l.b16 %v4948
    %v5184 = vunpack.c.h.b16 %v4948
    %v5185 = vunpack.c.l.b16 %v4949
    %v5186 = vunpack.c.h.b16 %v4949
    %v5187 = vunpack.c.l.b16 %v4950
    %v5188 = vunpack.c.h.b16 %v4950
    %v5189 = vunpack.c.l.b16 %v4951
    %v5190 = vunpack.c.h.b16 %v4951
    %v5191 = vunpack.c.l.b16 %v4952
    %v5192 = vunpack.c.h.b16 %v4952
    %v5193 = vunpack.c.l.b16 %v4953
    %v5194 = vunpack.c.h.b16 %v4953
    %v5195 = vunpack.c.l.b16 %v4954
    %v5196 = vunpack.c.h.b16 %v4954
    %v5197 = vunpack.c.l.b16 %v4955
    %v5198 = vunpack.c.h.b16 %v4955
    %v5199 = vunpack.c.l.b16 %v4956
    %v5200 = vunpack.c.h.b16 %v4956
    %v5201 = vunpack.c.l.b16 %v4957
    %v5202 = vunpack.c.h.b16 %v4957
    %v5203 = vunpack.c.l.b16 %v4958
    %v5204 = vunpack.c.h.b16 %v4958
    %v5205 = vpack.c.b16 %v5065, %v5061
    %v5206 = vpack.c.b16 %v5066, %v5062
    %v5207 = vpack.c.b16 %v5067, %v5063
    %v5208 = vpack.c.b16 %v5068, %v5064
    %v5209 = vpack.c.b16 %v5073, %v5069
    %v5210 = vpack.c.b16 %v5074, %v5070
    %v5211 = vpack.c.b16 %v5075, %v5071
    %v5212 = vpack.c.b16 %v5076, %v5072
    %v5213 = vpack.c.b16 %v5081, %v5077
    %v5214 = vpack.c.b16 %v5082, %v5078
    %v5215 = vpack.c.b16 %v5083, %v5079
    %v5216 = vpack.c.b16 %v5084, %v5080
    %v5217 = vpack.c.b16 %v5089, %v5085
    %v5218 = vpack.c.b16 %v5090, %v5086
    %v5219 = vpack.c.b16 %v5091, %v5087
    %v5220 = vpack.c.b16 %v5092, %v5088
    %v5221 = vpack.c.b16 %v5097, %v5093
    %v5222 = vpack.c.b16 %v5098, %v5094
    %v5223 = vpack.c.b16 %v5099, %v5095
    %v5224 = vpack.c.b16 %v5100, %v5096
    %v5225 = vpack.c.b16 %v5105, %v5101
    %v5226 = vpack.c.b16 %v5106, %v5102
    %v5227 = vpack.c.b16 %v5107, %v5103
    %v5228 = vpack.c.b16 %v5108, %v5104
    %v5229 = vpack.c.b16 %v5113, %v5109
    %v5230 = vpack.c.b16 %v5114, %v5110
    %v5231 = vpack.c.b16 %v5115, %v5111
    %v5232 = vpack.c.b16 %v5116, %v5112
    %v5233 = vpack.c.b16 %v5121, %v5117
    %v5234 = vpack.c.b16 %v5122, %v5118
    %v5235 = vpack.c.b16 %v5123, %v5119
    %v5236 = vpack.c.b16 %v5124, %v5120
    %v5237 = vpack.c.b16 %v5129, %v5125
    %v5238 = vpack.c.b16 %v5130, %v5126
    %v5239 = vpack.c.b16 %v5131, %v5127
    %v5240 = vpack.c.b16 %v5132, %v5128
    %v5241 = vpack.c.b16 %v5137, %v5133
    %v5242 = vpack.c.b16 %v5138, %v5134
    %v5243 = vpack.c.b16 %v5139, %v5135
    %v5244 = vpack.c.b16 %v5140, %v5136
    %v5245 = vpack.c.b16 %v5145, %v5141
    %v5246 = vpack.c.b16 %v5146, %v5142
    %v5247 = vpack.c.b16 %v5147, %v5143
    %v5248 = vpack.c.b16 %v5148, %v5144
    %v5249 = vpack.c.b16 %v5153, %v5149
    %v5250 = vpack.c.b16 %v5154, %v5150
    %v5251 = vpack.c.b16 %v5155, %v5151
    %v5252 = vpack.c.b16 %v5156, %v5152
    %v5253 = vpack.c.b16 %v5161, %v5157
    %v5254 = vpack.c.b16 %v5162, %v5158
    %v5255 = vpack.c.b16 %v5163, %v5159
    %v5256 = vpack.c.b16 %v5164, %v5160
    %v5257 = vpack.c.b16 %v5169, %v5165
    %v5258 = vpack.c.b16 %v5170, %v5166
    %v5259 = vpack.c.b16 %v5171, %v5167
    %v5260 = vpack.c.b16 %v5172, %v5168
    %v5261 = vpack.c.b16 %v5177, %v5173
    %v5262 = vpack.c.b16 %v5178, %v5174
    %v5263 = vpack.c.b16 %v5179, %v5175
    %v5264 = vpack.c.b16 %v5180, %v5176
    %v5265 = vpack.c.b16 %v5185, %v5181
    %v5266 = vpack.c.b16 %v5186, %v5182
    %v5267 = vpack.c.b16 %v5187, %v5183
    %v5268 = vpack.c.b16 %v5188, %v5184
    %v5269 = vpack.c.b16 %v5193, %v5189
    %v5270 = vpack.c.b16 %v5194, %v5190
    %v5271 = vpack.c.b16 %v5195, %v5191
    %v5272 = vpack.c.b16 %v5196, %v5192
    %v5273 = vpack.c.b16 %v5201, %v5197
    %v5274 = vpack.c.b16 %v5202, %v5198
    %v5275 = vpack.c.b16 %v5203, %v5199
    %v5276 = vpack.c.b16 %v5204, %v5200
    %v5350 = vsel %vm34, %v4976, 0
    %v5353 = vsel %vm34, %v4982, 0
    %v5356 = vsel %vm34, %v4981, 0
    %5358 = vmatpush.bf16.msra.mxu0 %v5233
    %5359 = vmatpush.bf16.msra.mxu0 %v5229
    %5360 = vmatpush.bf16.msra.mxu0 %v5225
    %5361 = vmatpush.bf16.msra.mxu0 %v5221
    %5362 = vmatpush.bf16.msra.mxu0 %v5217
    %5363 = vmatpush.bf16.msra.mxu0 %v5213
    %5364 = vmatpush.bf16.msra.mxu0 %v5209
    %5365 = vmatpush.bf16.msra.mxu0 %v5205
    %5366 = vmatmul.bf16.gmra.mxu0 %v4970
    %v5367 = vpop.f32.mrf.mxu0
    %v5368 = vadd.f32 0.0, %v5367
    %v5369 = vpop.f32.mrf.mxu0
    %v5370 = vadd.f32 0.0, %v5369
    %5371 = vmatmul.bf16.gmra.mxu0 %v4978
    %v5372 = vpop.f32.mrf.mxu0
    %v5373 = vadd.f32 0.0, %v5372
    %v5374 = vpop.f32.mrf.mxu0
    %v5375 = vadd.f32 0.0, %v5374
    %5376 = vmatmul.bf16.gmra.mxu0 %v4977
    %v5377 = vpop.f32.mrf.mxu0
    %v5378 = vadd.f32 0.0, %v5377
    %v5379 = vpop.f32.mrf.mxu0
    %5380 = vdwg.mxu0
    %5381 = vmatpush.bf16.msra.mxu0 %v5265
    %5382 = vmatpush.bf16.msra.mxu0 %v5261
    %5383 = vmatpush.bf16.msra.mxu0 %v5257
    %5384 = vmatpush.bf16.msra.mxu0 %v5253
    %5385 = vmatpush.bf16.msra.mxu0 %v5249
    %5386 = vmatpush.bf16.msra.mxu0 %v5245
    %5387 = vmatpush.bf16.msra.mxu0 %v5241
    %5388 = vmatpush.bf16.msra.mxu0 %v5237
    %5389 = vmatmul.bf16.gmra.mxu0 %v4973
    %v5390 = vpop.f32.mrf.mxu0
    %v5391 = vadd.f32 %v5368, %v5390
    %v5392 = vpop.f32.mrf.mxu0
    %v5393 = vadd.f32 %v5370, %v5392
    %5394 = vmatmul.bf16.gmra.mxu0 %v4980
    %v5395 = vpop.f32.mrf.mxu0
    %v5396 = vadd.f32 %v5373, %v5395
    %v5397 = vpop.f32.mrf.mxu0
    %v5398 = vadd.f32 %v5375, %v5397
    %5399 = vmatmul.bf16.gmra.mxu0 %v4979
    %v5400 = vpop.f32.mrf.mxu0
    %v5401 = vadd.f32 %v5378, %v5400
    %v5402 = vpop.f32.mrf.mxu0
    %5403 = vdwg.mxu0
    %5404 = vmatpush.bf16.msra.mxu0 0
    %5405 = vmatpush.bf16.msra.mxu0 0
    %5406 = vmatpush.bf16.msra.mxu0 0
    %5407 = vmatpush.bf16.msra.mxu0 0
    %5408 = vmatpush.bf16.msra.mxu0 0
    %5409 = vmatpush.bf16.msra.mxu0 0
    %5410 = vmatpush.bf16.msra.mxu0 %v5273
    %5411 = vmatpush.bf16.msra.mxu0 %v5269
    %5412 = vmatmul.bf16.gmra.mxu0 %v5350
    %v5413 = vpop.f32.mrf.mxu0
    %v5414 = vadd.f32 %v5391, %v5413
    %v5415 = vpop.f32.mrf.mxu0
    %v5416 = vadd.f32 %v5393, %v5415
    %5417 = vmatmul.bf16.gmra.mxu0 %v5353
    %v5418 = vpop.f32.mrf.mxu0
    %v5419 = vadd.f32 %v5396, %v5418
    %v5420 = vpop.f32.mrf.mxu0
    %v5421 = vadd.f32 %v5398, %v5420
    %5422 = vmatmul.bf16.gmra.mxu0 %v5356
    %v5423 = vpop.f32.mrf.mxu0
    %v5424 = vadd.f32 %v5401, %v5423
    %v5425 = vpop.f32.mrf.mxu0
    %5426 = vdwg.mxu0
    %5427 = vmatpush.bf16.msra.mxu0 %v5234
    %5428 = vmatpush.bf16.msra.mxu0 %v5230
    %5429 = vmatpush.bf16.msra.mxu0 %v5226
    %5430 = vmatpush.bf16.msra.mxu0 %v5222
    %5431 = vmatpush.bf16.msra.mxu0 %v5218
    %5432 = vmatpush.bf16.msra.mxu0 %v5214
    %5433 = vmatpush.bf16.msra.mxu0 %v5210
    %5434 = vmatpush.bf16.msra.mxu0 %v5206
    %5435 = vmatmul.bf16.gmra.mxu0 %v4970
    %v5436 = vpop.f32.mrf.mxu0
    %v5437 = vadd.f32 0.0, %v5436
    %v5438 = vpop.f32.mrf.mxu0
    %v5439 = vadd.f32 0.0, %v5438
    %5440 = vmatmul.bf16.gmra.mxu0 %v4978
    %v5441 = vpop.f32.mrf.mxu0
    %v5442 = vadd.f32 0.0, %v5441
    %v5443 = vpop.f32.mrf.mxu0
    %v5444 = vadd.f32 0.0, %v5443
    %5445 = vmatmul.bf16.gmra.mxu0 %v4977
    %v5446 = vpop.f32.mrf.mxu0
    %v5447 = vadd.f32 0.0, %v5446
    %v5448 = vpop.f32.mrf.mxu0
    %5449 = vdwg.mxu0
    %5450 = vmatpush.bf16.msra.mxu0 %v5266
    %5451 = vmatpush.bf16.msra.mxu0 %v5262
    %5452 = vmatpush.bf16.msra.mxu0 %v5258
    %5453 = vmatpush.bf16.msra.mxu0 %v5254
    %5454 = vmatpush.bf16.msra.mxu0 %v5250
    %5455 = vmatpush.bf16.msra.mxu0 %v5246
    %5456 = vmatpush.bf16.msra.mxu0 %v5242
    %5457 = vmatpush.bf16.msra.mxu0 %v5238
    %5458 = vmatmul.bf16.gmra.mxu0 %v4973
    %v5459 = vpop.f32.mrf.mxu0
    %v5460 = vadd.f32 %v5437, %v5459
    %v5461 = vpop.f32.mrf.mxu0
    %v5462 = vadd.f32 %v5439, %v5461
    %5463 = vmatmul.bf16.gmra.mxu0 %v4980
    %v5464 = vpop.f32.mrf.mxu0
    %v5465 = vadd.f32 %v5442, %v5464
    %v5466 = vpop.f32.mrf.mxu0
    %v5467 = vadd.f32 %v5444, %v5466
    %5468 = vmatmul.bf16.gmra.mxu0 %v4979
    %v5469 = vpop.f32.mrf.mxu0
    %v5470 = vadd.f32 %v5447, %v5469
    %v5471 = vpop.f32.mrf.mxu0
    %5472 = vdwg.mxu0
    %5473 = vmatpush.bf16.msra.mxu0 0
    %5474 = vmatpush.bf16.msra.mxu0 0
    %5475 = vmatpush.bf16.msra.mxu0 0
    %5476 = vmatpush.bf16.msra.mxu0 0
    %5477 = vmatpush.bf16.msra.mxu0 0
    %5478 = vmatpush.bf16.msra.mxu0 0
    %5479 = vmatpush.bf16.msra.mxu0 %v5274
    %5480 = vmatpush.bf16.msra.mxu0 %v5270
    %5481 = vmatmul.bf16.gmra.mxu0 %v5350
    %v5482 = vpop.f32.mrf.mxu0
    %v5483 = vadd.f32 %v5460, %v5482
    %v5484 = vpop.f32.mrf.mxu0
    %v5485 = vadd.f32 %v5462, %v5484
    %5486 = vmatmul.bf16.gmra.mxu0 %v5353
    %v5487 = vpop.f32.mrf.mxu0
    %v5488 = vadd.f32 %v5465, %v5487
    %v5489 = vpop.f32.mrf.mxu0
    %v5490 = vadd.f32 %v5467, %v5489
    %5491 = vmatmul.bf16.gmra.mxu0 %v5356
    %v5492 = vpop.f32.mrf.mxu0
    %v5493 = vadd.f32 %v5470, %v5492
    %v5494 = vpop.f32.mrf.mxu0
    %5495 = vdwg.mxu0
    %5496 = vmatpush.bf16.msra.mxu0 %v5235
    %5497 = vmatpush.bf16.msra.mxu0 %v5231
    %5498 = vmatpush.bf16.msra.mxu0 %v5227
    %5499 = vmatpush.bf16.msra.mxu0 %v5223
    %5500 = vmatpush.bf16.msra.mxu0 %v5219
    %5501 = vmatpush.bf16.msra.mxu0 %v5215
    %5502 = vmatpush.bf16.msra.mxu0 %v5211
    %5503 = vmatpush.bf16.msra.mxu0 %v5207
    %5504 = vmatmul.bf16.gmra.mxu0 %v4970
    %v5505 = vpop.f32.mrf.mxu0
    %v5506 = vadd.f32 0.0, %v5505
    %v5507 = vpop.f32.mrf.mxu0
    %v5508 = vadd.f32 0.0, %v5507
    %5509 = vmatmul.bf16.gmra.mxu0 %v4978
    %v5510 = vpop.f32.mrf.mxu0
    %v5511 = vadd.f32 0.0, %v5510
    %v5512 = vpop.f32.mrf.mxu0
    %v5513 = vadd.f32 0.0, %v5512
    %5514 = vmatmul.bf16.gmra.mxu0 %v4977
    %v5515 = vpop.f32.mrf.mxu0
    %v5516 = vadd.f32 0.0, %v5515
    %v5517 = vpop.f32.mrf.mxu0
    %5518 = vdwg.mxu0
    %5519 = vmatpush.bf16.msra.mxu0 %v5267
    %5520 = vmatpush.bf16.msra.mxu0 %v5263
    %5521 = vmatpush.bf16.msra.mxu0 %v5259
    %5522 = vmatpush.bf16.msra.mxu0 %v5255
    %5523 = vmatpush.bf16.msra.mxu0 %v5251
    %5524 = vmatpush.bf16.msra.mxu0 %v5247
    %5525 = vmatpush.bf16.msra.mxu0 %v5243
    %5526 = vmatpush.bf16.msra.mxu0 %v5239
    %5527 = vmatmul.bf16.gmra.mxu0 %v4973
    %v5528 = vpop.f32.mrf.mxu0
    %v5529 = vadd.f32 %v5506, %v5528
    %v5530 = vpop.f32.mrf.mxu0
    %v5531 = vadd.f32 %v5508, %v5530
    %5532 = vmatmul.bf16.gmra.mxu0 %v4980
    %v5533 = vpop.f32.mrf.mxu0
    %v5534 = vadd.f32 %v5511, %v5533
    %v5535 = vpop.f32.mrf.mxu0
    %v5536 = vadd.f32 %v5513, %v5535
    %5537 = vmatmul.bf16.gmra.mxu0 %v4979
    %v5538 = vpop.f32.mrf.mxu0
    %v5539 = vadd.f32 %v5516, %v5538
    %v5540 = vpop.f32.mrf.mxu0
    %5541 = vdwg.mxu0
    %5542 = vmatpush.bf16.msra.mxu0 0
    %5543 = vmatpush.bf16.msra.mxu0 0
    %5544 = vmatpush.bf16.msra.mxu0 0
    %5545 = vmatpush.bf16.msra.mxu0 0
    %5546 = vmatpush.bf16.msra.mxu0 0
    %5547 = vmatpush.bf16.msra.mxu0 0
    %5548 = vmatpush.bf16.msra.mxu0 %v5275
    %5549 = vmatpush.bf16.msra.mxu0 %v5271
    %5550 = vmatmul.bf16.gmra.mxu0 %v5350
    %v5551 = vpop.f32.mrf.mxu0
    %v5552 = vadd.f32 %v5529, %v5551
    %v5553 = vpop.f32.mrf.mxu0
    %v5554 = vadd.f32 %v5531, %v5553
    %5555 = vmatmul.bf16.gmra.mxu0 %v5353
    %v5556 = vpop.f32.mrf.mxu0
    %v5557 = vadd.f32 %v5534, %v5556
    %v5558 = vpop.f32.mrf.mxu0
    %v5559 = vadd.f32 %v5536, %v5558
    %5560 = vmatmul.bf16.gmra.mxu0 %v5356
    %v5561 = vpop.f32.mrf.mxu0
    %v5562 = vadd.f32 %v5539, %v5561
    %v5563 = vpop.f32.mrf.mxu0
    %5564 = vdwg.mxu0
    %5565 = vmatpush.bf16.msra.mxu0 %v5236
    %5566 = vmatpush.bf16.msra.mxu0 %v5232
    %5567 = vmatpush.bf16.msra.mxu0 %v5228
    %5568 = vmatpush.bf16.msra.mxu0 %v5224
    %5569 = vmatpush.bf16.msra.mxu0 %v5220
    %5570 = vmatpush.bf16.msra.mxu0 %v5216
    %5571 = vmatpush.bf16.msra.mxu0 %v5212
    %5572 = vmatpush.bf16.msra.mxu0 %v5208
    %5573 = vmatmul.bf16.gmra.mxu0 %v4970
    %v5574 = vpop.f32.mrf.mxu0
    %v5575 = vadd.f32 0.0, %v5574
    %v5576 = vpop.f32.mrf.mxu0
    %v5577 = vadd.f32 0.0, %v5576
    %5578 = vmatmul.bf16.gmra.mxu0 %v4978
    %v5579 = vpop.f32.mrf.mxu0
    %v5580 = vadd.f32 0.0, %v5579
    %v5581 = vpop.f32.mrf.mxu0
    %v5582 = vadd.f32 0.0, %v5581
    %5583 = vmatmul.bf16.gmra.mxu0 %v4977
    %v5584 = vpop.f32.mrf.mxu0
    %v5585 = vadd.f32 0.0, %v5584
    %v5586 = vpop.f32.mrf.mxu0
    %5587 = vdwg.mxu0
    %5588 = vmatpush.bf16.msra.mxu0 %v5268
    %5589 = vmatpush.bf16.msra.mxu0 %v5264
    %5590 = vmatpush.bf16.msra.mxu0 %v5260
    %5591 = vmatpush.bf16.msra.mxu0 %v5256
    %5592 = vmatpush.bf16.msra.mxu0 %v5252
    %5593 = vmatpush.bf16.msra.mxu0 %v5248
    %5594 = vmatpush.bf16.msra.mxu0 %v5244
    %5595 = vmatpush.bf16.msra.mxu0 %v5240
    %5596 = vmatmul.bf16.gmra.mxu0 %v4973
    %v5597 = vpop.f32.mrf.mxu0
    %v5598 = vadd.f32 %v5575, %v5597
    %v5599 = vpop.f32.mrf.mxu0
    %v5600 = vadd.f32 %v5577, %v5599
    %5601 = vmatmul.bf16.gmra.mxu0 %v4980
    %v5602 = vpop.f32.mrf.mxu0
    %v5603 = vadd.f32 %v5580, %v5602
    %v5604 = vpop.f32.mrf.mxu0
    %v5605 = vadd.f32 %v5582, %v5604
    %5606 = vmatmul.bf16.gmra.mxu0 %v4979
    %v5607 = vpop.f32.mrf.mxu0
    %v5608 = vadd.f32 %v5585, %v5607
    %v5609 = vpop.f32.mrf.mxu0
    %5610 = vdwg.mxu0
    %5611 = vmatpush.bf16.msra.mxu0 0
    %5612 = vmatpush.bf16.msra.mxu0 0
    %5613 = vmatpush.bf16.msra.mxu0 0
    %5614 = vmatpush.bf16.msra.mxu0 0
    %5615 = vmatpush.bf16.msra.mxu0 0
    %5616 = vmatpush.bf16.msra.mxu0 0
    %5617 = vmatpush.bf16.msra.mxu0 %v5276
    %5618 = vmatpush.bf16.msra.mxu0 %v5272
    %5619 = vmatmul.bf16.gmra.mxu0 %v5350
    %v5620 = vpop.f32.mrf.mxu0
    %v5621 = vadd.f32 %v5598, %v5620
    %v5622 = vpop.f32.mrf.mxu0
    %v5623 = vadd.f32 %v5600, %v5622
    %5624 = vmatmul.bf16.gmra.mxu0 %v5353
    %v5625 = vpop.f32.mrf.mxu0
    %v5626 = vadd.f32 %v5603, %v5625
    %v5627 = vpop.f32.mrf.mxu0
    %v5628 = vadd.f32 %v5605, %v5627
    %5629 = vmatmul.bf16.gmra.mxu0 %v5356
    %v5630 = vpop.f32.mrf.mxu0
    %v5631 = vadd.f32 %v5608, %v5630
    %v5632 = vpop.f32.mrf.mxu0
    %5633 = vdwg.mxu0
    %v5634 = vld [vmem:[#allocation6] sm:$0xff]
    %v5635 = vld [vmem:[#allocation6 + $0x8] sm:$0xff]
    %v5636 = vld [vmem:[#allocation6 + $0x10] sm:$0xff]
    %v5637 = vld [vmem:[#allocation6 + $0x18] sm:$0xff]
    %v5638 = vld [vmem:[#allocation6 + $0x20] sm:$0xff]
    %v5639 = vld [vmem:[#allocation6 + $0x28] sm:$0xff]
    %v5640 = vld [vmem:[#allocation6 + $0x30] sm:$0xff]
    %v5641 = vld [vmem:[#allocation6 + $0x38] sm:$0xff]
    %v5642 = vld [vmem:[#allocation6 + $0x40] sm:$0xff]
    %v5643 = vld [vmem:[#allocation6 + $0x48] sm:$0xff]
    %v5644 = vld [vmem:[#allocation6 + $0x50] sm:$0xff]
    %v5645 = vld [vmem:[#allocation6 + $0x58] sm:$0xff]
    %v5646 = vld [vmem:[#allocation6 + $0x60] sm:$0xff]
    %v5647 = vld [vmem:[#allocation6 + $0x68] sm:$0xff]
    %v5648 = vld [vmem:[#allocation6 + $0x70] sm:$0xff]
    %v5649 = vld [vmem:[#allocation6 + $0x78] sm:$0xff]
    %v5650 = vld [vmem:[#allocation6 + $0x80] sm:$0xf]
    %v5651 = vld [vmem:[#allocation6 + $0x88] sm:$0xf]
    %v5652 = vld [vmem:[#allocation6 + $0x90] sm:$0xf]
    %v5653 = vld [vmem:[#allocation6 + $0x98] sm:$0xf]
    %v5654 = vadd.f32 %v5634, %v5414
    %v5655 = vadd.f32 %v5635, %v5483
    %v5656 = vadd.f32 %v5636, %v5552
    %v5657 = vadd.f32 %v5637, %v5621
    %v5658 = vadd.f32 %v5638, %v5416
    %v5659 = vadd.f32 %v5639, %v5485
    %v5660 = vadd.f32 %v5640, %v5554
    %v5661 = vadd.f32 %v5641, %v5623
    %v5662 = vadd.f32 %v5642, %v5419
    %v5663 = vadd.f32 %v5643, %v5488
    %v5664 = vadd.f32 %v5644, %v5557
    %v5665 = vadd.f32 %v5645, %v5626
    %v5666 = vadd.f32 %v5646, %v5421
    %v5667 = vadd.f32 %v5647, %v5490
    %v5668 = vadd.f32 %v5648, %v5559
    %v5669 = vadd.f32 %v5649, %v5628
    %v5670 = vadd.f32 %v5650, %v5424
    %v5671 = vadd.f32 %v5651, %v5493
    %v5672 = vadd.f32 %v5652, %v5562
    %v5673 = vadd.f32 %v5653, %v5631
    %5674 = vst [vmem:[#allocation6] sm:$0xff] %v5654
    %5675 = vst [vmem:[#allocation6 + $0x8] sm:$0xff] %v5655
    %5676 = vst [vmem:[#allocation6 + $0x10] sm:$0xff] %v5656
    %5677 = vst.msk [vmem:[#allocation6 + $0x18] sm:$0xff] %vm286, %v5657
    %5678 = vst [vmem:[#allocation6 + $0x20] sm:$0xff] %v5658
    %5679 = vst [vmem:[#allocation6 + $0x28] sm:$0xff] %v5659
    %5680 = vst [vmem:[#allocation6 + $0x30] sm:$0xff] %v5660
    %5681 = vst.msk [vmem:[#allocation6 + $0x38] sm:$0xff] %vm286, %v5661
    %5682 = vst [vmem:[#allocation6 + $0x40] sm:$0xff] %v5662
    %5683 = vst [vmem:[#allocation6 + $0x48] sm:$0xff] %v5663
    %5684 = vst [vmem:[#allocation6 + $0x50] sm:$0xff] %v5664
    %5685 = vst.msk [vmem:[#allocation6 + $0x58] sm:$0xff] %vm286, %v5665
    %5686 = vst [vmem:[#allocation6 + $0x60] sm:$0xff] %v5666
    %5687 = vst [vmem:[#allocation6 + $0x68] sm:$0xff] %v5667
    %5688 = vst [vmem:[#allocation6 + $0x70] sm:$0xff] %v5668
    %5689 = vst.msk [vmem:[#allocation6 + $0x78] sm:$0xff] %vm286, %v5669
    %5690 = vst [vmem:[#allocation6 + $0x80] sm:$0xf] %v5670
    %5691 = vst [vmem:[#allocation6 + $0x88] sm:$0xf] %v5671
    %5692 = vst [vmem:[#allocation6 + $0x90] sm:$0xf] %v5672
    %5693 = vst.msk [vmem:[#allocation6 + $0x98] sm:$0xf] %vm3983, %v5673
    %v5694 = vld [vmem:[#allocation5] sm:$0xff]
    %v5695 = vld [vmem:[#allocation5 + $0x8] sm:$0xff]
    %v5696 = vld [vmem:[#allocation5 + $0x10] sm:$0xff]
    %v5697 = vld [vmem:[#allocation5 + $0x18] sm:$0xff]
    %v5698 = vld [vmem:[#allocation5 + $0x20] sm:$0xff]
    %v5699 = vld [vmem:[#allocation5 + $0x28] sm:$0xff]
    %v5700 = vld [vmem:[#allocation5 + $0x30] sm:$0xff]
    %v5701 = vld [vmem:[#allocation5 + $0x38] sm:$0xff]
    %v5702 = vld [vmem:[#allocation5 + $0x40] sm:$0xff]
    %v5703 = vld [vmem:[#allocation5 + $0x48] sm:$0xff]
    %v5704 = vld [vmem:[#allocation5 + $0x50] sm:$0xff]
    %v5705 = vld [vmem:[#allocation5 + $0x58] sm:$0xff]
    %v5706 = vld [vmem:[#allocation5 + $0x60] sm:$0xff]
    %v5707 = vld [vmem:[#allocation5 + $0x68] sm:$0xff]
    %v5708 = vld [vmem:[#allocation5 + $0x70] sm:$0xff]
    %v5709 = vpack.c.bf16 %v5697, %v5694
    %v5710 = vpack.c.bf16 %v5698, %v5695
    %v5711 = vpack.c.bf16 %v5699, %v5696
    %v5712 = vpack.c.bf16 %v5703, %v5700
    %v5713 = vpack.c.bf16 %v5704, %v5701
    %v5714 = vpack.c.bf16 %v5705, %v5702
    %v5715 = vpack.c.bf16 %v5706, %v5706
    %v5716 = vpack.c.bf16 %v5707, %v5707
    %v5717 = vpack.c.bf16 %v5708, %v5708
    %s5718 = scalar_lea.vmem %s2, 1728
    %v5719 = vld [vmem:[%s5718] sm:$0xff]
    %v5720 = vld [vmem:[%s5718 + $0x8] sm:$0xff]
    %v5721 = vld [vmem:[%s5718 + $0x10] sm:$0xff]
    %v5722 = vld [vmem:[%s5718 + $0x18] sm:$0xff]
    %v5723 = vld [vmem:[%s5718 + $0x20] sm:$0xff]
    %v5724 = vld [vmem:[%s5718 + $0x28] sm:$0xff]
    %v5725 = vld [vmem:[%s5718 + $0x30] sm:$0xff]
    %v5726 = vld [vmem:[%s5718 + $0x38] sm:$0xff]
    %v5727 = vld [vmem:[%s5718 + $0x40] sm:$0xff]
    %v5728 = vld [vmem:[%s5718 + $0x48] sm:$0xff]
    %v5729 = vld [vmem:[%s5718 + $0x50] sm:$0xff]
    %v5730 = vld [vmem:[%s5718 + $0x58] sm:$0xff]
    %v5731 = vld [vmem:[%s5718 + $0x60] sm:$0xff]
    %v5732 = vld [vmem:[%s5718 + $0x68] sm:$0xff]
    %v5733 = vld [vmem:[%s5718 + $0x70] sm:$0xff]
    %v5734 = vld [vmem:[%s5718 + $0x78] sm:$0xff]
    %v5735 = vld [vmem:[%s5718 + $0x80] sm:$0xff]
    %v5736 = vld [vmem:[%s5718 + $0x88] sm:$0xff]
    %v5737 = vld [vmem:[%s5718 + $0x90] sm:$0xff]
    %v5738 = vld [vmem:[%s5718 + $0x98] sm:$0xff]
    %v5739 = vld [vmem:[%s5718 + $0xa0] sm:$0xff]
    %v5740 = vld [vmem:[%s5718 + $0xa8] sm:$0xff]
    %v5741 = vld [vmem:[%s5718 + $0xb0] sm:$0xff]
    %v5742 = vld [vmem:[%s5718 + $0xb8] sm:$0xff]
    %v5743 = vld [vmem:[%s5718 + $0xc0] sm:$0xff]
    %v5744 = vld [vmem:[%s5718 + $0xc8] sm:$0xff]
    %v5745 = vld [vmem:[%s5718 + $0xd0] sm:$0xff]
    %v5746 = vld [vmem:[%s5718 + $0xd8] sm:$0xff]
    %v5747 = vld [vmem:[%s5718 + $0xe0] sm:$0xff]
    %v5748 = vld [vmem:[%s5718 + $0xe8] sm:$0xff]
    %v5749 = vld [vmem:[%s5718 + $0xf0] sm:$0xff]
    %v5750 = vld [vmem:[%s5718 + $0xf8] sm:$0xff]
    %v5751 = vld [vmem:[%s5718 + $0x100] sm:$0xff]
    %v5752 = vld [vmem:[%s5718 + $0x108] sm:$0xff]
    %v5753 = vld [vmem:[%s5718 + $0x110] sm:$0xff]
    %v5754 = vld [vmem:[%s5718 + $0x118] sm:$0xff]
    %v5755 = vld [vmem:[%s5718 + $0x120] sm:$0xff]
    %v5756 = vld [vmem:[%s5718 + $0x128] sm:$0xff]
    %v5757 = vld [vmem:[%s5718 + $0x130] sm:$0xff]
    %v5758 = vld [vmem:[%s5718 + $0x138] sm:$0xff]
    %v5759 = vld [vmem:[%s5718 + $0x140] sm:$0xff]
    %v5760 = vld [vmem:[%s5718 + $0x148] sm:$0xff]
    %v5761 = vld [vmem:[%s5718 + $0x150] sm:$0xff]
    %v5762 = vld [vmem:[%s5718 + $0x158] sm:$0xff]
    %v5763 = vld [vmem:[%s5718 + $0x160] sm:$0xff]
    %v5764 = vld [vmem:[%s5718 + $0x168] sm:$0xff]
    %v5765 = vld [vmem:[%s5718 + $0x170] sm:$0xff]
    %v5766 = vld [vmem:[%s5718 + $0x178] sm:$0xff]
    %v5767 = vld [vmem:[%s5718 + $0x180] sm:$0xff]
    %v5768 = vld [vmem:[%s5718 + $0x188] sm:$0xff]
    %v5769 = vld [vmem:[%s5718 + $0x190] sm:$0xff]
    %v5770 = vld [vmem:[%s5718 + $0x198] sm:$0xff]
    %v5771 = vld [vmem:[%s5718 + $0x1a0] sm:$0xff]
    %v5772 = vld [vmem:[%s5718 + $0x1a8] sm:$0xff]
    %v5773 = vld [vmem:[%s5718 + $0x1b0] sm:$0xff]
    %v5774 = vld [vmem:[%s5718 + $0x1b8] sm:$0xff]
    %v5775 = vld [vmem:[%s5718 + $0x1c0] sm:$0xff]
    %v5776 = vld [vmem:[%s5718 + $0x1c8] sm:$0xff]
    %v5777 = vld [vmem:[%s5718 + $0x1d0] sm:$0xff]
    %v5778 = vld [vmem:[%s5718 + $0x1d8] sm:$0xff]
    %v5779 = vld [vmem:[%s5718 + $0x1e0] sm:$0xff]
    %v5780 = vld [vmem:[%s5718 + $0x1e8] sm:$0xff]
    %v5781 = vld [vmem:[%s5718 + $0x1f0] sm:$0xff]
    %v5782 = vld [vmem:[%s5718 + $0x1f8] sm:$0xff]
    %v5783 = vld [vmem:[%s5718 + $0x200] sm:$0xff]
    %v5784 = vld [vmem:[%s5718 + $0x208] sm:$0xff]
    %v5785 = vld [vmem:[%s5718 + $0x210] sm:$0xff]
    %v5786 = vld [vmem:[%s5718 + $0x218] sm:$0xff]
    %v5787 = vld [vmem:[%s5718 + $0x220] sm:$0xff]
    %v5788 = vld [vmem:[%s5718 + $0x228] sm:$0xff]
    %v5789 = vld [vmem:[%s5718 + $0x230] sm:$0xff]
    %v5790 = vld [vmem:[%s5718 + $0x238] sm:$0xff]
    %v5792 = vshrl.u32 %v5709, 16
    %v5794 = vrot.slane %v5792, 1
    %v5795 = vshll.u32 %v5709, 16
    %v5797 = vrot.slane %v5795, 2
    %v5798 = vor.u32 %v5794, %v5797
    %v5800 = vshrl.u32 %v5712, 16
    %v5802 = vrot.slane %v5800, 1
    %v5803 = vshll.u32 %v5712, 16
    %v5805 = vrot.slane %v5803, 2
    %v5806 = vor.u32 %v5802, %v5805
    %v5807 = vsel %vm965, %v5798, %v5806
    %v5809 = vshrl.u32 %v5710, 16
    %v5811 = vrot.slane %v5809, 1
    %v5812 = vshll.u32 %v5710, 16
    %v5814 = vrot.slane %v5812, 2
    %v5815 = vor.u32 %v5811, %v5814
    %v5817 = vshrl.u32 %v5713, 16
    %v5819 = vrot.slane %v5817, 1
    %v5820 = vshll.u32 %v5713, 16
    %v5822 = vrot.slane %v5820, 2
    %v5823 = vor.u32 %v5819, %v5822
    %v5824 = vsel %vm965, %v5815, %v5823
    %v5826 = vshrl.u32 %v5711, 16
    %v5828 = vrot.slane %v5826, 1
    %v5829 = vshll.u32 %v5711, 16
    %v5831 = vrot.slane %v5829, 2
    %v5832 = vor.u32 %v5828, %v5831
    %v5834 = vshrl.u32 %v5714, 16
    %v5836 = vrot.slane %v5834, 1
    %v5837 = vshll.u32 %v5714, 16
    %v5839 = vrot.slane %v5837, 2
    %v5840 = vor.u32 %v5836, %v5839
    %v5841 = vsel %vm965, %v5832, %v5840
    %v5843 = vshrl.u32 %v5715, 16
    %v5845 = vrot.slane %v5843, 1
    %v5846 = vshll.u32 %v5715, 16
    %v5848 = vrot.slane %v5846, 2
    %v5849 = vor.u32 %v5845, %v5848
    %v5850 = vsel %vm965, %v5806, %v5849
    %v5852 = vshrl.u32 %v5716, 16
    %v5854 = vrot.slane %v5852, 1
    %v5855 = vshll.u32 %v5716, 16
    %v5857 = vrot.slane %v5855, 2
    %v5858 = vor.u32 %v5854, %v5857
    %v5859 = vsel %vm965, %v5823, %v5858
    %v5861 = vshrl.u32 %v5717, 16
    %v5863 = vrot.slane %v5861, 1
    %v5864 = vshll.u32 %v5717, 16
    %v5866 = vrot.slane %v5864, 2
    %v5867 = vor.u32 %v5863, %v5866
    %v5868 = vsel %vm965, %v5840, %v5867
    %v5947 = vunpack.c.l.b16 %v5719
    %v5948 = vunpack.c.h.b16 %v5719
    %v5949 = vunpack.c.l.b16 %v5720
    %v5950 = vunpack.c.h.b16 %v5720
    %v5951 = vunpack.c.l.b16 %v5721
    %v5952 = vunpack.c.h.b16 %v5721
    %v5953 = vunpack.c.l.b16 %v5722
    %v5954 = vunpack.c.h.b16 %v5722
    %v5955 = vunpack.c.l.b16 %v5723
    %v5956 = vunpack.c.h.b16 %v5723
    %v5957 = vunpack.c.l.b16 %v5724
    %v5958 = vunpack.c.h.b16 %v5724
    %v5959 = vunpack.c.l.b16 %v5725
    %v5960 = vunpack.c.h.b16 %v5725
    %v5961 = vunpack.c.l.b16 %v5726
    %v5962 = vunpack.c.h.b16 %v5726
    %v5963 = vunpack.c.l.b16 %v5727
    %v5964 = vunpack.c.h.b16 %v5727
    %v5965 = vunpack.c.l.b16 %v5728
    %v5966 = vunpack.c.h.b16 %v5728
    %v5967 = vunpack.c.l.b16 %v5729
    %v5968 = vunpack.c.h.b16 %v5729
    %v5969 = vunpack.c.l.b16 %v5730
    %v5970 = vunpack.c.h.b16 %v5730
    %v5971 = vunpack.c.l.b16 %v5731
    %v5972 = vunpack.c.h.b16 %v5731
    %v5973 = vunpack.c.l.b16 %v5732
    %v5974 = vunpack.c.h.b16 %v5732
    %v5975 = vunpack.c.l.b16 %v5733
    %v5976 = vunpack.c.h.b16 %v5733
    %v5977 = vunpack.c.l.b16 %v5734
    %v5978 = vunpack.c.h.b16 %v5734
    %v5979 = vunpack.c.l.b16 %v5735
    %v5980 = vunpack.c.h.b16 %v5735
    %v5981 = vunpack.c.l.b16 %v5736
    %v5982 = vunpack.c.h.b16 %v5736
    %v5983 = vunpack.c.l.b16 %v5737
    %v5984 = vunpack.c.h.b16 %v5737
    %v5985 = vunpack.c.l.b16 %v5738
    %v5986 = vunpack.c.h.b16 %v5738
    %v5987 = vunpack.c.l.b16 %v5739
    %v5988 = vunpack.c.h.b16 %v5739
    %v5989 = vunpack.c.l.b16 %v5740
    %v5990 = vunpack.c.h.b16 %v5740
    %v5991 = vunpack.c.l.b16 %v5741
    %v5992 = vunpack.c.h.b16 %v5741
    %v5993 = vunpack.c.l.b16 %v5742
    %v5994 = vunpack.c.h.b16 %v5742
    %v5995 = vunpack.c.l.b16 %v5743
    %v5996 = vunpack.c.h.b16 %v5743
    %v5997 = vunpack.c.l.b16 %v5744
    %v5998 = vunpack.c.h.b16 %v5744
    %v5999 = vunpack.c.l.b16 %v5745
    %v6000 = vunpack.c.h.b16 %v5745
    %v6001 = vunpack.c.l.b16 %v5746
    %v6002 = vunpack.c.h.b16 %v5746
    %v6003 = vunpack.c.l.b16 %v5747
    %v6004 = vunpack.c.h.b16 %v5747
    %v6005 = vunpack.c.l.b16 %v5748
    %v6006 = vunpack.c.h.b16 %v5748
    %v6007 = vunpack.c.l.b16 %v5749
    %v6008 = vunpack.c.h.b16 %v5749
    %v6009 = vunpack.c.l.b16 %v5750
    %v6010 = vunpack.c.h.b16 %v5750
    %v6011 = vunpack.c.l.b16 %v5751
    %v6012 = vunpack.c.h.b16 %v5751
    %v6013 = vunpack.c.l.b16 %v5752
    %v6014 = vunpack.c.h.b16 %v5752
    %v6015 = vunpack.c.l.b16 %v5753
    %v6016 = vunpack.c.h.b16 %v5753
    %v6017 = vunpack.c.l.b16 %v5754
    %v6018 = vunpack.c.h.b16 %v5754
    %v6019 = vunpack.c.l.b16 %v5755
    %v6020 = vunpack.c.h.b16 %v5755
    %v6021 = vunpack.c.l.b16 %v5756
    %v6022 = vunpack.c.h.b16 %v5756
    %v6023 = vunpack.c.l.b16 %v5757
    %v6024 = vunpack.c.h.b16 %v5757
    %v6025 = vunpack.c.l.b16 %v5758
    %v6026 = vunpack.c.h.b16 %v5758
    %v6027 = vunpack.c.l.b16 %v5759
    %v6028 = vunpack.c.h.b16 %v5759
    %v6029 = vunpack.c.l.b16 %v5760
    %v6030 = vunpack.c.h.b16 %v5760
    %v6031 = vunpack.c.l.b16 %v5761
    %v6032 = vunpack.c.h.b16 %v5761
    %v6033 = vunpack.c.l.b16 %v5762
    %v6034 = vunpack.c.h.b16 %v5762
    %v6035 = vunpack.c.l.b16 %v5763
    %v6036 = vunpack.c.h.b16 %v5763
    %v6037 = vunpack.c.l.b16 %v5764
    %v6038 = vunpack.c.h.b16 %v5764
    %v6039 = vunpack.c.l.b16 %v5765
    %v6040 = vunpack.c.h.b16 %v5765
    %v6041 = vunpack.c.l.b16 %v5766
    %v6042 = vunpack.c.h.b16 %v5766
    %v6043 = vunpack.c.l.b16 %v5767
    %v6044 = vunpack.c.h.b16 %v5767
    %v6045 = vunpack.c.l.b16 %v5768
    %v6046 = vunpack.c.h.b16 %v5768
    %v6047 = vunpack.c.l.b16 %v5769
    %v6048 = vunpack.c.h.b16 %v5769
    %v6049 = vunpack.c.l.b16 %v5770
    %v6050 = vunpack.c.h.b16 %v5770
    %v6051 = vunpack.c.l.b16 %v5771
    %v6052 = vunpack.c.h.b16 %v5771
    %v6053 = vunpack.c.l.b16 %v5772
    %v6054 = vunpack.c.h.b16 %v5772
    %v6055 = vunpack.c.l.b16 %v5773
    %v6056 = vunpack.c.h.b16 %v5773
    %v6057 = vunpack.c.l.b16 %v5774
    %v6058 = vunpack.c.h.b16 %v5774
    %v6059 = vunpack.c.l.b16 %v5775
    %v6060 = vunpack.c.h.b16 %v5775
    %v6061 = vunpack.c.l.b16 %v5776
    %v6062 = vunpack.c.h.b16 %v5776
    %v6063 = vunpack.c.l.b16 %v5777
    %v6064 = vunpack.c.h.b16 %v5777
    %v6065 = vunpack.c.l.b16 %v5778
    %v6066 = vunpack.c.h.b16 %v5778
    %v6067 = vunpack.c.l.b16 %v5779
    %v6068 = vunpack.c.h.b16 %v5779
    %v6069 = vunpack.c.l.b16 %v5780
    %v6070 = vunpack.c.h.b16 %v5780
    %v6071 = vunpack.c.l.b16 %v5781
    %v6072 = vunpack.c.h.b16 %v5781
    %v6073 = vunpack.c.l.b16 %v5782
    %v6074 = vunpack.c.h.b16 %v5782
    %v6075 = vunpack.c.l.b16 %v5783
    %v6076 = vunpack.c.h.b16 %v5783
    %v6077 = vunpack.c.l.b16 %v5784
    %v6078 = vunpack.c.h.b16 %v5784
    %v6079 = vunpack.c.l.b16 %v5785
    %v6080 = vunpack.c.h.b16 %v5785
    %v6081 = vunpack.c.l.b16 %v5786
    %v6082 = vunpack.c.h.b16 %v5786
    %v6083 = vunpack.c.l.b16 %v5787
    %v6084 = vunpack.c.h.b16 %v5787
    %v6085 = vunpack.c.l.b16 %v5788
    %v6086 = vunpack.c.h.b16 %v5788
    %v6087 = vunpack.c.l.b16 %v5789
    %v6088 = vunpack.c.h.b16 %v5789
    %v6089 = vunpack.c.l.b16 %v5790
    %v6090 = vunpack.c.h.b16 %v5790
    %v6091 = vpack.c.b16 %v5951, %v5947
    %v6092 = vpack.c.b16 %v5952, %v5948
    %v6093 = vpack.c.b16 %v5953, %v5949
    %v6094 = vpack.c.b16 %v5954, %v5950
    %v6095 = vpack.c.b16 %v5959, %v5955
    %v6096 = vpack.c.b16 %v5960, %v5956
    %v6097 = vpack.c.b16 %v5961, %v5957
    %v6098 = vpack.c.b16 %v5962, %v5958
    %v6099 = vpack.c.b16 %v5967, %v5963
    %v6100 = vpack.c.b16 %v5968, %v5964
    %v6101 = vpack.c.b16 %v5969, %v5965
    %v6102 = vpack.c.b16 %v5970, %v5966
    %v6103 = vpack.c.b16 %v5975, %v5971
    %v6104 = vpack.c.b16 %v5976, %v5972
    %v6105 = vpack.c.b16 %v5977, %v5973
    %v6106 = vpack.c.b16 %v5978, %v5974
    %v6107 = vpack.c.b16 %v5983, %v5979
    %v6108 = vpack.c.b16 %v5984, %v5980
    %v6109 = vpack.c.b16 %v5985, %v5981
    %v6110 = vpack.c.b16 %v5986, %v5982
    %v6111 = vpack.c.b16 %v5991, %v5987
    %v6112 = vpack.c.b16 %v5992, %v5988
    %v6113 = vpack.c.b16 %v5993, %v5989
    %v6114 = vpack.c.b16 %v5994, %v5990
    %v6115 = vpack.c.b16 %v5999, %v5995
    %v6116 = vpack.c.b16 %v6000, %v5996
    %v6117 = vpack.c.b16 %v6001, %v5997
    %v6118 = vpack.c.b16 %v6002, %v5998
    %v6119 = vpack.c.b16 %v6007, %v6003
    %v6120 = vpack.c.b16 %v6008, %v6004
    %v6121 = vpack.c.b16 %v6009, %v6005
    %v6122 = vpack.c.b16 %v6010, %v6006
    %v6123 = vpack.c.b16 %v6015, %v6011
    %v6124 = vpack.c.b16 %v6016, %v6012
    %v6125 = vpack.c.b16 %v6017, %v6013
    %v6126 = vpack.c.b16 %v6018, %v6014
    %v6127 = vpack.c.b16 %v6023, %v6019
    %v6128 = vpack.c.b16 %v6024, %v6020
    %v6129 = vpack.c.b16 %v6025, %v6021
    %v6130 = vpack.c.b16 %v6026, %v6022
    %v6131 = vpack.c.b16 %v6031, %v6027
    %v6132 = vpack.c.b16 %v6032, %v6028
    %v6133 = vpack.c.b16 %v6033, %v6029
    %v6134 = vpack.c.b16 %v6034, %v6030
    %v6135 = vpack.c.b16 %v6039, %v6035
    %v6136 = vpack.c.b16 %v6040, %v6036
    %v6137 = vpack.c.b16 %v6041, %v6037
    %v6138 = vpack.c.b16 %v6042, %v6038
    %v6139 = vpack.c.b16 %v6047, %v6043
    %v6140 = vpack.c.b16 %v6048, %v6044
    %v6141 = vpack.c.b16 %v6049, %v6045
    %v6142 = vpack.c.b16 %v6050, %v6046
    %v6143 = vpack.c.b16 %v6055, %v6051
    %v6144 = vpack.c.b16 %v6056, %v6052
    %v6145 = vpack.c.b16 %v6057, %v6053
    %v6146 = vpack.c.b16 %v6058, %v6054
    %v6147 = vpack.c.b16 %v6063, %v6059
    %v6148 = vpack.c.b16 %v6064, %v6060
    %v6149 = vpack.c.b16 %v6065, %v6061
    %v6150 = vpack.c.b16 %v6066, %v6062
    %v6151 = vpack.c.b16 %v6071, %v6067
    %v6152 = vpack.c.b16 %v6072, %v6068
    %v6153 = vpack.c.b16 %v6073, %v6069
    %v6154 = vpack.c.b16 %v6074, %v6070
    %v6155 = vpack.c.b16 %v6079, %v6075
    %v6156 = vpack.c.b16 %v6080, %v6076
    %v6157 = vpack.c.b16 %v6081, %v6077
    %v6158 = vpack.c.b16 %v6082, %v6078
    %v6159 = vpack.c.b16 %v6087, %v6083
    %v6160 = vpack.c.b16 %v6088, %v6084
    %v6161 = vpack.c.b16 %v6089, %v6085
    %v6162 = vpack.c.b16 %v6090, %v6086
    %v6236 = vsel %vm34, %v5841, 0
    %v6239 = vsel %vm34, %v5868, 0
    %v6242 = vsel %vm34, %v5867, 0
    %6244 = vmatpush.bf16.msra.mxu0 %v6119
    %6245 = vmatpush.bf16.msra.mxu0 %v6115
    %6246 = vmatpush.bf16.msra.mxu0 %v6111
    %6247 = vmatpush.bf16.msra.mxu0 %v6107
    %6248 = vmatpush.bf16.msra.mxu0 %v6103
    %6249 = vmatpush.bf16.msra.mxu0 %v6099
    %6250 = vmatpush.bf16.msra.mxu0 %v6095
    %6251 = vmatpush.bf16.msra.mxu0 %v6091
    %6252 = vmatmul.bf16.gmra.mxu0 %v5807
    %v6253 = vpop.f32.mrf.mxu0
    %v6254 = vadd.f32 0.0, %v6253
    %v6255 = vpop.f32.mrf.mxu0
    %v6256 = vadd.f32 0.0, %v6255
    %6257 = vmatmul.bf16.gmra.mxu0 %v5850
    %v6258 = vpop.f32.mrf.mxu0
    %v6259 = vadd.f32 0.0, %v6258
    %v6260 = vpop.f32.mrf.mxu0
    %v6261 = vadd.f32 0.0, %v6260
    %6262 = vmatmul.bf16.gmra.mxu0 %v5849
    %v6263 = vpop.f32.mrf.mxu0
    %v6264 = vadd.f32 0.0, %v6263
    %v6265 = vpop.f32.mrf.mxu0
    %6266 = vdwg.mxu0
    %6267 = vmatpush.bf16.msra.mxu0 %v6151
    %6268 = vmatpush.bf16.msra.mxu0 %v6147
    %6269 = vmatpush.bf16.msra.mxu0 %v6143
    %6270 = vmatpush.bf16.msra.mxu0 %v6139
    %6271 = vmatpush.bf16.msra.mxu0 %v6135
    %6272 = vmatpush.bf16.msra.mxu0 %v6131
    %6273 = vmatpush.bf16.msra.mxu0 %v6127
    %6274 = vmatpush.bf16.msra.mxu0 %v6123
    %6275 = vmatmul.bf16.gmra.mxu0 %v5824
    %v6276 = vpop.f32.mrf.mxu0
    %v6277 = vadd.f32 %v6254, %v6276
    %v6278 = vpop.f32.mrf.mxu0
    %v6279 = vadd.f32 %v6256, %v6278
    %6280 = vmatmul.bf16.gmra.mxu0 %v5859
    %v6281 = vpop.f32.mrf.mxu0
    %v6282 = vadd.f32 %v6259, %v6281
    %v6283 = vpop.f32.mrf.mxu0
    %v6284 = vadd.f32 %v6261, %v6283
    %6285 = vmatmul.bf16.gmra.mxu0 %v5858
    %v6286 = vpop.f32.mrf.mxu0
    %v6287 = vadd.f32 %v6264, %v6286
    %v6288 = vpop.f32.mrf.mxu0
    %6289 = vdwg.mxu0
    %6290 = vmatpush.bf16.msra.mxu0 0
    %6291 = vmatpush.bf16.msra.mxu0 0
    %6292 = vmatpush.bf16.msra.mxu0 0
    %6293 = vmatpush.bf16.msra.mxu0 0
    %6294 = vmatpush.bf16.msra.mxu0 0
    %6295 = vmatpush.bf16.msra.mxu0 0
    %6296 = vmatpush.bf16.msra.mxu0 %v6159
    %6297 = vmatpush.bf16.msra.mxu0 %v6155
    %6298 = vmatmul.bf16.gmra.mxu0 %v6236
    %v6299 = vpop.f32.mrf.mxu0
    %v6300 = vadd.f32 %v6277, %v6299
    %v6301 = vpop.f32.mrf.mxu0
    %v6302 = vadd.f32 %v6279, %v6301
    %6303 = vmatmul.bf16.gmra.mxu0 %v6239
    %v6304 = vpop.f32.mrf.mxu0
    %v6305 = vadd.f32 %v6282, %v6304
    %v6306 = vpop.f32.mrf.mxu0
    %v6307 = vadd.f32 %v6284, %v6306
    %6308 = vmatmul.bf16.gmra.mxu0 %v6242
    %v6309 = vpop.f32.mrf.mxu0
    %v6310 = vadd.f32 %v6287, %v6309
    %v6311 = vpop.f32.mrf.mxu0
    %6312 = vdwg.mxu0
    %6313 = vmatpush.bf16.msra.mxu0 %v6120
    %6314 = vmatpush.bf16.msra.mxu0 %v6116
    %6315 = vmatpush.bf16.msra.mxu0 %v6112
    %6316 = vmatpush.bf16.msra.mxu0 %v6108
    %6317 = vmatpush.bf16.msra.mxu0 %v6104
    %6318 = vmatpush.bf16.msra.mxu0 %v6100
    %6319 = vmatpush.bf16.msra.mxu0 %v6096
    %6320 = vmatpush.bf16.msra.mxu0 %v6092
    %6321 = vmatmul.bf16.gmra.mxu0 %v5807
    %v6322 = vpop.f32.mrf.mxu0
    %v6323 = vadd.f32 0.0, %v6322
    %v6324 = vpop.f32.mrf.mxu0
    %v6325 = vadd.f32 0.0, %v6324
    %6326 = vmatmul.bf16.gmra.mxu0 %v5850
    %v6327 = vpop.f32.mrf.mxu0
    %v6328 = vadd.f32 0.0, %v6327
    %v6329 = vpop.f32.mrf.mxu0
    %v6330 = vadd.f32 0.0, %v6329
    %6331 = vmatmul.bf16.gmra.mxu0 %v5849
    %v6332 = vpop.f32.mrf.mxu0
    %v6333 = vadd.f32 0.0, %v6332
    %v6334 = vpop.f32.mrf.mxu0
    %6335 = vdwg.mxu0
    %6336 = vmatpush.bf16.msra.mxu0 %v6152
    %6337 = vmatpush.bf16.msra.mxu0 %v6148
    %6338 = vmatpush.bf16.msra.mxu0 %v6144
    %6339 = vmatpush.bf16.msra.mxu0 %v6140
    %6340 = vmatpush.bf16.msra.mxu0 %v6136
    %6341 = vmatpush.bf16.msra.mxu0 %v6132
    %6342 = vmatpush.bf16.msra.mxu0 %v6128
    %6343 = vmatpush.bf16.msra.mxu0 %v6124
    %6344 = vmatmul.bf16.gmra.mxu0 %v5824
    %v6345 = vpop.f32.mrf.mxu0
    %v6346 = vadd.f32 %v6323, %v6345
    %v6347 = vpop.f32.mrf.mxu0
    %v6348 = vadd.f32 %v6325, %v6347
    %6349 = vmatmul.bf16.gmra.mxu0 %v5859
    %v6350 = vpop.f32.mrf.mxu0
    %v6351 = vadd.f32 %v6328, %v6350
    %v6352 = vpop.f32.mrf.mxu0
    %v6353 = vadd.f32 %v6330, %v6352
    %6354 = vmatmul.bf16.gmra.mxu0 %v5858
    %v6355 = vpop.f32.mrf.mxu0
    %v6356 = vadd.f32 %v6333, %v6355
    %v6357 = vpop.f32.mrf.mxu0
    %6358 = vdwg.mxu0
    %6359 = vmatpush.bf16.msra.mxu0 0
    %6360 = vmatpush.bf16.msra.mxu0 0
    %6361 = vmatpush.bf16.msra.mxu0 0
    %6362 = vmatpush.bf16.msra.mxu0 0
    %6363 = vmatpush.bf16.msra.mxu0 0
    %6364 = vmatpush.bf16.msra.mxu0 0
    %6365 = vmatpush.bf16.msra.mxu0 %v6160
    %6366 = vmatpush.bf16.msra.mxu0 %v6156
    %6367 = vmatmul.bf16.gmra.mxu0 %v6236
    %v6368 = vpop.f32.mrf.mxu0
    %v6369 = vadd.f32 %v6346, %v6368
    %v6370 = vpop.f32.mrf.mxu0
    %v6371 = vadd.f32 %v6348, %v6370
    %6372 = vmatmul.bf16.gmra.mxu0 %v6239
    %v6373 = vpop.f32.mrf.mxu0
    %v6374 = vadd.f32 %v6351, %v6373
    %v6375 = vpop.f32.mrf.mxu0
    %v6376 = vadd.f32 %v6353, %v6375
    %6377 = vmatmul.bf16.gmra.mxu0 %v6242
    %v6378 = vpop.f32.mrf.mxu0
    %v6379 = vadd.f32 %v6356, %v6378
    %v6380 = vpop.f32.mrf.mxu0
    %6381 = vdwg.mxu0
    %6382 = vmatpush.bf16.msra.mxu0 %v6121
    %6383 = vmatpush.bf16.msra.mxu0 %v6117
    %6384 = vmatpush.bf16.msra.mxu0 %v6113
    %6385 = vmatpush.bf16.msra.mxu0 %v6109
    %6386 = vmatpush.bf16.msra.mxu0 %v6105
    %6387 = vmatpush.bf16.msra.mxu0 %v6101
    %6388 = vmatpush.bf16.msra.mxu0 %v6097
    %6389 = vmatpush.bf16.msra.mxu0 %v6093
    %6390 = vmatmul.bf16.gmra.mxu0 %v5807
    %v6391 = vpop.f32.mrf.mxu0
    %v6392 = vadd.f32 0.0, %v6391
    %v6393 = vpop.f32.mrf.mxu0
    %v6394 = vadd.f32 0.0, %v6393
    %6395 = vmatmul.bf16.gmra.mxu0 %v5850
    %v6396 = vpop.f32.mrf.mxu0
    %v6397 = vadd.f32 0.0, %v6396
    %v6398 = vpop.f32.mrf.mxu0
    %v6399 = vadd.f32 0.0, %v6398
    %6400 = vmatmul.bf16.gmra.mxu0 %v5849
    %v6401 = vpop.f32.mrf.mxu0
    %v6402 = vadd.f32 0.0, %v6401
    %v6403 = vpop.f32.mrf.mxu0
    %6404 = vdwg.mxu0
    %6405 = vmatpush.bf16.msra.mxu0 %v6153
    %6406 = vmatpush.bf16.msra.mxu0 %v6149
    %6407 = vmatpush.bf16.msra.mxu0 %v6145
    %6408 = vmatpush.bf16.msra.mxu0 %v6141
    %6409 = vmatpush.bf16.msra.mxu0 %v6137
    %6410 = vmatpush.bf16.msra.mxu0 %v6133
    %6411 = vmatpush.bf16.msra.mxu0 %v6129
    %6412 = vmatpush.bf16.msra.mxu0 %v6125
    %6413 = vmatmul.bf16.gmra.mxu0 %v5824
    %v6414 = vpop.f32.mrf.mxu0
    %v6415 = vadd.f32 %v6392, %v6414
    %v6416 = vpop.f32.mrf.mxu0
    %v6417 = vadd.f32 %v6394, %v6416
    %6418 = vmatmul.bf16.gmra.mxu0 %v5859
    %v6419 = vpop.f32.mrf.mxu0
    %v6420 = vadd.f32 %v6397, %v6419
    %v6421 = vpop.f32.mrf.mxu0
    %v6422 = vadd.f32 %v6399, %v6421
    %6423 = vmatmul.bf16.gmra.mxu0 %v5858
    %v6424 = vpop.f32.mrf.mxu0
    %v6425 = vadd.f32 %v6402, %v6424
    %v6426 = vpop.f32.mrf.mxu0
    %6427 = vdwg.mxu0
    %6428 = vmatpush.bf16.msra.mxu0 0
    %6429 = vmatpush.bf16.msra.mxu0 0
    %6430 = vmatpush.bf16.msra.mxu0 0
    %6431 = vmatpush.bf16.msra.mxu0 0
    %6432 = vmatpush.bf16.msra.mxu0 0
    %6433 = vmatpush.bf16.msra.mxu0 0
    %6434 = vmatpush.bf16.msra.mxu0 %v6161
    %6435 = vmatpush.bf16.msra.mxu0 %v6157
    %6436 = vmatmul.bf16.gmra.mxu0 %v6236
    %v6437 = vpop.f32.mrf.mxu0
    %v6438 = vadd.f32 %v6415, %v6437
    %v6439 = vpop.f32.mrf.mxu0
    %v6440 = vadd.f32 %v6417, %v6439
    %6441 = vmatmul.bf16.gmra.mxu0 %v6239
    %v6442 = vpop.f32.mrf.mxu0
    %v6443 = vadd.f32 %v6420, %v6442
    %v6444 = vpop.f32.mrf.mxu0
    %v6445 = vadd.f32 %v6422, %v6444
    %6446 = vmatmul.bf16.gmra.mxu0 %v6242
    %v6447 = vpop.f32.mrf.mxu0
    %v6448 = vadd.f32 %v6425, %v6447
    %v6449 = vpop.f32.mrf.mxu0
    %6450 = vdwg.mxu0
    %6451 = vmatpush.bf16.msra.mxu0 %v6122
    %6452 = vmatpush.bf16.msra.mxu0 %v6118
    %6453 = vmatpush.bf16.msra.mxu0 %v6114
    %6454 = vmatpush.bf16.msra.mxu0 %v6110
    %6455 = vmatpush.bf16.msra.mxu0 %v6106
    %6456 = vmatpush.bf16.msra.mxu0 %v6102
    %6457 = vmatpush.bf16.msra.mxu0 %v6098
    %6458 = vmatpush.bf16.msra.mxu0 %v6094
    %6459 = vmatmul.bf16.gmra.mxu0 %v5807
    %v6460 = vpop.f32.mrf.mxu0
    %v6461 = vadd.f32 0.0, %v6460
    %v6462 = vpop.f32.mrf.mxu0
    %v6463 = vadd.f32 0.0, %v6462
    %6464 = vmatmul.bf16.gmra.mxu0 %v5850
    %v6465 = vpop.f32.mrf.mxu0
    %v6466 = vadd.f32 0.0, %v6465
    %v6467 = vpop.f32.mrf.mxu0
    %v6468 = vadd.f32 0.0, %v6467
    %6469 = vmatmul.bf16.gmra.mxu0 %v5849
    %v6470 = vpop.f32.mrf.mxu0
    %v6471 = vadd.f32 0.0, %v6470
    %v6472 = vpop.f32.mrf.mxu0
    %6473 = vdwg.mxu0
    %6474 = vmatpush.bf16.msra.mxu0 %v6154
    %6475 = vmatpush.bf16.msra.mxu0 %v6150
    %6476 = vmatpush.bf16.msra.mxu0 %v6146
    %6477 = vmatpush.bf16.msra.mxu0 %v6142
    %6478 = vmatpush.bf16.msra.mxu0 %v6138
    %6479 = vmatpush.bf16.msra.mxu0 %v6134
    %6480 = vmatpush.bf16.msra.mxu0 %v6130
    %6481 = vmatpush.bf16.msra.mxu0 %v6126
    %6482 = vmatmul.bf16.gmra.mxu0 %v5824
    %v6483 = vpop.f32.mrf.mxu0
    %v6484 = vadd.f32 %v6461, %v6483
    %v6485 = vpop.f32.mrf.mxu0
    %v6486 = vadd.f32 %v6463, %v6485
    %6487 = vmatmul.bf16.gmra.mxu0 %v5859
    %v6488 = vpop.f32.mrf.mxu0
    %v6489 = vadd.f32 %v6466, %v6488
    %v6490 = vpop.f32.mrf.mxu0
    %v6491 = vadd.f32 %v6468, %v6490
    %6492 = vmatmul.bf16.gmra.mxu0 %v5858
    %v6493 = vpop.f32.mrf.mxu0
    %v6494 = vadd.f32 %v6471, %v6493
    %v6495 = vpop.f32.mrf.mxu0
    %6496 = vdwg.mxu0
    %6497 = vmatpush.bf16.msra.mxu0 0
    %6498 = vmatpush.bf16.msra.mxu0 0
    %6499 = vmatpush.bf16.msra.mxu0 0
    %6500 = vmatpush.bf16.msra.mxu0 0
    %6501 = vmatpush.bf16.msra.mxu0 0
    %6502 = vmatpush.bf16.msra.mxu0 0
    %6503 = vmatpush.bf16.msra.mxu0 %v6162
    %6504 = vmatpush.bf16.msra.mxu0 %v6158
    %6505 = vmatmul.bf16.gmra.mxu0 %v6236
    %v6506 = vpop.f32.mrf.mxu0
    %v6507 = vadd.f32 %v6484, %v6506
    %v6508 = vpop.f32.mrf.mxu0
    %v6509 = vadd.f32 %v6486, %v6508
    %6510 = vmatmul.bf16.gmra.mxu0 %v6239
    %v6511 = vpop.f32.mrf.mxu0
    %v6512 = vadd.f32 %v6489, %v6511
    %v6513 = vpop.f32.mrf.mxu0
    %v6514 = vadd.f32 %v6491, %v6513
    %6515 = vmatmul.bf16.gmra.mxu0 %v6242
    %v6516 = vpop.f32.mrf.mxu0
    %v6517 = vadd.f32 %v6494, %v6516
    %v6518 = vpop.f32.mrf.mxu0
    %6519 = vdwg.mxu0
    %v6520 = vld [vmem:[#allocation6] sm:$0xff]
    %v6521 = vld [vmem:[#allocation6 + $0x8] sm:$0xff]
    %v6522 = vld [vmem:[#allocation6 + $0x10] sm:$0xff]
    %v6523 = vld [vmem:[#allocation6 + $0x18] sm:$0xff]
    %v6524 = vld [vmem:[#allocation6 + $0x20] sm:$0xff]
    %v6525 = vld [vmem:[#allocation6 + $0x28] sm:$0xff]
    %v6526 = vld [vmem:[#allocation6 + $0x30] sm:$0xff]
    %v6527 = vld [vmem:[#allocation6 + $0x38] sm:$0xff]
    %v6528 = vld [vmem:[#allocation6 + $0x40] sm:$0xff]
    %v6529 = vld [vmem:[#allocation6 + $0x48] sm:$0xff]
    %v6530 = vld [vmem:[#allocation6 + $0x50] sm:$0xff]
    %v6531 = vld [vmem:[#allocation6 + $0x58] sm:$0xff]
    %v6532 = vld [vmem:[#allocation6 + $0x60] sm:$0xff]
    %v6533 = vld [vmem:[#allocation6 + $0x68] sm:$0xff]
    %v6534 = vld [vmem:[#allocation6 + $0x70] sm:$0xff]
    %v6535 = vld [vmem:[#allocation6 + $0x78] sm:$0xff]
    %v6536 = vld [vmem:[#allocation6 + $0x80] sm:$0xf]
    %v6537 = vld [vmem:[#allocation6 + $0x88] sm:$0xf]
    %v6538 = vld [vmem:[#allocation6 + $0x90] sm:$0xf]
    %v6539 = vld [vmem:[#allocation6 + $0x98] sm:$0xf]
    %v6540 = vadd.f32 %v6520, %v6300
    %v6541 = vadd.f32 %v6521, %v6369
    %v6542 = vadd.f32 %v6522, %v6438
    %v6543 = vadd.f32 %v6523, %v6507
    %v6544 = vadd.f32 %v6524, %v6302
    %v6545 = vadd.f32 %v6525, %v6371
    %v6546 = vadd.f32 %v6526, %v6440
    %v6547 = vadd.f32 %v6527, %v6509
    %v6548 = vadd.f32 %v6528, %v6305
    %v6549 = vadd.f32 %v6529, %v6374
    %v6550 = vadd.f32 %v6530, %v6443
    %v6551 = vadd.f32 %v6531, %v6512
    %v6552 = vadd.f32 %v6532, %v6307
    %v6553 = vadd.f32 %v6533, %v6376
    %v6554 = vadd.f32 %v6534, %v6445
    %v6555 = vadd.f32 %v6535, %v6514
    %v6556 = vadd.f32 %v6536, %v6310
    %v6557 = vadd.f32 %v6537, %v6379
    %v6558 = vadd.f32 %v6538, %v6448
    %v6559 = vadd.f32 %v6539, %v6517
    %6560 = vst [vmem:[#allocation6] sm:$0xff] %v6540
    %6561 = vst [vmem:[#allocation6 + $0x8] sm:$0xff] %v6541
    %6562 = vst [vmem:[#allocation6 + $0x10] sm:$0xff] %v6542
    %6563 = vst.msk [vmem:[#allocation6 + $0x18] sm:$0xff] %vm286, %v6543
    %6564 = vst [vmem:[#allocation6 + $0x20] sm:$0xff] %v6544
    %6565 = vst [vmem:[#allocation6 + $0x28] sm:$0xff] %v6545
    %6566 = vst [vmem:[#allocation6 + $0x30] sm:$0xff] %v6546
    %6567 = vst.msk [vmem:[#allocation6 + $0x38] sm:$0xff] %vm286, %v6547
    %6568 = vst [vmem:[#allocation6 + $0x40] sm:$0xff] %v6548
    %6569 = vst [vmem:[#allocation6 + $0x48] sm:$0xff] %v6549
    %6570 = vst [vmem:[#allocation6 + $0x50] sm:$0xff] %v6550
    %6571 = vst.msk [vmem:[#allocation6 + $0x58] sm:$0xff] %vm286, %v6551
    %6572 = vst [vmem:[#allocation6 + $0x60] sm:$0xff] %v6552
    %6573 = vst [vmem:[#allocation6 + $0x68] sm:$0xff] %v6553
    %6574 = vst [vmem:[#allocation6 + $0x70] sm:$0xff] %v6554
    %6575 = vst.msk [vmem:[#allocation6 + $0x78] sm:$0xff] %vm286, %v6555
    %6576 = vst [vmem:[#allocation6 + $0x80] sm:$0xf] %v6556
    %6577 = vst [vmem:[#allocation6 + $0x88] sm:$0xf] %v6557
    %6578 = vst [vmem:[#allocation6 + $0x90] sm:$0xf] %v6558
    %6579 = vst.msk [vmem:[#allocation6 + $0x98] sm:$0xf] %vm3983, %v6559
    %v6580 = vld [vmem:[#allocation5] sm:$0xff]
    %v6581 = vld [vmem:[#allocation5 + $0x8] sm:$0xff]
    %v6582 = vld [vmem:[#allocation5 + $0x10] sm:$0xff]
    %v6583 = vld [vmem:[#allocation5 + $0x18] sm:$0xff]
    %v6584 = vld [vmem:[#allocation5 + $0x20] sm:$0xff]
    %v6585 = vld [vmem:[#allocation5 + $0x28] sm:$0xff]
    %v6586 = vld [vmem:[#allocation5 + $0x30] sm:$0xff]
    %v6587 = vld [vmem:[#allocation5 + $0x38] sm:$0xff]
    %v6588 = vld [vmem:[#allocation5 + $0x40] sm:$0xff]
    %v6589 = vld [vmem:[#allocation5 + $0x48] sm:$0xff]
    %v6590 = vld [vmem:[#allocation5 + $0x50] sm:$0xff]
    %v6591 = vld [vmem:[#allocation5 + $0x58] sm:$0xff]
    %v6592 = vld [vmem:[#allocation5 + $0x60] sm:$0xff]
    %v6593 = vld [vmem:[#allocation5 + $0x68] sm:$0xff]
    %v6594 = vld [vmem:[#allocation5 + $0x70] sm:$0xff]
    %v6595 = vpack.c.bf16 %v6583, %v6580
    %v6596 = vpack.c.bf16 %v6584, %v6581
    %v6597 = vpack.c.bf16 %v6585, %v6582
    %v6598 = vpack.c.bf16 %v6589, %v6586
    %v6599 = vpack.c.bf16 %v6590, %v6587
    %v6600 = vpack.c.bf16 %v6591, %v6588
    %v6601 = vpack.c.bf16 %v6592, %v6592
    %v6602 = vpack.c.bf16 %v6593, %v6593
    %v6603 = vpack.c.bf16 %v6594, %v6594
    %s6604 = scalar_lea.vmem %s2, 2304
    %v6605 = vld [vmem:[%s6604] sm:$0xff]
    %v6606 = vld [vmem:[%s6604 + $0x8] sm:$0xff]
    %v6607 = vld [vmem:[%s6604 + $0x10] sm:$0xff]
    %v6608 = vld [vmem:[%s6604 + $0x18] sm:$0xff]
    %v6609 = vld [vmem:[%s6604 + $0x20] sm:$0xff]
    %v6610 = vld [vmem:[%s6604 + $0x28] sm:$0xff]
    %v6611 = vld [vmem:[%s6604 + $0x30] sm:$0xff]
    %v6612 = vld [vmem:[%s6604 + $0x38] sm:$0xff]
    %v6613 = vld [vmem:[%s6604 + $0x40] sm:$0xff]
    %v6614 = vld [vmem:[%s6604 + $0x48] sm:$0xff]
    %v6615 = vld [vmem:[%s6604 + $0x50] sm:$0xff]
    %v6616 = vld [vmem:[%s6604 + $0x58] sm:$0xff]
    %v6617 = vld [vmem:[%s6604 + $0x60] sm:$0xff]
    %v6618 = vld [vmem:[%s6604 + $0x68] sm:$0xff]
    %v6619 = vld [vmem:[%s6604 + $0x70] sm:$0xff]
    %v6620 = vld [vmem:[%s6604 + $0x78] sm:$0xff]
    %v6621 = vld [vmem:[%s6604 + $0x80] sm:$0xff]
    %v6622 = vld [vmem:[%s6604 + $0x88] sm:$0xff]
    %v6623 = vld [vmem:[%s6604 + $0x90] sm:$0xff]
    %v6624 = vld [vmem:[%s6604 + $0x98] sm:$0xff]
    %v6625 = vld [vmem:[%s6604 + $0xa0] sm:$0xff]
    %v6626 = vld [vmem:[%s6604 + $0xa8] sm:$0xff]
    %v6627 = vld [vmem:[%s6604 + $0xb0] sm:$0xff]
    %v6628 = vld [vmem:[%s6604 + $0xb8] sm:$0xff]
    %v6629 = vld [vmem:[%s6604 + $0xc0] sm:$0xff]
    %v6630 = vld [vmem:[%s6604 + $0xc8] sm:$0xff]
    %v6631 = vld [vmem:[%s6604 + $0xd0] sm:$0xff]
    %v6632 = vld [vmem:[%s6604 + $0xd8] sm:$0xff]
    %v6633 = vld [vmem:[%s6604 + $0xe0] sm:$0xff]
    %v6634 = vld [vmem:[%s6604 + $0xe8] sm:$0xff]
    %v6635 = vld [vmem:[%s6604 + $0xf0] sm:$0xff]
    %v6636 = vld [vmem:[%s6604 + $0xf8] sm:$0xff]
    %v6637 = vld [vmem:[%s6604 + $0x100] sm:$0xff]
    %v6638 = vld [vmem:[%s6604 + $0x108] sm:$0xff]
    %v6639 = vld [vmem:[%s6604 + $0x110] sm:$0xff]
    %v6640 = vld [vmem:[%s6604 + $0x118] sm:$0xff]
    %v6641 = vld [vmem:[%s6604 + $0x120] sm:$0xff]
    %v6642 = vld [vmem:[%s6604 + $0x128] sm:$0xff]
    %v6643 = vld [vmem:[%s6604 + $0x130] sm:$0xff]
    %v6644 = vld [vmem:[%s6604 + $0x138] sm:$0xff]
    %v6645 = vld [vmem:[%s6604 + $0x140] sm:$0xff]
    %v6646 = vld [vmem:[%s6604 + $0x148] sm:$0xff]
    %v6647 = vld [vmem:[%s6604 + $0x150] sm:$0xff]
    %v6648 = vld [vmem:[%s6604 + $0x158] sm:$0xff]
    %v6649 = vld [vmem:[%s6604 + $0x160] sm:$0xff]
    %v6650 = vld [vmem:[%s6604 + $0x168] sm:$0xff]
    %v6651 = vld [vmem:[%s6604 + $0x170] sm:$0xff]
    %v6652 = vld [vmem:[%s6604 + $0x178] sm:$0xff]
    %v6653 = vld [vmem:[%s6604 + $0x180] sm:$0xff]
    %v6654 = vld [vmem:[%s6604 + $0x188] sm:$0xff]
    %v6655 = vld [vmem:[%s6604 + $0x190] sm:$0xff]
    %v6656 = vld [vmem:[%s6604 + $0x198] sm:$0xff]
    %v6657 = vld [vmem:[%s6604 + $0x1a0] sm:$0xff]
    %v6658 = vld [vmem:[%s6604 + $0x1a8] sm:$0xff]
    %v6659 = vld [vmem:[%s6604 + $0x1b0] sm:$0xff]
    %v6660 = vld [vmem:[%s6604 + $0x1b8] sm:$0xff]
    %v6661 = vld [vmem:[%s6604 + $0x1c0] sm:$0xff]
    %v6662 = vld [vmem:[%s6604 + $0x1c8] sm:$0xff]
    %v6663 = vld [vmem:[%s6604 + $0x1d0] sm:$0xff]
    %v6664 = vld [vmem:[%s6604 + $0x1d8] sm:$0xff]
    %v6665 = vld [vmem:[%s6604 + $0x1e0] sm:$0xff]
    %v6666 = vld [vmem:[%s6604 + $0x1e8] sm:$0xff]
    %v6667 = vld [vmem:[%s6604 + $0x1f0] sm:$0xff]
    %v6668 = vld [vmem:[%s6604 + $0x1f8] sm:$0xff]
    %v6669 = vld [vmem:[%s6604 + $0x200] sm:$0xff]
    %v6670 = vld [vmem:[%s6604 + $0x208] sm:$0xff]
    %v6671 = vld [vmem:[%s6604 + $0x210] sm:$0xff]
    %v6672 = vld [vmem:[%s6604 + $0x218] sm:$0xff]
    %v6673 = vld [vmem:[%s6604 + $0x220] sm:$0xff]
    %v6674 = vld [vmem:[%s6604 + $0x228] sm:$0xff]
    %v6675 = vld [vmem:[%s6604 + $0x230] sm:$0xff]
    %v6676 = vld [vmem:[%s6604 + $0x238] sm:$0xff]
    %v6686 = vrot.slane %v6595, 2
    %v6687 = vrot.slane %v6598, 2
    %v6688 = vsel %vm1302, %v6686, %v6687
    %v6689 = vrot.slane %v6596, 2
    %v6690 = vrot.slane %v6599, 2
    %v6691 = vsel %vm1302, %v6689, %v6690
    %v6692 = vrot.slane %v6597, 2
    %v6693 = vrot.slane %v6600, 2
    %v6694 = vsel %vm1302, %v6692, %v6693
    %v6695 = vrot.slane %v6601, 2
    %v6696 = vsel %vm1302, %v6687, %v6695
    %v6697 = vrot.slane %v6602, 2
    %v6698 = vsel %vm1302, %v6690, %v6697
    %v6699 = vrot.slane %v6603, 2
    %v6700 = vsel %vm1302, %v6693, %v6699
    %v6779 = vunpack.c.l.b16 %v6605
    %v6780 = vunpack.c.h.b16 %v6605
    %v6781 = vunpack.c.l.b16 %v6606
    %v6782 = vunpack.c.h.b16 %v6606
    %v6783 = vunpack.c.l.b16 %v6607
    %v6784 = vunpack.c.h.b16 %v6607
    %v6785 = vunpack.c.l.b16 %v6608
    %v6786 = vunpack.c.h.b16 %v6608
    %v6787 = vunpack.c.l.b16 %v6609
    %v6788 = vunpack.c.h.b16 %v6609
    %v6789 = vunpack.c.l.b16 %v6610
    %v6790 = vunpack.c.h.b16 %v6610
    %v6791 = vunpack.c.l.b16 %v6611
    %v6792 = vunpack.c.h.b16 %v6611
    %v6793 = vunpack.c.l.b16 %v6612
    %v6794 = vunpack.c.h.b16 %v6612
    %v6795 = vunpack.c.l.b16 %v6613
    %v6796 = vunpack.c.h.b16 %v6613
    %v6797 = vunpack.c.l.b16 %v6614
    %v6798 = vunpack.c.h.b16 %v6614
    %v6799 = vunpack.c.l.b16 %v6615
    %v6800 = vunpack.c.h.b16 %v6615
    %v6801 = vunpack.c.l.b16 %v6616
    %v6802 = vunpack.c.h.b16 %v6616
    %v6803 = vunpack.c.l.b16 %v6617
    %v6804 = vunpack.c.h.b16 %v6617
    %v6805 = vunpack.c.l.b16 %v6618
    %v6806 = vunpack.c.h.b16 %v6618
    %v6807 = vunpack.c.l.b16 %v6619
    %v6808 = vunpack.c.h.b16 %v6619
    %v6809 = vunpack.c.l.b16 %v6620
    %v6810 = vunpack.c.h.b16 %v6620
    %v6811 = vunpack.c.l.b16 %v6621
    %v6812 = vunpack.c.h.b16 %v6621
    %v6813 = vunpack.c.l.b16 %v6622
    %v6814 = vunpack.c.h.b16 %v6622
    %v6815 = vunpack.c.l.b16 %v6623
    %v6816 = vunpack.c.h.b16 %v6623
    %v6817 = vunpack.c.l.b16 %v6624
    %v6818 = vunpack.c.h.b16 %v6624
    %v6819 = vunpack.c.l.b16 %v6625
    %v6820 = vunpack.c.h.b16 %v6625
    %v6821 = vunpack.c.l.b16 %v6626
    %v6822 = vunpack.c.h.b16 %v6626
    %v6823 = vunpack.c.l.b16 %v6627
    %v6824 = vunpack.c.h.b16 %v6627
    %v6825 = vunpack.c.l.b16 %v6628
    %v6826 = vunpack.c.h.b16 %v6628
    %v6827 = vunpack.c.l.b16 %v6629
    %v6828 = vunpack.c.h.b16 %v6629
    %v6829 = vunpack.c.l.b16 %v6630
    %v6830 = vunpack.c.h.b16 %v6630
    %v6831 = vunpack.c.l.b16 %v6631
    %v6832 = vunpack.c.h.b16 %v6631
    %v6833 = vunpack.c.l.b16 %v6632
    %v6834 = vunpack.c.h.b16 %v6632
    %v6835 = vunpack.c.l.b16 %v6633
    %v6836 = vunpack.c.h.b16 %v6633
    %v6837 = vunpack.c.l.b16 %v6634
    %v6838 = vunpack.c.h.b16 %v6634
    %v6839 = vunpack.c.l.b16 %v6635
    %v6840 = vunpack.c.h.b16 %v6635
    %v6841 = vunpack.c.l.b16 %v6636
    %v6842 = vunpack.c.h.b16 %v6636
    %v6843 = vunpack.c.l.b16 %v6637
    %v6844 = vunpack.c.h.b16 %v6637
    %v6845 = vunpack.c.l.b16 %v6638
    %v6846 = vunpack.c.h.b16 %v6638
    %v6847 = vunpack.c.l.b16 %v6639
    %v6848 = vunpack.c.h.b16 %v6639
    %v6849 = vunpack.c.l.b16 %v6640
    %v6850 = vunpack.c.h.b16 %v6640
    %v6851 = vunpack.c.l.b16 %v6641
    %v6852 = vunpack.c.h.b16 %v6641
    %v6853 = vunpack.c.l.b16 %v6642
    %v6854 = vunpack.c.h.b16 %v6642
    %v6855 = vunpack.c.l.b16 %v6643
    %v6856 = vunpack.c.h.b16 %v6643
    %v6857 = vunpack.c.l.b16 %v6644
    %v6858 = vunpack.c.h.b16 %v6644
    %v6859 = vunpack.c.l.b16 %v6645
    %v6860 = vunpack.c.h.b16 %v6645
    %v6861 = vunpack.c.l.b16 %v6646
    %v6862 = vunpack.c.h.b16 %v6646
    %v6863 = vunpack.c.l.b16 %v6647
    %v6864 = vunpack.c.h.b16 %v6647
    %v6865 = vunpack.c.l.b16 %v6648
    %v6866 = vunpack.c.h.b16 %v6648
    %v6867 = vunpack.c.l.b16 %v6649
    %v6868 = vunpack.c.h.b16 %v6649
    %v6869 = vunpack.c.l.b16 %v6650
    %v6870 = vunpack.c.h.b16 %v6650
    %v6871 = vunpack.c.l.b16 %v6651
    %v6872 = vunpack.c.h.b16 %v6651
    %v6873 = vunpack.c.l.b16 %v6652
    %v6874 = vunpack.c.h.b16 %v6652
    %v6875 = vunpack.c.l.b16 %v6653
    %v6876 = vunpack.c.h.b16 %v6653
    %v6877 = vunpack.c.l.b16 %v6654
    %v6878 = vunpack.c.h.b16 %v6654
    %v6879 = vunpack.c.l.b16 %v6655
    %v6880 = vunpack.c.h.b16 %v6655
    %v6881 = vunpack.c.l.b16 %v6656
    %v6882 = vunpack.c.h.b16 %v6656
    %v6883 = vunpack.c.l.b16 %v6657
    %v6884 = vunpack.c.h.b16 %v6657
    %v6885 = vunpack.c.l.b16 %v6658
    %v6886 = vunpack.c.h.b16 %v6658
    %v6887 = vunpack.c.l.b16 %v6659
    %v6888 = vunpack.c.h.b16 %v6659
    %v6889 = vunpack.c.l.b16 %v6660
    %v6890 = vunpack.c.h.b16 %v6660
    %v6891 = vunpack.c.l.b16 %v6661
    %v6892 = vunpack.c.h.b16 %v6661
    %v6893 = vunpack.c.l.b16 %v6662
    %v6894 = vunpack.c.h.b16 %v6662
    %v6895 = vunpack.c.l.b16 %v6663
    %v6896 = vunpack.c.h.b16 %v6663
    %v6897 = vunpack.c.l.b16 %v6664
    %v6898 = vunpack.c.h.b16 %v6664
    %v6899 = vunpack.c.l.b16 %v6665
    %v6900 = vunpack.c.h.b16 %v6665
    %v6901 = vunpack.c.l.b16 %v6666
    %v6902 = vunpack.c.h.b16 %v6666
    %v6903 = vunpack.c.l.b16 %v6667
    %v6904 = vunpack.c.h.b16 %v6667
    %v6905 = vunpack.c.l.b16 %v6668
    %v6906 = vunpack.c.h.b16 %v6668
    %v6907 = vunpack.c.l.b16 %v6669
    %v6908 = vunpack.c.h.b16 %v6669
    %v6909 = vunpack.c.l.b16 %v6670
    %v6910 = vunpack.c.h.b16 %v6670
    %v6911 = vunpack.c.l.b16 %v6671
    %v6912 = vunpack.c.h.b16 %v6671
    %v6913 = vunpack.c.l.b16 %v6672
    %v6914 = vunpack.c.h.b16 %v6672
    %v6915 = vunpack.c.l.b16 %v6673
    %v6916 = vunpack.c.h.b16 %v6673
    %v6917 = vunpack.c.l.b16 %v6674
    %v6918 = vunpack.c.h.b16 %v6674
    %v6919 = vunpack.c.l.b16 %v6675
    %v6920 = vunpack.c.h.b16 %v6675
    %v6921 = vunpack.c.l.b16 %v6676
    %v6922 = vunpack.c.h.b16 %v6676
    %v6923 = vpack.c.b16 %v6783, %v6779
    %v6924 = vpack.c.b16 %v6784, %v6780
    %v6925 = vpack.c.b16 %v6785, %v6781
    %v6926 = vpack.c.b16 %v6786, %v6782
    %v6927 = vpack.c.b16 %v6791, %v6787
    %v6928 = vpack.c.b16 %v6792, %v6788
    %v6929 = vpack.c.b16 %v6793, %v6789
    %v6930 = vpack.c.b16 %v6794, %v6790
    %v6931 = vpack.c.b16 %v6799, %v6795
    %v6932 = vpack.c.b16 %v6800, %v6796
    %v6933 = vpack.c.b16 %v6801, %v6797
    %v6934 = vpack.c.b16 %v6802, %v6798
    %v6935 = vpack.c.b16 %v6807, %v6803
    %v6936 = vpack.c.b16 %v6808, %v6804
    %v6937 = vpack.c.b16 %v6809, %v6805
    %v6938 = vpack.c.b16 %v6810, %v6806
    %v6939 = vpack.c.b16 %v6815, %v6811
    %v6940 = vpack.c.b16 %v6816, %v6812
    %v6941 = vpack.c.b16 %v6817, %v6813
    %v6942 = vpack.c.b16 %v6818, %v6814
    %v6943 = vpack.c.b16 %v6823, %v6819
    %v6944 = vpack.c.b16 %v6824, %v6820
    %v6945 = vpack.c.b16 %v6825, %v6821
    %v6946 = vpack.c.b16 %v6826, %v6822
    %v6947 = vpack.c.b16 %v6831, %v6827
    %v6948 = vpack.c.b16 %v6832, %v6828
    %v6949 = vpack.c.b16 %v6833, %v6829
    %v6950 = vpack.c.b16 %v6834, %v6830
    %v6951 = vpack.c.b16 %v6839, %v6835
    %v6952 = vpack.c.b16 %v6840, %v6836
    %v6953 = vpack.c.b16 %v6841, %v6837
    %v6954 = vpack.c.b16 %v6842, %v6838
    %v6955 = vpack.c.b16 %v6847, %v6843
    %v6956 = vpack.c.b16 %v6848, %v6844
    %v6957 = vpack.c.b16 %v6849, %v6845
    %v6958 = vpack.c.b16 %v6850, %v6846
    %v6959 = vpack.c.b16 %v6855, %v6851
    %v6960 = vpack.c.b16 %v6856, %v6852
    %v6961 = vpack.c.b16 %v6857, %v6853
    %v6962 = vpack.c.b16 %v6858, %v6854
    %v6963 = vpack.c.b16 %v6863, %v6859
    %v6964 = vpack.c.b16 %v6864, %v6860
    %v6965 = vpack.c.b16 %v6865, %v6861
    %v6966 = vpack.c.b16 %v6866, %v6862
    %v6967 = vpack.c.b16 %v6871, %v6867
    %v6968 = vpack.c.b16 %v6872, %v6868
    %v6969 = vpack.c.b16 %v6873, %v6869
    %v6970 = vpack.c.b16 %v6874, %v6870
    %v6971 = vpack.c.b16 %v6879, %v6875
    %v6972 = vpack.c.b16 %v6880, %v6876
    %v6973 = vpack.c.b16 %v6881, %v6877
    %v6974 = vpack.c.b16 %v6882, %v6878
    %v6975 = vpack.c.b16 %v6887, %v6883
    %v6976 = vpack.c.b16 %v6888, %v6884
    %v6977 = vpack.c.b16 %v6889, %v6885
    %v6978 = vpack.c.b16 %v6890, %v6886
    %v6979 = vpack.c.b16 %v6895, %v6891
    %v6980 = vpack.c.b16 %v6896, %v6892
    %v6981 = vpack.c.b16 %v6897, %v6893
    %v6982 = vpack.c.b16 %v6898, %v6894
    %v6983 = vpack.c.b16 %v6903, %v6899
    %v6984 = vpack.c.b16 %v6904, %v6900
    %v6985 = vpack.c.b16 %v6905, %v6901
    %v6986 = vpack.c.b16 %v6906, %v6902
    %v6987 = vpack.c.b16 %v6911, %v6907
    %v6988 = vpack.c.b16 %v6912, %v6908
    %v6989 = vpack.c.b16 %v6913, %v6909
    %v6990 = vpack.c.b16 %v6914, %v6910
    %v6991 = vpack.c.b16 %v6919, %v6915
    %v6992 = vpack.c.b16 %v6920, %v6916
    %v6993 = vpack.c.b16 %v6921, %v6917
    %v6994 = vpack.c.b16 %v6922, %v6918
    %v7068 = vsel %vm34, %v6694, 0
    %v7071 = vsel %vm34, %v6700, 0
    %v7074 = vsel %vm34, %v6699, 0
    %7076 = vmatpush.bf16.msra.mxu0 %v6951
    %7077 = vmatpush.bf16.msra.mxu0 %v6947
    %7078 = vmatpush.bf16.msra.mxu0 %v6943
    %7079 = vmatpush.bf16.msra.mxu0 %v6939
    %7080 = vmatpush.bf16.msra.mxu0 %v6935
    %7081 = vmatpush.bf16.msra.mxu0 %v6931
    %7082 = vmatpush.bf16.msra.mxu0 %v6927
    %7083 = vmatpush.bf16.msra.mxu0 %v6923
    %7084 = vmatmul.bf16.gmra.mxu0 %v6688
    %v7085 = vpop.f32.mrf.mxu0
    %v7086 = vadd.f32 0.0, %v7085
    %v7087 = vpop.f32.mrf.mxu0
    %v7088 = vadd.f32 0.0, %v7087
    %7089 = vmatmul.bf16.gmra.mxu0 %v6696
    %v7090 = vpop.f32.mrf.mxu0
    %v7091 = vadd.f32 0.0, %v7090
    %v7092 = vpop.f32.mrf.mxu0
    %v7093 = vadd.f32 0.0, %v7092
    %7094 = vmatmul.bf16.gmra.mxu0 %v6695
    %v7095 = vpop.f32.mrf.mxu0
    %v7096 = vadd.f32 0.0, %v7095
    %v7097 = vpop.f32.mrf.mxu0
    %7098 = vdwg.mxu0
    %7099 = vmatpush.bf16.msra.mxu0 %v6983
    %7100 = vmatpush.bf16.msra.mxu0 %v6979
    %7101 = vmatpush.bf16.msra.mxu0 %v6975
    %7102 = vmatpush.bf16.msra.mxu0 %v6971
    %7103 = vmatpush.bf16.msra.mxu0 %v6967
    %7104 = vmatpush.bf16.msra.mxu0 %v6963
    %7105 = vmatpush.bf16.msra.mxu0 %v6959
    %7106 = vmatpush.bf16.msra.mxu0 %v6955
    %7107 = vmatmul.bf16.gmra.mxu0 %v6691
    %v7108 = vpop.f32.mrf.mxu0
    %v7109 = vadd.f32 %v7086, %v7108
    %v7110 = vpop.f32.mrf.mxu0
    %v7111 = vadd.f32 %v7088, %v7110
    %7112 = vmatmul.bf16.gmra.mxu0 %v6698
    %v7113 = vpop.f32.mrf.mxu0
    %v7114 = vadd.f32 %v7091, %v7113
    %v7115 = vpop.f32.mrf.mxu0
    %v7116 = vadd.f32 %v7093, %v7115
    %7117 = vmatmul.bf16.gmra.mxu0 %v6697
    %v7118 = vpop.f32.mrf.mxu0
    %v7119 = vadd.f32 %v7096, %v7118
    %v7120 = vpop.f32.mrf.mxu0
    %7121 = vdwg.mxu0
    %7122 = vmatpush.bf16.msra.mxu0 0
    %7123 = vmatpush.bf16.msra.mxu0 0
    %7124 = vmatpush.bf16.msra.mxu0 0
    %7125 = vmatpush.bf16.msra.mxu0 0
    %7126 = vmatpush.bf16.msra.mxu0 0
    %7127 = vmatpush.bf16.msra.mxu0 0
    %7128 = vmatpush.bf16.msra.mxu0 %v6991
    %7129 = vmatpush.bf16.msra.mxu0 %v6987
    %7130 = vmatmul.bf16.gmra.mxu0 %v7068
    %v7131 = vpop.f32.mrf.mxu0
    %v7132 = vadd.f32 %v7109, %v7131
    %v7133 = vpop.f32.mrf.mxu0
    %v7134 = vadd.f32 %v7111, %v7133
    %7135 = vmatmul.bf16.gmra.mxu0 %v7071
    %v7136 = vpop.f32.mrf.mxu0
    %v7137 = vadd.f32 %v7114, %v7136
    %v7138 = vpop.f32.mrf.mxu0
    %v7139 = vadd.f32 %v7116, %v7138
    %7140 = vmatmul.bf16.gmra.mxu0 %v7074
    %v7141 = vpop.f32.mrf.mxu0
    %v7142 = vadd.f32 %v7119, %v7141
    %v7143 = vpop.f32.mrf.mxu0
    %7144 = vdwg.mxu0
    %7145 = vmatpush.bf16.msra.mxu0 %v6952
    %7146 = vmatpush.bf16.msra.mxu0 %v6948
    %7147 = vmatpush.bf16.msra.mxu0 %v6944
    %7148 = vmatpush.bf16.msra.mxu0 %v6940
    %7149 = vmatpush.bf16.msra.mxu0 %v6936
    %7150 = vmatpush.bf16.msra.mxu0 %v6932
    %7151 = vmatpush.bf16.msra.mxu0 %v6928
    %7152 = vmatpush.bf16.msra.mxu0 %v6924
    %7153 = vmatmul.bf16.gmra.mxu0 %v6688
    %v7154 = vpop.f32.mrf.mxu0
    %v7155 = vadd.f32 0.0, %v7154
    %v7156 = vpop.f32.mrf.mxu0
    %v7157 = vadd.f32 0.0, %v7156
    %7158 = vmatmul.bf16.gmra.mxu0 %v6696
    %v7159 = vpop.f32.mrf.mxu0
    %v7160 = vadd.f32 0.0, %v7159
    %v7161 = vpop.f32.mrf.mxu0
    %v7162 = vadd.f32 0.0, %v7161
    %7163 = vmatmul.bf16.gmra.mxu0 %v6695
    %v7164 = vpop.f32.mrf.mxu0
    %v7165 = vadd.f32 0.0, %v7164
    %v7166 = vpop.f32.mrf.mxu0
    %7167 = vdwg.mxu0
    %7168 = vmatpush.bf16.msra.mxu0 %v6984
    %7169 = vmatpush.bf16.msra.mxu0 %v6980
    %7170 = vmatpush.bf16.msra.mxu0 %v6976
    %7171 = vmatpush.bf16.msra.mxu0 %v6972
    %7172 = vmatpush.bf16.msra.mxu0 %v6968
    %7173 = vmatpush.bf16.msra.mxu0 %v6964
    %7174 = vmatpush.bf16.msra.mxu0 %v6960
    %7175 = vmatpush.bf16.msra.mxu0 %v6956
    %7176 = vmatmul.bf16.gmra.mxu0 %v6691
    %v7177 = vpop.f32.mrf.mxu0
    %v7178 = vadd.f32 %v7155, %v7177
    %v7179 = vpop.f32.mrf.mxu0
    %v7180 = vadd.f32 %v7157, %v7179
    %7181 = vmatmul.bf16.gmra.mxu0 %v6698
    %v7182 = vpop.f32.mrf.mxu0
    %v7183 = vadd.f32 %v7160, %v7182
    %v7184 = vpop.f32.mrf.mxu0
    %v7185 = vadd.f32 %v7162, %v7184
    %7186 = vmatmul.bf16.gmra.mxu0 %v6697
    %v7187 = vpop.f32.mrf.mxu0
    %v7188 = vadd.f32 %v7165, %v7187
    %v7189 = vpop.f32.mrf.mxu0
    %7190 = vdwg.mxu0
    %7191 = vmatpush.bf16.msra.mxu0 0
    %7192 = vmatpush.bf16.msra.mxu0 0
    %7193 = vmatpush.bf16.msra.mxu0 0
    %7194 = vmatpush.bf16.msra.mxu0 0
    %7195 = vmatpush.bf16.msra.mxu0 0
    %7196 = vmatpush.bf16.msra.mxu0 0
    %7197 = vmatpush.bf16.msra.mxu0 %v6992
    %7198 = vmatpush.bf16.msra.mxu0 %v6988
    %7199 = vmatmul.bf16.gmra.mxu0 %v7068
    %v7200 = vpop.f32.mrf.mxu0
    %v7201 = vadd.f32 %v7178, %v7200
    %v7202 = vpop.f32.mrf.mxu0
    %v7203 = vadd.f32 %v7180, %v7202
    %7204 = vmatmul.bf16.gmra.mxu0 %v7071
    %v7205 = vpop.f32.mrf.mxu0
    %v7206 = vadd.f32 %v7183, %v7205
    %v7207 = vpop.f32.mrf.mxu0
    %v7208 = vadd.f32 %v7185, %v7207
    %7209 = vmatmul.bf16.gmra.mxu0 %v7074
    %v7210 = vpop.f32.mrf.mxu0
    %v7211 = vadd.f32 %v7188, %v7210
    %v7212 = vpop.f32.mrf.mxu0
    %7213 = vdwg.mxu0
    %7214 = vmatpush.bf16.msra.mxu0 %v6953
    %7215 = vmatpush.bf16.msra.mxu0 %v6949
    %7216 = vmatpush.bf16.msra.mxu0 %v6945
    %7217 = vmatpush.bf16.msra.mxu0 %v6941
    %7218 = vmatpush.bf16.msra.mxu0 %v6937
    %7219 = vmatpush.bf16.msra.mxu0 %v6933
    %7220 = vmatpush.bf16.msra.mxu0 %v6929
    %7221 = vmatpush.bf16.msra.mxu0 %v6925
    %7222 = vmatmul.bf16.gmra.mxu0 %v6688
    %v7223 = vpop.f32.mrf.mxu0
    %v7224 = vadd.f32 0.0, %v7223
    %v7225 = vpop.f32.mrf.mxu0
    %v7226 = vadd.f32 0.0, %v7225
    %7227 = vmatmul.bf16.gmra.mxu0 %v6696
    %v7228 = vpop.f32.mrf.mxu0
    %v7229 = vadd.f32 0.0, %v7228
    %v7230 = vpop.f32.mrf.mxu0
    %v7231 = vadd.f32 0.0, %v7230
    %7232 = vmatmul.bf16.gmra.mxu0 %v6695
    %v7233 = vpop.f32.mrf.mxu0
    %v7234 = vadd.f32 0.0, %v7233
    %v7235 = vpop.f32.mrf.mxu0
    %7236 = vdwg.mxu0
    %7237 = vmatpush.bf16.msra.mxu0 %v6985
    %7238 = vmatpush.bf16.msra.mxu0 %v6981
    %7239 = vmatpush.bf16.msra.mxu0 %v6977
    %7240 = vmatpush.bf16.msra.mxu0 %v6973
    %7241 = vmatpush.bf16.msra.mxu0 %v6969
    %7242 = vmatpush.bf16.msra.mxu0 %v6965
    %7243 = vmatpush.bf16.msra.mxu0 %v6961
    %7244 = vmatpush.bf16.msra.mxu0 %v6957
    %7245 = vmatmul.bf16.gmra.mxu0 %v6691
    %v7246 = vpop.f32.mrf.mxu0
    %v7247 = vadd.f32 %v7224, %v7246
    %v7248 = vpop.f32.mrf.mxu0
    %v7249 = vadd.f32 %v7226, %v7248
    %7250 = vmatmul.bf16.gmra.mxu0 %v6698
    %v7251 = vpop.f32.mrf.mxu0
    %v7252 = vadd.f32 %v7229, %v7251
    %v7253 = vpop.f32.mrf.mxu0
    %v7254 = vadd.f32 %v7231, %v7253
    %7255 = vmatmul.bf16.gmra.mxu0 %v6697
    %v7256 = vpop.f32.mrf.mxu0
    %v7257 = vadd.f32 %v7234, %v7256
    %v7258 = vpop.f32.mrf.mxu0
    %7259 = vdwg.mxu0
    %7260 = vmatpush.bf16.msra.mxu0 0
    %7261 = vmatpush.bf16.msra.mxu0 0
    %7262 = vmatpush.bf16.msra.mxu0 0
    %7263 = vmatpush.bf16.msra.mxu0 0
    %7264 = vmatpush.bf16.msra.mxu0 0
    %7265 = vmatpush.bf16.msra.mxu0 0
    %7266 = vmatpush.bf16.msra.mxu0 %v6993
    %7267 = vmatpush.bf16.msra.mxu0 %v6989
    %7268 = vmatmul.bf16.gmra.mxu0 %v7068
    %v7269 = vpop.f32.mrf.mxu0
    %v7270 = vadd.f32 %v7247, %v7269
    %v7271 = vpop.f32.mrf.mxu0
    %v7272 = vadd.f32 %v7249, %v7271
    %7273 = vmatmul.bf16.gmra.mxu0 %v7071
    %v7274 = vpop.f32.mrf.mxu0
    %v7275 = vadd.f32 %v7252, %v7274
    %v7276 = vpop.f32.mrf.mxu0
    %v7277 = vadd.f32 %v7254, %v7276
    %7278 = vmatmul.bf16.gmra.mxu0 %v7074
    %v7279 = vpop.f32.mrf.mxu0
    %v7280 = vadd.f32 %v7257, %v7279
    %v7281 = vpop.f32.mrf.mxu0
    %7282 = vdwg.mxu0
    %7283 = vmatpush.bf16.msra.mxu0 %v6954
    %7284 = vmatpush.bf16.msra.mxu0 %v6950
    %7285 = vmatpush.bf16.msra.mxu0 %v6946
    %7286 = vmatpush.bf16.msra.mxu0 %v6942
    %7287 = vmatpush.bf16.msra.mxu0 %v6938
    %7288 = vmatpush.bf16.msra.mxu0 %v6934
    %7289 = vmatpush.bf16.msra.mxu0 %v6930
    %7290 = vmatpush.bf16.msra.mxu0 %v6926
    %7291 = vmatmul.bf16.gmra.mxu0 %v6688
    %v7292 = vpop.f32.mrf.mxu0
    %v7293 = vadd.f32 0.0, %v7292
    %v7294 = vpop.f32.mrf.mxu0
    %v7295 = vadd.f32 0.0, %v7294
    %7296 = vmatmul.bf16.gmra.mxu0 %v6696
    %v7297 = vpop.f32.mrf.mxu0
    %v7298 = vadd.f32 0.0, %v7297
    %v7299 = vpop.f32.mrf.mxu0
    %v7300 = vadd.f32 0.0, %v7299
    %7301 = vmatmul.bf16.gmra.mxu0 %v6695
    %v7302 = vpop.f32.mrf.mxu0
    %v7303 = vadd.f32 0.0, %v7302
    %v7304 = vpop.f32.mrf.mxu0
    %7305 = vdwg.mxu0
    %7306 = vmatpush.bf16.msra.mxu0 %v6986
    %7307 = vmatpush.bf16.msra.mxu0 %v6982
    %7308 = vmatpush.bf16.msra.mxu0 %v6978
    %7309 = vmatpush.bf16.msra.mxu0 %v6974
    %7310 = vmatpush.bf16.msra.mxu0 %v6970
    %7311 = vmatpush.bf16.msra.mxu0 %v6966
    %7312 = vmatpush.bf16.msra.mxu0 %v6962
    %7313 = vmatpush.bf16.msra.mxu0 %v6958
    %7314 = vmatmul.bf16.gmra.mxu0 %v6691
    %v7315 = vpop.f32.mrf.mxu0
    %v7316 = vadd.f32 %v7293, %v7315
    %v7317 = vpop.f32.mrf.mxu0
    %v7318 = vadd.f32 %v7295, %v7317
    %7319 = vmatmul.bf16.gmra.mxu0 %v6698
    %v7320 = vpop.f32.mrf.mxu0
    %v7321 = vadd.f32 %v7298, %v7320
    %v7322 = vpop.f32.mrf.mxu0
    %v7323 = vadd.f32 %v7300, %v7322
    %7324 = vmatmul.bf16.gmra.mxu0 %v6697
    %v7325 = vpop.f32.mrf.mxu0
    %v7326 = vadd.f32 %v7303, %v7325
    %v7327 = vpop.f32.mrf.mxu0
    %7328 = vdwg.mxu0
    %7329 = vmatpush.bf16.msra.mxu0 0
    %7330 = vmatpush.bf16.msra.mxu0 0
    %7331 = vmatpush.bf16.msra.mxu0 0
    %7332 = vmatpush.bf16.msra.mxu0 0
    %7333 = vmatpush.bf16.msra.mxu0 0
    %7334 = vmatpush.bf16.msra.mxu0 0
    %7335 = vmatpush.bf16.msra.mxu0 %v6994
    %7336 = vmatpush.bf16.msra.mxu0 %v6990
    %7337 = vmatmul.bf16.gmra.mxu0 %v7068
    %v7338 = vpop.f32.mrf.mxu0
    %v7339 = vadd.f32 %v7316, %v7338
    %v7340 = vpop.f32.mrf.mxu0
    %v7341 = vadd.f32 %v7318, %v7340
    %7342 = vmatmul.bf16.gmra.mxu0 %v7071
    %v7343 = vpop.f32.mrf.mxu0
    %v7344 = vadd.f32 %v7321, %v7343
    %v7345 = vpop.f32.mrf.mxu0
    %v7346 = vadd.f32 %v7323, %v7345
    %7347 = vmatmul.bf16.gmra.mxu0 %v7074
    %v7348 = vpop.f32.mrf.mxu0
    %v7349 = vadd.f32 %v7326, %v7348
    %v7350 = vpop.f32.mrf.mxu0
    %7351 = vdwg.mxu0
    %v7352 = vld [vmem:[#allocation6] sm:$0xff]
    %v7353 = vld [vmem:[#allocation6 + $0x8] sm:$0xff]
    %v7354 = vld [vmem:[#allocation6 + $0x10] sm:$0xff]
    %v7355 = vld [vmem:[#allocation6 + $0x18] sm:$0xff]
    %v7356 = vld [vmem:[#allocation6 + $0x20] sm:$0xff]
    %v7357 = vld [vmem:[#allocation6 + $0x28] sm:$0xff]
    %v7358 = vld [vmem:[#allocation6 + $0x30] sm:$0xff]
    %v7359 = vld [vmem:[#allocation6 + $0x38] sm:$0xff]
    %v7360 = vld [vmem:[#allocation6 + $0x40] sm:$0xff]
    %v7361 = vld [vmem:[#allocation6 + $0x48] sm:$0xff]
    %v7362 = vld [vmem:[#allocation6 + $0x50] sm:$0xff]
    %v7363 = vld [vmem:[#allocation6 + $0x58] sm:$0xff]
    %v7364 = vld [vmem:[#allocation6 + $0x60] sm:$0xff]
    %v7365 = vld [vmem:[#allocation6 + $0x68] sm:$0xff]
    %v7366 = vld [vmem:[#allocation6 + $0x70] sm:$0xff]
    %v7367 = vld [vmem:[#allocation6 + $0x78] sm:$0xff]
    %v7368 = vld [vmem:[#allocation6 + $0x80] sm:$0xf]
    %v7369 = vld [vmem:[#allocation6 + $0x88] sm:$0xf]
    %v7370 = vld [vmem:[#allocation6 + $0x90] sm:$0xf]
    %v7371 = vld [vmem:[#allocation6 + $0x98] sm:$0xf]
    %v7372 = vadd.f32 %v7352, %v7132
    %v7373 = vadd.f32 %v7353, %v7201
    %v7374 = vadd.f32 %v7354, %v7270
    %v7375 = vadd.f32 %v7355, %v7339
    %v7376 = vadd.f32 %v7356, %v7134
    %v7377 = vadd.f32 %v7357, %v7203
    %v7378 = vadd.f32 %v7358, %v7272
    %v7379 = vadd.f32 %v7359, %v7341
    %v7380 = vadd.f32 %v7360, %v7137
    %v7381 = vadd.f32 %v7361, %v7206
    %v7382 = vadd.f32 %v7362, %v7275
    %v7383 = vadd.f32 %v7363, %v7344
    %v7384 = vadd.f32 %v7364, %v7139
    %v7385 = vadd.f32 %v7365, %v7208
    %v7386 = vadd.f32 %v7366, %v7277
    %v7387 = vadd.f32 %v7367, %v7346
    %v7388 = vadd.f32 %v7368, %v7142
    %v7389 = vadd.f32 %v7369, %v7211
    %v7390 = vadd.f32 %v7370, %v7280
    %v7391 = vadd.f32 %v7371, %v7349
    %7392 = vst [vmem:[#allocation6] sm:$0xff] %v7372
    %7393 = vst [vmem:[#allocation6 + $0x8] sm:$0xff] %v7373
    %7394 = vst [vmem:[#allocation6 + $0x10] sm:$0xff] %v7374
    %7395 = vst.msk [vmem:[#allocation6 + $0x18] sm:$0xff] %vm286, %v7375
    %7396 = vst [vmem:[#allocation6 + $0x20] sm:$0xff] %v7376
    %7397 = vst [vmem:[#allocation6 + $0x28] sm:$0xff] %v7377
    %7398 = vst [vmem:[#allocation6 + $0x30] sm:$0xff] %v7378
    %7399 = vst.msk [vmem:[#allocation6 + $0x38] sm:$0xff] %vm286, %v7379
    %7400 = vst [vmem:[#allocation6 + $0x40] sm:$0xff] %v7380
    %7401 = vst [vmem:[#allocation6 + $0x48] sm:$0xff] %v7381
    %7402 = vst [vmem:[#allocation6 + $0x50] sm:$0xff] %v7382
    %7403 = vst.msk [vmem:[#allocation6 + $0x58] sm:$0xff] %vm286, %v7383
    %7404 = vst [vmem:[#allocation6 + $0x60] sm:$0xff] %v7384
    %7405 = vst [vmem:[#allocation6 + $0x68] sm:$0xff] %v7385
    %7406 = vst [vmem:[#allocation6 + $0x70] sm:$0xff] %v7386
    %7407 = vst.msk [vmem:[#allocation6 + $0x78] sm:$0xff] %vm286, %v7387
    %7408 = vst [vmem:[#allocation6 + $0x80] sm:$0xf] %v7388
    %7409 = vst [vmem:[#allocation6 + $0x88] sm:$0xf] %v7389
    %7410 = vst [vmem:[#allocation6 + $0x90] sm:$0xf] %v7390
    %7411 = vst.msk [vmem:[#allocation6 + $0x98] sm:$0xf] %vm3983, %v7391
    %v7412 = vld [vmem:[#allocation6] sm:$0xff]
    %v7413 = vld [vmem:[#allocation6 + $0x20] sm:$0xff]
    %v7414 = vld [vmem:[#allocation6 + $0x40] sm:$0xff]
    %v7415 = vld [vmem:[#allocation6 + $0x60] sm:$0xff]
    %v7416 = vld [vmem:[#allocation6 + $0x80] sm:$0xf]
    %7422 = vrot.lane.b32.xlu0 %v7412, 96
    %v7423 = vpop.permute.xlu0 %7422
    %7424 = vrot.lane.b32.xlu0 %v7413, 96
    %v7425 = vpop.permute.xlu0 %7424
    %7426 = vrot.lane.b32.xlu0 %v7414, 96
    %v7427 = vpop.permute.xlu0 %7426
    %7428 = vrot.lane.b32.xlu0 %v7415, 96
    %v7429 = vpop.permute.xlu0 %7428
    %7430 = vrot.lane.b32.xlu0 %v7416, 96
    %v7431 = vpop.permute.xlu0 %7430
    %v7437 = vmax.f32 %v7412, %v7423
    %v7438 = vmax.f32 %v7413, %v7425
    %v7439 = vmax.f32 %v7414, %v7427
    %v7440 = vmax.f32 %v7415, %v7429
    %v7441 = vmax.f32 %v7416, %v7431
    %7442 = vst.msk [vmem:[#allocation7] sm:$0xff] %vm34, %v7437
    %7443 = vst.msk [vmem:[#allocation7 + $0x10] sm:$0xff] %vm34, %v7438
    %7444 = vst.msk [vmem:[#allocation7 + $0x20] sm:$0xff] %vm34, %v7439
    %7445 = vst.msk [vmem:[#allocation7 + $0x30] sm:$0xff] %vm34, %v7440
    %7446 = vst.msk [vmem:[#allocation7 + $0x40] sm:$0xf] %vm2769, %v7441
    %v7447 = vld [vmem:[#allocation6] sm:$0xff]
    %v7448 = vld [vmem:[#allocation6 + $0x20] sm:$0xff]
    %v7449 = vld [vmem:[#allocation6 + $0x40] sm:$0xff]
    %v7450 = vld [vmem:[#allocation6 + $0x60] sm:$0xff]
    %v7451 = vld [vmem:[#allocation6 + $0x80] sm:$0xf]
    %7457 = vrot.lane.b32.xlu0 %v7447, 96
    %v7458 = vpop.permute.xlu0 %7457
    %7459 = vrot.lane.b32.xlu0 %v7448, 96
    %v7460 = vpop.permute.xlu0 %7459
    %7461 = vrot.lane.b32.xlu0 %v7449, 96
    %v7462 = vpop.permute.xlu0 %7461
    %7463 = vrot.lane.b32.xlu0 %v7450, 96
    %v7464 = vpop.permute.xlu0 %7463
    %7465 = vrot.lane.b32.xlu0 %v7451, 96
    %v7466 = vpop.permute.xlu0 %7465
    %v7472 = vmax.f32 %v7447, %v7458
    %v7473 = vmax.f32 %v7448, %v7460
    %v7474 = vmax.f32 %v7449, %v7462
    %v7475 = vmax.f32 %v7450, %v7464
    %v7476 = vmax.f32 %v7451, %v7466
    %7482 = vrot.lane.b32.xlu0 %v7472, 96
    %v7483 = vpop.permute.xlu0 %7482
    %7484 = vrot.lane.b32.xlu0 %v7473, 96
    %v7485 = vpop.permute.xlu0 %7484
    %7486 = vrot.lane.b32.xlu0 %v7474, 96
    %v7487 = vpop.permute.xlu0 %7486
    %7488 = vrot.lane.b32.xlu0 %v7475, 96
    %v7489 = vpop.permute.xlu0 %7488
    %7490 = vrot.lane.b32.xlu0 %v7476, 96
    %v7491 = vpop.permute.xlu0 %7490
    %vm7497 = vcmask 523520
    %7498 = vst.msk [vmem:[#allocation7] sm:$0xff] %vm7497, %v7483
    %7499 = vst.msk [vmem:[#allocation7 + $0x10] sm:$0xff] %vm7497, %v7485
    %7500 = vst.msk [vmem:[#allocation7 + $0x20] sm:$0xff] %vm7497, %v7487
    %7501 = vst.msk [vmem:[#allocation7 + $0x30] sm:$0xff] %vm7497, %v7489
    %vm7502 = vcmask 519424
    %7503 = vst.msk [vmem:[#allocation7 + $0x40] sm:$0xf] %vm7502, %v7491
    %v7504 = vld [vmem:[#allocation6 + $0x8] sm:$0xff]
    %v7505 = vld [vmem:[#allocation6 + $0x28] sm:$0xff]
    %v7506 = vld [vmem:[#allocation6 + $0x48] sm:$0xff]
    %v7507 = vld [vmem:[#allocation6 + $0x68] sm:$0xff]
    %v7508 = vld [vmem:[#allocation6 + $0x88] sm:$0xf]
    %7514 = vrot.lane.b32.xlu0 %v7504, 96
    %v7515 = vpop.permute.xlu0 %7514
    %7516 = vrot.lane.b32.xlu0 %v7505, 96
    %v7517 = vpop.permute.xlu0 %7516
    %7518 = vrot.lane.b32.xlu0 %v7506, 96
    %v7519 = vpop.permute.xlu0 %7518
    %7520 = vrot.lane.b32.xlu0 %v7507, 96
    %v7521 = vpop.permute.xlu0 %7520
    %7522 = vrot.lane.b32.xlu0 %v7508, 96
    %v7523 = vpop.permute.xlu0 %7522
    %v7529 = vmax.f32 %v7504, %v7515
    %v7530 = vmax.f32 %v7505, %v7517
    %v7531 = vmax.f32 %v7506, %v7519
    %v7532 = vmax.f32 %v7507, %v7521
    %v7533 = vmax.f32 %v7508, %v7523
    %7539 = vrot.lane.b32.xlu0 %v7529, 64
    %v7540 = vpop.permute.xlu0 %7539
    %7541 = vrot.lane.b32.xlu0 %v7530, 64
    %v7542 = vpop.permute.xlu0 %7541
    %7543 = vrot.lane.b32.xlu0 %v7531, 64
    %v7544 = vpop.permute.xlu0 %7543
    %7545 = vrot.lane.b32.xlu0 %v7532, 64
    %v7546 = vpop.permute.xlu0 %7545
    %7547 = vrot.lane.b32.xlu0 %v7533, 64
    %v7548 = vpop.permute.xlu0 %7547
    %vm7554 = vcmask 785920
    %7555 = vst.msk [vmem:[#allocation7] sm:$0xff] %vm7554, %v7540
    %7556 = vst.msk [vmem:[#allocation7 + $0x10] sm:$0xff] %vm7554, %v7542
    %7557 = vst.msk [vmem:[#allocation7 + $0x20] sm:$0xff] %vm7554, %v7544
    %7558 = vst.msk [vmem:[#allocation7 + $0x30] sm:$0xff] %vm7554, %v7546
    %vm7559 = vcmask 781824
    %7560 = vst.msk [vmem:[#allocation7 + $0x40] sm:$0xf] %vm7559, %v7548
    %v7561 = vld [vmem:[#allocation6 + $0x8] sm:$0xff]
    %v7562 = vld [vmem:[#allocation6 + $0x28] sm:$0xff]
    %v7563 = vld [vmem:[#allocation6 + $0x48] sm:$0xff]
    %v7564 = vld [vmem:[#allocation6 + $0x68] sm:$0xff]
    %v7565 = vld [vmem:[#allocation6 + $0x88] sm:$0xf]
    %7571 = vrot.lane.b32.xlu0 %v7561, 96
    %v7572 = vpop.permute.xlu0 %7571
    %7573 = vrot.lane.b32.xlu0 %v7562, 96
    %v7574 = vpop.permute.xlu0 %7573
    %7575 = vrot.lane.b32.xlu0 %v7563, 96
    %v7576 = vpop.permute.xlu0 %7575
    %7577 = vrot.lane.b32.xlu0 %v7564, 96
    %v7578 = vpop.permute.xlu0 %7577
    %7579 = vrot.lane.b32.xlu0 %v7565, 96
    %v7580 = vpop.permute.xlu0 %7579
    %v7586 = vmax.f32 %v7561, %v7572
    %v7587 = vmax.f32 %v7562, %v7574
    %v7588 = vmax.f32 %v7563, %v7576
    %v7589 = vmax.f32 %v7564, %v7578
    %v7590 = vmax.f32 %v7565, %v7580
    %7596 = vrot.lane.b32.xlu0 %v7586, 32
    %v7597 = vpop.permute.xlu0 %7596
    %7598 = vrot.lane.b32.xlu0 %v7587, 32
    %v7599 = vpop.permute.xlu0 %7598
    %7600 = vrot.lane.b32.xlu0 %v7588, 32
    %v7601 = vpop.permute.xlu0 %7600
    %7602 = vrot.lane.b32.xlu0 %v7589, 32
    %v7603 = vpop.permute.xlu0 %7602
    %7604 = vrot.lane.b32.xlu0 %v7590, 32
    %v7605 = vpop.permute.xlu0 %7604
    %vm7611 = vcmask 1048320
    %7612 = vst.msk [vmem:[#allocation7] sm:$0xff] %vm7611, %v7597
    %7613 = vst.msk [vmem:[#allocation7 + $0x10] sm:$0xff] %vm7611, %v7599
    %7614 = vst.msk [vmem:[#allocation7 + $0x20] sm:$0xff] %vm7611, %v7601
    %7615 = vst.msk [vmem:[#allocation7 + $0x30] sm:$0xff] %vm7611, %v7603
    %vm7616 = vcmask 1044224
    %7617 = vst.msk [vmem:[#allocation7 + $0x40] sm:$0xf] %vm7616, %v7605
    %v7618 = vld [vmem:[#allocation6 + $0x10] sm:$0xff]
    %v7619 = vld [vmem:[#allocation6 + $0x30] sm:$0xff]
    %v7620 = vld [vmem:[#allocation6 + $0x50] sm:$0xff]
    %v7621 = vld [vmem:[#allocation6 + $0x70] sm:$0xff]
    %v7622 = vld [vmem:[#allocation6 + $0x90] sm:$0xf]
    %7628 = vrot.lane.b32.xlu0 %v7618, 96
    %v7629 = vpop.permute.xlu0 %7628
    %7630 = vrot.lane.b32.xlu0 %v7619, 96
    %v7631 = vpop.permute.xlu0 %7630
    %7632 = vrot.lane.b32.xlu0 %v7620, 96
    %v7633 = vpop.permute.xlu0 %7632
    %7634 = vrot.lane.b32.xlu0 %v7621, 96
    %v7635 = vpop.permute.xlu0 %7634
    %7636 = vrot.lane.b32.xlu0 %v7622, 96
    %v7637 = vpop.permute.xlu0 %7636
    %v7643 = vmax.f32 %v7618, %v7629
    %v7644 = vmax.f32 %v7619, %v7631
    %v7645 = vmax.f32 %v7620, %v7633
    %v7646 = vmax.f32 %v7621, %v7635
    %v7647 = vmax.f32 %v7622, %v7637
    %7648 = vst.msk [vmem:[#allocation7 + $0x8] sm:$0xff] %vm34, %v7643
    %7649 = vst.msk [vmem:[#allocation7 + $0x18] sm:$0xff] %vm34, %v7644
    %7650 = vst.msk [vmem:[#allocation7 + $0x28] sm:$0xff] %vm34, %v7645
    %7651 = vst.msk [vmem:[#allocation7 + $0x38] sm:$0xff] %vm34, %v7646
    %7652 = vst.msk [vmem:[#allocation7 + $0x48] sm:$0xf] %vm2769, %v7647
    %v7653 = vld [vmem:[#allocation6 + $0x10] sm:$0xff]
    %v7654 = vld [vmem:[#allocation6 + $0x30] sm:$0xff]
    %v7655 = vld [vmem:[#allocation6 + $0x50] sm:$0xff]
    %v7656 = vld [vmem:[#allocation6 + $0x70] sm:$0xff]
    %v7657 = vld [vmem:[#allocation6 + $0x90] sm:$0xf]
    %7663 = vrot.lane.b32.xlu0 %v7653, 96
    %v7664 = vpop.permute.xlu0 %7663
    %7665 = vrot.lane.b32.xlu0 %v7654, 96
    %v7666 = vpop.permute.xlu0 %7665
    %7667 = vrot.lane.b32.xlu0 %v7655, 96
    %v7668 = vpop.permute.xlu0 %7667
    %7669 = vrot.lane.b32.xlu0 %v7656, 96
    %v7670 = vpop.permute.xlu0 %7669
    %7671 = vrot.lane.b32.xlu0 %v7657, 96
    %v7672 = vpop.permute.xlu0 %7671
    %v7678 = vmax.f32 %v7653, %v7664
    %v7679 = vmax.f32 %v7654, %v7666
    %v7680 = vmax.f32 %v7655, %v7668
    %v7681 = vmax.f32 %v7656, %v7670
    %v7682 = vmax.f32 %v7657, %v7672
    %7688 = vrot.lane.b32.xlu0 %v7678, 96
    %v7689 = vpop.permute.xlu0 %7688
    %7690 = vrot.lane.b32.xlu0 %v7679, 96
    %v7691 = vpop.permute.xlu0 %7690
    %7692 = vrot.lane.b32.xlu0 %v7680, 96
    %v7693 = vpop.permute.xlu0 %7692
    %7694 = vrot.lane.b32.xlu0 %v7681, 96
    %v7695 = vpop.permute.xlu0 %7694
    %7696 = vrot.lane.b32.xlu0 %v7682, 96
    %v7697 = vpop.permute.xlu0 %7696
    %7703 = vst.msk [vmem:[#allocation7 + $0x8] sm:$0xff] %vm7497, %v7689
    %7704 = vst.msk [vmem:[#allocation7 + $0x18] sm:$0xff] %vm7497, %v7691
    %7705 = vst.msk [vmem:[#allocation7 + $0x28] sm:$0xff] %vm7497, %v7693
    %7706 = vst.msk [vmem:[#allocation7 + $0x38] sm:$0xff] %vm7497, %v7695
    %7707 = vst.msk [vmem:[#allocation7 + $0x48] sm:$0xf] %vm7502, %v7697
    %v7708 = vld [vmem:[#allocation6 + $0x18] sm:$0xff]
    %v7709 = vld [vmem:[#allocation6 + $0x38] sm:$0xff]
    %v7710 = vld [vmem:[#allocation6 + $0x58] sm:$0xff]
    %v7711 = vld [vmem:[#allocation6 + $0x78] sm:$0xff]
    %v7712 = vld [vmem:[#allocation6 + $0x98] sm:$0xf]
    %7718 = vrot.lane.b32.xlu0 %v7708, 96
    %v7719 = vpop.permute.xlu0 %7718
    %7720 = vrot.lane.b32.xlu0 %v7709, 96
    %v7721 = vpop.permute.xlu0 %7720
    %7722 = vrot.lane.b32.xlu0 %v7710, 96
    %v7723 = vpop.permute.xlu0 %7722
    %7724 = vrot.lane.b32.xlu0 %v7711, 96
    %v7725 = vpop.permute.xlu0 %7724
    %7726 = vrot.lane.b32.xlu0 %v7712, 96
    %v7727 = vpop.permute.xlu0 %7726
    %v7733 = vmax.f32 %v7708, %v7719
    %v7734 = vmax.f32 %v7709, %v7721
    %v7735 = vmax.f32 %v7710, %v7723
    %v7736 = vmax.f32 %v7711, %v7725
    %v7737 = vmax.f32 %v7712, %v7727
    %7743 = vrot.lane.b32.xlu0 %v7733, 64
    %v7744 = vpop.permute.xlu0 %7743
    %7745 = vrot.lane.b32.xlu0 %v7734, 64
    %v7746 = vpop.permute.xlu0 %7745
    %7747 = vrot.lane.b32.xlu0 %v7735, 64
    %v7748 = vpop.permute.xlu0 %7747
    %7749 = vrot.lane.b32.xlu0 %v7736, 64
    %v7750 = vpop.permute.xlu0 %7749
    %7751 = vrot.lane.b32.xlu0 %v7737, 64
    %v7752 = vpop.permute.xlu0 %7751
    %7758 = vst.msk [vmem:[#allocation7 + $0x8] sm:$0xff] %vm7554, %v7744
    %7759 = vst.msk [vmem:[#allocation7 + $0x18] sm:$0xff] %vm7554, %v7746
    %7760 = vst.msk [vmem:[#allocation7 + $0x28] sm:$0xff] %vm7554, %v7748
    %7761 = vst.msk [vmem:[#allocation7 + $0x38] sm:$0xff] %vm7554, %v7750
    %7762 = vst.msk [vmem:[#allocation7 + $0x48] sm:$0xf] %vm7559, %v7752
    %v7763 = vld [vmem:[%s4] sm:$0x3]
    %v7764 = vld [vmem:[#allocation7] ss:$8 sm:$0x3]
    %s7765 = scalar_lea.vmem [#allocation7], 1
    %v7766 = vld [vmem:[%s7765] ss:$8 sm:$0x3]
    %v7767 = vmax.f32 %v7764, %v7766
    %v7768 = vadd.f32 %v7767, %v7763
    %v7769 = vmax.f32 %v7768, 0.0
    %vm7770 = vcmp.ge.s32.totalorder %v2784, 0
    %vm7771 = vcmp.lt.s32.totalorder %v2784, 224
    %vm7772 = vmand %vm7770, %vm7771
    %7773 = vst.msk [vmem:[#allocation8] ss:$2 sm:$0x3] %vm7772, %v7769
    %s7774 = scalar_lea.vmem [#allocation7], 2
    %v7775 = vld [vmem:[%s7774] ss:$8 sm:$0x3]
    %s7776 = scalar_lea.vmem [#allocation7], 3
    %v7777 = vld [vmem:[%s7776] ss:$8 sm:$0x3]
    %v7778 = vmax.f32 %v7775, %v7777
    %v7779 = vadd.f32 %v7778, %v7763
    %v7780 = vmax.f32 %v7779, 0.0
    %7782 = vrot.lane.b32.xlu0 %v7780, 96
    %v7783 = vpop.permute.xlu0 %7782
    %v7784 = vrot.slane %v7783, 7
    %vm7785 = vcmask 785408
    %v7786 = vsel %vm7785, %v7784, %v7783
    %vm7788 = vcmp.ge.s32.totalorder %v2784, 96
    %vm7789 = vcmp.lt.s32.totalorder %v2784, 320
    %vm7790 = vmand %vm7788, %vm7789
    %s7791 = scalar_lea.vmem [#allocation8], 2
    %7792 = vst.msk [vmem:[%s7791] ss:$2 sm:$0x7] %vm7790, %v7786
    %s7793 = scalar_lea.vmem [#allocation7], 4
    %v7794 = vld [vmem:[%s7793] ss:$8 sm:$0x3]
    %s7795 = scalar_lea.vmem [#allocation7], 5
    %v7796 = vld [vmem:[%s7795] ss:$8 sm:$0x3]
    %v7797 = vmax.f32 %v7794, %v7796
    %v7798 = vadd.f32 %v7797, %v7763
    %v7799 = vmax.f32 %v7798, 0.0
    %7801 = vrot.lane.b32.xlu0 %v7799, 64
    %v7802 = vpop.permute.xlu0 %7801
    %v7803 = vrot.slane %v7802, 7
    %v7804 = vsel %vm286, %v7803, %v7802
    %vm7806 = vcmp.ge.s32.totalorder %v2784, 64
    %vm7807 = vcmp.lt.s32.totalorder %v2784, 288
    %vm7808 = vmand %vm7806, %vm7807
    %s7809 = scalar_lea.vmem [#allocation8], 6
    %7810 = vst.msk [vmem:[%s7809] ss:$2 sm:$0x7] %vm7808, %v7804
    %s7811 = scalar_lea.vmem [#allocation7], 6
    %v7812 = vld [vmem:[%s7811] ss:$8 sm:$0x3]
    %s7813 = scalar_lea.vmem [#allocation7], 7
    %v7814 = vld [vmem:[%s7813] ss:$8 sm:$0x3]
    %v7815 = vmax.f32 %v7812, %v7814
    %v7816 = vadd.f32 %v7815, %v7763
    %v7817 = vmax.f32 %v7816, 0.0
    %7819 = vrot.lane.b32.xlu0 %v7817, 32
    %v7820 = vpop.permute.xlu0 %7819
    %v7821 = vrot.slane %v7820, 7
    %v7822 = vsel %vm34, %v7821, %v7820
    %s7824 = scalar_lea.vmem [#allocation8], 10
    %7825 = vst.msk [vmem:[%s7824] ss:$2 sm:$0x3] %vm2787, %v7822
    %s7826 = scalar_lea.vmem [#allocation7], 16
    %v7827 = vld [vmem:[%s7826] ss:$8 sm:$0x3]
    %s7828 = scalar_lea.vmem [#allocation7], 17
    %v7829 = vld [vmem:[%s7828] ss:$8 sm:$0x3]
    %v7830 = vmax.f32 %v7827, %v7829
    %v7831 = vadd.f32 %v7830, %v7763
    %v7832 = vmax.f32 %v7831, 0.0
    %s7833 = scalar_lea.vmem [#allocation8], 14
    %7834 = vst.msk [vmem:[%s7833] ss:$2 sm:$0x3] %vm7772, %v7832
    %s7835 = scalar_lea.vmem [#allocation7], 18
    %v7836 = vld [vmem:[%s7835] ss:$8 sm:$0x3]
    %s7837 = scalar_lea.vmem [#allocation7], 19
    %v7838 = vld [vmem:[%s7837] ss:$8 sm:$0x3]
    %v7839 = vmax.f32 %v7836, %v7838
    %v7840 = vadd.f32 %v7839, %v7763
    %v7841 = vmax.f32 %v7840, 0.0
    %7843 = vrot.lane.b32.xlu0 %v7841, 96
    %v7844 = vpop.permute.xlu0 %7843
    %v7845 = vrot.slane %v7844, 7
    %v7846 = vsel %vm7785, %v7845, %v7844
    %s7848 = scalar_lea.vmem [#allocation8], 16
    %7849 = vst.msk [vmem:[%s7848] ss:$2 sm:$0x7] %vm7790, %v7846
    %s7850 = scalar_lea.vmem [#allocation7], 20
    %v7851 = vld [vmem:[%s7850] ss:$8 sm:$0x3]
    %s7852 = scalar_lea.vmem [#allocation7], 21
    %v7853 = vld [vmem:[%s7852] ss:$8 sm:$0x3]
    %v7854 = vmax.f32 %v7851, %v7853
    %v7855 = vadd.f32 %v7854, %v7763
    %v7856 = vmax.f32 %v7855, 0.0
    %7858 = vrot.lane.b32.xlu0 %v7856, 64
    %v7859 = vpop.permute.xlu0 %7858
    %v7860 = vrot.slane %v7859, 7
    %v7861 = vsel %vm286, %v7860, %v7859
    %s7863 = scalar_lea.vmem [#allocation8], 20
    %7864 = vst.msk [vmem:[%s7863] ss:$2 sm:$0x7] %vm7808, %v7861
    %s7865 = scalar_lea.vmem [#allocation7], 34
    %v7866 = vld [vmem:[%s7865] ss:$8 sm:$0x3]
    %s7867 = scalar_lea.vmem [#allocation7], 35
    %v7868 = vld [vmem:[%s7867] ss:$8 sm:$0x3]
    %v7869 = vmax.f32 %v7866, %v7868
    %v7870 = vadd.f32 %v7869, %v7763
    %v7871 = vmax.f32 %v7870, 0.0
    %s7872 = scalar_lea.vmem [#allocation8], 1
    %7873 = vst.msk [vmem:[%s7872] ss:$2 sm:$0x3] %vm7772, %v7871
    %s7874 = scalar_lea.vmem [#allocation7], 36
    %v7875 = vld [vmem:[%s7874] ss:$8 sm:$0x3]
    %s7876 = scalar_lea.vmem [#allocation7], 37
    %v7877 = vld [vmem:[%s7876] ss:$8 sm:$0x3]
    %v7878 = vmax.f32 %v7875, %v7877
    %v7879 = vadd.f32 %v7878, %v7763
    %v7880 = vmax.f32 %v7879, 0.0
    %7882 = vrot.lane.b32.xlu0 %v7880, 96
    %v7883 = vpop.permute.xlu0 %7882
    %v7884 = vrot.slane %v7883, 7
    %v7885 = vsel %vm7785, %v7884, %v7883
    %s7887 = scalar_lea.vmem [#allocation8], 3
    %7888 = vst.msk [vmem:[%s7887] ss:$2 sm:$0x7] %vm7790, %v7885
    %s7889 = scalar_lea.vmem [#allocation7], 38
    %v7890 = vld [vmem:[%s7889] ss:$8 sm:$0x3]
    %s7891 = scalar_lea.vmem [#allocation7], 39
    %v7892 = vld [vmem:[%s7891] ss:$8 sm:$0x3]
    %v7893 = vmax.f32 %v7890, %v7892
    %v7894 = vadd.f32 %v7893, %v7763
    %v7895 = vmax.f32 %v7894, 0.0
    %7897 = vrot.lane.b32.xlu0 %v7895, 64
    %v7898 = vpop.permute.xlu0 %7897
    %v7899 = vrot.slane %v7898, 7
    %v7900 = vsel %vm286, %v7899, %v7898
    %s7902 = scalar_lea.vmem [#allocation8], 7
    %7903 = vst.msk [vmem:[%s7902] ss:$2 sm:$0x7] %vm7808, %v7900
    %s7904 = scalar_lea.vmem [#allocation7], 48
    %v7905 = vld [vmem:[%s7904] ss:$8 sm:$0x3]
    %s7906 = scalar_lea.vmem [#allocation7], 49
    %v7907 = vld [vmem:[%s7906] ss:$8 sm:$0x3]
    %v7908 = vmax.f32 %v7905, %v7907
    %v7909 = vadd.f32 %v7908, %v7763
    %v7910 = vmax.f32 %v7909, 0.0
    %7912 = vrot.lane.b32.xlu0 %v7910, 32
    %v7913 = vpop.permute.xlu0 %7912
    %v7914 = vrot.slane %v7913, 7
    %v7915 = vsel %vm34, %v7914, %v7913
    %s7917 = scalar_lea.vmem [#allocation8], 11
    %7918 = vst.msk [vmem:[%s7917] ss:$2 sm:$0x3] %vm2787, %v7915
    %s7919 = scalar_lea.vmem [#allocation7], 50
    %v7920 = vld [vmem:[%s7919] ss:$8 sm:$0x3]
    %s7921 = scalar_lea.vmem [#allocation7], 51
    %v7922 = vld [vmem:[%s7921] ss:$8 sm:$0x3]
    %v7923 = vmax.f32 %v7920, %v7922
    %v7924 = vadd.f32 %v7923, %v7763
    %v7925 = vmax.f32 %v7924, 0.0
    %s7926 = scalar_lea.vmem [#allocation8], 15
    %7927 = vst.msk [vmem:[%s7926] ss:$2 sm:$0x3] %vm7772, %v7925
    %s7928 = scalar_lea.vmem [#allocation7], 52
    %v7929 = vld [vmem:[%s7928] ss:$8 sm:$0x3]
    %s7930 = scalar_lea.vmem [#allocation7], 53
    %v7931 = vld [vmem:[%s7930] ss:$8 sm:$0x3]
    %v7932 = vmax.f32 %v7929, %v7931
    %v7933 = vadd.f32 %v7932, %v7763
    %v7934 = vmax.f32 %v7933, 0.0
    %7936 = vrot.lane.b32.xlu0 %v7934, 96
    %v7937 = vpop.permute.xlu0 %7936
    %v7938 = vrot.slane %v7937, 7
    %v7939 = vsel %vm7785, %v7938, %v7937
    %s7941 = scalar_lea.vmem [#allocation8], 17
    %7942 = vst.msk [vmem:[%s7941] ss:$2 sm:$0x7] %vm7790, %v7939
    %s7943 = scalar_lea.vmem [#allocation7], 54
    %v7944 = vld [vmem:[%s7943] ss:$8 sm:$0x3]
    %s7945 = scalar_lea.vmem [#allocation7], 55
    %v7946 = vld [vmem:[%s7945] ss:$8 sm:$0x3]
    %v7947 = vmax.f32 %v7944, %v7946
    %v7948 = vadd.f32 %v7947, %v7763
    %v7949 = vmax.f32 %v7948, 0.0
    %7951 = vrot.lane.b32.xlu0 %v7949, 64
    %v7952 = vpop.permute.xlu0 %7951
    %v7953 = vrot.slane %v7952, 7
    %v7954 = vsel %vm286, %v7953, %v7952
    %s7956 = scalar_lea.vmem [#allocation8], 21
    %7957 = vst.msk [vmem:[%s7956] ss:$2 sm:$0x7] %vm7808, %v7954
    %v7958 = vld [vmem:[#allocation8] sm:$0xff]
    %v7959 = vld [vmem:[#allocation8 + $0x8] sm:$0xff]
    %v7960 = vld [vmem:[#allocation8 + $0x10] sm:$0xff]
    %v7961 = vld [vmem:[#allocation8 + $0x18] sm:$0x3]
    %7966 = vst [vmem:[#allocation1] ss:$4 sm:$0xff] %v7958
    %s7967 = scalar_lea.vmem [#allocation1], 32
    %7968 = vst [vmem:[%s7967] ss:$4 sm:$0xff] %v7959
    %v7969 = vld.sshfl [vmem:[#allocation1] sm:$0xff pattern:$0x73625140]
    %v7970 = vld.sshfl [vmem:[#allocation1 + $0x8] sm:$0xff pattern:$0x73625140]
    %v7971 = vld.sshfl [vmem:[#allocation1 + $0x10] sm:$0xff pattern:$0x73625140]
    %v7972 = vld.sshfl [vmem:[#allocation1 + $0x18] sm:$0xff pattern:$0x73625140]
    %v7973 = vld.sshfl [vmem:[#allocation1 + $0x20] sm:$0xff pattern:$0x73625140]
    %v7974 = vld.sshfl [vmem:[#allocation1 + $0x28] sm:$0xff pattern:$0x73625140]
    %v7975 = vld.sshfl [vmem:[#allocation1 + $0x30] sm:$0xff pattern:$0x73625140]
    %v7976 = vld.sshfl [vmem:[#allocation1 + $0x38] sm:$0xff pattern:$0x73625140]
    %7977 = vst [vmem:[#allocation1] ss:$4 sm:$0xff] %v7960
    %7978 = vst [vmem:[%s7967] ss:$4 sm:$0xff] %v7961
    %v7979 = vld.sshfl [vmem:[#allocation1] sm:$0xff pattern:$0x73625140]
    %v7980 = vld.sshfl [vmem:[#allocation1 + $0x8] sm:$0xff pattern:$0x73625140]
    %v7981 = vld.sshfl [vmem:[#allocation1 + $0x10] sm:$0xff pattern:$0x73625140]
    %v7982 = vld.sshfl [vmem:[#allocation1 + $0x18] sm:$0xff pattern:$0x73625140]
    %v7983 = vld.sshfl [vmem:[#allocation1 + $0x20] sm:$0xff pattern:$0x73625140]
    %v7997 = vpack.c.bf16 %v7969, %v7969
    %v7998 = vpack.c.bf16 %v7970, %v7970
    %v7999 = vpack.c.bf16 %v7971, %v7971
    %v8000 = vpack.c.bf16 %v7972, %v7972
    %v8001 = vpack.c.bf16 %v7973, %v7973
    %v8002 = vpack.c.bf16 %v7974, %v7974
    %v8003 = vpack.c.bf16 %v7975, %v7975
    %v8004 = vpack.c.bf16 %v7976, %v7976
    %v8005 = vpack.c.bf16 %v7979, %v7979
    %v8006 = vpack.c.bf16 %v7980, %v7980
    %v8007 = vpack.c.bf16 %v7981, %v7981
    %v8008 = vpack.c.bf16 %v7982, %v7982
    %v8009 = vpack.c.bf16 %v7983, %v7983
    %v8010 = vld [vmem:[%s5] sm:$0xff]
    %v8011 = vld [vmem:[%s5 + $0x8] sm:$0xff]
    %v8012 = vld [vmem:[%s5 + $0x10] sm:$0xff]
    %v8013 = vld [vmem:[%s5 + $0x18] sm:$0xff]
    %v8014 = vld [vmem:[%s5 + $0x20] sm:$0xff]
    %v8015 = vld [vmem:[%s5 + $0x28] sm:$0xff]
    %v8016 = vld [vmem:[%s5 + $0x30] sm:$0xff]
    %v8017 = vld [vmem:[%s5 + $0x38] sm:$0xff]
    %v8018 = vld [vmem:[%s5 + $0x40] sm:$0xff]
    %v8019 = vld [vmem:[%s5 + $0x48] sm:$0xff]
    %v8020 = vld [vmem:[%s5 + $0x50] sm:$0xff]
    %v8021 = vld [vmem:[%s5 + $0x58] sm:$0xff]
    %v8022 = vld [vmem:[%s5 + $0x60] sm:$0xff]
    %v8023 = vld [vmem:[%s5 + $0x68] sm:$0xff]
    %v8024 = vld [vmem:[%s5 + $0x70] sm:$0xff]
    %v8025 = vld [vmem:[%s5 + $0x78] sm:$0xff]
    %v8026 = vld [vmem:[%s5 + $0x80] sm:$0xff]
    %v8027 = vld [vmem:[%s5 + $0x88] sm:$0xff]
    %v8028 = vld [vmem:[%s5 + $0x90] sm:$0xff]
    %v8029 = vld [vmem:[%s5 + $0x98] sm:$0xff]
    %v8030 = vld [vmem:[%s5 + $0xa0] sm:$0xff]
    %v8031 = vld [vmem:[%s5 + $0xa8] sm:$0xff]
    %v8032 = vld [vmem:[%s5 + $0xb0] sm:$0xff]
    %v8033 = vld [vmem:[%s5 + $0xb8] sm:$0xff]
    %v8034 = vld [vmem:[%s5 + $0xc0] sm:$0xff]
    %v8035 = vld [vmem:[%s5 + $0xc8] sm:$0xff]
    %v8036 = vld [vmem:[%s5 + $0xd0] sm:$0xff]
    %v8037 = vld [vmem:[%s5 + $0xd8] sm:$0xff]
    %v8038 = vld [vmem:[%s5 + $0xe0] sm:$0xff]
    %v8039 = vld [vmem:[%s5 + $0xe8] sm:$0xff]
    %v8040 = vld [vmem:[%s5 + $0xf0] sm:$0xff]
    %v8041 = vld [vmem:[%s5 + $0xf8] sm:$0xff]
    %v8042 = vld [vmem:[%s5 + $0x100] sm:$0xff]
    %v8043 = vld [vmem:[%s5 + $0x108] sm:$0xff]
    %v8044 = vld [vmem:[%s5 + $0x110] sm:$0xff]
    %v8045 = vld [vmem:[%s5 + $0x118] sm:$0xff]
    %v8046 = vld [vmem:[%s5 + $0x120] sm:$0xff]
    %v8047 = vld [vmem:[%s5 + $0x128] sm:$0xff]
    %v8048 = vld [vmem:[%s5 + $0x130] sm:$0xff]
    %v8049 = vld [vmem:[%s5 + $0x138] sm:$0xff]
    %v8050 = vld [vmem:[%s5 + $0x140] sm:$0xff]
    %v8051 = vld [vmem:[%s5 + $0x148] sm:$0xff]
    %v8052 = vld [vmem:[%s5 + $0x150] sm:$0xff]
    %v8053 = vld [vmem:[%s5 + $0x158] sm:$0xff]
    %v8054 = vld [vmem:[%s5 + $0x160] sm:$0xff]
    %v8055 = vld [vmem:[%s5 + $0x168] sm:$0xff]
    %v8056 = vld [vmem:[%s5 + $0x170] sm:$0xff]
    %v8057 = vld [vmem:[%s5 + $0x178] sm:$0xff]
    %v8058 = vld [vmem:[%s5 + $0x180] sm:$0xff]
    %v8059 = vld [vmem:[%s5 + $0x188] sm:$0xff]
    %v8060 = vld [vmem:[%s5 + $0x190] sm:$0xff]
    %v8061 = vld [vmem:[%s5 + $0x198] sm:$0xff]
    %v8062 = vld [vmem:[%s5 + $0x1a0] sm:$0xff]
    %v8063 = vld [vmem:[%s5 + $0x1a8] sm:$0xff]
    %v8064 = vld [vmem:[%s5 + $0x1b0] sm:$0xff]
    %v8065 = vld [vmem:[%s5 + $0x1b8] sm:$0xff]
    %v8066 = vld [vmem:[%s5 + $0x1c0] sm:$0xff]
    %v8067 = vld [vmem:[%s5 + $0x1c8] sm:$0xff]
    %v8068 = vld [vmem:[%s5 + $0x1d0] sm:$0xff]
    %v8069 = vld [vmem:[%s5 + $0x1d8] sm:$0xff]
    %v8070 = vld [vmem:[%s5 + $0x1e0] sm:$0xff]
    %v8071 = vld [vmem:[%s5 + $0x1e8] sm:$0xff]
    %v8072 = vld [vmem:[%s5 + $0x1f0] sm:$0xff]
    %v8073 = vld [vmem:[%s5 + $0x1f8] sm:$0xff]
    %v8074 = vld [vmem:[%s5 + $0x200] sm:$0xff]
    %v8075 = vld [vmem:[%s5 + $0x208] sm:$0xff]
    %v8076 = vld [vmem:[%s5 + $0x210] sm:$0xff]
    %v8077 = vld [vmem:[%s5 + $0x218] sm:$0xff]
    %v8078 = vld [vmem:[%s5 + $0x220] sm:$0xff]
    %v8079 = vld [vmem:[%s5 + $0x228] sm:$0xff]
    %v8080 = vld [vmem:[%s5 + $0x230] sm:$0xff]
    %v8081 = vld [vmem:[%s5 + $0x238] sm:$0xff]
    %v8082 = vld [vmem:[%s5 + $0x240] sm:$0xff]
    %v8083 = vld [vmem:[%s5 + $0x248] sm:$0xff]
    %v8084 = vld [vmem:[%s5 + $0x250] sm:$0xff]
    %v8085 = vld [vmem:[%s5 + $0x258] sm:$0xff]
    %v8086 = vld [vmem:[%s5 + $0x260] sm:$0xff]
    %v8087 = vld [vmem:[%s5 + $0x268] sm:$0xff]
    %v8088 = vld [vmem:[%s5 + $0x270] sm:$0xff]
    %v8089 = vld [vmem:[%s5 + $0x278] sm:$0xff]
    %v8090 = vld [vmem:[%s5 + $0x280] sm:$0xff]
    %v8091 = vld [vmem:[%s5 + $0x288] sm:$0xff]
    %v8092 = vld [vmem:[%s5 + $0x290] sm:$0xff]
    %v8093 = vld [vmem:[%s5 + $0x298] sm:$0xff]
    %v8094 = vld [vmem:[%s5 + $0x2a0] sm:$0xff]
    %v8095 = vld [vmem:[%s5 + $0x2a8] sm:$0xff]
    %v8096 = vld [vmem:[%s5 + $0x2b0] sm:$0xff]
    %v8097 = vld [vmem:[%s5 + $0x2b8] sm:$0xff]
    %v8098 = vld [vmem:[%s5 + $0x2c0] sm:$0xff]
    %v8099 = vld [vmem:[%s5 + $0x2c8] sm:$0xff]
    %v8100 = vld [vmem:[%s5 + $0x2d0] sm:$0xff]
    %v8101 = vld [vmem:[%s5 + $0x2d8] sm:$0xff]
    %v8102 = vld [vmem:[%s5 + $0x2e0] sm:$0xff]
    %v8103 = vld [vmem:[%s5 + $0x2e8] sm:$0xff]
    %v8104 = vld [vmem:[%s5 + $0x2f0] sm:$0xff]
    %v8105 = vld [vmem:[%s5 + $0x2f8] sm:$0xff]
    %v8106 = vld [vmem:[%s5 + $0x300] sm:$0xff]
    %v8107 = vld [vmem:[%s5 + $0x308] sm:$0xff]
    %v8108 = vld [vmem:[%s5 + $0x310] sm:$0xff]
    %v8109 = vld [vmem:[%s5 + $0x318] sm:$0xff]
    %v8110 = vld [vmem:[%s5 + $0x320] sm:$0xff]
    %v8111 = vld [vmem:[%s5 + $0x328] sm:$0xff]
    %v8112 = vld [vmem:[%s5 + $0x330] sm:$0xff]
    %v8113 = vld [vmem:[%s5 + $0x338] sm:$0xff]
    %v8114 = vld [vmem:[%s5 + $0x340] sm:$0xff]
    %v8115 = vld [vmem:[%s5 + $0x348] sm:$0xff]
    %v8116 = vld [vmem:[%s5 + $0x350] sm:$0xff]
    %v8117 = vld [vmem:[%s5 + $0x358] sm:$0xff]
    %v8118 = vld [vmem:[%s5 + $0x360] sm:$0xff]
    %v8119 = vld [vmem:[%s5 + $0x368] sm:$0xff]
    %v8120 = vld [vmem:[%s5 + $0x370] sm:$0xff]
    %v8121 = vld [vmem:[%s5 + $0x378] sm:$0xff]
    %v8122 = vld [vmem:[%s5 + $0x380] sm:$0xff]
    %v8123 = vld [vmem:[%s5 + $0x388] sm:$0xff]
    %v8124 = vld [vmem:[%s5 + $0x390] sm:$0xff]
    %v8125 = vld [vmem:[%s5 + $0x398] sm:$0xff]
    %v8126 = vld [vmem:[%s5 + $0x3a0] sm:$0xff]
    %v8127 = vld [vmem:[%s5 + $0x3a8] sm:$0xff]
    %v8128 = vld [vmem:[%s5 + $0x3b0] sm:$0xff]
    %v8129 = vld [vmem:[%s5 + $0x3b8] sm:$0xff]
    %v8130 = vld [vmem:[%s5 + $0x3c0] sm:$0xff]
    %v8131 = vld [vmem:[%s5 + $0x3c8] sm:$0xff]
    %v8132 = vld [vmem:[%s5 + $0x3d0] sm:$0xff]
    %v8133 = vld [vmem:[%s5 + $0x3d8] sm:$0xff]
    %v8134 = vld [vmem:[%s5 + $0x3e0] sm:$0xff]
    %v8135 = vld [vmem:[%s5 + $0x3e8] sm:$0xff]
    %v8136 = vld [vmem:[%s5 + $0x3f0] sm:$0xff]
    %v8137 = vld [vmem:[%s5 + $0x3f8] sm:$0xff]
    %v8138 = vld [vmem:[%s5 + $0x400] sm:$0xff]
    %v8139 = vld [vmem:[%s5 + $0x408] sm:$0xff]
    %v8140 = vld [vmem:[%s5 + $0x410] sm:$0xff]
    %v8141 = vld [vmem:[%s5 + $0x418] sm:$0xff]
    %v8142 = vld [vmem:[%s5 + $0x420] sm:$0xff]
    %v8143 = vld [vmem:[%s5 + $0x428] sm:$0xff]
    %v8144 = vld [vmem:[%s5 + $0x430] sm:$0xff]
    %v8145 = vld [vmem:[%s5 + $0x438] sm:$0xff]
    %v8146 = vld [vmem:[%s5 + $0x440] sm:$0xff]
    %v8147 = vld [vmem:[%s5 + $0x448] sm:$0xff]
    %v8148 = vld [vmem:[%s5 + $0x450] sm:$0xff]
    %v8149 = vld [vmem:[%s5 + $0x458] sm:$0xff]
    %v8150 = vld [vmem:[%s5 + $0x460] sm:$0xff]
    %v8151 = vld [vmem:[%s5 + $0x468] sm:$0xff]
    %v8152 = vld [vmem:[%s5 + $0x470] sm:$0xff]
    %v8153 = vld [vmem:[%s5 + $0x478] sm:$0xff]
    %v8154 = vld [vmem:[%s5 + $0x480] sm:$0xff]
    %v8155 = vld [vmem:[%s5 + $0x488] sm:$0xff]
    %v8156 = vld [vmem:[%s5 + $0x490] sm:$0xff]
    %v8157 = vld [vmem:[%s5 + $0x498] sm:$0xff]
    %v8158 = vld [vmem:[%s5 + $0x4a0] sm:$0xff]
    %v8159 = vld [vmem:[%s5 + $0x4a8] sm:$0xff]
    %v8160 = vld [vmem:[%s5 + $0x4b0] sm:$0xff]
    %v8161 = vld [vmem:[%s5 + $0x4b8] sm:$0xff]
    %v8162 = vld [vmem:[%s5 + $0x4c0] sm:$0xff]
    %v8163 = vld [vmem:[%s5 + $0x4c8] sm:$0xff]
    %v8164 = vld [vmem:[%s5 + $0x4d0] sm:$0xff]
    %v8165 = vld [vmem:[%s5 + $0x4d8] sm:$0xff]
    %v8166 = vld [vmem:[%s5 + $0x4e0] sm:$0xff]
    %v8167 = vld [vmem:[%s5 + $0x4e8] sm:$0xff]
    %v8168 = vld [vmem:[%s5 + $0x4f0] sm:$0xff]
    %v8169 = vld [vmem:[%s5 + $0x4f8] sm:$0xff]
    %v8170 = vld [vmem:[%s5 + $0x500] sm:$0xff]
    %v8171 = vld [vmem:[%s5 + $0x508] sm:$0xff]
    %v8172 = vld [vmem:[%s5 + $0x510] sm:$0xff]
    %v8173 = vld [vmem:[%s5 + $0x518] sm:$0xff]
    %v8174 = vld [vmem:[%s5 + $0x520] sm:$0xff]
    %v8175 = vld [vmem:[%s5 + $0x528] sm:$0xff]
    %v8176 = vld [vmem:[%s5 + $0x530] sm:$0xff]
    %v8177 = vld [vmem:[%s5 + $0x538] sm:$0xff]
    %v8178 = vld [vmem:[%s5 + $0x540] sm:$0xff]
    %v8179 = vld [vmem:[%s5 + $0x548] sm:$0xff]
    %v8180 = vld [vmem:[%s5 + $0x550] sm:$0xff]
    %v8181 = vld [vmem:[%s5 + $0x558] sm:$0xff]
    %v8182 = vld [vmem:[%s5 + $0x560] sm:$0xff]
    %v8183 = vld [vmem:[%s5 + $0x568] sm:$0xff]
    %v8184 = vld [vmem:[%s5 + $0x570] sm:$0xff]
    %v8185 = vld [vmem:[%s5 + $0x578] sm:$0xff]
    %v8186 = vld [vmem:[%s5 + $0x580] sm:$0xff]
    %v8187 = vld [vmem:[%s5 + $0x588] sm:$0xff]
    %v8188 = vld [vmem:[%s5 + $0x590] sm:$0xff]
    %v8189 = vld [vmem:[%s5 + $0x598] sm:$0xff]
    %v8190 = vld [vmem:[%s5 + $0x5a0] sm:$0xff]
    %v8191 = vld [vmem:[%s5 + $0x5a8] sm:$0xff]
    %v8192 = vld [vmem:[%s5 + $0x5b0] sm:$0xff]
    %v8193 = vld [vmem:[%s5 + $0x5b8] sm:$0xff]
    %v8194 = vld [vmem:[%s5 + $0x5c0] sm:$0xff]
    %v8195 = vld [vmem:[%s5 + $0x5c8] sm:$0xff]
    %v8196 = vld [vmem:[%s5 + $0x5d0] sm:$0xff]
    %v8197 = vld [vmem:[%s5 + $0x5d8] sm:$0xff]
    %v8198 = vld [vmem:[%s5 + $0x5e0] sm:$0xff]
    %v8199 = vld [vmem:[%s5 + $0x5e8] sm:$0xff]
    %v8200 = vld [vmem:[%s5 + $0x5f0] sm:$0xff]
    %v8201 = vld [vmem:[%s5 + $0x5f8] sm:$0xff]
    %v8202 = vld [vmem:[%s5 + $0x600] sm:$0xff]
    %v8203 = vld [vmem:[%s5 + $0x608] sm:$0xff]
    %v8204 = vld [vmem:[%s5 + $0x610] sm:$0xff]
    %v8205 = vld [vmem:[%s5 + $0x618] sm:$0xff]
    %v8206 = vld [vmem:[%s5 + $0x620] sm:$0xff]
    %v8207 = vld [vmem:[%s5 + $0x628] sm:$0xff]
    %v8208 = vld [vmem:[%s5 + $0x630] sm:$0xff]
    %v8209 = vld [vmem:[%s5 + $0x638] sm:$0xff]
    %v8210 = vld [vmem:[%s5 + $0x640] sm:$0xff]
    %v8211 = vld [vmem:[%s5 + $0x648] sm:$0xff]
    %v8212 = vld [vmem:[%s5 + $0x650] sm:$0xff]
    %v8213 = vld [vmem:[%s5 + $0x658] sm:$0xff]
    %v8214 = vld [vmem:[%s5 + $0x660] sm:$0xff]
    %v8215 = vld [vmem:[%s5 + $0x668] sm:$0xff]
    %v8216 = vld [vmem:[%s5 + $0x670] sm:$0xff]
    %v8217 = vld [vmem:[%s5 + $0x678] sm:$0xff]
    %v8218 = vld [vmem:[%s5 + $0x680] sm:$0xff]
    %v8219 = vld [vmem:[%s5 + $0x688] sm:$0xff]
    %v8220 = vld [vmem:[%s5 + $0x690] sm:$0xff]
    %v8221 = vld [vmem:[%s5 + $0x698] sm:$0xff]
    %v8222 = vld [vmem:[%s5 + $0x6a0] sm:$0xff]
    %v8223 = vld [vmem:[%s5 + $0x6a8] sm:$0xff]
    %v8224 = vld [vmem:[%s5 + $0x6b0] sm:$0xff]
    %v8225 = vld [vmem:[%s5 + $0x6b8] sm:$0xff]
    %v8226 = vld [vmem:[%s5 + $0x6c0] sm:$0xff]
    %v8227 = vld [vmem:[%s5 + $0x6c8] sm:$0xff]
    %v8228 = vld [vmem:[%s5 + $0x6d0] sm:$0xff]
    %v8229 = vld [vmem:[%s5 + $0x6d8] sm:$0xff]
    %v8230 = vld [vmem:[%s5 + $0x6e0] sm:$0xff]
    %v8231 = vld [vmem:[%s5 + $0x6e8] sm:$0xff]
    %v8232 = vld [vmem:[%s5 + $0x6f0] sm:$0xff]
    %v8233 = vld [vmem:[%s5 + $0x6f8] sm:$0xff]
    %v8234 = vld [vmem:[%s5 + $0x700] sm:$0xff]
    %v8235 = vld [vmem:[%s5 + $0x708] sm:$0xff]
    %v8236 = vld [vmem:[%s5 + $0x710] sm:$0xff]
    %v8237 = vld [vmem:[%s5 + $0x718] sm:$0xff]
    %v8238 = vld [vmem:[%s5 + $0x720] sm:$0xff]
    %v8239 = vld [vmem:[%s5 + $0x728] sm:$0xff]
    %v8240 = vld [vmem:[%s5 + $0x730] sm:$0xff]
    %v8241 = vld [vmem:[%s5 + $0x738] sm:$0xff]
    %v8242 = vld [vmem:[%s5 + $0x740] sm:$0xff]
    %v8243 = vld [vmem:[%s5 + $0x748] sm:$0xff]
    %v8244 = vld [vmem:[%s5 + $0x750] sm:$0xff]
    %v8245 = vld [vmem:[%s5 + $0x758] sm:$0xff]
    %v8246 = vld [vmem:[%s5 + $0x760] sm:$0xff]
    %v8247 = vld [vmem:[%s5 + $0x768] sm:$0xff]
    %v8248 = vld [vmem:[%s5 + $0x770] sm:$0xff]
    %v8249 = vld [vmem:[%s5 + $0x778] sm:$0xff]
    %v8250 = vld [vmem:[%s5 + $0x780] sm:$0xff]
    %v8251 = vld [vmem:[%s5 + $0x788] sm:$0xff]
    %v8252 = vld [vmem:[%s5 + $0x790] sm:$0xff]
    %v8253 = vld [vmem:[%s5 + $0x798] sm:$0xff]
    %v8254 = vld [vmem:[%s5 + $0x7a0] sm:$0xff]
    %v8255 = vld [vmem:[%s5 + $0x7a8] sm:$0xff]
    %v8256 = vld [vmem:[%s5 + $0x7b0] sm:$0xff]
    %v8257 = vld [vmem:[%s5 + $0x7b8] sm:$0xff]
    %v8258 = vld [vmem:[%s5 + $0x7c0] sm:$0xff]
    %v8259 = vld [vmem:[%s5 + $0x7c8] sm:$0xff]
    %v8260 = vld [vmem:[%s5 + $0x7d0] sm:$0xff]
    %v8261 = vld [vmem:[%s5 + $0x7d8] sm:$0xff]
    %v8262 = vld [vmem:[%s5 + $0x7e0] sm:$0xff]
    %v8263 = vld [vmem:[%s5 + $0x7e8] sm:$0xff]
    %v8264 = vld [vmem:[%s5 + $0x7f0] sm:$0xff]
    %v8265 = vld [vmem:[%s5 + $0x7f8] sm:$0xff]
    %v8266 = vld [vmem:[%s5 + $0x800] sm:$0xff]
    %v8267 = vld [vmem:[%s5 + $0x808] sm:$0xff]
    %v8268 = vld [vmem:[%s5 + $0x810] sm:$0xff]
    %v8269 = vld [vmem:[%s5 + $0x818] sm:$0xff]
    %v8270 = vld [vmem:[%s5 + $0x820] sm:$0xff]
    %v8271 = vld [vmem:[%s5 + $0x828] sm:$0xff]
    %v8272 = vld [vmem:[%s5 + $0x830] sm:$0xff]
    %v8273 = vld [vmem:[%s5 + $0x838] sm:$0xff]
    %v8274 = vld [vmem:[%s5 + $0x840] sm:$0xff]
    %v8275 = vld [vmem:[%s5 + $0x848] sm:$0xff]
    %v8276 = vld [vmem:[%s5 + $0x850] sm:$0xff]
    %v8277 = vld [vmem:[%s5 + $0x858] sm:$0xff]
    %v8278 = vld [vmem:[%s5 + $0x860] sm:$0xff]
    %v8279 = vld [vmem:[%s5 + $0x868] sm:$0xff]
    %v8280 = vld [vmem:[%s5 + $0x870] sm:$0xff]
    %v8281 = vld [vmem:[%s5 + $0x878] sm:$0xff]
    %v8282 = vld [vmem:[%s5 + $0x880] sm:$0xff]
    %v8283 = vld [vmem:[%s5 + $0x888] sm:$0xff]
    %v8284 = vld [vmem:[%s5 + $0x890] sm:$0xff]
    %v8285 = vld [vmem:[%s5 + $0x898] sm:$0xff]
    %v8286 = vld [vmem:[%s5 + $0x8a0] sm:$0xff]
    %v8287 = vld [vmem:[%s5 + $0x8a8] sm:$0xff]
    %v8288 = vld [vmem:[%s5 + $0x8b0] sm:$0xff]
    %v8289 = vld [vmem:[%s5 + $0x8b8] sm:$0xff]
    %v8290 = vld [vmem:[%s5 + $0x8c0] sm:$0xff]
    %v8291 = vld [vmem:[%s5 + $0x8c8] sm:$0xff]
    %v8292 = vld [vmem:[%s5 + $0x8d0] sm:$0xff]
    %v8293 = vld [vmem:[%s5 + $0x8d8] sm:$0xff]
    %v8294 = vld [vmem:[%s5 + $0x8e0] sm:$0xff]
    %v8295 = vld [vmem:[%s5 + $0x8e8] sm:$0xff]
    %v8296 = vld [vmem:[%s5 + $0x8f0] sm:$0xff]
    %v8297 = vld [vmem:[%s5 + $0x8f8] sm:$0xff]
    %v8298 = vld [vmem:[%s5 + $0x900] sm:$0xff]
    %v8299 = vld [vmem:[%s5 + $0x908] sm:$0xff]
    %v8300 = vld [vmem:[%s5 + $0x910] sm:$0xff]
    %v8301 = vld [vmem:[%s5 + $0x918] sm:$0xff]
    %v8302 = vld [vmem:[%s5 + $0x920] sm:$0xff]
    %v8303 = vld [vmem:[%s5 + $0x928] sm:$0xff]
    %v8304 = vld [vmem:[%s5 + $0x930] sm:$0xff]
    %v8305 = vld [vmem:[%s5 + $0x938] sm:$0xff]
    %v8306 = vld [vmem:[%s5 + $0x940] sm:$0xff]
    %v8307 = vld [vmem:[%s5 + $0x948] sm:$0xff]
    %v8308 = vld [vmem:[%s5 + $0x950] sm:$0xff]
    %v8309 = vld [vmem:[%s5 + $0x958] sm:$0xff]
    %v8310 = vld [vmem:[%s5 + $0x960] sm:$0xff]
    %v8311 = vld [vmem:[%s5 + $0x968] sm:$0xff]
    %v8312 = vld [vmem:[%s5 + $0x970] sm:$0xff]
    %v8313 = vld [vmem:[%s5 + $0x978] sm:$0xff]
    %v8314 = vld [vmem:[%s5 + $0x980] sm:$0xff]
    %v8315 = vld [vmem:[%s5 + $0x988] sm:$0xff]
    %v8316 = vld [vmem:[%s5 + $0x990] sm:$0xff]
    %v8317 = vld [vmem:[%s5 + $0x998] sm:$0xff]
    %v8318 = vld [vmem:[%s5 + $0x9a0] sm:$0xff]
    %v8319 = vld [vmem:[%s5 + $0x9a8] sm:$0xff]
    %v8320 = vld [vmem:[%s5 + $0x9b0] sm:$0xff]
    %v8321 = vld [vmem:[%s5 + $0x9b8] sm:$0xff]
    %v8322 = vld [vmem:[%s5 + $0x9c0] sm:$0xff]
    %v8323 = vld [vmem:[%s5 + $0x9c8] sm:$0xff]
    %v8324 = vld [vmem:[%s5 + $0x9d0] sm:$0xff]
    %v8325 = vld [vmem:[%s5 + $0x9d8] sm:$0xff]
    %v8326 = vld [vmem:[%s5 + $0x9e0] sm:$0xff]
    %v8327 = vld [vmem:[%s5 + $0x9e8] sm:$0xff]
    %v8328 = vld [vmem:[%s5 + $0x9f0] sm:$0xff]
    %v8329 = vld [vmem:[%s5 + $0x9f8] sm:$0xff]
    %v8330 = vld [vmem:[%s5 + $0xa00] sm:$0xff]
    %v8331 = vld [vmem:[%s5 + $0xa08] sm:$0xff]
    %v8332 = vld [vmem:[%s5 + $0xa10] sm:$0xff]
    %v8333 = vld [vmem:[%s5 + $0xa18] sm:$0xff]
    %v8334 = vld [vmem:[%s5 + $0xa20] sm:$0xff]
    %v8335 = vld [vmem:[%s5 + $0xa28] sm:$0xff]
    %v8336 = vld [vmem:[%s5 + $0xa30] sm:$0xff]
    %v8337 = vld [vmem:[%s5 + $0xa38] sm:$0xff]
    %v8338 = vld [vmem:[%s5 + $0xa40] sm:$0xff]
    %v8339 = vld [vmem:[%s5 + $0xa48] sm:$0xff]
    %v8340 = vld [vmem:[%s5 + $0xa50] sm:$0xff]
    %v8341 = vld [vmem:[%s5 + $0xa58] sm:$0xff]
    %v8342 = vld [vmem:[%s5 + $0xa60] sm:$0xff]
    %v8343 = vld [vmem:[%s5 + $0xa68] sm:$0xff]
    %v8344 = vld [vmem:[%s5 + $0xa70] sm:$0xff]
    %v8345 = vld [vmem:[%s5 + $0xa78] sm:$0xff]
    %v8346 = vld [vmem:[%s5 + $0xa80] sm:$0xff]
    %v8347 = vld [vmem:[%s5 + $0xa88] sm:$0xff]
    %v8348 = vld [vmem:[%s5 + $0xa90] sm:$0xff]
    %v8349 = vld [vmem:[%s5 + $0xa98] sm:$0xff]
    %v8350 = vld [vmem:[%s5 + $0xaa0] sm:$0xff]
    %v8351 = vld [vmem:[%s5 + $0xaa8] sm:$0xff]
    %v8352 = vld [vmem:[%s5 + $0xab0] sm:$0xff]
    %v8353 = vld [vmem:[%s5 + $0xab8] sm:$0xff]
    %v8354 = vld [vmem:[%s5 + $0xac0] sm:$0xff]
    %v8355 = vld [vmem:[%s5 + $0xac8] sm:$0xff]
    %v8356 = vld [vmem:[%s5 + $0xad0] sm:$0xff]
    %v8357 = vld [vmem:[%s5 + $0xad8] sm:$0xff]
    %v8358 = vld [vmem:[%s5 + $0xae0] sm:$0xff]
    %v8359 = vld [vmem:[%s5 + $0xae8] sm:$0xff]
    %v8360 = vld [vmem:[%s5 + $0xaf0] sm:$0xff]
    %v8361 = vld [vmem:[%s5 + $0xaf8] sm:$0xff]
    %v8362 = vld [vmem:[%s5 + $0xb00] sm:$0xff]
    %v8363 = vld [vmem:[%s5 + $0xb08] sm:$0xff]
    %v8364 = vld [vmem:[%s5 + $0xb10] sm:$0xff]
    %v8365 = vld [vmem:[%s5 + $0xb18] sm:$0xff]
    %v8366 = vld [vmem:[%s5 + $0xb20] sm:$0xff]
    %v8367 = vld [vmem:[%s5 + $0xb28] sm:$0xff]
    %v8368 = vld [vmem:[%s5 + $0xb30] sm:$0xff]
    %v8369 = vld [vmem:[%s5 + $0xb38] sm:$0xff]
    %v8370 = vld [vmem:[%s5 + $0xb40] sm:$0xff]
    %v8371 = vld [vmem:[%s5 + $0xb48] sm:$0xff]
    %v8372 = vld [vmem:[%s5 + $0xb50] sm:$0xff]
    %v8373 = vld [vmem:[%s5 + $0xb58] sm:$0xff]
    %v8374 = vld [vmem:[%s5 + $0xb60] sm:$0xff]
    %v8375 = vld [vmem:[%s5 + $0xb68] sm:$0xff]
    %v8376 = vld [vmem:[%s5 + $0xb70] sm:$0xff]
    %v8377 = vld [vmem:[%s5 + $0xb78] sm:$0xff]
    %v8378 = vld [vmem:[%s5 + $0xb80] sm:$0xff]
    %v8379 = vld [vmem:[%s5 + $0xb88] sm:$0xff]
    %v8380 = vld [vmem:[%s5 + $0xb90] sm:$0xff]
    %v8381 = vld [vmem:[%s5 + $0xb98] sm:$0xff]
    %v8382 = vld [vmem:[%s5 + $0xba0] sm:$0xff]
    %v8383 = vld [vmem:[%s5 + $0xba8] sm:$0xff]
    %v8384 = vld [vmem:[%s5 + $0xbb0] sm:$0xff]
    %v8385 = vld [vmem:[%s5 + $0xbb8] sm:$0xff]
    %v8386 = vld [vmem:[%s5 + $0xbc0] sm:$0xff]
    %v8387 = vld [vmem:[%s5 + $0xbc8] sm:$0xff]
    %v8388 = vld [vmem:[%s5 + $0xbd0] sm:$0xff]
    %v8389 = vld [vmem:[%s5 + $0xbd8] sm:$0xff]
    %v8390 = vld [vmem:[%s5 + $0xbe0] sm:$0xff]
    %v8391 = vld [vmem:[%s5 + $0xbe8] sm:$0xff]
    %v8392 = vld [vmem:[%s5 + $0xbf0] sm:$0xff]
    %v8393 = vld [vmem:[%s5 + $0xbf8] sm:$0xff]
    %v8394 = vld [vmem:[%s5 + $0xc00] sm:$0xff]
    %v8395 = vld [vmem:[%s5 + $0xc08] sm:$0xff]
    %v8396 = vld [vmem:[%s5 + $0xc10] sm:$0xff]
    %v8397 = vld [vmem:[%s5 + $0xc18] sm:$0xff]
    %v8398 = vld [vmem:[%s5 + $0xc20] sm:$0xff]
    %v8399 = vld [vmem:[%s5 + $0xc28] sm:$0xff]
    %v8400 = vld [vmem:[%s5 + $0xc30] sm:$0xff]
    %v8401 = vld [vmem:[%s5 + $0xc38] sm:$0xff]
    %v8402 = vld [vmem:[%s6] sm:$0xf]
    %v8404 = vperm.slane %v8402, 0
    %v8405 = vperm.slane %v8402, 1
    %v8406 = vperm.slane %v8402, 2
    %v8407 = vperm.slane %v8402, 3
    %v8804 = vunpack.c.l.b16 %v8010
    %v8805 = vunpack.c.h.b16 %v8010
    %v8806 = vunpack.c.l.b16 %v8011
    %v8807 = vunpack.c.h.b16 %v8011
    %v8808 = vunpack.c.l.b16 %v8012
    %v8809 = vunpack.c.h.b16 %v8012
    %v8810 = vunpack.c.l.b16 %v8013
    %v8811 = vunpack.c.h.b16 %v8013
    %v8812 = vunpack.c.l.b16 %v8014
    %v8813 = vunpack.c.h.b16 %v8014
    %v8814 = vunpack.c.l.b16 %v8015
    %v8815 = vunpack.c.h.b16 %v8015
    %v8816 = vunpack.c.l.b16 %v8016
    %v8817 = vunpack.c.h.b16 %v8016
    %v8818 = vunpack.c.l.b16 %v8017
    %v8819 = vunpack.c.h.b16 %v8017
    %v8820 = vunpack.c.l.b16 %v8018
    %v8821 = vunpack.c.h.b16 %v8018
    %v8822 = vunpack.c.l.b16 %v8019
    %v8823 = vunpack.c.h.b16 %v8019
    %v8824 = vunpack.c.l.b16 %v8020
    %v8825 = vunpack.c.h.b16 %v8020
    %v8826 = vunpack.c.l.b16 %v8021
    %v8827 = vunpack.c.h.b16 %v8021
    %v8828 = vunpack.c.l.b16 %v8022
    %v8829 = vunpack.c.h.b16 %v8022
    %v8830 = vunpack.c.l.b16 %v8023
    %v8831 = vunpack.c.h.b16 %v8023
    %v8832 = vunpack.c.l.b16 %v8024
    %v8833 = vunpack.c.h.b16 %v8024
    %v8834 = vunpack.c.l.b16 %v8025
    %v8835 = vunpack.c.h.b16 %v8025
    %v8836 = vunpack.c.l.b16 %v8026
    %v8837 = vunpack.c.h.b16 %v8026
    %v8838 = vunpack.c.l.b16 %v8027
    %v8839 = vunpack.c.h.b16 %v8027
    %v8840 = vunpack.c.l.b16 %v8028
    %v8841 = vunpack.c.h.b16 %v8028
    %v8842 = vunpack.c.l.b16 %v8029
    %v8843 = vunpack.c.h.b16 %v8029
    %v8844 = vunpack.c.l.b16 %v8030
    %v8845 = vunpack.c.h.b16 %v8030
    %v8846 = vunpack.c.l.b16 %v8031
    %v8847 = vunpack.c.h.b16 %v8031
    %v8848 = vunpack.c.l.b16 %v8032
    %v8849 = vunpack.c.h.b16 %v8032
    %v8850 = vunpack.c.l.b16 %v8033
    %v8851 = vunpack.c.h.b16 %v8033
    %v8852 = vunpack.c.l.b16 %v8034
    %v8853 = vunpack.c.h.b16 %v8034
    %v8854 = vunpack.c.l.b16 %v8035
    %v8855 = vunpack.c.h.b16 %v8035
    %v8856 = vunpack.c.l.b16 %v8036
    %v8857 = vunpack.c.h.b16 %v8036
    %v8858 = vunpack.c.l.b16 %v8037
    %v8859 = vunpack.c.h.b16 %v8037
    %v8860 = vunpack.c.l.b16 %v8038
    %v8861 = vunpack.c.h.b16 %v8038
    %v8862 = vunpack.c.l.b16 %v8039
    %v8863 = vunpack.c.h.b16 %v8039
    %v8864 = vunpack.c.l.b16 %v8040
    %v8865 = vunpack.c.h.b16 %v8040
    %v8866 = vunpack.c.l.b16 %v8041
    %v8867 = vunpack.c.h.b16 %v8041
    %v8868 = vunpack.c.l.b16 %v8042
    %v8869 = vunpack.c.h.b16 %v8042
    %v8870 = vunpack.c.l.b16 %v8043
    %v8871 = vunpack.c.h.b16 %v8043
    %v8872 = vunpack.c.l.b16 %v8044
    %v8873 = vunpack.c.h.b16 %v8044
    %v8874 = vunpack.c.l.b16 %v8045
    %v8875 = vunpack.c.h.b16 %v8045
    %v8876 = vunpack.c.l.b16 %v8046
    %v8877 = vunpack.c.h.b16 %v8046
    %v8878 = vunpack.c.l.b16 %v8047
    %v8879 = vunpack.c.h.b16 %v8047
    %v8880 = vunpack.c.l.b16 %v8048
    %v8881 = vunpack.c.h.b16 %v8048
    %v8882 = vunpack.c.l.b16 %v8049
    %v8883 = vunpack.c.h.b16 %v8049
    %v8884 = vunpack.c.l.b16 %v8050
    %v8885 = vunpack.c.h.b16 %v8050
    %v8886 = vunpack.c.l.b16 %v8051
    %v8887 = vunpack.c.h.b16 %v8051
    %v8888 = vunpack.c.l.b16 %v8052
    %v8889 = vunpack.c.h.b16 %v8052
    %v8890 = vunpack.c.l.b16 %v8053
    %v8891 = vunpack.c.h.b16 %v8053
    %v8892 = vunpack.c.l.b16 %v8054
    %v8893 = vunpack.c.h.b16 %v8054
    %v8894 = vunpack.c.l.b16 %v8055
    %v8895 = vunpack.c.h.b16 %v8055
    %v8896 = vunpack.c.l.b16 %v8056
    %v8897 = vunpack.c.h.b16 %v8056
    %v8898 = vunpack.c.l.b16 %v8057
    %v8899 = vunpack.c.h.b16 %v8057
    %v8900 = vunpack.c.l.b16 %v8058
    %v8901 = vunpack.c.h.b16 %v8058
    %v8902 = vunpack.c.l.b16 %v8059
    %v8903 = vunpack.c.h.b16 %v8059
    %v8904 = vunpack.c.l.b16 %v8060
    %v8905 = vunpack.c.h.b16 %v8060
    %v8906 = vunpack.c.l.b16 %v8061
    %v8907 = vunpack.c.h.b16 %v8061
    %v8908 = vunpack.c.l.b16 %v8062
    %v8909 = vunpack.c.h.b16 %v8062
    %v8910 = vunpack.c.l.b16 %v8063
    %v8911 = vunpack.c.h.b16 %v8063
    %v8912 = vunpack.c.l.b16 %v8064
    %v8913 = vunpack.c.h.b16 %v8064
    %v8914 = vunpack.c.l.b16 %v8065
    %v8915 = vunpack.c.h.b16 %v8065
    %v8916 = vunpack.c.l.b16 %v8066
    %v8917 = vunpack.c.h.b16 %v8066
    %v8918 = vunpack.c.l.b16 %v8067
    %v8919 = vunpack.c.h.b16 %v8067
    %v8920 = vunpack.c.l.b16 %v8068
    %v8921 = vunpack.c.h.b16 %v8068
    %v8922 = vunpack.c.l.b16 %v8069
    %v8923 = vunpack.c.h.b16 %v8069
    %v8924 = vunpack.c.l.b16 %v8070
    %v8925 = vunpack.c.h.b16 %v8070
    %v8926 = vunpack.c.l.b16 %v8071
    %v8927 = vunpack.c.h.b16 %v8071
    %v8928 = vunpack.c.l.b16 %v8072
    %v8929 = vunpack.c.h.b16 %v8072
    %v8930 = vunpack.c.l.b16 %v8073
    %v8931 = vunpack.c.h.b16 %v8073
    %v8932 = vunpack.c.l.b16 %v8074
    %v8933 = vunpack.c.h.b16 %v8074
    %v8934 = vunpack.c.l.b16 %v8075
    %v8935 = vunpack.c.h.b16 %v8075
    %v8936 = vunpack.c.l.b16 %v8076
    %v8937 = vunpack.c.h.b16 %v8076
    %v8938 = vunpack.c.l.b16 %v8077
    %v8939 = vunpack.c.h.b16 %v8077
    %v8940 = vunpack.c.l.b16 %v8078
    %v8941 = vunpack.c.h.b16 %v8078
    %v8942 = vunpack.c.l.b16 %v8079
    %v8943 = vunpack.c.h.b16 %v8079
    %v8944 = vunpack.c.l.b16 %v8080
    %v8945 = vunpack.c.h.b16 %v8080
    %v8946 = vunpack.c.l.b16 %v8081
    %v8947 = vunpack.c.h.b16 %v8081
    %v8948 = vunpack.c.l.b16 %v8082
    %v8949 = vunpack.c.h.b16 %v8082
    %v8950 = vunpack.c.l.b16 %v8083
    %v8951 = vunpack.c.h.b16 %v8083
    %v8952 = vunpack.c.l.b16 %v8084
    %v8953 = vunpack.c.h.b16 %v8084
    %v8954 = vunpack.c.l.b16 %v8085
    %v8955 = vunpack.c.h.b16 %v8085
    %v8956 = vunpack.c.l.b16 %v8086
    %v8957 = vunpack.c.h.b16 %v8086
    %v8958 = vunpack.c.l.b16 %v8087
    %v8959 = vunpack.c.h.b16 %v8087
    %v8960 = vunpack.c.l.b16 %v8088
    %v8961 = vunpack.c.h.b16 %v8088
    %v8962 = vunpack.c.l.b16 %v8089
    %v8963 = vunpack.c.h.b16 %v8089
    %v8964 = vunpack.c.l.b16 %v8090
    %v8965 = vunpack.c.h.b16 %v8090
    %v8966 = vunpack.c.l.b16 %v8091
    %v8967 = vunpack.c.h.b16 %v8091
    %v8968 = vunpack.c.l.b16 %v8092
    %v8969 = vunpack.c.h.b16 %v8092
    %v8970 = vunpack.c.l.b16 %v8093
    %v8971 = vunpack.c.h.b16 %v8093
    %v8972 = vunpack.c.l.b16 %v8094
    %v8973 = vunpack.c.h.b16 %v8094
    %v8974 = vunpack.c.l.b16 %v8095
    %v8975 = vunpack.c.h.b16 %v8095
    %v8976 = vunpack.c.l.b16 %v8096
    %v8977 = vunpack.c.h.b16 %v8096
    %v8978 = vunpack.c.l.b16 %v8097
    %v8979 = vunpack.c.h.b16 %v8097
    %v8980 = vunpack.c.l.b16 %v8098
    %v8981 = vunpack.c.h.b16 %v8098
    %v8982 = vunpack.c.l.b16 %v8099
    %v8983 = vunpack.c.h.b16 %v8099
    %v8984 = vunpack.c.l.b16 %v8100
    %v8985 = vunpack.c.h.b16 %v8100
    %v8986 = vunpack.c.l.b16 %v8101
    %v8987 = vunpack.c.h.b16 %v8101
    %v8988 = vunpack.c.l.b16 %v8102
    %v8989 = vunpack.c.h.b16 %v8102
    %v8990 = vunpack.c.l.b16 %v8103
    %v8991 = vunpack.c.h.b16 %v8103
    %v8992 = vunpack.c.l.b16 %v8104
    %v8993 = vunpack.c.h.b16 %v8104
    %v8994 = vunpack.c.l.b16 %v8105
    %v8995 = vunpack.c.h.b16 %v8105
    %v8996 = vunpack.c.l.b16 %v8106
    %v8997 = vunpack.c.h.b16 %v8106
    %v8998 = vunpack.c.l.b16 %v8107
    %v8999 = vunpack.c.h.b16 %v8107
    %v9000 = vunpack.c.l.b16 %v8108
    %v9001 = vunpack.c.h.b16 %v8108
    %v9002 = vunpack.c.l.b16 %v8109
    %v9003 = vunpack.c.h.b16 %v8109
    %v9004 = vunpack.c.l.b16 %v8110
    %v9005 = vunpack.c.h.b16 %v8110
    %v9006 = vunpack.c.l.b16 %v8111
    %v9007 = vunpack.c.h.b16 %v8111
    %v9008 = vunpack.c.l.b16 %v8112
    %v9009 = vunpack.c.h.b16 %v8112
    %v9010 = vunpack.c.l.b16 %v8113
    %v9011 = vunpack.c.h.b16 %v8113
    %v9012 = vunpack.c.l.b16 %v8114
    %v9013 = vunpack.c.h.b16 %v8114
    %v9014 = vunpack.c.l.b16 %v8115
    %v9015 = vunpack.c.h.b16 %v8115
    %v9016 = vunpack.c.l.b16 %v8116
    %v9017 = vunpack.c.h.b16 %v8116
    %v9018 = vunpack.c.l.b16 %v8117
    %v9019 = vunpack.c.h.b16 %v8117
    %v9020 = vunpack.c.l.b16 %v8118
    %v9021 = vunpack.c.h.b16 %v8118
    %v9022 = vunpack.c.l.b16 %v8119
    %v9023 = vunpack.c.h.b16 %v8119
    %v9024 = vunpack.c.l.b16 %v8120
    %v9025 = vunpack.c.h.b16 %v8120
    %v9026 = vunpack.c.l.b16 %v8121
    %v9027 = vunpack.c.h.b16 %v8121
    %v9028 = vunpack.c.l.b16 %v8122
    %v9029 = vunpack.c.h.b16 %v8122
    %v9030 = vunpack.c.l.b16 %v8123
    %v9031 = vunpack.c.h.b16 %v8123
    %v9032 = vunpack.c.l.b16 %v8124
    %v9033 = vunpack.c.h.b16 %v8124
    %v9034 = vunpack.c.l.b16 %v8125
    %v9035 = vunpack.c.h.b16 %v8125
    %v9036 = vunpack.c.l.b16 %v8126
    %v9037 = vunpack.c.h.b16 %v8126
    %v9038 = vunpack.c.l.b16 %v8127
    %v9039 = vunpack.c.h.b16 %v8127
    %v9040 = vunpack.c.l.b16 %v8128
    %v9041 = vunpack.c.h.b16 %v8128
    %v9042 = vunpack.c.l.b16 %v8129
    %v9043 = vunpack.c.h.b16 %v8129
    %v9044 = vunpack.c.l.b16 %v8130
    %v9045 = vunpack.c.h.b16 %v8130
    %v9046 = vunpack.c.l.b16 %v8131
    %v9047 = vunpack.c.h.b16 %v8131
    %v9048 = vunpack.c.l.b16 %v8132
    %v9049 = vunpack.c.h.b16 %v8132
    %v9050 = vunpack.c.l.b16 %v8133
    %v9051 = vunpack.c.h.b16 %v8133
    %v9052 = vunpack.c.l.b16 %v8134
    %v9053 = vunpack.c.h.b16 %v8134
    %v9054 = vunpack.c.l.b16 %v8135
    %v9055 = vunpack.c.h.b16 %v8135
    %v9056 = vunpack.c.l.b16 %v8136
    %v9057 = vunpack.c.h.b16 %v8136
    %v9058 = vunpack.c.l.b16 %v8137
    %v9059 = vunpack.c.h.b16 %v8137
    %v9060 = vunpack.c.l.b16 %v8138
    %v9061 = vunpack.c.h.b16 %v8138
    %v9062 = vunpack.c.l.b16 %v8139
    %v9063 = vunpack.c.h.b16 %v8139
    %v9064 = vunpack.c.l.b16 %v8140
    %v9065 = vunpack.c.h.b16 %v8140
    %v9066 = vunpack.c.l.b16 %v8141
    %v9067 = vunpack.c.h.b16 %v8141
    %v9068 = vunpack.c.l.b16 %v8142
    %v9069 = vunpack.c.h.b16 %v8142
    %v9070 = vunpack.c.l.b16 %v8143
    %v9071 = vunpack.c.h.b16 %v8143
    %v9072 = vunpack.c.l.b16 %v8144
    %v9073 = vunpack.c.h.b16 %v8144
    %v9074 = vunpack.c.l.b16 %v8145
    %v9075 = vunpack.c.h.b16 %v8145
    %v9076 = vunpack.c.l.b16 %v8146
    %v9077 = vunpack.c.h.b16 %v8146
    %v9078 = vunpack.c.l.b16 %v8147
    %v9079 = vunpack.c.h.b16 %v8147
    %v9080 = vunpack.c.l.b16 %v8148
    %v9081 = vunpack.c.h.b16 %v8148
    %v9082 = vunpack.c.l.b16 %v8149
    %v9083 = vunpack.c.h.b16 %v8149
    %v9084 = vunpack.c.l.b16 %v8150
    %v9085 = vunpack.c.h.b16 %v8150
    %v9086 = vunpack.c.l.b16 %v8151
    %v9087 = vunpack.c.h.b16 %v8151
    %v9088 = vunpack.c.l.b16 %v8152
    %v9089 = vunpack.c.h.b16 %v8152
    %v9090 = vunpack.c.l.b16 %v8153
    %v9091 = vunpack.c.h.b16 %v8153
    %v9092 = vunpack.c.l.b16 %v8154
    %v9093 = vunpack.c.h.b16 %v8154
    %v9094 = vunpack.c.l.b16 %v8155
    %v9095 = vunpack.c.h.b16 %v8155
    %v9096 = vunpack.c.l.b16 %v8156
    %v9097 = vunpack.c.h.b16 %v8156
    %v9098 = vunpack.c.l.b16 %v8157
    %v9099 = vunpack.c.h.b16 %v8157
    %v9100 = vunpack.c.l.b16 %v8158
    %v9101 = vunpack.c.h.b16 %v8158
    %v9102 = vunpack.c.l.b16 %v8159
    %v9103 = vunpack.c.h.b16 %v8159
    %v9104 = vunpack.c.l.b16 %v8160
    %v9105 = vunpack.c.h.b16 %v8160
    %v9106 = vunpack.c.l.b16 %v8161
    %v9107 = vunpack.c.h.b16 %v8161
    %v9108 = vunpack.c.l.b16 %v8162
    %v9109 = vunpack.c.h.b16 %v8162
    %v9110 = vunpack.c.l.b16 %v8163
    %v9111 = vunpack.c.h.b16 %v8163
    %v9112 = vunpack.c.l.b16 %v8164
    %v9113 = vunpack.c.h.b16 %v8164
    %v9114 = vunpack.c.l.b16 %v8165
    %v9115 = vunpack.c.h.b16 %v8165
    %v9116 = vunpack.c.l.b16 %v8166
    %v9117 = vunpack.c.h.b16 %v8166
    %v9118 = vunpack.c.l.b16 %v8167
    %v9119 = vunpack.c.h.b16 %v8167
    %v9120 = vunpack.c.l.b16 %v8168
    %v9121 = vunpack.c.h.b16 %v8168
    %v9122 = vunpack.c.l.b16 %v8169
    %v9123 = vunpack.c.h.b16 %v8169
    %v9124 = vunpack.c.l.b16 %v8170
    %v9125 = vunpack.c.h.b16 %v8170
    %v9126 = vunpack.c.l.b16 %v8171
    %v9127 = vunpack.c.h.b16 %v8171
    %v9128 = vunpack.c.l.b16 %v8172
    %v9129 = vunpack.c.h.b16 %v8172
    %v9130 = vunpack.c.l.b16 %v8173
    %v9131 = vunpack.c.h.b16 %v8173
    %v9132 = vunpack.c.l.b16 %v8174
    %v9133 = vunpack.c.h.b16 %v8174
    %v9134 = vunpack.c.l.b16 %v8175
    %v9135 = vunpack.c.h.b16 %v8175
    %v9136 = vunpack.c.l.b16 %v8176
    %v9137 = vunpack.c.h.b16 %v8176
    %v9138 = vunpack.c.l.b16 %v8177
    %v9139 = vunpack.c.h.b16 %v8177
    %v9140 = vunpack.c.l.b16 %v8178
    %v9141 = vunpack.c.h.b16 %v8178
    %v9142 = vunpack.c.l.b16 %v8179
    %v9143 = vunpack.c.h.b16 %v8179
    %v9144 = vunpack.c.l.b16 %v8180
    %v9145 = vunpack.c.h.b16 %v8180
    %v9146 = vunpack.c.l.b16 %v8181
    %v9147 = vunpack.c.h.b16 %v8181
    %v9148 = vunpack.c.l.b16 %v8182
    %v9149 = vunpack.c.h.b16 %v8182
    %v9150 = vunpack.c.l.b16 %v8183
    %v9151 = vunpack.c.h.b16 %v8183
    %v9152 = vunpack.c.l.b16 %v8184
    %v9153 = vunpack.c.h.b16 %v8184
    %v9154 = vunpack.c.l.b16 %v8185
    %v9155 = vunpack.c.h.b16 %v8185
    %v9156 = vunpack.c.l.b16 %v8186
    %v9157 = vunpack.c.h.b16 %v8186
    %v9158 = vunpack.c.l.b16 %v8187
    %v9159 = vunpack.c.h.b16 %v8187
    %v9160 = vunpack.c.l.b16 %v8188
    %v9161 = vunpack.c.h.b16 %v8188
    %v9162 = vunpack.c.l.b16 %v8189
    %v9163 = vunpack.c.h.b16 %v8189
    %v9164 = vunpack.c.l.b16 %v8190
    %v9165 = vunpack.c.h.b16 %v8190
    %v9166 = vunpack.c.l.b16 %v8191
    %v9167 = vunpack.c.h.b16 %v8191
    %v9168 = vunpack.c.l.b16 %v8192
    %v9169 = vunpack.c.h.b16 %v8192
    %v9170 = vunpack.c.l.b16 %v8193
    %v9171 = vunpack.c.h.b16 %v8193
    %v9172 = vunpack.c.l.b16 %v8194
    %v9173 = vunpack.c.h.b16 %v8194
    %v9174 = vunpack.c.l.b16 %v8195
    %v9175 = vunpack.c.h.b16 %v8195
    %v9176 = vunpack.c.l.b16 %v8196
    %v9177 = vunpack.c.h.b16 %v8196
    %v9178 = vunpack.c.l.b16 %v8197
    %v9179 = vunpack.c.h.b16 %v8197
    %v9180 = vunpack.c.l.b16 %v8198
    %v9181 = vunpack.c.h.b16 %v8198
    %v9182 = vunpack.c.l.b16 %v8199
    %v9183 = vunpack.c.h.b16 %v8199
    %v9184 = vunpack.c.l.b16 %v8200
    %v9185 = vunpack.c.h.b16 %v8200
    %v9186 = vunpack.c.l.b16 %v8201
    %v9187 = vunpack.c.h.b16 %v8201
    %v9188 = vunpack.c.l.b16 %v8202
    %v9189 = vunpack.c.h.b16 %v8202
    %v9190 = vunpack.c.l.b16 %v8203
    %v9191 = vunpack.c.h.b16 %v8203
    %v9192 = vunpack.c.l.b16 %v8204
    %v9193 = vunpack.c.h.b16 %v8204
    %v9194 = vunpack.c.l.b16 %v8205
    %v9195 = vunpack.c.h.b16 %v8205
    %v9196 = vunpack.c.l.b16 %v8206
    %v9197 = vunpack.c.h.b16 %v8206
    %v9198 = vunpack.c.l.b16 %v8207
    %v9199 = vunpack.c.h.b16 %v8207
    %v9200 = vunpack.c.l.b16 %v8208
    %v9201 = vunpack.c.h.b16 %v8208
    %v9202 = vunpack.c.l.b16 %v8209
    %v9203 = vunpack.c.h.b16 %v8209
    %v9204 = vunpack.c.l.b16 %v8210
    %v9205 = vunpack.c.h.b16 %v8210
    %v9206 = vunpack.c.l.b16 %v8211
    %v9207 = vunpack.c.h.b16 %v8211
    %v9208 = vunpack.c.l.b16 %v8212
    %v9209 = vunpack.c.h.b16 %v8212
    %v9210 = vunpack.c.l.b16 %v8213
    %v9211 = vunpack.c.h.b16 %v8213
    %v9212 = vunpack.c.l.b16 %v8214
    %v9213 = vunpack.c.h.b16 %v8214
    %v9214 = vunpack.c.l.b16 %v8215
    %v9215 = vunpack.c.h.b16 %v8215
    %v9216 = vunpack.c.l.b16 %v8216
    %v9217 = vunpack.c.h.b16 %v8216
    %v9218 = vunpack.c.l.b16 %v8217
    %v9219 = vunpack.c.h.b16 %v8217
    %v9220 = vunpack.c.l.b16 %v8218
    %v9221 = vunpack.c.h.b16 %v8218
    %v9222 = vunpack.c.l.b16 %v8219
    %v9223 = vunpack.c.h.b16 %v8219
    %v9224 = vunpack.c.l.b16 %v8220
    %v9225 = vunpack.c.h.b16 %v8220
    %v9226 = vunpack.c.l.b16 %v8221
    %v9227 = vunpack.c.h.b16 %v8221
    %v9228 = vunpack.c.l.b16 %v8222
    %v9229 = vunpack.c.h.b16 %v8222
    %v9230 = vunpack.c.l.b16 %v8223
    %v9231 = vunpack.c.h.b16 %v8223
    %v9232 = vunpack.c.l.b16 %v8224
    %v9233 = vunpack.c.h.b16 %v8224
    %v9234 = vunpack.c.l.b16 %v8225
    %v9235 = vunpack.c.h.b16 %v8225
    %v9236 = vunpack.c.l.b16 %v8226
    %v9237 = vunpack.c.h.b16 %v8226
    %v9238 = vunpack.c.l.b16 %v8227
    %v9239 = vunpack.c.h.b16 %v8227
    %v9240 = vunpack.c.l.b16 %v8228
    %v9241 = vunpack.c.h.b16 %v8228
    %v9242 = vunpack.c.l.b16 %v8229
    %v9243 = vunpack.c.h.b16 %v8229
    %v9244 = vunpack.c.l.b16 %v8230
    %v9245 = vunpack.c.h.b16 %v8230
    %v9246 = vunpack.c.l.b16 %v8231
    %v9247 = vunpack.c.h.b16 %v8231
    %v9248 = vunpack.c.l.b16 %v8232
    %v9249 = vunpack.c.h.b16 %v8232
    %v9250 = vunpack.c.l.b16 %v8233
    %v9251 = vunpack.c.h.b16 %v8233
    %v9252 = vunpack.c.l.b16 %v8234
    %v9253 = vunpack.c.h.b16 %v8234
    %v9254 = vunpack.c.l.b16 %v8235
    %v9255 = vunpack.c.h.b16 %v8235
    %v9256 = vunpack.c.l.b16 %v8236
    %v9257 = vunpack.c.h.b16 %v8236
    %v9258 = vunpack.c.l.b16 %v8237
    %v9259 = vunpack.c.h.b16 %v8237
    %v9260 = vunpack.c.l.b16 %v8238
    %v9261 = vunpack.c.h.b16 %v8238
    %v9262 = vunpack.c.l.b16 %v8239
    %v9263 = vunpack.c.h.b16 %v8239
    %v9264 = vunpack.c.l.b16 %v8240
    %v9265 = vunpack.c.h.b16 %v8240
    %v9266 = vunpack.c.l.b16 %v8241
    %v9267 = vunpack.c.h.b16 %v8241
    %v9268 = vunpack.c.l.b16 %v8242
    %v9269 = vunpack.c.h.b16 %v8242
    %v9270 = vunpack.c.l.b16 %v8243
    %v9271 = vunpack.c.h.b16 %v8243
    %v9272 = vunpack.c.l.b16 %v8244
    %v9273 = vunpack.c.h.b16 %v8244
    %v9274 = vunpack.c.l.b16 %v8245
    %v9275 = vunpack.c.h.b16 %v8245
    %v9276 = vunpack.c.l.b16 %v8246
    %v9277 = vunpack.c.h.b16 %v8246
    %v9278 = vunpack.c.l.b16 %v8247
    %v9279 = vunpack.c.h.b16 %v8247
    %v9280 = vunpack.c.l.b16 %v8248
    %v9281 = vunpack.c.h.b16 %v8248
    %v9282 = vunpack.c.l.b16 %v8249
    %v9283 = vunpack.c.h.b16 %v8249
    %v9284 = vunpack.c.l.b16 %v8250
    %v9285 = vunpack.c.h.b16 %v8250
    %v9286 = vunpack.c.l.b16 %v8251
    %v9287 = vunpack.c.h.b16 %v8251
    %v9288 = vunpack.c.l.b16 %v8252
    %v9289 = vunpack.c.h.b16 %v8252
    %v9290 = vunpack.c.l.b16 %v8253
    %v9291 = vunpack.c.h.b16 %v8253
    %v9292 = vunpack.c.l.b16 %v8254
    %v9293 = vunpack.c.h.b16 %v8254
    %v9294 = vunpack.c.l.b16 %v8255
    %v9295 = vunpack.c.h.b16 %v8255
    %v9296 = vunpack.c.l.b16 %v8256
    %v9297 = vunpack.c.h.b16 %v8256
    %v9298 = vunpack.c.l.b16 %v8257
    %v9299 = vunpack.c.h.b16 %v8257
    %v9300 = vunpack.c.l.b16 %v8258
    %v9301 = vunpack.c.h.b16 %v8258
    %v9302 = vunpack.c.l.b16 %v8259
    %v9303 = vunpack.c.h.b16 %v8259
    %v9304 = vunpack.c.l.b16 %v8260
    %v9305 = vunpack.c.h.b16 %v8260
    %v9306 = vunpack.c.l.b16 %v8261
    %v9307 = vunpack.c.h.b16 %v8261
    %v9308 = vunpack.c.l.b16 %v8262
    %v9309 = vunpack.c.h.b16 %v8262
    %v9310 = vunpack.c.l.b16 %v8263
    %v9311 = vunpack.c.h.b16 %v8263
    %v9312 = vunpack.c.l.b16 %v8264
    %v9313 = vunpack.c.h.b16 %v8264
    %v9314 = vunpack.c.l.b16 %v8265
    %v9315 = vunpack.c.h.b16 %v8265
    %v9316 = vunpack.c.l.b16 %v8266
    %v9317 = vunpack.c.h.b16 %v8266
    %v9318 = vunpack.c.l.b16 %v8267
    %v9319 = vunpack.c.h.b16 %v8267
    %v9320 = vunpack.c.l.b16 %v8268
    %v9321 = vunpack.c.h.b16 %v8268
    %v9322 = vunpack.c.l.b16 %v8269
    %v9323 = vunpack.c.h.b16 %v8269
    %v9324 = vunpack.c.l.b16 %v8270
    %v9325 = vunpack.c.h.b16 %v8270
    %v9326 = vunpack.c.l.b16 %v8271
    %v9327 = vunpack.c.h.b16 %v8271
    %v9328 = vunpack.c.l.b16 %v8272
    %v9329 = vunpack.c.h.b16 %v8272
    %v9330 = vunpack.c.l.b16 %v8273
    %v9331 = vunpack.c.h.b16 %v8273
    %v9332 = vunpack.c.l.b16 %v8274
    %v9333 = vunpack.c.h.b16 %v8274
    %v9334 = vunpack.c.l.b16 %v8275
    %v9335 = vunpack.c.h.b16 %v8275
    %v9336 = vunpack.c.l.b16 %v8276
    %v9337 = vunpack.c.h.b16 %v8276
    %v9338 = vunpack.c.l.b16 %v8277
    %v9339 = vunpack.c.h.b16 %v8277
    %v9340 = vunpack.c.l.b16 %v8278
    %v9341 = vunpack.c.h.b16 %v8278
    %v9342 = vunpack.c.l.b16 %v8279
    %v9343 = vunpack.c.h.b16 %v8279
    %v9344 = vunpack.c.l.b16 %v8280
    %v9345 = vunpack.c.h.b16 %v8280
    %v9346 = vunpack.c.l.b16 %v8281
    %v9347 = vunpack.c.h.b16 %v8281
    %v9348 = vunpack.c.l.b16 %v8282
    %v9349 = vunpack.c.h.b16 %v8282
    %v9350 = vunpack.c.l.b16 %v8283
    %v9351 = vunpack.c.h.b16 %v8283
    %v9352 = vunpack.c.l.b16 %v8284
    %v9353 = vunpack.c.h.b16 %v8284
    %v9354 = vunpack.c.l.b16 %v8285
    %v9355 = vunpack.c.h.b16 %v8285
    %v9356 = vunpack.c.l.b16 %v8286
    %v9357 = vunpack.c.h.b16 %v8286
    %v9358 = vunpack.c.l.b16 %v8287
    %v9359 = vunpack.c.h.b16 %v8287
    %v9360 = vunpack.c.l.b16 %v8288
    %v9361 = vunpack.c.h.b16 %v8288
    %v9362 = vunpack.c.l.b16 %v8289
    %v9363 = vunpack.c.h.b16 %v8289
    %v9364 = vunpack.c.l.b16 %v8290
    %v9365 = vunpack.c.h.b16 %v8290
    %v9366 = vunpack.c.l.b16 %v8291
    %v9367 = vunpack.c.h.b16 %v8291
    %v9368 = vunpack.c.l.b16 %v8292
    %v9369 = vunpack.c.h.b16 %v8292
    %v9370 = vunpack.c.l.b16 %v8293
    %v9371 = vunpack.c.h.b16 %v8293
    %v9372 = vunpack.c.l.b16 %v8294
    %v9373 = vunpack.c.h.b16 %v8294
    %v9374 = vunpack.c.l.b16 %v8295
    %v9375 = vunpack.c.h.b16 %v8295
    %v9376 = vunpack.c.l.b16 %v8296
    %v9377 = vunpack.c.h.b16 %v8296
    %v9378 = vunpack.c.l.b16 %v8297
    %v9379 = vunpack.c.h.b16 %v8297
    %v9380 = vunpack.c.l.b16 %v8298
    %v9381 = vunpack.c.h.b16 %v8298
    %v9382 = vunpack.c.l.b16 %v8299
    %v9383 = vunpack.c.h.b16 %v8299
    %v9384 = vunpack.c.l.b16 %v8300
    %v9385 = vunpack.c.h.b16 %v8300
    %v9386 = vunpack.c.l.b16 %v8301
    %v9387 = vunpack.c.h.b16 %v8301
    %v9388 = vunpack.c.l.b16 %v8302
    %v9389 = vunpack.c.h.b16 %v8302
    %v9390 = vunpack.c.l.b16 %v8303
    %v9391 = vunpack.c.h.b16 %v8303
    %v9392 = vunpack.c.l.b16 %v8304
    %v9393 = vunpack.c.h.b16 %v8304
    %v9394 = vunpack.c.l.b16 %v8305
    %v9395 = vunpack.c.h.b16 %v8305
    %v9396 = vunpack.c.l.b16 %v8306
    %v9397 = vunpack.c.h.b16 %v8306
    %v9398 = vunpack.c.l.b16 %v8307
    %v9399 = vunpack.c.h.b16 %v8307
    %v9400 = vunpack.c.l.b16 %v8308
    %v9401 = vunpack.c.h.b16 %v8308
    %v9402 = vunpack.c.l.b16 %v8309
    %v9403 = vunpack.c.h.b16 %v8309
    %v9404 = vunpack.c.l.b16 %v8310
    %v9405 = vunpack.c.h.b16 %v8310
    %v9406 = vunpack.c.l.b16 %v8311
    %v9407 = vunpack.c.h.b16 %v8311
    %v9408 = vunpack.c.l.b16 %v8312
    %v9409 = vunpack.c.h.b16 %v8312
    %v9410 = vunpack.c.l.b16 %v8313
    %v9411 = vunpack.c.h.b16 %v8313
    %v9412 = vunpack.c.l.b16 %v8314
    %v9413 = vunpack.c.h.b16 %v8314
    %v9414 = vunpack.c.l.b16 %v8315
    %v9415 = vunpack.c.h.b16 %v8315
    %v9416 = vunpack.c.l.b16 %v8316
    %v9417 = vunpack.c.h.b16 %v8316
    %v9418 = vunpack.c.l.b16 %v8317
    %v9419 = vunpack.c.h.b16 %v8317
    %v9420 = vunpack.c.l.b16 %v8318
    %v9421 = vunpack.c.h.b16 %v8318
    %v9422 = vunpack.c.l.b16 %v8319
    %v9423 = vunpack.c.h.b16 %v8319
    %v9424 = vunpack.c.l.b16 %v8320
    %v9425 = vunpack.c.h.b16 %v8320
    %v9426 = vunpack.c.l.b16 %v8321
    %v9427 = vunpack.c.h.b16 %v8321
    %v9428 = vunpack.c.l.b16 %v8322
    %v9429 = vunpack.c.h.b16 %v8322
    %v9430 = vunpack.c.l.b16 %v8323
    %v9431 = vunpack.c.h.b16 %v8323
    %v9432 = vunpack.c.l.b16 %v8324
    %v9433 = vunpack.c.h.b16 %v8324
    %v9434 = vunpack.c.l.b16 %v8325
    %v9435 = vunpack.c.h.b16 %v8325
    %v9436 = vunpack.c.l.b16 %v8326
    %v9437 = vunpack.c.h.b16 %v8326
    %v9438 = vunpack.c.l.b16 %v8327
    %v9439 = vunpack.c.h.b16 %v8327
    %v9440 = vunpack.c.l.b16 %v8328
    %v9441 = vunpack.c.h.b16 %v8328
    %v9442 = vunpack.c.l.b16 %v8329
    %v9443 = vunpack.c.h.b16 %v8329
    %v9444 = vunpack.c.l.b16 %v8330
    %v9445 = vunpack.c.h.b16 %v8330
    %v9446 = vunpack.c.l.b16 %v8331
    %v9447 = vunpack.c.h.b16 %v8331
    %v9448 = vunpack.c.l.b16 %v8332
    %v9449 = vunpack.c.h.b16 %v8332
    %v9450 = vunpack.c.l.b16 %v8333
    %v9451 = vunpack.c.h.b16 %v8333
    %v9452 = vunpack.c.l.b16 %v8334
    %v9453 = vunpack.c.h.b16 %v8334
    %v9454 = vunpack.c.l.b16 %v8335
    %v9455 = vunpack.c.h.b16 %v8335
    %v9456 = vunpack.c.l.b16 %v8336
    %v9457 = vunpack.c.h.b16 %v8336
    %v9458 = vunpack.c.l.b16 %v8337
    %v9459 = vunpack.c.h.b16 %v8337
    %v9460 = vunpack.c.l.b16 %v8338
    %v9461 = vunpack.c.h.b16 %v8338
    %v9462 = vunpack.c.l.b16 %v8339
    %v9463 = vunpack.c.h.b16 %v8339
    %v9464 = vunpack.c.l.b16 %v8340
    %v9465 = vunpack.c.h.b16 %v8340
    %v9466 = vunpack.c.l.b16 %v8341
    %v9467 = vunpack.c.h.b16 %v8341
    %v9468 = vunpack.c.l.b16 %v8342
    %v9469 = vunpack.c.h.b16 %v8342
    %v9470 = vunpack.c.l.b16 %v8343
    %v9471 = vunpack.c.h.b16 %v8343
    %v9472 = vunpack.c.l.b16 %v8344
    %v9473 = vunpack.c.h.b16 %v8344
    %v9474 = vunpack.c.l.b16 %v8345
    %v9475 = vunpack.c.h.b16 %v8345
    %v9476 = vunpack.c.l.b16 %v8346
    %v9477 = vunpack.c.h.b16 %v8346
    %v9478 = vunpack.c.l.b16 %v8347
    %v9479 = vunpack.c.h.b16 %v8347
    %v9480 = vunpack.c.l.b16 %v8348
    %v9481 = vunpack.c.h.b16 %v8348
    %v9482 = vunpack.c.l.b16 %v8349
    %v9483 = vunpack.c.h.b16 %v8349
    %v9484 = vunpack.c.l.b16 %v8350
    %v9485 = vunpack.c.h.b16 %v8350
    %v9486 = vunpack.c.l.b16 %v8351
    %v9487 = vunpack.c.h.b16 %v8351
    %v9488 = vunpack.c.l.b16 %v8352
    %v9489 = vunpack.c.h.b16 %v8352
    %v9490 = vunpack.c.l.b16 %v8353
    %v9491 = vunpack.c.h.b16 %v8353
    %v9492 = vunpack.c.l.b16 %v8354
    %v9493 = vunpack.c.h.b16 %v8354
    %v9494 = vunpack.c.l.b16 %v8355
    %v9495 = vunpack.c.h.b16 %v8355
    %v9496 = vunpack.c.l.b16 %v8356
    %v9497 = vunpack.c.h.b16 %v8356
    %v9498 = vunpack.c.l.b16 %v8357
    %v9499 = vunpack.c.h.b16 %v8357
    %v9500 = vunpack.c.l.b16 %v8358
    %v9501 = vunpack.c.h.b16 %v8358
    %v9502 = vunpack.c.l.b16 %v8359
    %v9503 = vunpack.c.h.b16 %v8359
    %v9504 = vunpack.c.l.b16 %v8360
    %v9505 = vunpack.c.h.b16 %v8360
    %v9506 = vunpack.c.l.b16 %v8361
    %v9507 = vunpack.c.h.b16 %v8361
    %v9508 = vunpack.c.l.b16 %v8362
    %v9509 = vunpack.c.h.b16 %v8362
    %v9510 = vunpack.c.l.b16 %v8363
    %v9511 = vunpack.c.h.b16 %v8363
    %v9512 = vunpack.c.l.b16 %v8364
    %v9513 = vunpack.c.h.b16 %v8364
    %v9514 = vunpack.c.l.b16 %v8365
    %v9515 = vunpack.c.h.b16 %v8365
    %v9516 = vunpack.c.l.b16 %v8366
    %v9517 = vunpack.c.h.b16 %v8366
    %v9518 = vunpack.c.l.b16 %v8367
    %v9519 = vunpack.c.h.b16 %v8367
    %v9520 = vunpack.c.l.b16 %v8368
    %v9521 = vunpack.c.h.b16 %v8368
    %v9522 = vunpack.c.l.b16 %v8369
    %v9523 = vunpack.c.h.b16 %v8369
    %v9524 = vunpack.c.l.b16 %v8370
    %v9525 = vunpack.c.h.b16 %v8370
    %v9526 = vunpack.c.l.b16 %v8371
    %v9527 = vunpack.c.h.b16 %v8371
    %v9528 = vunpack.c.l.b16 %v8372
    %v9529 = vunpack.c.h.b16 %v8372
    %v9530 = vunpack.c.l.b16 %v8373
    %v9531 = vunpack.c.h.b16 %v8373
    %v9532 = vunpack.c.l.b16 %v8374
    %v9533 = vunpack.c.h.b16 %v8374
    %v9534 = vunpack.c.l.b16 %v8375
    %v9535 = vunpack.c.h.b16 %v8375
    %v9536 = vunpack.c.l.b16 %v8376
    %v9537 = vunpack.c.h.b16 %v8376
    %v9538 = vunpack.c.l.b16 %v8377
    %v9539 = vunpack.c.h.b16 %v8377
    %v9540 = vunpack.c.l.b16 %v8378
    %v9541 = vunpack.c.h.b16 %v8378
    %v9542 = vunpack.c.l.b16 %v8379
    %v9543 = vunpack.c.h.b16 %v8379
    %v9544 = vunpack.c.l.b16 %v8380
    %v9545 = vunpack.c.h.b16 %v8380
    %v9546 = vunpack.c.l.b16 %v8381
    %v9547 = vunpack.c.h.b16 %v8381
    %v9548 = vunpack.c.l.b16 %v8382
    %v9549 = vunpack.c.h.b16 %v8382
    %v9550 = vunpack.c.l.b16 %v8383
    %v9551 = vunpack.c.h.b16 %v8383
    %v9552 = vunpack.c.l.b16 %v8384
    %v9553 = vunpack.c.h.b16 %v8384
    %v9554 = vunpack.c.l.b16 %v8385
    %v9555 = vunpack.c.h.b16 %v8385
    %v9556 = vunpack.c.l.b16 %v8386
    %v9557 = vunpack.c.h.b16 %v8386
    %v9558 = vunpack.c.l.b16 %v8387
    %v9559 = vunpack.c.h.b16 %v8387
    %v9560 = vunpack.c.l.b16 %v8388
    %v9561 = vunpack.c.h.b16 %v8388
    %v9562 = vunpack.c.l.b16 %v8389
    %v9563 = vunpack.c.h.b16 %v8389
    %v9564 = vunpack.c.l.b16 %v8390
    %v9565 = vunpack.c.h.b16 %v8390
    %v9566 = vunpack.c.l.b16 %v8391
    %v9567 = vunpack.c.h.b16 %v8391
    %v9568 = vunpack.c.l.b16 %v8392
    %v9569 = vunpack.c.h.b16 %v8392
    %v9570 = vunpack.c.l.b16 %v8393
    %v9571 = vunpack.c.h.b16 %v8393
    %v9572 = vunpack.c.l.b16 %v8394
    %v9573 = vunpack.c.h.b16 %v8394
    %v9574 = vunpack.c.l.b16 %v8395
    %v9575 = vunpack.c.h.b16 %v8395
    %v9576 = vunpack.c.l.b16 %v8396
    %v9577 = vunpack.c.h.b16 %v8396
    %v9578 = vunpack.c.l.b16 %v8397
    %v9579 = vunpack.c.h.b16 %v8397
    %v9580 = vunpack.c.l.b16 %v8398
    %v9581 = vunpack.c.h.b16 %v8398
    %v9582 = vunpack.c.l.b16 %v8399
    %v9583 = vunpack.c.h.b16 %v8399
    %v9584 = vunpack.c.l.b16 %v8400
    %v9585 = vunpack.c.h.b16 %v8400
    %v9586 = vunpack.c.l.b16 %v8401
    %v9587 = vunpack.c.h.b16 %v8401
    %v9588 = vpack.c.b16 %v8808, %v8804
    %v9589 = vpack.c.b16 %v8809, %v8805
    %v9590 = vpack.c.b16 %v8810, %v8806
    %v9591 = vpack.c.b16 %v8811, %v8807
    %v9592 = vpack.c.b16 %v8816, %v8812
    %v9593 = vpack.c.b16 %v8817, %v8813
    %v9594 = vpack.c.b16 %v8818, %v8814
    %v9595 = vpack.c.b16 %v8819, %v8815
    %v9596 = vpack.c.b16 %v8824, %v8820
    %v9597 = vpack.c.b16 %v8825, %v8821
    %v9598 = vpack.c.b16 %v8826, %v8822
    %v9599 = vpack.c.b16 %v8827, %v8823
    %v9600 = vpack.c.b16 %v8832, %v8828
    %v9601 = vpack.c.b16 %v8833, %v8829
    %v9602 = vpack.c.b16 %v8834, %v8830
    %v9603 = vpack.c.b16 %v8835, %v8831
    %v9604 = vpack.c.b16 %v8840, %v8836
    %v9605 = vpack.c.b16 %v8841, %v8837
    %v9606 = vpack.c.b16 %v8842, %v8838
    %v9607 = vpack.c.b16 %v8843, %v8839
    %v9608 = vpack.c.b16 %v8848, %v8844
    %v9609 = vpack.c.b16 %v8849, %v8845
    %v9610 = vpack.c.b16 %v8850, %v8846
    %v9611 = vpack.c.b16 %v8851, %v8847
    %v9612 = vpack.c.b16 %v8856, %v8852
    %v9613 = vpack.c.b16 %v8857, %v8853
    %v9614 = vpack.c.b16 %v8858, %v8854
    %v9615 = vpack.c.b16 %v8859, %v8855
    %v9616 = vpack.c.b16 %v8864, %v8860
    %v9617 = vpack.c.b16 %v8865, %v8861
    %v9618 = vpack.c.b16 %v8866, %v8862
    %v9619 = vpack.c.b16 %v8867, %v8863
    %v9620 = vpack.c.b16 %v8872, %v8868
    %v9621 = vpack.c.b16 %v8873, %v8869
    %v9622 = vpack.c.b16 %v8874, %v8870
    %v9623 = vpack.c.b16 %v8875, %v8871
    %v9624 = vpack.c.b16 %v8880, %v8876
    %v9625 = vpack.c.b16 %v8881, %v8877
    %v9626 = vpack.c.b16 %v8882, %v8878
    %v9627 = vpack.c.b16 %v8883, %v8879
    %v9628 = vpack.c.b16 %v8888, %v8884
    %v9629 = vpack.c.b16 %v8889, %v8885
    %v9630 = vpack.c.b16 %v8890, %v8886
    %v9631 = vpack.c.b16 %v8891, %v8887
    %v9632 = vpack.c.b16 %v8896, %v8892
    %v9633 = vpack.c.b16 %v8897, %v8893
    %v9634 = vpack.c.b16 %v8898, %v8894
    %v9635 = vpack.c.b16 %v8899, %v8895
    %v9636 = vpack.c.b16 %v8904, %v8900
    %v9637 = vpack.c.b16 %v8905, %v8901
    %v9638 = vpack.c.b16 %v8906, %v8902
    %v9639 = vpack.c.b16 %v8907, %v8903
    %v9640 = vpack.c.b16 %v8912, %v8908
    %v9641 = vpack.c.b16 %v8913, %v8909
    %v9642 = vpack.c.b16 %v8914, %v8910
    %v9643 = vpack.c.b16 %v8915, %v8911
    %v9644 = vpack.c.b16 %v8920, %v8916
    %v9645 = vpack.c.b16 %v8921, %v8917
    %v9646 = vpack.c.b16 %v8922, %v8918
    %v9647 = vpack.c.b16 %v8923, %v8919
    %v9648 = vpack.c.b16 %v8928, %v8924
    %v9649 = vpack.c.b16 %v8929, %v8925
    %v9650 = vpack.c.b16 %v8930, %v8926
    %v9651 = vpack.c.b16 %v8931, %v8927
    %v9652 = vpack.c.b16 %v8936, %v8932
    %v9653 = vpack.c.b16 %v8937, %v8933
    %v9654 = vpack.c.b16 %v8938, %v8934
    %v9655 = vpack.c.b16 %v8939, %v8935
    %v9656 = vpack.c.b16 %v8944, %v8940
    %v9657 = vpack.c.b16 %v8945, %v8941
    %v9658 = vpack.c.b16 %v8946, %v8942
    %v9659 = vpack.c.b16 %v8947, %v8943
    %v9660 = vpack.c.b16 %v8952, %v8948
    %v9661 = vpack.c.b16 %v8953, %v8949
    %v9662 = vpack.c.b16 %v8954, %v8950
    %v9663 = vpack.c.b16 %v8955, %v8951
    %v9664 = vpack.c.b16 %v8960, %v8956
    %v9665 = vpack.c.b16 %v8961, %v8957
    %v9666 = vpack.c.b16 %v8962, %v8958
    %v9667 = vpack.c.b16 %v8963, %v8959
    %v9668 = vpack.c.b16 %v8968, %v8964
    %v9669 = vpack.c.b16 %v8969, %v8965
    %v9670 = vpack.c.b16 %v8970, %v8966
    %v9671 = vpack.c.b16 %v8971, %v8967
    %v9672 = vpack.c.b16 %v8976, %v8972
    %v9673 = vpack.c.b16 %v8977, %v8973
    %v9674 = vpack.c.b16 %v8978, %v8974
    %v9675 = vpack.c.b16 %v8979, %v8975
    %v9676 = vpack.c.b16 %v8984, %v8980
    %v9677 = vpack.c.b16 %v8985, %v8981
    %v9678 = vpack.c.b16 %v8986, %v8982
    %v9679 = vpack.c.b16 %v8987, %v8983
    %v9680 = vpack.c.b16 %v8992, %v8988
    %v9681 = vpack.c.b16 %v8993, %v8989
    %v9682 = vpack.c.b16 %v8994, %v8990
    %v9683 = vpack.c.b16 %v8995, %v8991
    %v9684 = vpack.c.b16 %v9000, %v8996
    %v9685 = vpack.c.b16 %v9001, %v8997
    %v9686 = vpack.c.b16 %v9002, %v8998
    %v9687 = vpack.c.b16 %v9003, %v8999
    %v9688 = vpack.c.b16 %v9008, %v9004
    %v9689 = vpack.c.b16 %v9009, %v9005
    %v9690 = vpack.c.b16 %v9010, %v9006
    %v9691 = vpack.c.b16 %v9011, %v9007
    %v9692 = vpack.c.b16 %v9016, %v9012
    %v9693 = vpack.c.b16 %v9017, %v9013
    %v9694 = vpack.c.b16 %v9018, %v9014
    %v9695 = vpack.c.b16 %v9019, %v9015
    %v9696 = vpack.c.b16 %v9024, %v9020
    %v9697 = vpack.c.b16 %v9025, %v9021
    %v9698 = vpack.c.b16 %v9026, %v9022
    %v9699 = vpack.c.b16 %v9027, %v9023
    %v9700 = vpack.c.b16 %v9032, %v9028
    %v9701 = vpack.c.b16 %v9033, %v9029
    %v9702 = vpack.c.b16 %v9034, %v9030
    %v9703 = vpack.c.b16 %v9035, %v9031
    %v9704 = vpack.c.b16 %v9040, %v9036
    %v9705 = vpack.c.b16 %v9041, %v9037
    %v9706 = vpack.c.b16 %v9042, %v9038
    %v9707 = vpack.c.b16 %v9043, %v9039
    %v9708 = vpack.c.b16 %v9048, %v9044
    %v9709 = vpack.c.b16 %v9049, %v9045
    %v9710 = vpack.c.b16 %v9050, %v9046
    %v9711 = vpack.c.b16 %v9051, %v9047
    %v9712 = vpack.c.b16 %v9056, %v9052
    %v9713 = vpack.c.b16 %v9057, %v9053
    %v9714 = vpack.c.b16 %v9058, %v9054
    %v9715 = vpack.c.b16 %v9059, %v9055
    %v9716 = vpack.c.b16 %v9064, %v9060
    %v9717 = vpack.c.b16 %v9065, %v9061
    %v9718 = vpack.c.b16 %v9066, %v9062
    %v9719 = vpack.c.b16 %v9067, %v9063
    %v9720 = vpack.c.b16 %v9072, %v9068
    %v9721 = vpack.c.b16 %v9073, %v9069
    %v9722 = vpack.c.b16 %v9074, %v9070
    %v9723 = vpack.c.b16 %v9075, %v9071
    %v9724 = vpack.c.b16 %v9080, %v9076
    %v9725 = vpack.c.b16 %v9081, %v9077
    %v9726 = vpack.c.b16 %v9082, %v9078
    %v9727 = vpack.c.b16 %v9083, %v9079
    %v9728 = vpack.c.b16 %v9088, %v9084
    %v9729 = vpack.c.b16 %v9089, %v9085
    %v9730 = vpack.c.b16 %v9090, %v9086
    %v9731 = vpack.c.b16 %v9091, %v9087
    %v9732 = vpack.c.b16 %v9096, %v9092
    %v9733 = vpack.c.b16 %v9097, %v9093
    %v9734 = vpack.c.b16 %v9098, %v9094
    %v9735 = vpack.c.b16 %v9099, %v9095
    %v9736 = vpack.c.b16 %v9104, %v9100
    %v9737 = vpack.c.b16 %v9105, %v9101
    %v9738 = vpack.c.b16 %v9106, %v9102
    %v9739 = vpack.c.b16 %v9107, %v9103
    %v9740 = vpack.c.b16 %v9112, %v9108
    %v9741 = vpack.c.b16 %v9113, %v9109
    %v9742 = vpack.c.b16 %v9114, %v9110
    %v9743 = vpack.c.b16 %v9115, %v9111
    %v9744 = vpack.c.b16 %v9120, %v9116
    %v9745 = vpack.c.b16 %v9121, %v9117
    %v9746 = vpack.c.b16 %v9122, %v9118
    %v9747 = vpack.c.b16 %v9123, %v9119
    %v9748 = vpack.c.b16 %v9128, %v9124
    %v9749 = vpack.c.b16 %v9129, %v9125
    %v9750 = vpack.c.b16 %v9130, %v9126
    %v9751 = vpack.c.b16 %v9131, %v9127
    %v9752 = vpack.c.b16 %v9136, %v9132
    %v9753 = vpack.c.b16 %v9137, %v9133
    %v9754 = vpack.c.b16 %v9138, %v9134
    %v9755 = vpack.c.b16 %v9139, %v9135
    %v9756 = vpack.c.b16 %v9144, %v9140
    %v9757 = vpack.c.b16 %v9145, %v9141
    %v9758 = vpack.c.b16 %v9146, %v9142
    %v9759 = vpack.c.b16 %v9147, %v9143
    %v9760 = vpack.c.b16 %v9152, %v9148
    %v9761 = vpack.c.b16 %v9153, %v9149
    %v9762 = vpack.c.b16 %v9154, %v9150
    %v9763 = vpack.c.b16 %v9155, %v9151
    %v9764 = vpack.c.b16 %v9160, %v9156
    %v9765 = vpack.c.b16 %v9161, %v9157
    %v9766 = vpack.c.b16 %v9162, %v9158
    %v9767 = vpack.c.b16 %v9163, %v9159
    %v9768 = vpack.c.b16 %v9168, %v9164
    %v9769 = vpack.c.b16 %v9169, %v9165
    %v9770 = vpack.c.b16 %v9170, %v9166
    %v9771 = vpack.c.b16 %v9171, %v9167
    %v9772 = vpack.c.b16 %v9176, %v9172
    %v9773 = vpack.c.b16 %v9177, %v9173
    %v9774 = vpack.c.b16 %v9178, %v9174
    %v9775 = vpack.c.b16 %v9179, %v9175
    %v9776 = vpack.c.b16 %v9184, %v9180
    %v9777 = vpack.c.b16 %v9185, %v9181
    %v9778 = vpack.c.b16 %v9186, %v9182
    %v9779 = vpack.c.b16 %v9187, %v9183
    %v9780 = vpack.c.b16 %v9192, %v9188
    %v9781 = vpack.c.b16 %v9193, %v9189
    %v9782 = vpack.c.b16 %v9194, %v9190
    %v9783 = vpack.c.b16 %v9195, %v9191
    %v9784 = vpack.c.b16 %v9200, %v9196
    %v9785 = vpack.c.b16 %v9201, %v9197
    %v9786 = vpack.c.b16 %v9202, %v9198
    %v9787 = vpack.c.b16 %v9203, %v9199
    %v9788 = vpack.c.b16 %v9208, %v9204
    %v9789 = vpack.c.b16 %v9209, %v9205
    %v9790 = vpack.c.b16 %v9210, %v9206
    %v9791 = vpack.c.b16 %v9211, %v9207
    %v9792 = vpack.c.b16 %v9216, %v9212
    %v9793 = vpack.c.b16 %v9217, %v9213
    %v9794 = vpack.c.b16 %v9218, %v9214
    %v9795 = vpack.c.b16 %v9219, %v9215
    %v9796 = vpack.c.b16 %v9224, %v9220
    %v9797 = vpack.c.b16 %v9225, %v9221
    %v9798 = vpack.c.b16 %v9226, %v9222
    %v9799 = vpack.c.b16 %v9227, %v9223
    %v9800 = vpack.c.b16 %v9232, %v9228
    %v9801 = vpack.c.b16 %v9233, %v9229
    %v9802 = vpack.c.b16 %v9234, %v9230
    %v9803 = vpack.c.b16 %v9235, %v9231
    %v9804 = vpack.c.b16 %v9240, %v9236
    %v9805 = vpack.c.b16 %v9241, %v9237
    %v9806 = vpack.c.b16 %v9242, %v9238
    %v9807 = vpack.c.b16 %v9243, %v9239
    %v9808 = vpack.c.b16 %v9248, %v9244
    %v9809 = vpack.c.b16 %v9249, %v9245
    %v9810 = vpack.c.b16 %v9250, %v9246
    %v9811 = vpack.c.b16 %v9251, %v9247
    %v9812 = vpack.c.b16 %v9256, %v9252
    %v9813 = vpack.c.b16 %v9257, %v9253
    %v9814 = vpack.c.b16 %v9258, %v9254
    %v9815 = vpack.c.b16 %v9259, %v9255
    %v9816 = vpack.c.b16 %v9264, %v9260
    %v9817 = vpack.c.b16 %v9265, %v9261
    %v9818 = vpack.c.b16 %v9266, %v9262
    %v9819 = vpack.c.b16 %v9267, %v9263
    %v9820 = vpack.c.b16 %v9272, %v9268
    %v9821 = vpack.c.b16 %v9273, %v9269
    %v9822 = vpack.c.b16 %v9274, %v9270
    %v9823 = vpack.c.b16 %v9275, %v9271
    %v9824 = vpack.c.b16 %v9280, %v9276
    %v9825 = vpack.c.b16 %v9281, %v9277
    %v9826 = vpack.c.b16 %v9282, %v9278
    %v9827 = vpack.c.b16 %v9283, %v9279
    %v9828 = vpack.c.b16 %v9288, %v9284
    %v9829 = vpack.c.b16 %v9289, %v9285
    %v9830 = vpack.c.b16 %v9290, %v9286
    %v9831 = vpack.c.b16 %v9291, %v9287
    %v9832 = vpack.c.b16 %v9296, %v9292
    %v9833 = vpack.c.b16 %v9297, %v9293
    %v9834 = vpack.c.b16 %v9298, %v9294
    %v9835 = vpack.c.b16 %v9299, %v9295
    %v9836 = vpack.c.b16 %v9304, %v9300
    %v9837 = vpack.c.b16 %v9305, %v9301
    %v9838 = vpack.c.b16 %v9306, %v9302
    %v9839 = vpack.c.b16 %v9307, %v9303
    %v9840 = vpack.c.b16 %v9312, %v9308
    %v9841 = vpack.c.b16 %v9313, %v9309
    %v9842 = vpack.c.b16 %v9314, %v9310
    %v9843 = vpack.c.b16 %v9315, %v9311
    %v9844 = vpack.c.b16 %v9320, %v9316
    %v9845 = vpack.c.b16 %v9321, %v9317
    %v9846 = vpack.c.b16 %v9322, %v9318
    %v9847 = vpack.c.b16 %v9323, %v9319
    %v9848 = vpack.c.b16 %v9328, %v9324
    %v9849 = vpack.c.b16 %v9329, %v9325
    %v9850 = vpack.c.b16 %v9330, %v9326
    %v9851 = vpack.c.b16 %v9331, %v9327
    %v9852 = vpack.c.b16 %v9336, %v9332
    %v9853 = vpack.c.b16 %v9337, %v9333
    %v9854 = vpack.c.b16 %v9338, %v9334
    %v9855 = vpack.c.b16 %v9339, %v9335
    %v9856 = vpack.c.b16 %v9344, %v9340
    %v9857 = vpack.c.b16 %v9345, %v9341
    %v9858 = vpack.c.b16 %v9346, %v9342
    %v9859 = vpack.c.b16 %v9347, %v9343
    %v9860 = vpack.c.b16 %v9352, %v9348
    %v9861 = vpack.c.b16 %v9353, %v9349
    %v9862 = vpack.c.b16 %v9354, %v9350
    %v9863 = vpack.c.b16 %v9355, %v9351
    %v9864 = vpack.c.b16 %v9360, %v9356
    %v9865 = vpack.c.b16 %v9361, %v9357
    %v9866 = vpack.c.b16 %v9362, %v9358
    %v9867 = vpack.c.b16 %v9363, %v9359
    %v9868 = vpack.c.b16 %v9368, %v9364
    %v9869 = vpack.c.b16 %v9369, %v9365
    %v9870 = vpack.c.b16 %v9370, %v9366
    %v9871 = vpack.c.b16 %v9371, %v9367
    %v9872 = vpack.c.b16 %v9376, %v9372
    %v9873 = vpack.c.b16 %v9377, %v9373
    %v9874 = vpack.c.b16 %v9378, %v9374
    %v9875 = vpack.c.b16 %v9379, %v9375
    %v9876 = vpack.c.b16 %v9384, %v9380
    %v9877 = vpack.c.b16 %v9385, %v9381
    %v9878 = vpack.c.b16 %v9386, %v9382
    %v9879 = vpack.c.b16 %v9387, %v9383
    %v9880 = vpack.c.b16 %v9392, %v9388
    %v9881 = vpack.c.b16 %v9393, %v9389
    %v9882 = vpack.c.b16 %v9394, %v9390
    %v9883 = vpack.c.b16 %v9395, %v9391
    %v9884 = vpack.c.b16 %v9400, %v9396
    %v9885 = vpack.c.b16 %v9401, %v9397
    %v9886 = vpack.c.b16 %v9402, %v9398
    %v9887 = vpack.c.b16 %v9403, %v9399
    %v9888 = vpack.c.b16 %v9408, %v9404
    %v9889 = vpack.c.b16 %v9409, %v9405
    %v9890 = vpack.c.b16 %v9410, %v9406
    %v9891 = vpack.c.b16 %v9411, %v9407
    %v9892 = vpack.c.b16 %v9416, %v9412
    %v9893 = vpack.c.b16 %v9417, %v9413
    %v9894 = vpack.c.b16 %v9418, %v9414
    %v9895 = vpack.c.b16 %v9419, %v9415
    %v9896 = vpack.c.b16 %v9424, %v9420
    %v9897 = vpack.c.b16 %v9425, %v9421
    %v9898 = vpack.c.b16 %v9426, %v9422
    %v9899 = vpack.c.b16 %v9427, %v9423
    %v9900 = vpack.c.b16 %v9432, %v9428
    %v9901 = vpack.c.b16 %v9433, %v9429
    %v9902 = vpack.c.b16 %v9434, %v9430
    %v9903 = vpack.c.b16 %v9435, %v9431
    %v9904 = vpack.c.b16 %v9440, %v9436
    %v9905 = vpack.c.b16 %v9441, %v9437
    %v9906 = vpack.c.b16 %v9442, %v9438
    %v9907 = vpack.c.b16 %v9443, %v9439
    %v9908 = vpack.c.b16 %v9448, %v9444
    %v9909 = vpack.c.b16 %v9449, %v9445
    %v9910 = vpack.c.b16 %v9450, %v9446
    %v9911 = vpack.c.b16 %v9451, %v9447
    %v9912 = vpack.c.b16 %v9456, %v9452
    %v9913 = vpack.c.b16 %v9457, %v9453
    %v9914 = vpack.c.b16 %v9458, %v9454
    %v9915 = vpack.c.b16 %v9459, %v9455
    %v9916 = vpack.c.b16 %v9464, %v9460
    %v9917 = vpack.c.b16 %v9465, %v9461
    %v9918 = vpack.c.b16 %v9466, %v9462
    %v9919 = vpack.c.b16 %v9467, %v9463
    %v9920 = vpack.c.b16 %v9472, %v9468
    %v9921 = vpack.c.b16 %v9473, %v9469
    %v9922 = vpack.c.b16 %v9474, %v9470
    %v9923 = vpack.c.b16 %v9475, %v9471
    %v9924 = vpack.c.b16 %v9480, %v9476
    %v9925 = vpack.c.b16 %v9481, %v9477
    %v9926 = vpack.c.b16 %v9482, %v9478
    %v9927 = vpack.c.b16 %v9483, %v9479
    %v9928 = vpack.c.b16 %v9488, %v9484
    %v9929 = vpack.c.b16 %v9489, %v9485
    %v9930 = vpack.c.b16 %v9490, %v9486
    %v9931 = vpack.c.b16 %v9491, %v9487
    %v9932 = vpack.c.b16 %v9496, %v9492
    %v9933 = vpack.c.b16 %v9497, %v9493
    %v9934 = vpack.c.b16 %v9498, %v9494
    %v9935 = vpack.c.b16 %v9499, %v9495
    %v9936 = vpack.c.b16 %v9504, %v9500
    %v9937 = vpack.c.b16 %v9505, %v9501
    %v9938 = vpack.c.b16 %v9506, %v9502
    %v9939 = vpack.c.b16 %v9507, %v9503
    %v9940 = vpack.c.b16 %v9512, %v9508
    %v9941 = vpack.c.b16 %v9513, %v9509
    %v9942 = vpack.c.b16 %v9514, %v9510
    %v9943 = vpack.c.b16 %v9515, %v9511
    %v9944 = vpack.c.b16 %v9520, %v9516
    %v9945 = vpack.c.b16 %v9521, %v9517
    %v9946 = vpack.c.b16 %v9522, %v9518
    %v9947 = vpack.c.b16 %v9523, %v9519
    %v9948 = vpack.c.b16 %v9528, %v9524
    %v9949 = vpack.c.b16 %v9529, %v9525
    %v9950 = vpack.c.b16 %v9530, %v9526
    %v9951 = vpack.c.b16 %v9531, %v9527
    %v9952 = vpack.c.b16 %v9536, %v9532
    %v9953 = vpack.c.b16 %v9537, %v9533
    %v9954 = vpack.c.b16 %v9538, %v9534
    %v9955 = vpack.c.b16 %v9539, %v9535
    %v9956 = vpack.c.b16 %v9544, %v9540
    %v9957 = vpack.c.b16 %v9545, %v9541
    %v9958 = vpack.c.b16 %v9546, %v9542
    %v9959 = vpack.c.b16 %v9547, %v9543
    %v9960 = vpack.c.b16 %v9552, %v9548
    %v9961 = vpack.c.b16 %v9553, %v9549
    %v9962 = vpack.c.b16 %v9554, %v9550
    %v9963 = vpack.c.b16 %v9555, %v9551
    %v9964 = vpack.c.b16 %v9560, %v9556
    %v9965 = vpack.c.b16 %v9561, %v9557
    %v9966 = vpack.c.b16 %v9562, %v9558
    %v9967 = vpack.c.b16 %v9563, %v9559
    %v9968 = vpack.c.b16 %v9568, %v9564
    %v9969 = vpack.c.b16 %v9569, %v9565
    %v9970 = vpack.c.b16 %v9570, %v9566
    %v9971 = vpack.c.b16 %v9571, %v9567
    %v9972 = vpack.c.b16 %v9576, %v9572
    %v9973 = vpack.c.b16 %v9577, %v9573
    %v9974 = vpack.c.b16 %v9578, %v9574
    %v9975 = vpack.c.b16 %v9579, %v9575
    %v9976 = vpack.c.b16 %v9584, %v9580
    %v9977 = vpack.c.b16 %v9585, %v9581
    %v9978 = vpack.c.b16 %v9586, %v9582
    %v9979 = vpack.c.b16 %v9587, %v9583
    %v10373 = vsel %vm34, %v8009, 0
    %10375 = vmatpush.bf16.msra.mxu0 %v9616
    %10376 = vmatpush.bf16.msra.mxu0 %v9612
    %10377 = vmatpush.bf16.msra.mxu0 %v9608
    %10378 = vmatpush.bf16.msra.mxu0 %v9604
    %10379 = vmatpush.bf16.msra.mxu0 %v9600
    %10380 = vmatpush.bf16.msra.mxu0 %v9596
    %10381 = vmatpush.bf16.msra.mxu0 %v9592
    %10382 = vmatpush.bf16.msra.mxu0 %v9588
    %10383 = vmatmul.bf16.gmra.mxu0 %v7997
    %v10384 = vpop.f32.mrf.mxu0
    %v10385 = vadd.f32 %v8404, %v10384
    %v10386 = vpop.f32.mrf.mxu0
    %10387 = vdwg.mxu0
    %10388 = vmatpush.bf16.msra.mxu0 %v9648
    %10389 = vmatpush.bf16.msra.mxu0 %v9644
    %10390 = vmatpush.bf16.msra.mxu0 %v9640
    %10391 = vmatpush.bf16.msra.mxu0 %v9636
    %10392 = vmatpush.bf16.msra.mxu0 %v9632
    %10393 = vmatpush.bf16.msra.mxu0 %v9628
    %10394 = vmatpush.bf16.msra.mxu0 %v9624
    %10395 = vmatpush.bf16.msra.mxu0 %v9620
    %10396 = vmatmul.bf16.gmra.mxu0 %v7998
    %v10397 = vpop.f32.mrf.mxu0
    %v10398 = vadd.f32 %v10385, %v10397
    %v10399 = vpop.f32.mrf.mxu0
    %10400 = vdwg.mxu0
    %10401 = vmatpush.bf16.msra.mxu0 %v9680
    %10402 = vmatpush.bf16.msra.mxu0 %v9676
    %10403 = vmatpush.bf16.msra.mxu0 %v9672
    %10404 = vmatpush.bf16.msra.mxu0 %v9668
    %10405 = vmatpush.bf16.msra.mxu0 %v9664
    %10406 = vmatpush.bf16.msra.mxu0 %v9660
    %10407 = vmatpush.bf16.msra.mxu0 %v9656
    %10408 = vmatpush.bf16.msra.mxu0 %v9652
    %10409 = vmatmul.bf16.gmra.mxu0 %v7999
    %v10410 = vpop.f32.mrf.mxu0
    %v10411 = vadd.f32 %v10398, %v10410
    %v10412 = vpop.f32.mrf.mxu0
    %10413 = vdwg.mxu0
    %10414 = vmatpush.bf16.msra.mxu0 %v9712
    %10415 = vmatpush.bf16.msra.mxu0 %v9708
    %10416 = vmatpush.bf16.msra.mxu0 %v9704
    %10417 = vmatpush.bf16.msra.mxu0 %v9700
    %10418 = vmatpush.bf16.msra.mxu0 %v9696
    %10419 = vmatpush.bf16.msra.mxu0 %v9692
    %10420 = vmatpush.bf16.msra.mxu0 %v9688
    %10421 = vmatpush.bf16.msra.mxu0 %v9684
    %10422 = vmatmul.bf16.gmra.mxu0 %v8000
    %v10423 = vpop.f32.mrf.mxu0
    %v10424 = vadd.f32 %v10411, %v10423
    %v10425 = vpop.f32.mrf.mxu0
    %10426 = vdwg.mxu0
    %10427 = vmatpush.bf16.msra.mxu0 %v9744
    %10428 = vmatpush.bf16.msra.mxu0 %v9740
    %10429 = vmatpush.bf16.msra.mxu0 %v9736
    %10430 = vmatpush.bf16.msra.mxu0 %v9732
    %10431 = vmatpush.bf16.msra.mxu0 %v9728
    %10432 = vmatpush.bf16.msra.mxu0 %v9724
    %10433 = vmatpush.bf16.msra.mxu0 %v9720
    %10434 = vmatpush.bf16.msra.mxu0 %v9716
    %10435 = vmatmul.bf16.gmra.mxu0 %v8001
    %v10436 = vpop.f32.mrf.mxu0
    %v10437 = vadd.f32 %v10424, %v10436
    %v10438 = vpop.f32.mrf.mxu0
    %10439 = vdwg.mxu0
    %10440 = vmatpush.bf16.msra.mxu0 %v9776
    %10441 = vmatpush.bf16.msra.mxu0 %v9772
    %10442 = vmatpush.bf16.msra.mxu0 %v9768
    %10443 = vmatpush.bf16.msra.mxu0 %v9764
    %10444 = vmatpush.bf16.msra.mxu0 %v9760
    %10445 = vmatpush.bf16.msra.mxu0 %v9756
    %10446 = vmatpush.bf16.msra.mxu0 %v9752
    %10447 = vmatpush.bf16.msra.mxu0 %v9748
    %10448 = vmatmul.bf16.gmra.mxu0 %v8002
    %v10449 = vpop.f32.mrf.mxu0
    %v10450 = vadd.f32 %v10437, %v10449
    %v10451 = vpop.f32.mrf.mxu0
    %10452 = vdwg.mxu0
    %10453 = vmatpush.bf16.msra.mxu0 %v9808
    %10454 = vmatpush.bf16.msra.mxu0 %v9804
    %10455 = vmatpush.bf16.msra.mxu0 %v9800
    %10456 = vmatpush.bf16.msra.mxu0 %v9796
    %10457 = vmatpush.bf16.msra.mxu0 %v9792
    %10458 = vmatpush.bf16.msra.mxu0 %v9788
    %10459 = vmatpush.bf16.msra.mxu0 %v9784
    %10460 = vmatpush.bf16.msra.mxu0 %v9780
    %10461 = vmatmul.bf16.gmra.mxu0 %v8003
    %v10462 = vpop.f32.mrf.mxu0
    %v10463 = vadd.f32 %v10450, %v10462
    %v10464 = vpop.f32.mrf.mxu0
    %10465 = vdwg.mxu0
    %10466 = vmatpush.bf16.msra.mxu0 %v9840
    %10467 = vmatpush.bf16.msra.mxu0 %v9836
    %10468 = vmatpush.bf16.msra.mxu0 %v9832
    %10469 = vmatpush.bf16.msra.mxu0 %v9828
    %10470 = vmatpush.bf16.msra.mxu0 %v9824
    %10471 = vmatpush.bf16.msra.mxu0 %v9820
    %10472 = vmatpush.bf16.msra.mxu0 %v9816
    %10473 = vmatpush.bf16.msra.mxu0 %v9812
    %10474 = vmatmul.bf16.gmra.mxu0 %v8004
    %v10475 = vpop.f32.mrf.mxu0
    %v10476 = vadd.f32 %v10463, %v10475
    %v10477 = vpop.f32.mrf.mxu0
    %10478 = vdwg.mxu0
    %10479 = vmatpush.bf16.msra.mxu0 %v9872
    %10480 = vmatpush.bf16.msra.mxu0 %v9868
    %10481 = vmatpush.bf16.msra.mxu0 %v9864
    %10482 = vmatpush.bf16.msra.mxu0 %v9860
    %10483 = vmatpush.bf16.msra.mxu0 %v9856
    %10484 = vmatpush.bf16.msra.mxu0 %v9852
    %10485 = vmatpush.bf16.msra.mxu0 %v9848
    %10486 = vmatpush.bf16.msra.mxu0 %v9844
    %10487 = vmatmul.bf16.gmra.mxu0 %v8005
    %v10488 = vpop.f32.mrf.mxu0
    %v10489 = vadd.f32 %v10476, %v10488
    %v10490 = vpop.f32.mrf.mxu0
    %10491 = vdwg.mxu0
    %10492 = vmatpush.bf16.msra.mxu0 %v9904
    %10493 = vmatpush.bf16.msra.mxu0 %v9900
    %10494 = vmatpush.bf16.msra.mxu0 %v9896
    %10495 = vmatpush.bf16.msra.mxu0 %v9892
    %10496 = vmatpush.bf16.msra.mxu0 %v9888
    %10497 = vmatpush.bf16.msra.mxu0 %v9884
    %10498 = vmatpush.bf16.msra.mxu0 %v9880
    %10499 = vmatpush.bf16.msra.mxu0 %v9876
    %10500 = vmatmul.bf16.gmra.mxu0 %v8006
    %v10501 = vpop.f32.mrf.mxu0
    %v10502 = vadd.f32 %v10489, %v10501
    %v10503 = vpop.f32.mrf.mxu0
    %10504 = vdwg.mxu0
    %10505 = vmatpush.bf16.msra.mxu0 %v9936
    %10506 = vmatpush.bf16.msra.mxu0 %v9932
    %10507 = vmatpush.bf16.msra.mxu0 %v9928
    %10508 = vmatpush.bf16.msra.mxu0 %v9924
    %10509 = vmatpush.bf16.msra.mxu0 %v9920
    %10510 = vmatpush.bf16.msra.mxu0 %v9916
    %10511 = vmatpush.bf16.msra.mxu0 %v9912
    %10512 = vmatpush.bf16.msra.mxu0 %v9908
    %10513 = vmatmul.bf16.gmra.mxu0 %v8007
    %v10514 = vpop.f32.mrf.mxu0
    %v10515 = vadd.f32 %v10502, %v10514
    %v10516 = vpop.f32.mrf.mxu0
    %10517 = vdwg.mxu0
    %10518 = vmatpush.bf16.msra.mxu0 %v9968
    %10519 = vmatpush.bf16.msra.mxu0 %v9964
    %10520 = vmatpush.bf16.msra.mxu0 %v9960
    %10521 = vmatpush.bf16.msra.mxu0 %v9956
    %10522 = vmatpush.bf16.msra.mxu0 %v9952
    %10523 = vmatpush.bf16.msra.mxu0 %v9948
    %10524 = vmatpush.bf16.msra.mxu0 %v9944
    %10525 = vmatpush.bf16.msra.mxu0 %v9940
    %10526 = vmatmul.bf16.gmra.mxu0 %v8008
    %v10527 = vpop.f32.mrf.mxu0
    %v10528 = vadd.f32 %v10515, %v10527
    %v10529 = vpop.f32.mrf.mxu0
    %10530 = vdwg.mxu0
    %10531 = vmatpush.bf16.msra.mxu0 0
    %10532 = vmatpush.bf16.msra.mxu0 0
    %10533 = vmatpush.bf16.msra.mxu0 0
    %10534 = vmatpush.bf16.msra.mxu0 0
    %10535 = vmatpush.bf16.msra.mxu0 0
    %10536 = vmatpush.bf16.msra.mxu0 0
    %10537 = vmatpush.bf16.msra.mxu0 %v9976
    %10538 = vmatpush.bf16.msra.mxu0 %v9972
    %10539 = vmatmul.bf16.gmra.mxu0 %v10373
    %v10540 = vpop.f32.mrf.mxu0
    %v10541 = vadd.f32 %v10528, %v10540
    %v10542 = vpop.f32.mrf.mxu0
    %10543 = vdwg.mxu0
    %10544 = vmatpush.bf16.msra.mxu0 %v9617
    %10545 = vmatpush.bf16.msra.mxu0 %v9613
    %10546 = vmatpush.bf16.msra.mxu0 %v9609
    %10547 = vmatpush.bf16.msra.mxu0 %v9605
    %10548 = vmatpush.bf16.msra.mxu0 %v9601
    %10549 = vmatpush.bf16.msra.mxu0 %v9597
    %10550 = vmatpush.bf16.msra.mxu0 %v9593
    %10551 = vmatpush.bf16.msra.mxu0 %v9589
    %10552 = vmatmul.bf16.gmra.mxu0 %v7997
    %v10553 = vpop.f32.mrf.mxu0
    %v10554 = vadd.f32 %v8405, %v10553
    %v10555 = vpop.f32.mrf.mxu0
    %10556 = vdwg.mxu0
    %10557 = vmatpush.bf16.msra.mxu0 %v9649
    %10558 = vmatpush.bf16.msra.mxu0 %v9645
    %10559 = vmatpush.bf16.msra.mxu0 %v9641
    %10560 = vmatpush.bf16.msra.mxu0 %v9637
    %10561 = vmatpush.bf16.msra.mxu0 %v9633
    %10562 = vmatpush.bf16.msra.mxu0 %v9629
    %10563 = vmatpush.bf16.msra.mxu0 %v9625
    %10564 = vmatpush.bf16.msra.mxu0 %v9621
    %10565 = vmatmul.bf16.gmra.mxu0 %v7998
    %v10566 = vpop.f32.mrf.mxu0
    %v10567 = vadd.f32 %v10554, %v10566
    %v10568 = vpop.f32.mrf.mxu0
    %10569 = vdwg.mxu0
    %10570 = vmatpush.bf16.msra.mxu0 %v9681
    %10571 = vmatpush.bf16.msra.mxu0 %v9677
    %10572 = vmatpush.bf16.msra.mxu0 %v9673
    %10573 = vmatpush.bf16.msra.mxu0 %v9669
    %10574 = vmatpush.bf16.msra.mxu0 %v9665
    %10575 = vmatpush.bf16.msra.mxu0 %v9661
    %10576 = vmatpush.bf16.msra.mxu0 %v9657
    %10577 = vmatpush.bf16.msra.mxu0 %v9653
    %10578 = vmatmul.bf16.gmra.mxu0 %v7999
    %v10579 = vpop.f32.mrf.mxu0
    %v10580 = vadd.f32 %v10567, %v10579
    %v10581 = vpop.f32.mrf.mxu0
    %10582 = vdwg.mxu0
    %10583 = vmatpush.bf16.msra.mxu0 %v9713
    %10584 = vmatpush.bf16.msra.mxu0 %v9709
    %10585 = vmatpush.bf16.msra.mxu0 %v9705
    %10586 = vmatpush.bf16.msra.mxu0 %v9701
    %10587 = vmatpush.bf16.msra.mxu0 %v9697
    %10588 = vmatpush.bf16.msra.mxu0 %v9693
    %10589 = vmatpush.bf16.msra.mxu0 %v9689
    %10590 = vmatpush.bf16.msra.mxu0 %v9685
    %10591 = vmatmul.bf16.gmra.mxu0 %v8000
    %v10592 = vpop.f32.mrf.mxu0
    %v10593 = vadd.f32 %v10580, %v10592
    %v10594 = vpop.f32.mrf.mxu0
    %10595 = vdwg.mxu0
    %10596 = vmatpush.bf16.msra.mxu0 %v9745
    %10597 = vmatpush.bf16.msra.mxu0 %v9741
    %10598 = vmatpush.bf16.msra.mxu0 %v9737
    %10599 = vmatpush.bf16.msra.mxu0 %v9733
    %10600 = vmatpush.bf16.msra.mxu0 %v9729
    %10601 = vmatpush.bf16.msra.mxu0 %v9725
    %10602 = vmatpush.bf16.msra.mxu0 %v9721
    %10603 = vmatpush.bf16.msra.mxu0 %v9717
    %10604 = vmatmul.bf16.gmra.mxu0 %v8001
    %v10605 = vpop.f32.mrf.mxu0
    %v10606 = vadd.f32 %v10593, %v10605
    %v10607 = vpop.f32.mrf.mxu0
    %10608 = vdwg.mxu0
    %10609 = vmatpush.bf16.msra.mxu0 %v9777
    %10610 = vmatpush.bf16.msra.mxu0 %v9773
    %10611 = vmatpush.bf16.msra.mxu0 %v9769
    %10612 = vmatpush.bf16.msra.mxu0 %v9765
    %10613 = vmatpush.bf16.msra.mxu0 %v9761
    %10614 = vmatpush.bf16.msra.mxu0 %v9757
    %10615 = vmatpush.bf16.msra.mxu0 %v9753
    %10616 = vmatpush.bf16.msra.mxu0 %v9749
    %10617 = vmatmul.bf16.gmra.mxu0 %v8002
    %v10618 = vpop.f32.mrf.mxu0
    %v10619 = vadd.f32 %v10606, %v10618
    %v10620 = vpop.f32.mrf.mxu0
    %10621 = vdwg.mxu0
    %10622 = vmatpush.bf16.msra.mxu0 %v9809
    %10623 = vmatpush.bf16.msra.mxu0 %v9805
    %10624 = vmatpush.bf16.msra.mxu0 %v9801
    %10625 = vmatpush.bf16.msra.mxu0 %v9797
    %10626 = vmatpush.bf16.msra.mxu0 %v9793
    %10627 = vmatpush.bf16.msra.mxu0 %v9789
    %10628 = vmatpush.bf16.msra.mxu0 %v9785
    %10629 = vmatpush.bf16.msra.mxu0 %v9781
    %10630 = vmatmul.bf16.gmra.mxu0 %v8003
    %v10631 = vpop.f32.mrf.mxu0
    %v10632 = vadd.f32 %v10619, %v10631
    %v10633 = vpop.f32.mrf.mxu0
    %10634 = vdwg.mxu0
    %10635 = vmatpush.bf16.msra.mxu0 %v9841
    %10636 = vmatpush.bf16.msra.mxu0 %v9837
    %10637 = vmatpush.bf16.msra.mxu0 %v9833
    %10638 = vmatpush.bf16.msra.mxu0 %v9829
    %10639 = vmatpush.bf16.msra.mxu0 %v9825
    %10640 = vmatpush.bf16.msra.mxu0 %v9821
    %10641 = vmatpush.bf16.msra.mxu0 %v9817
    %10642 = vmatpush.bf16.msra.mxu0 %v9813
    %10643 = vmatmul.bf16.gmra.mxu0 %v8004
    %v10644 = vpop.f32.mrf.mxu0
    %v10645 = vadd.f32 %v10632, %v10644
    %v10646 = vpop.f32.mrf.mxu0
    %10647 = vdwg.mxu0
    %10648 = vmatpush.bf16.msra.mxu0 %v9873
    %10649 = vmatpush.bf16.msra.mxu0 %v9869
    %10650 = vmatpush.bf16.msra.mxu0 %v9865
    %10651 = vmatpush.bf16.msra.mxu0 %v9861
    %10652 = vmatpush.bf16.msra.mxu0 %v9857
    %10653 = vmatpush.bf16.msra.mxu0 %v9853
    %10654 = vmatpush.bf16.msra.mxu0 %v9849
    %10655 = vmatpush.bf16.msra.mxu0 %v9845
    %10656 = vmatmul.bf16.gmra.mxu0 %v8005
    %v10657 = vpop.f32.mrf.mxu0
    %v10658 = vadd.f32 %v10645, %v10657
    %v10659 = vpop.f32.mrf.mxu0
    %10660 = vdwg.mxu0
    %10661 = vmatpush.bf16.msra.mxu0 %v9905
    %10662 = vmatpush.bf16.msra.mxu0 %v9901
    %10663 = vmatpush.bf16.msra.mxu0 %v9897
    %10664 = vmatpush.bf16.msra.mxu0 %v9893
    %10665 = vmatpush.bf16.msra.mxu0 %v9889
    %10666 = vmatpush.bf16.msra.mxu0 %v9885
    %10667 = vmatpush.bf16.msra.mxu0 %v9881
    %10668 = vmatpush.bf16.msra.mxu0 %v9877
    %10669 = vmatmul.bf16.gmra.mxu0 %v8006
    %v10670 = vpop.f32.mrf.mxu0
    %v10671 = vadd.f32 %v10658, %v10670
    %v10672 = vpop.f32.mrf.mxu0
    %10673 = vdwg.mxu0
    %10674 = vmatpush.bf16.msra.mxu0 %v9937
    %10675 = vmatpush.bf16.msra.mxu0 %v9933
    %10676 = vmatpush.bf16.msra.mxu0 %v9929
    %10677 = vmatpush.bf16.msra.mxu0 %v9925
    %10678 = vmatpush.bf16.msra.mxu0 %v9921
    %10679 = vmatpush.bf16.msra.mxu0 %v9917
    %10680 = vmatpush.bf16.msra.mxu0 %v9913
    %10681 = vmatpush.bf16.msra.mxu0 %v9909
    %10682 = vmatmul.bf16.gmra.mxu0 %v8007
    %v10683 = vpop.f32.mrf.mxu0
    %v10684 = vadd.f32 %v10671, %v10683
    %v10685 = vpop.f32.mrf.mxu0
    %10686 = vdwg.mxu0
    %10687 = vmatpush.bf16.msra.mxu0 %v9969
    %10688 = vmatpush.bf16.msra.mxu0 %v9965
    %10689 = vmatpush.bf16.msra.mxu0 %v9961
    %10690 = vmatpush.bf16.msra.mxu0 %v9957
    %10691 = vmatpush.bf16.msra.mxu0 %v9953
    %10692 = vmatpush.bf16.msra.mxu0 %v9949
    %10693 = vmatpush.bf16.msra.mxu0 %v9945
    %10694 = vmatpush.bf16.msra.mxu0 %v9941
    %10695 = vmatmul.bf16.gmra.mxu0 %v8008
    %v10696 = vpop.f32.mrf.mxu0
    %v10697 = vadd.f32 %v10684, %v10696
    %v10698 = vpop.f32.mrf.mxu0
    %10699 = vdwg.mxu0
    %10700 = vmatpush.bf16.msra.mxu0 0
    %10701 = vmatpush.bf16.msra.mxu0 0
    %10702 = vmatpush.bf16.msra.mxu0 0
    %10703 = vmatpush.bf16.msra.mxu0 0
    %10704 = vmatpush.bf16.msra.mxu0 0
    %10705 = vmatpush.bf16.msra.mxu0 0
    %10706 = vmatpush.bf16.msra.mxu0 %v9977
    %10707 = vmatpush.bf16.msra.mxu0 %v9973
    %10708 = vmatmul.bf16.gmra.mxu0 %v10373
    %v10709 = vpop.f32.mrf.mxu0
    %v10710 = vadd.f32 %v10697, %v10709
    %v10711 = vpop.f32.mrf.mxu0
    %10712 = vdwg.mxu0
    %10713 = vmatpush.bf16.msra.mxu0 %v9618
    %10714 = vmatpush.bf16.msra.mxu0 %v9614
    %10715 = vmatpush.bf16.msra.mxu0 %v9610
    %10716 = vmatpush.bf16.msra.mxu0 %v9606
    %10717 = vmatpush.bf16.msra.mxu0 %v9602
    %10718 = vmatpush.bf16.msra.mxu0 %v9598
    %10719 = vmatpush.bf16.msra.mxu0 %v9594
    %10720 = vmatpush.bf16.msra.mxu0 %v9590
    %10721 = vmatmul.bf16.gmra.mxu0 %v7997
    %v10722 = vpop.f32.mrf.mxu0
    %v10723 = vadd.f32 %v8406, %v10722
    %v10724 = vpop.f32.mrf.mxu0
    %10725 = vdwg.mxu0
    %10726 = vmatpush.bf16.msra.mxu0 %v9650
    %10727 = vmatpush.bf16.msra.mxu0 %v9646
    %10728 = vmatpush.bf16.msra.mxu0 %v9642
    %10729 = vmatpush.bf16.msra.mxu0 %v9638
    %10730 = vmatpush.bf16.msra.mxu0 %v9634
    %10731 = vmatpush.bf16.msra.mxu0 %v9630
    %10732 = vmatpush.bf16.msra.mxu0 %v9626
    %10733 = vmatpush.bf16.msra.mxu0 %v9622
    %10734 = vmatmul.bf16.gmra.mxu0 %v7998
    %v10735 = vpop.f32.mrf.mxu0
    %v10736 = vadd.f32 %v10723, %v10735
    %v10737 = vpop.f32.mrf.mxu0
    %10738 = vdwg.mxu0
    %10739 = vmatpush.bf16.msra.mxu0 %v9682
    %10740 = vmatpush.bf16.msra.mxu0 %v9678
    %10741 = vmatpush.bf16.msra.mxu0 %v9674
    %10742 = vmatpush.bf16.msra.mxu0 %v9670
    %10743 = vmatpush.bf16.msra.mxu0 %v9666
    %10744 = vmatpush.bf16.msra.mxu0 %v9662
    %10745 = vmatpush.bf16.msra.mxu0 %v9658
    %10746 = vmatpush.bf16.msra.mxu0 %v9654
    %10747 = vmatmul.bf16.gmra.mxu0 %v7999
    %v10748 = vpop.f32.mrf.mxu0
    %v10749 = vadd.f32 %v10736, %v10748
    %v10750 = vpop.f32.mrf.mxu0
    %10751 = vdwg.mxu0
    %10752 = vmatpush.bf16.msra.mxu0 %v9714
    %10753 = vmatpush.bf16.msra.mxu0 %v9710
    %10754 = vmatpush.bf16.msra.mxu0 %v9706
    %10755 = vmatpush.bf16.msra.mxu0 %v9702
    %10756 = vmatpush.bf16.msra.mxu0 %v9698
    %10757 = vmatpush.bf16.msra.mxu0 %v9694
    %10758 = vmatpush.bf16.msra.mxu0 %v9690
    %10759 = vmatpush.bf16.msra.mxu0 %v9686
    %10760 = vmatmul.bf16.gmra.mxu0 %v8000
    %v10761 = vpop.f32.mrf.mxu0
    %v10762 = vadd.f32 %v10749, %v10761
    %v10763 = vpop.f32.mrf.mxu0
    %10764 = vdwg.mxu0
    %10765 = vmatpush.bf16.msra.mxu0 %v9746
    %10766 = vmatpush.bf16.msra.mxu0 %v9742
    %10767 = vmatpush.bf16.msra.mxu0 %v9738
    %10768 = vmatpush.bf16.msra.mxu0 %v9734
    %10769 = vmatpush.bf16.msra.mxu0 %v9730
    %10770 = vmatpush.bf16.msra.mxu0 %v9726
    %10771 = vmatpush.bf16.msra.mxu0 %v9722
    %10772 = vmatpush.bf16.msra.mxu0 %v9718
    %10773 = vmatmul.bf16.gmra.mxu0 %v8001
    %v10774 = vpop.f32.mrf.mxu0
    %v10775 = vadd.f32 %v10762, %v10774
    %v10776 = vpop.f32.mrf.mxu0
    %10777 = vdwg.mxu0
    %10778 = vmatpush.bf16.msra.mxu0 %v9778
    %10779 = vmatpush.bf16.msra.mxu0 %v9774
    %10780 = vmatpush.bf16.msra.mxu0 %v9770
    %10781 = vmatpush.bf16.msra.mxu0 %v9766
    %10782 = vmatpush.bf16.msra.mxu0 %v9762
    %10783 = vmatpush.bf16.msra.mxu0 %v9758
    %10784 = vmatpush.bf16.msra.mxu0 %v9754
    %10785 = vmatpush.bf16.msra.mxu0 %v9750
    %10786 = vmatmul.bf16.gmra.mxu0 %v8002
    %v10787 = vpop.f32.mrf.mxu0
    %v10788 = vadd.f32 %v10775, %v10787
    %v10789 = vpop.f32.mrf.mxu0
    %10790 = vdwg.mxu0
    %10791 = vmatpush.bf16.msra.mxu0 %v9810
    %10792 = vmatpush.bf16.msra.mxu0 %v9806
    %10793 = vmatpush.bf16.msra.mxu0 %v9802
    %10794 = vmatpush.bf16.msra.mxu0 %v9798
    %10795 = vmatpush.bf16.msra.mxu0 %v9794
    %10796 = vmatpush.bf16.msra.mxu0 %v9790
    %10797 = vmatpush.bf16.msra.mxu0 %v9786
    %10798 = vmatpush.bf16.msra.mxu0 %v9782
    %10799 = vmatmul.bf16.gmra.mxu0 %v8003
    %v10800 = vpop.f32.mrf.mxu0
    %v10801 = vadd.f32 %v10788, %v10800
    %v10802 = vpop.f32.mrf.mxu0
    %10803 = vdwg.mxu0
    %10804 = vmatpush.bf16.msra.mxu0 %v9842
    %10805 = vmatpush.bf16.msra.mxu0 %v9838
    %10806 = vmatpush.bf16.msra.mxu0 %v9834
    %10807 = vmatpush.bf16.msra.mxu0 %v9830
    %10808 = vmatpush.bf16.msra.mxu0 %v9826
    %10809 = vmatpush.bf16.msra.mxu0 %v9822
    %10810 = vmatpush.bf16.msra.mxu0 %v9818
    %10811 = vmatpush.bf16.msra.mxu0 %v9814
    %10812 = vmatmul.bf16.gmra.mxu0 %v8004
    %v10813 = vpop.f32.mrf.mxu0
    %v10814 = vadd.f32 %v10801, %v10813
    %v10815 = vpop.f32.mrf.mxu0
    %10816 = vdwg.mxu0
    %10817 = vmatpush.bf16.msra.mxu0 %v9874
    %10818 = vmatpush.bf16.msra.mxu0 %v9870
    %10819 = vmatpush.bf16.msra.mxu0 %v9866
    %10820 = vmatpush.bf16.msra.mxu0 %v9862
    %10821 = vmatpush.bf16.msra.mxu0 %v9858
    %10822 = vmatpush.bf16.msra.mxu0 %v9854
    %10823 = vmatpush.bf16.msra.mxu0 %v9850
    %10824 = vmatpush.bf16.msra.mxu0 %v9846
    %10825 = vmatmul.bf16.gmra.mxu0 %v8005
    %v10826 = vpop.f32.mrf.mxu0
    %v10827 = vadd.f32 %v10814, %v10826
    %v10828 = vpop.f32.mrf.mxu0
    %10829 = vdwg.mxu0
    %10830 = vmatpush.bf16.msra.mxu0 %v9906
    %10831 = vmatpush.bf16.msra.mxu0 %v9902
    %10832 = vmatpush.bf16.msra.mxu0 %v9898
    %10833 = vmatpush.bf16.msra.mxu0 %v9894
    %10834 = vmatpush.bf16.msra.mxu0 %v9890
    %10835 = vmatpush.bf16.msra.mxu0 %v9886
    %10836 = vmatpush.bf16.msra.mxu0 %v9882
    %10837 = vmatpush.bf16.msra.mxu0 %v9878
    %10838 = vmatmul.bf16.gmra.mxu0 %v8006
    %v10839 = vpop.f32.mrf.mxu0
    %v10840 = vadd.f32 %v10827, %v10839
    %v10841 = vpop.f32.mrf.mxu0
    %10842 = vdwg.mxu0
    %10843 = vmatpush.bf16.msra.mxu0 %v9938
    %10844 = vmatpush.bf16.msra.mxu0 %v9934
    %10845 = vmatpush.bf16.msra.mxu0 %v9930
    %10846 = vmatpush.bf16.msra.mxu0 %v9926
    %10847 = vmatpush.bf16.msra.mxu0 %v9922
    %10848 = vmatpush.bf16.msra.mxu0 %v9918
    %10849 = vmatpush.bf16.msra.mxu0 %v9914
    %10850 = vmatpush.bf16.msra.mxu0 %v9910
    %10851 = vmatmul.bf16.gmra.mxu0 %v8007
    %v10852 = vpop.f32.mrf.mxu0
    %v10853 = vadd.f32 %v10840, %v10852
    %v10854 = vpop.f32.mrf.mxu0
    %10855 = vdwg.mxu0
    %10856 = vmatpush.bf16.msra.mxu0 %v9970
    %10857 = vmatpush.bf16.msra.mxu0 %v9966
    %10858 = vmatpush.bf16.msra.mxu0 %v9962
    %10859 = vmatpush.bf16.msra.mxu0 %v9958
    %10860 = vmatpush.bf16.msra.mxu0 %v9954
    %10861 = vmatpush.bf16.msra.mxu0 %v9950
    %10862 = vmatpush.bf16.msra.mxu0 %v9946
    %10863 = vmatpush.bf16.msra.mxu0 %v9942
    %10864 = vmatmul.bf16.gmra.mxu0 %v8008
    %v10865 = vpop.f32.mrf.mxu0
    %v10866 = vadd.f32 %v10853, %v10865
    %v10867 = vpop.f32.mrf.mxu0
    %10868 = vdwg.mxu0
    %10869 = vmatpush.bf16.msra.mxu0 0
    %10870 = vmatpush.bf16.msra.mxu0 0
    %10871 = vmatpush.bf16.msra.mxu0 0
    %10872 = vmatpush.bf16.msra.mxu0 0
    %10873 = vmatpush.bf16.msra.mxu0 0
    %10874 = vmatpush.bf16.msra.mxu0 0
    %10875 = vmatpush.bf16.msra.mxu0 %v9978
    %10876 = vmatpush.bf16.msra.mxu0 %v9974
    %10877 = vmatmul.bf16.gmra.mxu0 %v10373
    %v10878 = vpop.f32.mrf.mxu0
    %v10879 = vadd.f32 %v10866, %v10878
    %v10880 = vpop.f32.mrf.mxu0
    %10881 = vdwg.mxu0
    %10882 = vmatpush.bf16.msra.mxu0 %v9619
    %10883 = vmatpush.bf16.msra.mxu0 %v9615
    %10884 = vmatpush.bf16.msra.mxu0 %v9611
    %10885 = vmatpush.bf16.msra.mxu0 %v9607
    %10886 = vmatpush.bf16.msra.mxu0 %v9603
    %10887 = vmatpush.bf16.msra.mxu0 %v9599
    %10888 = vmatpush.bf16.msra.mxu0 %v9595
    %10889 = vmatpush.bf16.msra.mxu0 %v9591
    %10890 = vmatmul.bf16.gmra.mxu0 %v7997
    %v10891 = vpop.f32.mrf.mxu0
    %v10892 = vadd.f32 %v8407, %v10891
    %v10893 = vpop.f32.mrf.mxu0
    %10894 = vdwg.mxu0
    %10895 = vmatpush.bf16.msra.mxu0 %v9651
    %10896 = vmatpush.bf16.msra.mxu0 %v9647
    %10897 = vmatpush.bf16.msra.mxu0 %v9643
    %10898 = vmatpush.bf16.msra.mxu0 %v9639
    %10899 = vmatpush.bf16.msra.mxu0 %v9635
    %10900 = vmatpush.bf16.msra.mxu0 %v9631
    %10901 = vmatpush.bf16.msra.mxu0 %v9627
    %10902 = vmatpush.bf16.msra.mxu0 %v9623
    %10903 = vmatmul.bf16.gmra.mxu0 %v7998
    %v10904 = vpop.f32.mrf.mxu0
    %v10905 = vadd.f32 %v10892, %v10904
    %v10906 = vpop.f32.mrf.mxu0
    %10907 = vdwg.mxu0
    %10908 = vmatpush.bf16.msra.mxu0 %v9683
    %10909 = vmatpush.bf16.msra.mxu0 %v9679
    %10910 = vmatpush.bf16.msra.mxu0 %v9675
    %10911 = vmatpush.bf16.msra.mxu0 %v9671
    %10912 = vmatpush.bf16.msra.mxu0 %v9667
    %10913 = vmatpush.bf16.msra.mxu0 %v9663
    %10914 = vmatpush.bf16.msra.mxu0 %v9659
    %10915 = vmatpush.bf16.msra.mxu0 %v9655
    %10916 = vmatmul.bf16.gmra.mxu0 %v7999
    %v10917 = vpop.f32.mrf.mxu0
    %v10918 = vadd.f32 %v10905, %v10917
    %v10919 = vpop.f32.mrf.mxu0
    %10920 = vdwg.mxu0
    %10921 = vmatpush.bf16.msra.mxu0 %v9715
    %10922 = vmatpush.bf16.msra.mxu0 %v9711
    %10923 = vmatpush.bf16.msra.mxu0 %v9707
    %10924 = vmatpush.bf16.msra.mxu0 %v9703
    %10925 = vmatpush.bf16.msra.mxu0 %v9699
    %10926 = vmatpush.bf16.msra.mxu0 %v9695
    %10927 = vmatpush.bf16.msra.mxu0 %v9691
    %10928 = vmatpush.bf16.msra.mxu0 %v9687
    %10929 = vmatmul.bf16.gmra.mxu0 %v8000
    %v10930 = vpop.f32.mrf.mxu0
    %v10931 = vadd.f32 %v10918, %v10930
    %v10932 = vpop.f32.mrf.mxu0
    %10933 = vdwg.mxu0
    %10934 = vmatpush.bf16.msra.mxu0 %v9747
    %10935 = vmatpush.bf16.msra.mxu0 %v9743
    %10936 = vmatpush.bf16.msra.mxu0 %v9739
    %10937 = vmatpush.bf16.msra.mxu0 %v9735
    %10938 = vmatpush.bf16.msra.mxu0 %v9731
    %10939 = vmatpush.bf16.msra.mxu0 %v9727
    %10940 = vmatpush.bf16.msra.mxu0 %v9723
    %10941 = vmatpush.bf16.msra.mxu0 %v9719
    %10942 = vmatmul.bf16.gmra.mxu0 %v8001
    %v10943 = vpop.f32.mrf.mxu0
    %v10944 = vadd.f32 %v10931, %v10943
    %v10945 = vpop.f32.mrf.mxu0
    %10946 = vdwg.mxu0
    %10947 = vmatpush.bf16.msra.mxu0 %v9779
    %10948 = vmatpush.bf16.msra.mxu0 %v9775
    %10949 = vmatpush.bf16.msra.mxu0 %v9771
    %10950 = vmatpush.bf16.msra.mxu0 %v9767
    %10951 = vmatpush.bf16.msra.mxu0 %v9763
    %10952 = vmatpush.bf16.msra.mxu0 %v9759
    %10953 = vmatpush.bf16.msra.mxu0 %v9755
    %10954 = vmatpush.bf16.msra.mxu0 %v9751
    %10955 = vmatmul.bf16.gmra.mxu0 %v8002
    %v10956 = vpop.f32.mrf.mxu0
    %v10957 = vadd.f32 %v10944, %v10956
    %v10958 = vpop.f32.mrf.mxu0
    %10959 = vdwg.mxu0
    %10960 = vmatpush.bf16.msra.mxu0 %v9811
    %10961 = vmatpush.bf16.msra.mxu0 %v9807
    %10962 = vmatpush.bf16.msra.mxu0 %v9803
    %10963 = vmatpush.bf16.msra.mxu0 %v9799
    %10964 = vmatpush.bf16.msra.mxu0 %v9795
    %10965 = vmatpush.bf16.msra.mxu0 %v9791
    %10966 = vmatpush.bf16.msra.mxu0 %v9787
    %10967 = vmatpush.bf16.msra.mxu0 %v9783
    %10968 = vmatmul.bf16.gmra.mxu0 %v8003
    %v10969 = vpop.f32.mrf.mxu0
    %v10970 = vadd.f32 %v10957, %v10969
    %v10971 = vpop.f32.mrf.mxu0
    %10972 = vdwg.mxu0
    %10973 = vmatpush.bf16.msra.mxu0 %v9843
    %10974 = vmatpush.bf16.msra.mxu0 %v9839
    %10975 = vmatpush.bf16.msra.mxu0 %v9835
    %10976 = vmatpush.bf16.msra.mxu0 %v9831
    %10977 = vmatpush.bf16.msra.mxu0 %v9827
    %10978 = vmatpush.bf16.msra.mxu0 %v9823
    %10979 = vmatpush.bf16.msra.mxu0 %v9819
    %10980 = vmatpush.bf16.msra.mxu0 %v9815
    %10981 = vmatmul.bf16.gmra.mxu0 %v8004
    %v10982 = vpop.f32.mrf.mxu0
    %v10983 = vadd.f32 %v10970, %v10982
    %v10984 = vpop.f32.mrf.mxu0
    %10985 = vdwg.mxu0
    %10986 = vmatpush.bf16.msra.mxu0 %v9875
    %10987 = vmatpush.bf16.msra.mxu0 %v9871
    %10988 = vmatpush.bf16.msra.mxu0 %v9867
    %10989 = vmatpush.bf16.msra.mxu0 %v9863
    %10990 = vmatpush.bf16.msra.mxu0 %v9859
    %10991 = vmatpush.bf16.msra.mxu0 %v9855
    %10992 = vmatpush.bf16.msra.mxu0 %v9851
    %10993 = vmatpush.bf16.msra.mxu0 %v9847
    %10994 = vmatmul.bf16.gmra.mxu0 %v8005
    %v10995 = vpop.f32.mrf.mxu0
    %v10996 = vadd.f32 %v10983, %v10995
    %v10997 = vpop.f32.mrf.mxu0
    %10998 = vdwg.mxu0
    %10999 = vmatpush.bf16.msra.mxu0 %v9907
    %11000 = vmatpush.bf16.msra.mxu0 %v9903
    %11001 = vmatpush.bf16.msra.mxu0 %v9899
    %11002 = vmatpush.bf16.msra.mxu0 %v9895
    %11003 = vmatpush.bf16.msra.mxu0 %v9891
    %11004 = vmatpush.bf16.msra.mxu0 %v9887
    %11005 = vmatpush.bf16.msra.mxu0 %v9883
    %11006 = vmatpush.bf16.msra.mxu0 %v9879
    %11007 = vmatmul.bf16.gmra.mxu0 %v8006
    %v11008 = vpop.f32.mrf.mxu0
    %v11009 = vadd.f32 %v10996, %v11008
    %v11010 = vpop.f32.mrf.mxu0
    %11011 = vdwg.mxu0
    %11012 = vmatpush.bf16.msra.mxu0 %v9939
    %11013 = vmatpush.bf16.msra.mxu0 %v9935
    %11014 = vmatpush.bf16.msra.mxu0 %v9931
    %11015 = vmatpush.bf16.msra.mxu0 %v9927
    %11016 = vmatpush.bf16.msra.mxu0 %v9923
    %11017 = vmatpush.bf16.msra.mxu0 %v9919
    %11018 = vmatpush.bf16.msra.mxu0 %v9915
    %11019 = vmatpush.bf16.msra.mxu0 %v9911
    %11020 = vmatmul.bf16.gmra.mxu0 %v8007
    %v11021 = vpop.f32.mrf.mxu0
    %v11022 = vadd.f32 %v11009, %v11021
    %v11023 = vpop.f32.mrf.mxu0
    %11024 = vdwg.mxu0
    %11025 = vmatpush.bf16.msra.mxu0 %v9971
    %11026 = vmatpush.bf16.msra.mxu0 %v9967
    %11027 = vmatpush.bf16.msra.mxu0 %v9963
    %11028 = vmatpush.bf16.msra.mxu0 %v9959
    %11029 = vmatpush.bf16.msra.mxu0 %v9955
    %11030 = vmatpush.bf16.msra.mxu0 %v9951
    %11031 = vmatpush.bf16.msra.mxu0 %v9947
    %11032 = vmatpush.bf16.msra.mxu0 %v9943
    %11033 = vmatmul.bf16.gmra.mxu0 %v8008
    %v11034 = vpop.f32.mrf.mxu0
    %v11035 = vadd.f32 %v11022, %v11034
    %v11036 = vpop.f32.mrf.mxu0
    %11037 = vdwg.mxu0
    %11038 = vmatpush.bf16.msra.mxu0 0
    %11039 = vmatpush.bf16.msra.mxu0 0
    %11040 = vmatpush.bf16.msra.mxu0 0
    %11041 = vmatpush.bf16.msra.mxu0 0
    %11042 = vmatpush.bf16.msra.mxu0 0
    %11043 = vmatpush.bf16.msra.mxu0 0
    %11044 = vmatpush.bf16.msra.mxu0 %v9979
    %11045 = vmatpush.bf16.msra.mxu0 %v9975
    %11046 = vmatmul.bf16.gmra.mxu0 %v10373
    %v11047 = vpop.f32.mrf.mxu0
    %v11048 = vadd.f32 %v11035, %v11047
    %v11049 = vpop.f32.mrf.mxu0
    %11050 = vdwg.mxu0
    %v11051 = vmax.f32 %v10541, 0.0
    %v11052 = vmax.f32 %v10710, 0.0
    %v11053 = vmax.f32 %v10879, 0.0
    %v11054 = vmax.f32 %v11048, 0.0
    %v11055 = vpack.c.bf16 %v11051, %v11051
    %v11056 = vpack.c.bf16 %v11052, %v11052
    %v11057 = vpack.c.bf16 %v11053, %v11053
    %v11058 = vpack.c.bf16 %v11054, %v11054
    %v11059 = vld [vmem:[%s7] sm:$0xf]
    %v11060 = vld [vmem:[%s7 + $0x4] sm:$0xf]
    %v11061 = vld [vmem:[%s7 + $0x8] sm:$0xf]
    %v11062 = vld [vmem:[%s7 + $0xc] sm:$0xf]
    %v11063 = vld [vmem:[%s7 + $0x10] sm:$0xf]
    %v11064 = vld [vmem:[%s7 + $0x14] sm:$0xf]
    %v11065 = vld [vmem:[%s7 + $0x18] sm:$0xf]
    %v11066 = vld [vmem:[%s7 + $0x1c] sm:$0xf]
    %v11067 = vld [vmem:[%s7 + $0x20] sm:$0xf]
    %v11068 = vld [vmem:[%s7 + $0x24] sm:$0xf]
    %v11069 = vld [vmem:[%s7 + $0x28] sm:$0xf]
    %v11070 = vld [vmem:[%s7 + $0x2c] sm:$0xf]
    %v11071 = vld [vmem:[%s7 + $0x30] sm:$0xf]
    %v11072 = vld [vmem:[%s7 + $0x34] sm:$0xf]
    %v11073 = vld [vmem:[%s7 + $0x38] sm:$0xf]
    %v11074 = vld [vmem:[%s7 + $0x3c] sm:$0xf]
    %v11075 = vld [vmem:[%s7 + $0x40] sm:$0xf]
    %v11076 = vld [vmem:[%s7 + $0x44] sm:$0xf]
    %v11077 = vld [vmem:[%s7 + $0x48] sm:$0xf]
    %v11078 = vld [vmem:[%s7 + $0x4c] sm:$0xf]
    %v11079 = vld [vmem:[%s7 + $0x50] sm:$0xf]
    %v11080 = vld [vmem:[%s7 + $0x54] sm:$0xf]
    %v11081 = vld [vmem:[%s7 + $0x58] sm:$0xf]
    %v11082 = vld [vmem:[%s7 + $0x5c] sm:$0xf]
    %v11083 = vld [vmem:[%s7 + $0x60] sm:$0xf]
    %v11084 = vld [vmem:[%s7 + $0x64] sm:$0xf]
    %v11085 = vld [vmem:[%s7 + $0x68] sm:$0xf]
    %v11086 = vld [vmem:[%s7 + $0x6c] sm:$0xf]
    %v11087 = vld [vmem:[%s7 + $0x70] sm:$0xf]
    %v11088 = vld [vmem:[%s7 + $0x74] sm:$0xf]
    %v11089 = vld [vmem:[%s7 + $0x78] sm:$0xf]
    %v11090 = vld [vmem:[%s7 + $0x7c] sm:$0xf]
    %v11091 = vld [vmem:[%s7 + $0x80] sm:$0xf]
    %v11092 = vld [vmem:[%s7 + $0x84] sm:$0xf]
    %v11093 = vld [vmem:[%s7 + $0x88] sm:$0xf]
    %v11094 = vld [vmem:[%s7 + $0x8c] sm:$0xf]
    %v11095 = vld [vmem:[%s7 + $0x90] sm:$0xf]
    %v11096 = vld [vmem:[%s7 + $0x94] sm:$0xf]
    %v11097 = vld [vmem:[%s7 + $0x98] sm:$0xf]
    %v11098 = vld [vmem:[%s7 + $0x9c] sm:$0xf]
    %v11099 = vld [vmem:[%s7 + $0xa0] sm:$0xf]
    %v11100 = vld [vmem:[%s7 + $0xa4] sm:$0xf]
    %v11101 = vld [vmem:[%s7 + $0xa8] sm:$0xf]
    %v11102 = vld [vmem:[%s7 + $0xac] sm:$0xf]
    %v11103 = vld [vmem:[%s7 + $0xb0] sm:$0xf]
    %v11104 = vld [vmem:[%s7 + $0xb4] sm:$0xf]
    %v11105 = vld [vmem:[%s7 + $0xb8] sm:$0xf]
    %v11106 = vld [vmem:[%s7 + $0xbc] sm:$0xf]
    %v11107 = vld [vmem:[%s7 + $0xc0] sm:$0xf]
    %v11108 = vld [vmem:[%s7 + $0xc4] sm:$0xf]
    %v11109 = vld [vmem:[%s7 + $0xc8] sm:$0xf]
    %v11110 = vld [vmem:[%s7 + $0xcc] sm:$0xf]
    %v11111 = vld [vmem:[%s7 + $0xd0] sm:$0xf]
    %v11112 = vld [vmem:[%s7 + $0xd4] sm:$0xf]
    %v11113 = vld [vmem:[%s7 + $0xd8] sm:$0xf]
    %v11114 = vld [vmem:[%s7 + $0xdc] sm:$0xf]
    %v11115 = vld [vmem:[%s7 + $0xe0] sm:$0xf]
    %v11116 = vld [vmem:[%s7 + $0xe4] sm:$0xf]
    %v11117 = vld [vmem:[%s7 + $0xe8] sm:$0xf]
    %v11118 = vld [vmem:[%s7 + $0xec] sm:$0xf]
    %v11119 = vld [vmem:[%s7 + $0xf0] sm:$0xf]
    %v11120 = vld [vmem:[%s7 + $0xf4] sm:$0xf]
    %v11121 = vld [vmem:[%s7 + $0xf8] sm:$0xf]
    %v11122 = vld [vmem:[%s7 + $0xfc] sm:$0xf]
    %v11123 = vld [vmem:[%s8] sm:$0x1]
    %v11125 = vperm.slane %v11123, 0
    %v11191 = vunpack.c.l.b16 %v11059
    %v11192 = vunpack.c.l.b16 %v11060
    %v11193 = vunpack.c.l.b16 %v11061
    %v11194 = vunpack.c.l.b16 %v11062
    %v11195 = vunpack.c.l.b16 %v11063
    %v11196 = vunpack.c.l.b16 %v11064
    %v11197 = vunpack.c.l.b16 %v11065
    %v11198 = vunpack.c.l.b16 %v11066
    %v11199 = vunpack.c.l.b16 %v11067
    %v11200 = vunpack.c.l.b16 %v11068
    %v11201 = vunpack.c.l.b16 %v11069
    %v11202 = vunpack.c.l.b16 %v11070
    %v11203 = vunpack.c.l.b16 %v11071
    %v11204 = vunpack.c.l.b16 %v11072
    %v11205 = vunpack.c.l.b16 %v11073
    %v11206 = vunpack.c.l.b16 %v11074
    %v11207 = vunpack.c.l.b16 %v11075
    %v11208 = vunpack.c.l.b16 %v11076
    %v11209 = vunpack.c.l.b16 %v11077
    %v11210 = vunpack.c.l.b16 %v11078
    %v11211 = vunpack.c.l.b16 %v11079
    %v11212 = vunpack.c.l.b16 %v11080
    %v11213 = vunpack.c.l.b16 %v11081
    %v11214 = vunpack.c.l.b16 %v11082
    %v11215 = vunpack.c.l.b16 %v11083
    %v11216 = vunpack.c.l.b16 %v11084
    %v11217 = vunpack.c.l.b16 %v11085
    %v11218 = vunpack.c.l.b16 %v11086
    %v11219 = vunpack.c.l.b16 %v11087
    %v11220 = vunpack.c.l.b16 %v11088
    %v11221 = vunpack.c.l.b16 %v11089
    %v11222 = vunpack.c.l.b16 %v11090
    %v11223 = vunpack.c.l.b16 %v11091
    %v11224 = vunpack.c.l.b16 %v11092
    %v11225 = vunpack.c.l.b16 %v11093
    %v11226 = vunpack.c.l.b16 %v11094
    %v11227 = vunpack.c.l.b16 %v11095
    %v11228 = vunpack.c.l.b16 %v11096
    %v11229 = vunpack.c.l.b16 %v11097
    %v11230 = vunpack.c.l.b16 %v11098
    %v11231 = vunpack.c.l.b16 %v11099
    %v11232 = vunpack.c.l.b16 %v11100
    %v11233 = vunpack.c.l.b16 %v11101
    %v11234 = vunpack.c.l.b16 %v11102
    %v11235 = vunpack.c.l.b16 %v11103
    %v11236 = vunpack.c.l.b16 %v11104
    %v11237 = vunpack.c.l.b16 %v11105
    %v11238 = vunpack.c.l.b16 %v11106
    %v11239 = vunpack.c.l.b16 %v11107
    %v11240 = vunpack.c.l.b16 %v11108
    %v11241 = vunpack.c.l.b16 %v11109
    %v11242 = vunpack.c.l.b16 %v11110
    %v11243 = vunpack.c.l.b16 %v11111
    %v11244 = vunpack.c.l.b16 %v11112
    %v11245 = vunpack.c.l.b16 %v11113
    %v11246 = vunpack.c.l.b16 %v11114
    %v11247 = vunpack.c.l.b16 %v11115
    %v11248 = vunpack.c.l.b16 %v11116
    %v11249 = vunpack.c.l.b16 %v11117
    %v11250 = vunpack.c.l.b16 %v11118
    %v11251 = vunpack.c.l.b16 %v11119
    %v11252 = vunpack.c.l.b16 %v11120
    %v11253 = vunpack.c.l.b16 %v11121
    %v11254 = vunpack.c.l.b16 %v11122
    %v11255 = vpack.c.b16 %v11192, %v11191
    %v11256 = vpack.c.b16 %v11194, %v11193
    %v11257 = vpack.c.b16 %v11196, %v11195
    %v11258 = vpack.c.b16 %v11198, %v11197
    %v11259 = vpack.c.b16 %v11200, %v11199
    %v11260 = vpack.c.b16 %v11202, %v11201
    %v11261 = vpack.c.b16 %v11204, %v11203
    %v11262 = vpack.c.b16 %v11206, %v11205
    %v11263 = vpack.c.b16 %v11208, %v11207
    %v11264 = vpack.c.b16 %v11210, %v11209
    %v11265 = vpack.c.b16 %v11212, %v11211
    %v11266 = vpack.c.b16 %v11214, %v11213
    %v11267 = vpack.c.b16 %v11216, %v11215
    %v11268 = vpack.c.b16 %v11218, %v11217
    %v11269 = vpack.c.b16 %v11220, %v11219
    %v11270 = vpack.c.b16 %v11222, %v11221
    %v11271 = vpack.c.b16 %v11224, %v11223
    %v11272 = vpack.c.b16 %v11226, %v11225
    %v11273 = vpack.c.b16 %v11228, %v11227
    %v11274 = vpack.c.b16 %v11230, %v11229
    %v11275 = vpack.c.b16 %v11232, %v11231
    %v11276 = vpack.c.b16 %v11234, %v11233
    %v11277 = vpack.c.b16 %v11236, %v11235
    %v11278 = vpack.c.b16 %v11238, %v11237
    %v11279 = vpack.c.b16 %v11240, %v11239
    %v11280 = vpack.c.b16 %v11242, %v11241
    %v11281 = vpack.c.b16 %v11244, %v11243
    %v11282 = vpack.c.b16 %v11246, %v11245
    %v11283 = vpack.c.b16 %v11248, %v11247
    %v11284 = vpack.c.b16 %v11250, %v11249
    %v11285 = vpack.c.b16 %v11252, %v11251
    %v11286 = vpack.c.b16 %v11254, %v11253
    %11319 = vmatpush.bf16.msra.mxu0 %v11262
    %11320 = vmatpush.bf16.msra.mxu0 %v11261
    %11321 = vmatpush.bf16.msra.mxu0 %v11260
    %11322 = vmatpush.bf16.msra.mxu0 %v11259
    %11323 = vmatpush.bf16.msra.mxu0 %v11258
    %11324 = vmatpush.bf16.msra.mxu0 %v11257
    %11325 = vmatpush.bf16.msra.mxu0 %v11256
    %11326 = vmatpush.bf16.msra.mxu0 %v11255
    %11327 = vmatmul.bf16.gmra.mxu0 %v11055
    %v11328 = vpop.f32.mrf.mxu0
    %v11329 = vadd.f32 %v11125, %v11328
    %v11330 = vpop.f32.mrf.mxu0
    %11331 = vdwg.mxu0
    %11332 = vmatpush.bf16.msra.mxu0 %v11270
    %11333 = vmatpush.bf16.msra.mxu0 %v11269
    %11334 = vmatpush.bf16.msra.mxu0 %v11268
    %11335 = vmatpush.bf16.msra.mxu0 %v11267
    %11336 = vmatpush.bf16.msra.mxu0 %v11266
    %11337 = vmatpush.bf16.msra.mxu0 %v11265
    %11338 = vmatpush.bf16.msra.mxu0 %v11264
    %11339 = vmatpush.bf16.msra.mxu0 %v11263
    %11340 = vmatmul.bf16.gmra.mxu0 %v11056
    %v11341 = vpop.f32.mrf.mxu0
    %v11342 = vadd.f32 %v11329, %v11341
    %v11343 = vpop.f32.mrf.mxu0
    %11344 = vdwg.mxu0
    %11345 = vmatpush.bf16.msra.mxu0 %v11278
    %11346 = vmatpush.bf16.msra.mxu0 %v11277
    %11347 = vmatpush.bf16.msra.mxu0 %v11276
    %11348 = vmatpush.bf16.msra.mxu0 %v11275
    %11349 = vmatpush.bf16.msra.mxu0 %v11274
    %11350 = vmatpush.bf16.msra.mxu0 %v11273
    %11351 = vmatpush.bf16.msra.mxu0 %v11272
    %11352 = vmatpush.bf16.msra.mxu0 %v11271
    %11353 = vmatmul.bf16.gmra.mxu0 %v11057
    %v11354 = vpop.f32.mrf.mxu0
    %v11355 = vadd.f32 %v11342, %v11354
    %v11356 = vpop.f32.mrf.mxu0
    %11357 = vdwg.mxu0
    %11358 = vmatpush.bf16.msra.mxu0 %v11286
    %11359 = vmatpush.bf16.msra.mxu0 %v11285
    %11360 = vmatpush.bf16.msra.mxu0 %v11284
    %11361 = vmatpush.bf16.msra.mxu0 %v11283
    %11362 = vmatpush.bf16.msra.mxu0 %v11282
    %11363 = vmatpush.bf16.msra.mxu0 %v11281
    %11364 = vmatpush.bf16.msra.mxu0 %v11280
    %11365 = vmatpush.bf16.msra.mxu0 %v11279
    %11366 = vmatmul.bf16.gmra.mxu0 %v11058
    %v11367 = vpop.f32.mrf.mxu0
    %v11368 = vadd.f32 %v11355, %v11367
    %v11369 = vpop.f32.mrf.mxu0
    %11370 = vdwg.mxu0
    %vm11371 = vcmask 74752
    %11372 = vst.msk [vmem:[#allocation9] sm:$0x3] %vm11371, %v11368
    // Predicated region
    $region38: #{convnet_forward.1} parent=1 // pred_check
      _
    $region39: #{convnet_forward.1} parent=1 // pred_check_branch
      %11374 = sbr.rel (0) target = $region41
    $region40: #{convnet_forward.1} parent=1 // pred_region
      %11376 = vsyncadd [#allocation10], 0
      %s11378 = sshll.u32 [#allocation9], 4
      %s11379 = int_to_ptr.vmem [resolvable:$true] %s11378
      %s11380 = sshll.u32 %s9, 4
      %s11381 = int_to_ptr.hbm [resolvable:$true] %s11380
      %11383 = dma.vmem_to_hbm [thread:$0]  %s11379, 32, %s11381, [#allocation10]
    $region41: #{convnet_forward.1} parent=1 // pred_fallthru
      _
    // Predicated region
    $region42: #{convnet_forward.1} parent=1 // pred_check
      _
    $region43: #{convnet_forward.1} parent=1 // pred_check_branch
      %11385 = sbr.rel (0) target = $region45
    $region44: #{convnet_forward.1} parent=1 // pred_region
      %11387 = dma.done [#allocation10], 32
    $region45: #{convnet_forward.1} parent=1 // pred_fallthru
      _
    %11388 = vsyncpa [#allocation10], 1

</llo_original>
